<compile_context>
chip_gen: v7x
topology: tpu7x:2x2x1
jax: 0.10.0
libtpu: 0.0.40
codegen_flags: <defaults>
</compile_context>

<pallas_src>
import functools

import jax
import jax.numpy as jnp
import numpy as np
from jax.experimental import pallas as pl
from jax.experimental.pallas import tpu as pltpu


# ----------------------------- fused kernel -----------------------------


def _conv_bn_act(a, band_ref, s_ref, t_ref, mask, leaky):
    """3x3 conv (three banded matmuls over row shifts) + folded BN (+LeakyReLU).

    a        : (R, W*Cin) f32 stacked rows (zero halo rows carried through)
    band_ref : (3, W*Cin, W*Cout) bf16 banded weights (W-direction taps folded)
    s_ref/t_ref : (1, W*Cout) f32 folded eval-mode BatchNorm scale / shift
    mask     : (R-2, 1) f32 periodic keep-mask re-zeroing halo rows, or None
    returns  : (R-2, W*Cout) f32 ("valid" conv along the stacked row axis)
    """
    r_out = a.shape[0] - 2
    ab = a.astype(jnp.bfloat16)

    acc = jnp.dot(ab[0:r_out, :], band_ref[0],
                  preferred_element_type=jnp.float32)
    acc = acc + jnp.dot(ab[1:1 + r_out, :], band_ref[1],
                        preferred_element_type=jnp.float32)
    acc = acc + jnp.dot(ab[2:2 + r_out, :], band_ref[2],
                        preferred_element_type=jnp.float32)

    y = acc * s_ref[...] + t_ref[...]
    if leaky:
        y = jnp.where(y > 0.0, y, 0.2 * y)
    if mask is not None:
        # Re-zero halo rows (periodic per image) so they act as zero padding
        # for the next conv layer.
        y = y * mask
    return y


def specadapter_kernel(x_ref, m1_ref, m2_ref,
                       b1_ref, s1_ref, t1_ref,
                       b2_ref, s2_ref, t2_ref,
                       b3_ref, s3_ref, t3_ref,
                       o_ref, *, H, Pin, Hp, Bt):
    a = x_ref[...]                                           # (Bt*Pin, W) f32
    a = _conv_bn_act(a, b1_ref, s1_ref, t1_ref, m1_ref[...], leaky=True)
    a = _conv_bn_act(a, b2_ref, s2_ref, t2_ref, m2_ref[...], leaky=False)
    a = _conv_bn_act(a, b3_ref, s3_ref, t3_ref, None, leaky=True)
    # Image i's data rows sit at [i*Pin, i*Pin+H) of `a`; store them
    # lane-dense at [i*Hp, i*Hp+H) of the (Bt*Hp, W*64) output slab.
    # Bt is a small compile-time constant, so this unrolls statically.
    for i in range(Bt):
        o_ref[i * Hp:i * Hp + H, :] = a[i * Pin:i * Pin + H, :].astype(o_ref.dtype)


# ----------------------------- host-side helpers -----------------------------


def _make_band(w, W):
    """Conv weight (3,3,Cin,Cout) -> banded (3, W*Cin, W*Cout) matmul weights.

    band[ky][win*Cin+ci, wout*Cout+co] = w[ky, win-wout+1, ci, co] for
    |win-wout| <= 1, else 0.  Zero padding along W is implicit (missing rows).
    """
    _, _, cin, cout = w.shape
    win = jnp.arange(W)[:, None]
    wout = jnp.arange(W)[None, :]
    kx = win - wout + 1                                   # (W, W)
    valid = (kx >= 0) & (kx <= 2)
    g = w[:, jnp.clip(kx, 0, 2), :, :]                    # (3, W, W, Cin, Cout)
    g = jnp.where(valid[None, :, :, None, None], g, 0.0)
    g = jnp.transpose(g, (0, 1, 3, 2, 4)).reshape(3, W * cin, W * cout)
    return g


def _fold_bn(conv_bias, gamma, beta, mean, var, W, eps=1e-5):
    """Fold conv bias + eval-mode BatchNorm into per-lane scale/shift."""
    s = gamma / jnp.sqrt(var + eps)
    t = (conv_bias - mean) * s + beta
    return (jnp.tile(s, W)[None, :].astype(jnp.float32),
            jnp.tile(t, W)[None, :].astype(jnp.float32))


def _round_up(x, m):
    return (x + m - 1) // m * m


def _choose_block_batch(B, Pin):
    """Images stacked per grid step.

    Fill the MXU M dimension (cap ~128 rows so the f32 accumulator stays small
    without internal M tiling), but keep >=2 grid steps when B >= 2 so both of
    v7x's TensorCores get work under dimension_semantics=("parallel",).  On
    single-TC parts (v5e/v6e) the 2-step floor costs only ~0.35us of overhead.
    """
    bt = max(1, 128 // Pin)
    bt = min(bt, B)
    if B >= 2:
        bt = min(bt, -(-B // 2))
    return max(1, bt)


def specadapter_forward(x_nchw, params, *, single_buffer_consts=True,
                        out_layout="NCHW", out_dtype=jnp.float32):
    B, cin, H, W = x_nchw.shape
    assert cin == 1
    c_out = params['w3'].shape[-1]                         # 64

    # Per-image row periods, padded to sublane multiples of 8 so every block
    # shape obeys the TPU (8, 128) tiling rule.
    Pin = _round_up(H + 6, 8)                              # >= 3 halo rows/side
    Hp = _round_up(H, 8)

    Bt = _choose_block_batch(B, Pin)
    num_blocks = -(-B // Bt)
    B_pad = num_blocks * Bt

    # Zero-pad once: batch to B_pad, 3 halo rows on top, Pin-H-3 (>=3) below,
    # then flatten to a 2-D row stack (B_pad*Pin, W).  All intermediate padding
    # is handled inside the fused kernel via periodic row masks.
    xf = jnp.pad(x_nchw[:, 0, :, :],
                 ((0, B_pad - B), (3, Pin - H - 3), (0, 0)))
    xf = xf.reshape(B_pad * Pin, W)

    # Banded conv weights (W taps folded in) + folded eval-mode BatchNorm.
    band1 = _make_band(params['w1'], W).astype(jnp.bfloat16)
    band2 = _make_band(params['w2'], W).astype(jnp.bfloat16)
    band3 = _make_band(params['w3'], W).astype(jnp.bfloat16)
    s1, t1 = _fold_bn(params['b1'], *params['bn1'], W)
    s2, t2 = _fold_bn(params['b2'], *params['bn2'], W)
    s3, t3 = _fold_bn(params['b3'], *params['bn3'], W)

    # Periodic halo re-zero masks (host precomputed; period Pin, data rows H).
    R0 = Bt * Pin
    r1 = np.arange(R0 - 2)
    r2 = np.arange(R0 - 4)
    m1 = jnp.asarray((((r1 - 2) % Pin) < H).astype(np.float32)[:, None])
    m2 = jnp.asarray((((r2 - 1) % Pin) < H).astype(np.float32)[:, None])

    consts = (m1, m2, band1, s1, t1, band2, s2, t2, band3, s3, t3)

    def const_spec(a):
        idx = lambda g, _nd=a.ndim: (0,) * _nd
        if single_buffer_consts:
            # Constant operands never change across the grid: single-buffer
            # them so the weights are not held twice in VMEM.
            return pl.BlockSpec(a.shape, idx, pipeline_mode=pl.Buffered(1))
        return pl.BlockSpec(a.shape, idx)

    out_elem = jnp.dtype(out_dtype).itemsize
    out_rows_total = B_pad * Hp

    # VMEM budget: double-buffered I/O blocks + constants (x1 or x2) + f32/bf16
    # intermediates with slack; clamp to [32 MiB, 48 MiB] so it never dips
    # below the scoped defaults yet leaves headroom on v7x's 64 MiB physical.
    const_bytes = sum(int(np.prod(c.shape)) * c.dtype.itemsize for c in consts)
    io_bytes = 2 * (R0 * max(W, 128) * 4) + 2 * (Bt * Hp * W * c_out * out_elem)
    act_bytes = 6 * R0 * W * (1 + 4 + 16 + c_out)
    needed = io_bytes + (1 if single_buffer_consts else 2) * const_bytes + act_bytes
    vmem_limit = int(min(max(2 * needed, 32 << 20), 48 << 20))

    flops = 0
    for (ci_k, co_k, shrink) in ((1, 4, 2), (4, 16, 4), (16, c_out, 6)):
        flops += 2 * 3 * (R0 - shrink) * (W * ci_k) * (W * co_k)
    flops *= num_blocks
    bytes_accessed = (xf.size * 4 + out_rows_total * W * c_out * out_elem
                      + const_bytes)

    out = pl.pallas_call(
        functools.partial(specadapter_kernel, H=H, Pin=Pin, Hp=Hp, Bt=Bt),
        out_shape=jax.ShapeDtypeStruct((out_rows_total, W * c_out), out_dtype),
        grid=(num_blocks,),
        in_specs=[pl.BlockSpec((R0, W), lambda g: (g, 0))]
                + [const_spec(c) for c in consts],
        out_specs=pl.BlockSpec((Bt * Hp, W * c_out), lambda g: (g, 0)),
        compiler_params=pltpu.CompilerParams(
            dimension_semantics=("parallel",),
            vmem_limit_bytes=vmem_limit),
        cost_estimate=pl.CostEstimate(flops=flops, transcendentals=0,
                                      bytes_accessed=bytes_accessed),
    )(xf, *consts)

    # Lane-dense (rows, W*64) slab -> (B, H, W, 64).  The NCHW transpose is an
    # extra HBM pass; prefer out_layout="NHWC" downstream when possible.
    out = out.reshape(B_pad, Hp, W, c_out)[:B, :H]
    if out_layout == "NHWC":
        return out
    return jnp.transpose(out, (0, 3, 1, 2))


# ------------------- reference (plain JAX, f32) & params -------------------


def specadapter_reference(x, params):
    def conv(h, w, b):
        wt = jnp.transpose(w, (3, 2, 0, 1))               # (Cout, Cin, kH, kW)
        y = jax.lax.conv_general_dilated(
            h, wt, window_strides=(1, 1), padding=((1, 1), (1, 1)),
            dimension_numbers=('NCHW', 'OIHW', 'NCHW'))
        return y + b[None, :, None, None]

    def bn(h, g, bt, m, v, eps=1e-5):
        s = g / jnp.sqrt(v + eps)
        return h * s[None, :, None, None] + (bt - m * s)[None, :, None, None]

    def lrelu(h):
        return jnp.where(h > 0, h, 0.2 * h)

    h = lrelu(bn(conv(x, params['w1'], params['b1']), *params['bn1']))
    h = bn(conv(h, params['w2'], params['b2']), *params['bn2'])
    h = lrelu(bn(conv(h, params['w3'], params['b3']), *params['bn3']))
    return h


def init_params(key):
    def conv_init(k, ci, co):
        kw, kb = jax.random.split(k)
        return (jax.random.normal(kw, (3, 3, ci, co), jnp.float32) * 0.1,
                jax.random.normal(kb, (co,), jnp.float32) * 0.1)

    def bn_init(k, c):
        k1, k2, k3, k4 = jax.random.split(k, 4)
        gamma = 1.0 + 0.1 * jax.random.normal(k1, (c,), jnp.float32)
        beta = 0.1 * jax.random.normal(k2, (c,), jnp.float32)
        mean = 0.1 * jax.random.normal(k3, (c,), jnp.float32)
        var = 1.0 + 0.1 * jnp.abs(jax.random.normal(k4, (c,), jnp.float32))
        return gamma, beta, mean, var

    ks = jax.random.split(key, 6)
    w1, b1 = conv_init(ks[0], 1, 4)
    w2, b2 = conv_init(ks[1], 4, 16)
    w3, b3 = conv_init(ks[2], 16, 64)
    return {'w1': w1, 'b1': b1, 'bn1': bn_init(ks[3], 4),
            'w2': w2, 'b2': b2, 'bn2': bn_init(ks[4], 16),
            'w3': w3, 'b3': b3, 'bn3': bn_init(ks[5], 64)}


# ----------------------------- main -----------------------------


if __name__ == "__main__":
    key = jax.random.PRNGKey(0)
    kp, kx = jax.random.split(key)
    params = init_params(kp)

    B, H, W = 2, 16, 16
    x = jax.random.normal(kx, (B, 1, H, W), jnp.float32)

    def run(single_buffer):
        f = jax.jit(functools.partial(specadapter_forward,
                                      single_buffer_consts=single_buffer))
        y = f(x, params)
        jax.block_until_ready(y)
        return y

    try:
        y = run(True)          # single-buffered constant weights
    except Exception:
        y = run(False)         # fallback: default (double-buffered) specs

    assert y.shape == (B, 64, H, W)

    # Correctness vs. plain-JAX f32 reference (kernel matmuls are bf16).
    y_ref = specadapter_reference(x, params)
    err = float(jnp.max(jnp.abs(y - y_ref)))
    assert err < 5e-2, f"max abs err {err}"

    print("KERNEL_OK")
</pallas_src>

<mosaic_0001>
module attributes {stable_mosaic.version = 11 : i64} {
  func.func @specadapter_kernel(%arg0: i32, %arg1: memref<24x16xf32, #tpu.memory_space<vmem>>, %arg2: memref<22x1xf32, #tpu.memory_space<vmem>>, %arg3: memref<20x1xf32, #tpu.memory_space<vmem>>, %arg4: memref<3x16x64xbf16, #tpu.memory_space<vmem>>, %arg5: memref<1x64xf32, #tpu.memory_space<vmem>>, %arg6: memref<1x64xf32, #tpu.memory_space<vmem>>, %arg7: memref<3x64x256xbf16, #tpu.memory_space<vmem>>, %arg8: memref<1x256xf32, #tpu.memory_space<vmem>>, %arg9: memref<1x256xf32, #tpu.memory_space<vmem>>, %arg10: memref<3x256x1024xbf16, #tpu.memory_space<vmem>>, %arg11: memref<1x1024xf32, #tpu.memory_space<vmem>>, %arg12: memref<1x1024xf32, #tpu.memory_space<vmem>>, %arg13: memref<16x1024xf32, #tpu.memory_space<vmem>>) attributes {dimension_semantics = [#tpu.dimension_semantics<parallel>], iteration_bounds = array<i64: 2>, scalar_prefetch = 0 : i64, scratch_operands = 0 : i64, tpu.core_type = #tpu.core_type<tc>, window_params = [{transform_indices = @transform_0, window_bounds = array<i64: 24, 16>}, {pipeline_mode = #tpu.pipeline_mode<synchronous>, transform_indices = @transform_1, window_bounds = array<i64: 22, 1>}, {pipeline_mode = #tpu.pipeline_mode<synchronous>, transform_indices = @transform_2, window_bounds = array<i64: 20, 1>}, {pipeline_mode = #tpu.pipeline_mode<synchronous>, transform_indices = @transform_3, window_bounds = array<i64: 3, 16, 64>}, {pipeline_mode = #tpu.pipeline_mode<synchronous>, transform_indices = @transform_4, window_bounds = array<i64: 1, 64>}, {pipeline_mode = #tpu.pipeline_mode<synchronous>, transform_indices = @transform_5, window_bounds = array<i64: 1, 64>}, {pipeline_mode = #tpu.pipeline_mode<synchronous>, transform_indices = @transform_6, window_bounds = array<i64: 3, 64, 256>}, {pipeline_mode = #tpu.pipeline_mode<synchronous>, transform_indices = @transform_7, window_bounds = array<i64: 1, 256>}, {pipeline_mode = #tpu.pipeline_mode<synchronous>, transform_indices = @transform_8, window_bounds = array<i64: 1, 256>}, {pipeline_mode = #tpu.pipeline_mode<synchronous>, transform_indices = @transform_9, window_bounds = array<i64: 3, 256, 1024>}, {pipeline_mode = #tpu.pipeline_mode<synchronous>, transform_indices = @transform_10, window_bounds = array<i64: 1, 1024>}, {pipeline_mode = #tpu.pipeline_mode<synchronous>, transform_indices = @transform_11, window_bounds = array<i64: 1, 1024>}, {transform_indices = @transform_12, window_bounds = array<i64: 16, 1024>}]} {
    %c0 = arith.constant 0 : index
    %c0_0 = arith.constant 0 : index
    %0 = vector.load %arg1[%c0, %c0_0] : memref<24x16xf32, #tpu.memory_space<vmem>>, vector<24x16xf32>
    %c0_1 = arith.constant 0 : index
    %c0_2 = arith.constant 0 : index
    %1 = vector.load %arg2[%c0_1, %c0_2] : memref<22x1xf32, #tpu.memory_space<vmem>>, vector<22x1xf32>
    %2 = arith.truncf %0 : vector<24x16xf32> to vector<24x16xbf16>
    %3 = vector.extract_strided_slice %2 {offsets = [0, 0], sizes = [22, 16], strides = [1, 1]} : vector<24x16xbf16> to vector<22x16xbf16>
    %c0_3 = arith.constant 0 : index
    %c0_4 = arith.constant 0 : index
    %c0_5 = arith.constant 0 : index
    %4 = vector.load %arg4[%c0_3, %c0_4, %c0_5] : memref<3x16x64xbf16, #tpu.memory_space<vmem>>, vector<1x16x64xbf16>
    %5 = vector.shape_cast %4 : vector<1x16x64xbf16> to vector<16x64xbf16>
    %cst = arith.constant dense<0.000000e+00> : vector<22x64xf32>
    %6 = tpu.matmul %3, %5, %cst {dimension_numbers = #tpu.dot_dimension_numbers<[1], [0], [0], [1], [0, 0, 1, 1], [], []>} : vector<22x16xbf16>, vector<16x64xbf16>, vector<22x64xf32> -> vector<22x64xf32>
    %7 = vector.extract_strided_slice %2 {offsets = [1, 0], sizes = [22, 16], strides = [1, 1]} : vector<24x16xbf16> to vector<22x16xbf16>
    %c1 = arith.constant 1 : index
    %c0_6 = arith.constant 0 : index
    %c0_7 = arith.constant 0 : index
    %8 = vector.load %arg4[%c1, %c0_6, %c0_7] : memref<3x16x64xbf16, #tpu.memory_space<vmem>>, vector<1x16x64xbf16>
    %9 = vector.shape_cast %8 : vector<1x16x64xbf16> to vector<16x64xbf16>
    %cst_8 = arith.constant dense<0.000000e+00> : vector<22x64xf32>
    %10 = tpu.matmul %7, %9, %cst_8 {dimension_numbers = #tpu.dot_dimension_numbers<[1], [0], [0], [1], [0, 0, 1, 1], [], []>} : vector<22x16xbf16>, vector<16x64xbf16>, vector<22x64xf32> -> vector<22x64xf32>
    %11 = arith.addf %6, %10 : vector<22x64xf32>
    %12 = vector.extract_strided_slice %2 {offsets = [2, 0], sizes = [22, 16], strides = [1, 1]} : vector<24x16xbf16> to vector<22x16xbf16>
    %c2 = arith.constant 2 : index
    %c0_9 = arith.constant 0 : index
    %c0_10 = arith.constant 0 : index
    %13 = vector.load %arg4[%c2, %c0_9, %c0_10] : memref<3x16x64xbf16, #tpu.memory_space<vmem>>, vector<1x16x64xbf16>
    %14 = vector.shape_cast %13 : vector<1x16x64xbf16> to vector<16x64xbf16>
    %cst_11 = arith.constant dense<0.000000e+00> : vector<22x64xf32>
    %15 = tpu.matmul %12, %14, %cst_11 {dimension_numbers = #tpu.dot_dimension_numbers<[1], [0], [0], [1], [0, 0, 1, 1], [], []>} : vector<22x16xbf16>, vector<16x64xbf16>, vector<22x64xf32> -> vector<22x64xf32>
    %16 = arith.addf %11, %15 : vector<22x64xf32>
    %c0_12 = arith.constant 0 : index
    %c0_13 = arith.constant 0 : index
    %17 = vector.load %arg5[%c0_12, %c0_13] : memref<1x64xf32, #tpu.memory_space<vmem>>, vector<1x64xf32>
    %18 = vector.broadcast %17 : vector<1x64xf32> to vector<22x64xf32>
    %19 = arith.mulf %16, %18 : vector<22x64xf32>
    %c0_14 = arith.constant 0 : index
    %c0_15 = arith.constant 0 : index
    %20 = vector.load %arg6[%c0_14, %c0_15] : memref<1x64xf32, #tpu.memory_space<vmem>>, vector<1x64xf32>
    %21 = vector.broadcast %20 : vector<1x64xf32> to vector<22x64xf32>
    %22 = arith.addf %19, %21 : vector<22x64xf32>
    %cst_16 = arith.constant 0.000000e+00 : f32
    %23 = vector.broadcast %cst_16 : f32 to vector<22x64xf32>
    %24 = arith.cmpf ogt, %22, %23 : vector<22x64xf32>
    %cst_17 = arith.constant 2.000000e-01 : f32
    %25 = vector.broadcast %cst_17 : f32 to vector<22x64xf32>
    %26 = arith.mulf %25, %22 : vector<22x64xf32>
    %27 = arith.select %24, %22, %26 : vector<22x64xi1>, vector<22x64xf32>
    %28 = vector.broadcast %1 : vector<22x1xf32> to vector<22x64xf32>
    %29 = arith.mulf %27, %28 : vector<22x64xf32>
    %c0_18 = arith.constant 0 : index
    %c0_19 = arith.constant 0 : index
    %30 = vector.load %arg3[%c0_18, %c0_19] : memref<20x1xf32, #tpu.memory_space<vmem>>, vector<20x1xf32>
    %31 = arith.truncf %29 : vector<22x64xf32> to vector<22x64xbf16>
    %32 = vector.extract_strided_slice %31 {offsets = [0, 0], sizes = [20, 64], strides = [1, 1]} : vector<22x64xbf16> to vector<20x64xbf16>
    %c0_20 = arith.constant 0 : index
    %c0_21 = arith.constant 0 : index
    %c0_22 = arith.constant 0 : index
    %33 = vector.load %arg7[%c0_20, %c0_21, %c0_22] : memref<3x64x256xbf16, #tpu.memory_space<vmem>>, vector<1x64x256xbf16>
    %34 = vector.shape_cast %33 : vector<1x64x256xbf16> to vector<64x256xbf16>
    %cst_23 = arith.constant dense<0.000000e+00> : vector<20x256xf32>
    %35 = tpu.matmul %32, %34, %cst_23 {dimension_numbers = #tpu.dot_dimension_numbers<[1], [0], [0], [1], [0, 0, 1, 1], [], []>} : vector<20x64xbf16>, vector<64x256xbf16>, vector<20x256xf32> -> vector<20x256xf32>
    %36 = vector.extract_strided_slice %31 {offsets = [1, 0], sizes = [20, 64], strides = [1, 1]} : vector<22x64xbf16> to vector<20x64xbf16>
    %c1_24 = arith.constant 1 : index
    %c0_25 = arith.constant 0 : index
    %c0_26 = arith.constant 0 : index
    %37 = vector.load %arg7[%c1_24, %c0_25, %c0_26] : memref<3x64x256xbf16, #tpu.memory_space<vmem>>, vector<1x64x256xbf16>
    %38 = vector.shape_cast %37 : vector<1x64x256xbf16> to vector<64x256xbf16>
    %cst_27 = arith.constant dense<0.000000e+00> : vector<20x256xf32>
    %39 = tpu.matmul %36, %38, %cst_27 {dimension_numbers = #tpu.dot_dimension_numbers<[1], [0], [0], [1], [0, 0, 1, 1], [], []>} : vector<20x64xbf16>, vector<64x256xbf16>, vector<20x256xf32> -> vector<20x256xf32>
    %40 = arith.addf %35, %39 : vector<20x256xf32>
    %41 = vector.extract_strided_slice %31 {offsets = [2, 0], sizes = [20, 64], strides = [1, 1]} : vector<22x64xbf16> to vector<20x64xbf16>
    %c2_28 = arith.constant 2 : index
    %c0_29 = arith.constant 0 : index
    %c0_30 = arith.constant 0 : index
    %42 = vector.load %arg7[%c2_28, %c0_29, %c0_30] : memref<3x64x256xbf16, #tpu.memory_space<vmem>>, vector<1x64x256xbf16>
    %43 = vector.shape_cast %42 : vector<1x64x256xbf16> to vector<64x256xbf16>
    %cst_31 = arith.constant dense<0.000000e+00> : vector<20x256xf32>
    %44 = tpu.matmul %41, %43, %cst_31 {dimension_numbers = #tpu.dot_dimension_numbers<[1], [0], [0], [1], [0, 0, 1, 1], [], []>} : vector<20x64xbf16>, vector<64x256xbf16>, vector<20x256xf32> -> vector<20x256xf32>
    %45 = arith.addf %40, %44 : vector<20x256xf32>
    %c0_32 = arith.constant 0 : index
    %c0_33 = arith.constant 0 : index
    %46 = vector.load %arg8[%c0_32, %c0_33] : memref<1x256xf32, #tpu.memory_space<vmem>>, vector<1x256xf32>
    %47 = vector.broadcast %46 : vector<1x256xf32> to vector<20x256xf32>
    %48 = arith.mulf %45, %47 : vector<20x256xf32>
    %c0_34 = arith.constant 0 : index
    %c0_35 = arith.constant 0 : index
    %49 = vector.load %arg9[%c0_34, %c0_35] : memref<1x256xf32, #tpu.memory_space<vmem>>, vector<1x256xf32>
    %50 = vector.broadcast %49 : vector<1x256xf32> to vector<20x256xf32>
    %51 = arith.addf %48, %50 : vector<20x256xf32>
    %52 = vector.broadcast %30 : vector<20x1xf32> to vector<20x256xf32>
    %53 = arith.mulf %51, %52 : vector<20x256xf32>
    %54 = arith.truncf %53 : vector<20x256xf32> to vector<20x256xbf16>
    %55 = vector.extract_strided_slice %54 {offsets = [0, 0], sizes = [18, 256], strides = [1, 1]} : vector<20x256xbf16> to vector<18x256xbf16>
    %c0_36 = arith.constant 0 : index
    %c0_37 = arith.constant 0 : index
    %c0_38 = arith.constant 0 : index
    %56 = vector.load %arg10[%c0_36, %c0_37, %c0_38] : memref<3x256x1024xbf16, #tpu.memory_space<vmem>>, vector<1x256x1024xbf16>
    %57 = vector.shape_cast %56 : vector<1x256x1024xbf16> to vector<256x1024xbf16>
    %cst_39 = arith.constant dense<0.000000e+00> : vector<18x1024xf32>
    %58 = tpu.matmul %55, %57, %cst_39 {dimension_numbers = #tpu.dot_dimension_numbers<[1], [0], [0], [1], [0, 0, 1, 1], [], []>} : vector<18x256xbf16>, vector<256x1024xbf16>, vector<18x1024xf32> -> vector<18x1024xf32>
    %59 = vector.extract_strided_slice %54 {offsets = [1, 0], sizes = [18, 256], strides = [1, 1]} : vector<20x256xbf16> to vector<18x256xbf16>
    %c1_40 = arith.constant 1 : index
    %c0_41 = arith.constant 0 : index
    %c0_42 = arith.constant 0 : index
    %60 = vector.load %arg10[%c1_40, %c0_41, %c0_42] : memref<3x256x1024xbf16, #tpu.memory_space<vmem>>, vector<1x256x1024xbf16>
    %61 = vector.shape_cast %60 : vector<1x256x1024xbf16> to vector<256x1024xbf16>
    %cst_43 = arith.constant dense<0.000000e+00> : vector<18x1024xf32>
    %62 = tpu.matmul %59, %61, %cst_43 {dimension_numbers = #tpu.dot_dimension_numbers<[1], [0], [0], [1], [0, 0, 1, 1], [], []>} : vector<18x256xbf16>, vector<256x1024xbf16>, vector<18x1024xf32> -> vector<18x1024xf32>
    %63 = arith.addf %58, %62 : vector<18x1024xf32>
    %64 = vector.extract_strided_slice %54 {offsets = [2, 0], sizes = [18, 256], strides = [1, 1]} : vector<20x256xbf16> to vector<18x256xbf16>
    %c2_44 = arith.constant 2 : index
    %c0_45 = arith.constant 0 : index
    %c0_46 = arith.constant 0 : index
    %65 = vector.load %arg10[%c2_44, %c0_45, %c0_46] : memref<3x256x1024xbf16, #tpu.memory_space<vmem>>, vector<1x256x1024xbf16>
    %66 = vector.shape_cast %65 : vector<1x256x1024xbf16> to vector<256x1024xbf16>
    %cst_47 = arith.constant dense<0.000000e+00> : vector<18x1024xf32>
    %67 = tpu.matmul %64, %66, %cst_47 {dimension_numbers = #tpu.dot_dimension_numbers<[1], [0], [0], [1], [0, 0, 1, 1], [], []>} : vector<18x256xbf16>, vector<256x1024xbf16>, vector<18x1024xf32> -> vector<18x1024xf32>
    %68 = arith.addf %63, %67 : vector<18x1024xf32>
    %c0_48 = arith.constant 0 : index
    %c0_49 = arith.constant 0 : index
    %69 = vector.load %arg11[%c0_48, %c0_49] : memref<1x1024xf32, #tpu.memory_space<vmem>>, vector<1x1024xf32>
    %70 = vector.broadcast %69 : vector<1x1024xf32> to vector<18x1024xf32>
    %71 = arith.mulf %68, %70 : vector<18x1024xf32>
    %c0_50 = arith.constant 0 : index
    %c0_51 = arith.constant 0 : index
    %72 = vector.load %arg12[%c0_50, %c0_51] : memref<1x1024xf32, #tpu.memory_space<vmem>>, vector<1x1024xf32>
    %73 = vector.broadcast %72 : vector<1x1024xf32> to vector<18x1024xf32>
    %74 = arith.addf %71, %73 : vector<18x1024xf32>
    %cst_52 = arith.constant 0.000000e+00 : f32
    %75 = vector.broadcast %cst_52 : f32 to vector<18x1024xf32>
    %76 = arith.cmpf ogt, %74, %75 : vector<18x1024xf32>
    %cst_53 = arith.constant 2.000000e-01 : f32
    %77 = vector.broadcast %cst_53 : f32 to vector<18x1024xf32>
    %78 = arith.mulf %77, %74 : vector<18x1024xf32>
    %79 = arith.select %76, %74, %78 : vector<18x1024xi1>, vector<18x1024xf32>
    %80 = vector.extract_strided_slice %79 {offsets = [0, 0], sizes = [16, 1024], strides = [1, 1]} : vector<18x1024xf32> to vector<16x1024xf32>
    %c0_54 = arith.constant 0 : index
    %c0_55 = arith.constant 0 : index
    %81 = vector.load %arg13[%c0_54, %c0_55] : memref<16x1024xf32, #tpu.memory_space<vmem>>, vector<16x1024xf32>
    tpu.vector_store %arg13[%c0_54, %c0_55], %80 {strides = array<i32>} : memref<16x1024xf32, #tpu.memory_space<vmem>>, vector<16x1024xf32>,
    return
  }
  func.func @transform_0(%arg0: i32) -> (i32, i32) {
    %c0_i32 = arith.constant 0 : i32
    %c0_i32_0 = arith.constant 0 : i32
    return %arg0, %c0_i32 : i32, i32
  }
  func.func @transform_1(%arg0: i32) -> (i32, i32) {
    %c0_i32 = arith.constant 0 : i32
    %c0_i32_0 = arith.constant 0 : i32
    %c0_i32_1 = arith.constant 0 : i32
    return %c0_i32, %c0_i32_0 : i32, i32
  }
  func.func @transform_2(%arg0: i32) -> (i32, i32) {
    %c0_i32 = arith.constant 0 : i32
    %c0_i32_0 = arith.constant 0 : i32
    %c0_i32_1 = arith.constant 0 : i32
    return %c0_i32, %c0_i32_0 : i32, i32
  }
  func.func @transform_3(%arg0: i32) -> (i32, i32, i32) {
    %c0_i32 = arith.constant 0 : i32
    %c0_i32_0 = arith.constant 0 : i32
    %c0_i32_1 = arith.constant 0 : i32
    %c0_i32_2 = arith.constant 0 : i32
    return %c0_i32, %c0_i32_0, %c0_i32_1 : i32, i32, i32
  }
  func.func @transform_4(%arg0: i32) -> (i32, i32) {
    %c0_i32 = arith.constant 0 : i32
    %c0_i32_0 = arith.constant 0 : i32
    %c0_i32_1 = arith.constant 0 : i32
    return %c0_i32, %c0_i32_0 : i32, i32
  }
  func.func @transform_5(%arg0: i32) -> (i32, i32) {
    %c0_i32 = arith.constant 0 : i32
    %c0_i32_0 = arith.constant 0 : i32
    %c0_i32_1 = arith.constant 0 : i32
    return %c0_i32, %c0_i32_0 : i32, i32
  }
  func.func @transform_6(%arg0: i32) -> (i32, i32, i32) {
    %c0_i32 = arith.constant 0 : i32
    %c0_i32_0 = arith.constant 0 : i32
    %c0_i32_1 = arith.constant 0 : i32
    %c0_i32_2 = arith.constant 0 : i32
    return %c0_i32, %c0_i32_0, %c0_i32_1 : i32, i32, i32
  }
  func.func @transform_7(%arg0: i32) -> (i32, i32) {
    %c0_i32 = arith.constant 0 : i32
    %c0_i32_0 = arith.constant 0 : i32
    %c0_i32_1 = arith.constant 0 : i32
    return %c0_i32, %c0_i32_0 : i32, i32
  }
  func.func @transform_8(%arg0: i32) -> (i32, i32) {
    %c0_i32 = arith.constant 0 : i32
    %c0_i32_0 = arith.constant 0 : i32
    %c0_i32_1 = arith.constant 0 : i32
    return %c0_i32, %c0_i32_0 : i32, i32
  }
  func.func @transform_9(%arg0: i32) -> (i32, i32, i32) {
    %c0_i32 = arith.constant 0 : i32
    %c0_i32_0 = arith.constant 0 : i32
    %c0_i32_1 = arith.constant 0 : i32
    %c0_i32_2 = arith.constant 0 : i32
    return %c0_i32, %c0_i32_0, %c0_i32_1 : i32, i32, i32
  }
  func.func @transform_10(%arg0: i32) -> (i32, i32) {
    %c0_i32 = arith.constant 0 : i32
    %c0_i32_0 = arith.constant 0 : i32
    %c0_i32_1 = arith.constant 0 : i32
    return %c0_i32, %c0_i32_0 : i32, i32
  }
  func.func @transform_11(%arg0: i32) -> (i32, i32) {
    %c0_i32 = arith.constant 0 : i32
    %c0_i32_0 = arith.constant 0 : i32
    %c0_i32_1 = arith.constant 0 : i32
    return %c0_i32, %c0_i32_0 : i32, i32
  }
  func.func @transform_12(%arg0: i32) -> (i32, i32) {
    %c0_i32 = arith.constant 0 : i32
    %c0_i32_0 = arith.constant 0 : i32
    return %arg0, %c0_i32 : i32, i32
  }
}

module attributes {stable_mosaic.version = 11 : i64} {
  func.func @specadapter_kernel(%arg0: i32, %arg1: memref<24x16xf32, #tpu.memory_space<vmem>>, %arg2: memref<22x1xf32, #tpu.memory_space<vmem>>, %arg3: memref<20x1xf32, #tpu.memory_space<vmem>>, %arg4: memref<3x16x64xbf16, #tpu.memory_space<vmem>>, %arg5: memref<1x64xf32, #tpu.memory_space<vmem>>, %arg6: memref<1x64xf32, #tpu.memory_space<vmem>>, %arg7: memref<3x64x256xbf16, #tpu.memory_space<vmem>>, %arg8: memref<1x256xf32, #tpu.memory_space<vmem>>, %arg9: memref<1x256xf32, #tpu.memory_space<vmem>>, %arg10: memref<3x256x1024xbf16, #tpu.memory_space<vmem>>, %arg11: memref<1x1024xf32, #tpu.memory_space<vmem>>, %arg12: memref<1x1024xf32, #tpu.memory_space<vmem>>, %arg13: memref<16x1024xf32, #tpu.memory_space<vmem>>) attributes {dimension_semantics = [#tpu.dimension_semantics<parallel>], iteration_bounds = array<i64: 2>, scalar_prefetch = 0 : i64, scratch_operands = 0 : i64, tpu.core_type = #tpu.core_type<tc>, window_params = [{transform_indices = @transform_0, window_bounds = array<i64: 24, 16>}, {pipeline_mode = #tpu.pipeline_mode<synchronous>, transform_indices = @transform_1, window_bounds = array<i64: 22, 1>}, {pipeline_mode = #tpu.pipeline_mode<synchronous>, transform_indices = @transform_2, window_bounds = array<i64: 20, 1>}, {pipeline_mode = #tpu.pipeline_mode<synchronous>, transform_indices = @transform_3, window_bounds = array<i64: 3, 16, 64>}, {pipeline_mode = #tpu.pipeline_mode<synchronous>, transform_indices = @transform_4, window_bounds = array<i64: 1, 64>}, {pipeline_mode = #tpu.pipeline_mode<synchronous>, transform_indices = @transform_5, window_bounds = array<i64: 1, 64>}, {pipeline_mode = #tpu.pipeline_mode<synchronous>, transform_indices = @transform_6, window_bounds = array<i64: 3, 64, 256>}, {pipeline_mode = #tpu.pipeline_mode<synchronous>, transform_indices = @transform_7, window_bounds = array<i64: 1, 256>}, {pipeline_mode = #tpu.pipeline_mode<synchronous>, transform_indices = @transform_8, window_bounds = array<i64: 1, 256>}, {pipeline_mode = #tpu.pipeline_mode<synchronous>, transform_indices = @transform_9, window_bounds = array<i64: 3, 256, 1024>}, {pipeline_mode = #tpu.pipeline_mode<synchronous>, transform_indices = @transform_10, window_bounds = array<i64: 1, 1024>}, {pipeline_mode = #tpu.pipeline_mode<synchronous>, transform_indices = @transform_11, window_bounds = array<i64: 1, 1024>}, {transform_indices = @transform_12, window_bounds = array<i64: 16, 1024>}]} {
    %c0 = arith.constant 0 : index
    %c0_0 = arith.constant 0 : index
    %0 = vector.load %arg1[%c0, %c0_0] : memref<24x16xf32, #tpu.memory_space<vmem>>, vector<24x16xf32>
    %c0_1 = arith.constant 0 : index
    %c0_2 = arith.constant 0 : index
    %1 = vector.load %arg2[%c0_1, %c0_2] : memref<22x1xf32, #tpu.memory_space<vmem>>, vector<22x1xf32>
    %2 = arith.truncf %0 : vector<24x16xf32> to vector<24x16xbf16>
    %3 = vector.extract_strided_slice %2 {offsets = [0, 0], sizes = [22, 16], strides = [1, 1]} : vector<24x16xbf16> to vector<22x16xbf16>
    %c0_3 = arith.constant 0 : index
    %c0_4 = arith.constant 0 : index
    %c0_5 = arith.constant 0 : index
    %4 = vector.load %arg4[%c0_3, %c0_4, %c0_5] : memref<3x16x64xbf16, #tpu.memory_space<vmem>>, vector<1x16x64xbf16>
    %5 = vector.shape_cast %4 : vector<1x16x64xbf16> to vector<16x64xbf16>
    %cst = arith.constant dense<0.000000e+00> : vector<22x64xf32>
    %6 = tpu.matmul %3, %5, %cst {dimension_numbers = #tpu.dot_dimension_numbers<[1], [0], [0], [1], [0, 0, 1, 1], [], []>} : vector<22x16xbf16>, vector<16x64xbf16>, vector<22x64xf32> -> vector<22x64xf32>
    %7 = vector.extract_strided_slice %2 {offsets = [1, 0], sizes = [22, 16], strides = [1, 1]} : vector<24x16xbf16> to vector<22x16xbf16>
    %c1 = arith.constant 1 : index
    %c0_6 = arith.constant 0 : index
    %c0_7 = arith.constant 0 : index
    %8 = vector.load %arg4[%c1, %c0_6, %c0_7] : memref<3x16x64xbf16, #tpu.memory_space<vmem>>, vector<1x16x64xbf16>
    %9 = vector.shape_cast %8 : vector<1x16x64xbf16> to vector<16x64xbf16>
    %cst_8 = arith.constant dense<0.000000e+00> : vector<22x64xf32>
    %10 = tpu.matmul %7, %9, %cst_8 {dimension_numbers = #tpu.dot_dimension_numbers<[1], [0], [0], [1], [0, 0, 1, 1], [], []>} : vector<22x16xbf16>, vector<16x64xbf16>, vector<22x64xf32> -> vector<22x64xf32>
    %11 = arith.addf %6, %10 : vector<22x64xf32>
    %12 = vector.extract_strided_slice %2 {offsets = [2, 0], sizes = [22, 16], strides = [1, 1]} : vector<24x16xbf16> to vector<22x16xbf16>
    %c2 = arith.constant 2 : index
    %c0_9 = arith.constant 0 : index
    %c0_10 = arith.constant 0 : index
    %13 = vector.load %arg4[%c2, %c0_9, %c0_10] : memref<3x16x64xbf16, #tpu.memory_space<vmem>>, vector<1x16x64xbf16>
    %14 = vector.shape_cast %13 : vector<1x16x64xbf16> to vector<16x64xbf16>
    %cst_11 = arith.constant dense<0.000000e+00> : vector<22x64xf32>
    %15 = tpu.matmul %12, %14, %cst_11 {dimension_numbers = #tpu.dot_dimension_numbers<[1], [0], [0], [1], [0, 0, 1, 1], [], []>} : vector<22x16xbf16>, vector<16x64xbf16>, vector<22x64xf32> -> vector<22x64xf32>
    %16 = arith.addf %11, %15 : vector<22x64xf32>
    %c0_12 = arith.constant 0 : index
    %c0_13 = arith.constant 0 : index
    %17 = vector.load %arg5[%c0_12, %c0_13] : memref<1x64xf32, #tpu.memory_space<vmem>>, vector<1x64xf32>
    %18 = vector.broadcast %17 : vector<1x64xf32> to vector<22x64xf32>
    %19 = arith.mulf %16, %18 : vector<22x64xf32>
    %c0_14 = arith.constant 0 : index
    %c0_15 = arith.constant 0 : index
    %20 = vector.load %arg6[%c0_14, %c0_15] : memref<1x64xf32, #tpu.memory_space<vmem>>, vector<1x64xf32>
    %21 = vector.broadcast %20 : vector<1x64xf32> to vector<22x64xf32>
    %22 = arith.addf %19, %21 : vector<22x64xf32>
    %cst_16 = arith.constant 0.000000e+00 : f32
    %23 = vector.broadcast %cst_16 : f32 to vector<22x64xf32>
    %24 = arith.cmpf ogt, %22, %23 : vector<22x64xf32>
    %cst_17 = arith.constant 2.000000e-01 : f32
    %25 = vector.broadcast %cst_17 : f32 to vector<22x64xf32>
    %26 = arith.mulf %25, %22 : vector<22x64xf32>
    %27 = arith.select %24, %22, %26 : vector<22x64xi1>, vector<22x64xf32>
    %28 = vector.broadcast %1 : vector<22x1xf32> to vector<22x64xf32>
    %29 = arith.mulf %27, %28 : vector<22x64xf32>
    %c0_18 = arith.constant 0 : index
    %c0_19 = arith.constant 0 : index
    %30 = vector.load %arg3[%c0_18, %c0_19] : memref<20x1xf32, #tpu.memory_space<vmem>>, vector<20x1xf32>
    %31 = arith.truncf %29 : vector<22x64xf32> to vector<22x64xbf16>
    %32 = vector.extract_strided_slice %31 {offsets = [0, 0], sizes = [20, 64], strides = [1, 1]} : vector<22x64xbf16> to vector<20x64xbf16>
    %c0_20 = arith.constant 0 : index
    %c0_21 = arith.constant 0 : index
    %c0_22 = arith.constant 0 : index
    %33 = vector.load %arg7[%c0_20, %c0_21, %c0_22] : memref<3x64x256xbf16, #tpu.memory_space<vmem>>, vector<1x64x256xbf16>
    %34 = vector.shape_cast %33 : vector<1x64x256xbf16> to vector<64x256xbf16>
    %cst_23 = arith.constant dense<0.000000e+00> : vector<20x256xf32>
    %35 = tpu.matmul %32, %34, %cst_23 {dimension_numbers = #tpu.dot_dimension_numbers<[1], [0], [0], [1], [0, 0, 1, 1], [], []>} : vector<20x64xbf16>, vector<64x256xbf16>, vector<20x256xf32> -> vector<20x256xf32>
    %36 = vector.extract_strided_slice %31 {offsets = [1, 0], sizes = [20, 64], strides = [1, 1]} : vector<22x64xbf16> to vector<20x64xbf16>
    %c1_24 = arith.constant 1 : index
    %c0_25 = arith.constant 0 : index
    %c0_26 = arith.constant 0 : index
    %37 = vector.load %arg7[%c1_24, %c0_25, %c0_26] : memref<3x64x256xbf16, #tpu.memory_space<vmem>>, vector<1x64x256xbf16>
    %38 = vector.shape_cast %37 : vector<1x64x256xbf16> to vector<64x256xbf16>
    %cst_27 = arith.constant dense<0.000000e+00> : vector<20x256xf32>
    %39 = tpu.matmul %36, %38, %cst_27 {dimension_numbers = #tpu.dot_dimension_numbers<[1], [0], [0], [1], [0, 0, 1, 1], [], []>} : vector<20x64xbf16>, vector<64x256xbf16>, vector<20x256xf32> -> vector<20x256xf32>
    %40 = arith.addf %35, %39 : vector<20x256xf32>
    %41 = vector.extract_strided_slice %31 {offsets = [2, 0], sizes = [20, 64], strides = [1, 1]} : vector<22x64xbf16> to vector<20x64xbf16>
    %c2_28 = arith.constant 2 : index
    %c0_29 = arith.constant 0 : index
    %c0_30 = arith.constant 0 : index
    %42 = vector.load %arg7[%c2_28, %c0_29, %c0_30] : memref<3x64x256xbf16, #tpu.memory_space<vmem>>, vector<1x64x256xbf16>
    %43 = vector.shape_cast %42 : vector<1x64x256xbf16> to vector<64x256xbf16>
    %cst_31 = arith.constant dense<0.000000e+00> : vector<20x256xf32>
    %44 = tpu.matmul %41, %43, %cst_31 {dimension_numbers = #tpu.dot_dimension_numbers<[1], [0], [0], [1], [0, 0, 1, 1], [], []>} : vector<20x64xbf16>, vector<64x256xbf16>, vector<20x256xf32> -> vector<20x256xf32>
    %45 = arith.addf %40, %44 : vector<20x256xf32>
    %c0_32 = arith.constant 0 : index
    %c0_33 = arith.constant 0 : index
    %46 = vector.load %arg8[%c0_32, %c0_33] : memref<1x256xf32, #tpu.memory_space<vmem>>, vector<1x256xf32>
    %47 = vector.broadcast %46 : vector<1x256xf32> to vector<20x256xf32>
    %48 = arith.mulf %45, %47 : vector<20x256xf32>
    %c0_34 = arith.constant 0 : index
    %c0_35 = arith.constant 0 : index
    %49 = vector.load %arg9[%c0_34, %c0_35] : memref<1x256xf32, #tpu.memory_space<vmem>>, vector<1x256xf32>
    %50 = vector.broadcast %49 : vector<1x256xf32> to vector<20x256xf32>
    %51 = arith.addf %48, %50 : vector<20x256xf32>
    %52 = vector.broadcast %30 : vector<20x1xf32> to vector<20x256xf32>
    %53 = arith.mulf %51, %52 : vector<20x256xf32>
    %54 = arith.truncf %53 : vector<20x256xf32> to vector<20x256xbf16>
    %55 = vector.extract_strided_slice %54 {offsets = [0, 0], sizes = [18, 256], strides = [1, 1]} : vector<20x256xbf16> to vector<18x256xbf16>
    %c0_36 = arith.constant 0 : index
    %c0_37 = arith.constant 0 : index
    %c0_38 = arith.constant 0 : index
    %56 = vector.load %arg10[%c0_36, %c0_37, %c0_38] : memref<3x256x1024xbf16, #tpu.memory_space<vmem>>, vector<1x256x1024xbf16>
    %57 = vector.shape_cast %56 : vector<1x256x1024xbf16> to vector<256x1024xbf16>
    %cst_39 = arith.constant dense<0.000000e+00> : vector<18x1024xf32>
    %58 = tpu.matmul %55, %57, %cst_39 {dimension_numbers = #tpu.dot_dimension_numbers<[1], [0], [0], [1], [0, 0, 1, 1], [], []>} : vector<18x256xbf16>, vector<256x1024xbf16>, vector<18x1024xf32> -> vector<18x1024xf32>
    %59 = vector.extract_strided_slice %54 {offsets = [1, 0], sizes = [18, 256], strides = [1, 1]} : vector<20x256xbf16> to vector<18x256xbf16>
    %c1_40 = arith.constant 1 : index
    %c0_41 = arith.constant 0 : index
    %c0_42 = arith.constant 0 : index
    %60 = vector.load %arg10[%c1_40, %c0_41, %c0_42] : memref<3x256x1024xbf16, #tpu.memory_space<vmem>>, vector<1x256x1024xbf16>
    %61 = vector.shape_cast %60 : vector<1x256x1024xbf16> to vector<256x1024xbf16>
    %cst_43 = arith.constant dense<0.000000e+00> : vector<18x1024xf32>
    %62 = tpu.matmul %59, %61, %cst_43 {dimension_numbers = #tpu.dot_dimension_numbers<[1], [0], [0], [1], [0, 0, 1, 1], [], []>} : vector<18x256xbf16>, vector<256x1024xbf16>, vector<18x1024xf32> -> vector<18x1024xf32>
    %63 = arith.addf %58, %62 : vector<18x1024xf32>
    %64 = vector.extract_strided_slice %54 {offsets = [2, 0], sizes = [18, 256], strides = [1, 1]} : vector<20x256xbf16> to vector<18x256xbf16>
    %c2_44 = arith.constant 2 : index
    %c0_45 = arith.constant 0 : index
    %c0_46 = arith.constant 0 : index
    %65 = vector.load %arg10[%c2_44, %c0_45, %c0_46] : memref<3x256x1024xbf16, #tpu.memory_space<vmem>>, vector<1x256x1024xbf16>
    %66 = vector.shape_cast %65 : vector<1x256x1024xbf16> to vector<256x1024xbf16>
    %cst_47 = arith.constant dense<0.000000e+00> : vector<18x1024xf32>
    %67 = tpu.matmul %64, %66, %cst_47 {dimension_numbers = #tpu.dot_dimension_numbers<[1], [0], [0], [1], [0, 0, 1, 1], [], []>} : vector<18x256xbf16>, vector<256x1024xbf16>, vector<18x1024xf32> -> vector<18x1024xf32>
    %68 = arith.addf %63, %67 : vector<18x1024xf32>
    %c0_48 = arith.constant 0 : index
    %c0_49 = arith.constant 0 : index
    %69 = vector.load %arg11[%c0_48, %c0_49] : memref<1x1024xf32, #tpu.memory_space<vmem>>, vector<1x1024xf32>
    %70 = vector.broadcast %69 : vector<1x1024xf32> to vector<18x1024xf32>
    %71 = arith.mulf %68, %70 : vector<18x1024xf32>
    %c0_50 = arith.constant 0 : index
    %c0_51 = arith.constant 0 : index
    %72 = vector.load %arg12[%c0_50, %c0_51] : memref<1x1024xf32, #tpu.memory_space<vmem>>, vector<1x1024xf32>
    %73 = vector.broadcast %72 : vector<1x1024xf32> to vector<18x1024xf32>
    %74 = arith.addf %71, %73 : vector<18x1024xf32>
    %cst_52 = arith.constant 0.000000e+00 : f32
    %75 = vector.broadcast %cst_52 : f32 to vector<18x1024xf32>
    %76 = arith.cmpf ogt, %74, %75 : vector<18x1024xf32>
    %cst_53 = arith.constant 2.000000e-01 : f32
    %77 = vector.broadcast %cst_53 : f32 to vector<18x1024xf32>
    %78 = arith.mulf %77, %74 : vector<18x1024xf32>
    %79 = arith.select %76, %74, %78 : vector<18x1024xi1>, vector<18x1024xf32>
    %80 = vector.extract_strided_slice %79 {offsets = [0, 0], sizes = [16, 1024], strides = [1, 1]} : vector<18x1024xf32> to vector<16x1024xf32>
    %c0_54 = arith.constant 0 : index
    %c0_55 = arith.constant 0 : index
    %81 = vector.load %arg13[%c0_54, %c0_55] : memref<16x1024xf32, #tpu.memory_space<vmem>>, vector<16x1024xf32>
    tpu.vector_store %arg13[%c0_54, %c0_55], %80 {strides = array<i32>} : memref<16x1024xf32, #tpu.memory_space<vmem>>, vector<16x1024xf32>,
    return
  }
  func.func @transform_0(%arg0: i32) -> (i32, i32) {
    %c0_i32 = arith.constant 0 : i32
    %c0_i32_0 = arith.constant 0 : i32
    return %arg0, %c0_i32 : i32, i32
  }
  func.func @transform_1(%arg0: i32) -> (i32, i32) {
    %c0_i32 = arith.constant 0 : i32
    %c0_i32_0 = arith.constant 0 : i32
    %c0_i32_1 = arith.constant 0 : i32
    return %c0_i32, %c0_i32_0 : i32, i32
  }
  func.func @transform_2(%arg0: i32) -> (i32, i32) {
    %c0_i32 = arith.constant 0 : i32
    %c0_i32_0 = arith.constant 0 : i32
    %c0_i32_1 = arith.constant 0 : i32
    return %c0_i32, %c0_i32_0 : i32, i32
  }
  func.func @transform_3(%arg0: i32) -> (i32, i32, i32) {
    %c0_i32 = arith.constant 0 : i32
    %c0_i32_0 = arith.constant 0 : i32
    %c0_i32_1 = arith.constant 0 : i32
    %c0_i32_2 = arith.constant 0 : i32
    return %c0_i32, %c0_i32_0, %c0_i32_1 : i32, i32, i32
  }
  func.func @transform_4(%arg0: i32) -> (i32, i32) {
    %c0_i32 = arith.constant 0 : i32
    %c0_i32_0 = arith.constant 0 : i32
    %c0_i32_1 = arith.constant 0 : i32
    return %c0_i32, %c0_i32_0 : i32, i32
  }
  func.func @transform_5(%arg0: i32) -> (i32, i32) {
    %c0_i32 = arith.constant 0 : i32
    %c0_i32_0 = arith.constant 0 : i32
    %c0_i32_1 = arith.constant 0 : i32
    return %c0_i32, %c0_i32_0 : i32, i32
  }
  func.func @transform_6(%arg0: i32) -> (i32, i32, i32) {
    %c0_i32 = arith.constant 0 : i32
    %c0_i32_0 = arith.constant 0 : i32
    %c0_i32_1 = arith.constant 0 : i32
    %c0_i32_2 = arith.constant 0 : i32
    return %c0_i32, %c0_i32_0, %c0_i32_1 : i32, i32, i32
  }
  func.func @transform_7(%arg0: i32) -> (i32, i32) {
    %c0_i32 = arith.constant 0 : i32
    %c0_i32_0 = arith.constant 0 : i32
    %c0_i32_1 = arith.constant 0 : i32
    return %c0_i32, %c0_i32_0 : i32, i32
  }
  func.func @transform_8(%arg0: i32) -> (i32, i32) {
    %c0_i32 = arith.constant 0 : i32
    %c0_i32_0 = arith.constant 0 : i32
    %c0_i32_1 = arith.constant 0 : i32
    return %c0_i32, %c0_i32_0 : i32, i32
  }
  func.func @transform_9(%arg0: i32) -> (i32, i32, i32) {
    %c0_i32 = arith.constant 0 : i32
    %c0_i32_0 = arith.constant 0 : i32
    %c0_i32_1 = arith.constant 0 : i32
    %c0_i32_2 = arith.constant 0 : i32
    return %c0_i32, %c0_i32_0, %c0_i32_1 : i32, i32, i32
  }
  func.func @transform_10(%arg0: i32) -> (i32, i32) {
    %c0_i32 = arith.constant 0 : i32
    %c0_i32_0 = arith.constant 0 : i32
    %c0_i32_1 = arith.constant 0 : i32
    return %c0_i32, %c0_i32_0 : i32, i32
  }
  func.func @transform_11(%arg0: i32) -> (i32, i32) {
    %c0_i32 = arith.constant 0 : i32
    %c0_i32_0 = arith.constant 0 : i32
    %c0_i32_1 = arith.constant 0 : i32
    return %c0_i32, %c0_i32_0 : i32, i32
  }
  func.func @transform_12(%arg0: i32) -> (i32, i32) {
    %c0_i32 = arith.constant 0 : i32
    %c0_i32_0 = arith.constant 0 : i32
    return %arg0, %c0_i32 : i32, i32
  }
}

</mosaic_0001>

<llo_original>
// kernel: tile.53
$region0: #{tile.53}
  #allocation0 [shape = 's32[1]{0}', space=sflag, size = 0x4, scoped, tag = 'scoped memory for tile.53']
  %s0 = inlined_call_operand.vmem [shape: f32[64], index: 0, kind: input, shape index: {}]
  %s1 = inlined_call_operand.vmem [shape: f32[16,64], index: 1, kind: output, shape index: {}]
  // Predicated region
  $region2: #{tile.53} parent=0 // pred_check
    _
  $region3: #{tile.53} parent=0 // pred_check_branch
    %3 = sbr.rel (0) target = $region5
  $region4: #{tile.53} parent=0 // pred_region
    _
  $region5: #{tile.53} parent=0 // pred_fallthru
    _
  %v4 = vld [vmem:[%s0] ss:$0 sm:$0xff]
  %5 = vst [vmem:[%s1] sm:$0xff] %v4
  %s6 = scalar_lea.vmem %s1, 8
  %7 = vst [vmem:[%s6] sm:$0xff] %v4

// kernel: tile.54
$region0: #{tile.54}
  %s0 = inlined_call_operand.vmem [shape: f32[16,64], index: 0, kind: input, shape index: {}]
  %s1 = inlined_call_operand.vmem [shape: f32[1,1024], index: 1, kind: output, shape index: {}]
  $region1: #{tile.54} parent=0
    #allocation0 [shape = 'u8[32768]{0}', space=vmem, size = 0x8000, scoped, tag = 'scoped mem for output reshape']
    %v2 = vld [vmem:[%s0] ss:$2 sm:$0xff]
    %vm3 = vcmask 523264
    %4 = vst.msk [vmem:[#allocation0] ss:$8 sm:$0xf] %vm3, %v2
    %5 = vst.msk [vmem:[#allocation0] ss:$8 sm:$0xf0] %vm3, %v2
    %s6 = scalar_lea.vmem %s0, 1
    %v7 = vld [vmem:[%s6] ss:$2 sm:$0xff]
    %8 = vrot.lane.b32.xlu0 %v7, 64
    %v9 = vpop.permute.xlu0 %8
    %vm10 = vcmask 1048064
    %11 = vst.msk [vmem:[#allocation0] ss:$8 sm:$0xf] %vm10, %v9
    %12 = vst.msk [vmem:[#allocation0] ss:$8 sm:$0xf0] %vm10, %v9
    %s14 = sshllo.u32 0, 1
    %v16 = vld [vmem:[#allocation0] sm:%s14]
    %s17 = sshllo.u32 0, 1
    %18 = vst [vmem:[%s1] sm:%s17] %v16
    %s19 = scalar_lea.vmem [#allocation0], 8
    %v20 = vld [vmem:[%s19] sm:%s14]
    %s21 = sshllo.u32 0, 1
    %s22 = scalar_lea.vmem %s1, 1
    %23 = vst [vmem:[%s22] sm:%s21] %v20
    %s24 = scalar_lea.vmem [#allocation0], 16
    %v25 = vld [vmem:[%s24] sm:%s14]
    %s26 = sshllo.u32 0, 1
    %s27 = smul.addr 1, 2
    %s28 = scalar_lea.vmem %s1, %s27
    %29 = vst [vmem:[%s28] sm:%s26] %v25
    %s30 = scalar_lea.vmem [#allocation0], 24
    %v31 = vld [vmem:[%s30] sm:%s14]
    %s32 = sshllo.u32 0, 1
    %s33 = smul.addr 1, 3
    %s34 = scalar_lea.vmem %s1, %s33
    %35 = vst [vmem:[%s34] sm:%s32] %v31
    %s36 = scalar_lea.vmem [#allocation0], 32
    %v37 = vld [vmem:[%s36] sm:%s14]
    %s38 = sshllo.u32 0, 1
    %s39 = smul.addr 1, 4
    %s40 = scalar_lea.vmem %s1, %s39
    %41 = vst [vmem:[%s40] sm:%s38] %v37
    %s42 = scalar_lea.vmem [#allocation0], 40
    %v43 = vld [vmem:[%s42] sm:%s14]
    %s44 = sshllo.u32 0, 1
    %s45 = smul.addr 1, 5
    %s46 = scalar_lea.vmem %s1, %s45
    %47 = vst [vmem:[%s46] sm:%s44] %v43
    %s48 = scalar_lea.vmem [#allocation0], 48
    %v49 = vld [vmem:[%s48] sm:%s14]
    %s50 = sshllo.u32 0, 1
    %s51 = smul.addr 1, 6
    %s52 = scalar_lea.vmem %s1, %s51
    %53 = vst [vmem:[%s52] sm:%s50] %v49
    %s54 = scalar_lea.vmem [#allocation0], 56
    %v55 = vld [vmem:[%s54] sm:%s14]
    %s56 = sshllo.u32 0, 1
    %s57 = smul.addr 1, 7
    %s58 = scalar_lea.vmem %s1, %s57
    %59 = vst [vmem:[%s58] sm:%s56] %v55

// kernel: tile.43
$region0: #{tile.43}
  #allocation0 [shape = 's32[1]{0}', space=sflag, size = 0x4, scoped, tag = 'scoped memory for tile.43']
  %s0 = inlined_call_operand.vmem [shape: f32[16], index: 0, kind: input, shape index: {}]
  %s1 = inlined_call_operand.vmem [shape: f32[16,16], index: 1, kind: output, shape index: {}]
  // Predicated region
  $region2: #{tile.43} parent=0 // pred_check
    _
  $region3: #{tile.43} parent=0 // pred_check_branch
    %3 = sbr.rel (0) target = $region5
  $region4: #{tile.43} parent=0 // pred_region
    _
  $region5: #{tile.43} parent=0 // pred_fallthru
    _
  %v4 = vld [vmem:[%s0] ss:$0 sm:$0xff]
  %5 = vst [vmem:[%s1] sm:$0xff] %v4
  %s6 = scalar_lea.vmem %s1, 8
  %7 = vst [vmem:[%s6] sm:$0xff] %v4

// kernel: tile.44
$region0: #{tile.44}
  %s0 = inlined_call_operand.vmem [shape: f32[16,16], index: 0, kind: input, shape index: {}]
  %s1 = inlined_call_operand.vmem [shape: f32[1,256], index: 1, kind: output, shape index: {}]
  $region1: #{tile.44} parent=0
    #allocation0 [shape = 'u8[8192]{0}', space=vmem, size = 0x2000, scoped, tag = 'scoped mem for output reshape']
    %s2 = smov 3
    %v3 = vld [vmem:[%s0] ss:$8 sm:%s2]
    %vm4 = vcmask 130048
    %5 = vst.msk [vmem:[#allocation0] ss:$8 sm:$0x3] %vm4, %v3
    %s6 = scalar_lea.vmem %s0, 7
    %s7 = smov 3
    %v8 = vld [vmem:[%s6] ss:$8 sm:%s7]
    %9 = vrot.lane.b32.xlu0 %v8, 112
    %v10 = vpop.permute.xlu0 %9
    %vm11 = vcmask 1048448
    %12 = vst.msk [vmem:[#allocation0] ss:$8 sm:$0x3] %vm11, %v10
    %s13 = scalar_lea.vmem %s0, 6
    %s14 = smov 3
    %v15 = vld [vmem:[%s13] ss:$8 sm:%s14]
    %16 = vrot.lane.b32.xlu0 %v15, 96
    %v17 = vpop.permute.xlu0 %16
    %vm18 = vcmask 917248
    %19 = vst.msk [vmem:[#allocation0] ss:$8 sm:$0x3] %vm18, %v17
    %s20 = scalar_lea.vmem %s0, 5
    %s21 = smov 3
    %v22 = vld [vmem:[%s20] ss:$8 sm:%s21]
    %23 = vrot.lane.b32.xlu0 %v22, 80
    %v24 = vpop.permute.xlu0 %23
    %vm25 = vcmask 786048
    %26 = vst.msk [vmem:[#allocation0] ss:$8 sm:$0x3] %vm25, %v24
    %s27 = scalar_lea.vmem %s0, 4
    %s28 = smov 3
    %v29 = vld [vmem:[%s27] ss:$8 sm:%s28]
    %30 = vrot.lane.b32.xlu0 %v29, 64
    %v31 = vpop.permute.xlu0 %30
    %vm32 = vcmask 654848
    %33 = vst.msk [vmem:[#allocation0] ss:$8 sm:$0x3] %vm32, %v31
    %s34 = scalar_lea.vmem %s0, 3
    %s35 = smov 3
    %v36 = vld [vmem:[%s34] ss:$8 sm:%s35]
    %37 = vrot.lane.b32.xlu0 %v36, 48
    %v38 = vpop.permute.xlu0 %37
    %vm39 = vcmask 523648
    %40 = vst.msk [vmem:[#allocation0] ss:$8 sm:$0x3] %vm39, %v38
    %s41 = scalar_lea.vmem %s0, 2
    %s42 = smov 3
    %v43 = vld [vmem:[%s41] ss:$8 sm:%s42]
    %44 = vrot.lane.b32.xlu0 %v43, 32
    %v45 = vpop.permute.xlu0 %44
    %vm46 = vcmask 392448
    %47 = vst.msk [vmem:[#allocation0] ss:$8 sm:$0x3] %vm46, %v45
    %s48 = scalar_lea.vmem %s0, 1
    %s49 = smov 3
    %v50 = vld [vmem:[%s48] ss:$8 sm:%s49]
    %51 = vrot.lane.b32.xlu0 %v50, 16
    %v52 = vpop.permute.xlu0 %51
    %vm53 = vcmask 261248
    %54 = vst.msk [vmem:[#allocation0] ss:$8 sm:$0x3] %vm53, %v52
    %s56 = sshllo.u32 0, 1
    %v58 = vld [vmem:[#allocation0] sm:%s56]
    %s59 = sshllo.u32 0, 1
    %60 = vst [vmem:[%s1] sm:%s59] %v58
    %s61 = scalar_lea.vmem [#allocation0], 8
    %v62 = vld [vmem:[%s61] sm:%s56]
    %s63 = sshllo.u32 0, 1
    %s64 = scalar_lea.vmem %s1, 1
    %65 = vst [vmem:[%s64] sm:%s63] %v62

// kernel: tile.33
$region0: #{tile.33}
  #allocation0 [shape = 's32[1]{0}', space=sflag, size = 0x4, scoped, tag = 'scoped memory for tile.33']
  %s0 = inlined_call_operand.vmem [shape: f32[4], index: 0, kind: input, shape index: {}]
  %s1 = inlined_call_operand.vmem [shape: f32[16,4], index: 1, kind: output, shape index: {}]
  // Predicated region
  $region2: #{tile.33} parent=0 // pred_check
    _
  $region3: #{tile.33} parent=0 // pred_check_branch
    %3 = sbr.rel (0) target = $region5
  $region4: #{tile.33} parent=0 // pred_region
    _
  $region5: #{tile.33} parent=0 // pred_fallthru
    _
  %v4 = vld [vmem:[%s0] ss:$0 sm:$0xff]
  %5 = vst [vmem:[%s1] sm:$0xff] %v4
  %s6 = scalar_lea.vmem %s1, 8
  %7 = vst [vmem:[%s6] sm:$0xff] %v4

// kernel: tile.34
$region0: #{tile.34}
  %s0 = inlined_call_operand.vmem [shape: f32[16,4], index: 0, kind: input, shape index: {}]
  %s1 = inlined_call_operand.vmem [shape: f32[1,64], index: 1, kind: output, shape index: {}]
  $region1: #{tile.34} parent=0
    #allocation0 [shape = 'u8[4096]{0}', space=vmem, size = 0x1000, scoped, tag = 'scoped mem for output reshape']
    %v2 = vld [vmem:[%s0] sm:$0x1]
    %vm3 = vcmask 31744
    %4 = vst.msk [vmem:[#allocation0] sm:$0x1] %vm3, %v2
    %s5 = scalar_lea.vmem %s0, 15
    %v6 = vld [vmem:[%s5] sm:$0x1]
    %7 = vrot.lane.b32.xlu0 %v6, 60
    %v8 = vpop.permute.xlu0 %7
    %vm9 = vcmask 523744
    %10 = vst.msk [vmem:[#allocation0] sm:$0x1] %vm9, %v8
    %s11 = scalar_lea.vmem %s0, 14
    %v12 = vld [vmem:[%s11] sm:$0x1]
    %13 = vrot.lane.b32.xlu0 %v12, 56
    %v14 = vpop.permute.xlu0 %13
    %vm15 = vcmask 490944
    %16 = vst.msk [vmem:[#allocation0] sm:$0x1] %vm15, %v14
    %s17 = scalar_lea.vmem %s0, 13
    %v18 = vld [vmem:[%s17] sm:$0x1]
    %19 = vrot.lane.b32.xlu0 %v18, 52
    %v20 = vpop.permute.xlu0 %19
    %vm21 = vcmask 458144
    %22 = vst.msk [vmem:[#allocation0] sm:$0x1] %vm21, %v20
    %s23 = scalar_lea.vmem %s0, 12
    %v24 = vld [vmem:[%s23] sm:$0x1]
    %25 = vrot.lane.b32.xlu0 %v24, 48
    %v26 = vpop.permute.xlu0 %25
    %vm27 = vcmask 425344
    %28 = vst.msk [vmem:[#allocation0] sm:$0x1] %vm27, %v26
    %s29 = scalar_lea.vmem %s0, 11
    %v30 = vld [vmem:[%s29] sm:$0x1]
    %31 = vrot.lane.b32.xlu0 %v30, 44
    %v32 = vpop.permute.xlu0 %31
    %vm33 = vcmask 392544
    %34 = vst.msk [vmem:[#allocation0] sm:$0x1] %vm33, %v32
    %s35 = scalar_lea.vmem %s0, 10
    %v36 = vld [vmem:[%s35] sm:$0x1]
    %37 = vrot.lane.b32.xlu0 %v36, 40
    %v38 = vpop.permute.xlu0 %37
    %vm39 = vcmask 359744
    %40 = vst.msk [vmem:[#allocation0] sm:$0x1] %vm39, %v38
    %s41 = scalar_lea.vmem %s0, 9
    %v42 = vld [vmem:[%s41] sm:$0x1]
    %43 = vrot.lane.b32.xlu0 %v42, 36
    %v44 = vpop.permute.xlu0 %43
    %vm45 = vcmask 326944
    %46 = vst.msk [vmem:[#allocation0] sm:$0x1] %vm45, %v44
    %s47 = scalar_lea.vmem %s0, 8
    %v48 = vld [vmem:[%s47] sm:$0x1]
    %49 = vrot.lane.b32.xlu0 %v48, 32
    %v50 = vpop.permute.xlu0 %49
    %vm51 = vcmask 294144
    %52 = vst.msk [vmem:[#allocation0] sm:$0x1] %vm51, %v50
    %s53 = scalar_lea.vmem %s0, 7
    %v54 = vld [vmem:[%s53] sm:$0x1]
    %55 = vrot.lane.b32.xlu0 %v54, 28
    %v56 = vpop.permute.xlu0 %55
    %vm57 = vcmask 261344
    %58 = vst.msk [vmem:[#allocation0] sm:$0x1] %vm57, %v56
    %s59 = scalar_lea.vmem %s0, 6
    %v60 = vld [vmem:[%s59] sm:$0x1]
    %61 = vrot.lane.b32.xlu0 %v60, 24
    %v62 = vpop.permute.xlu0 %61
    %vm63 = vcmask 228544
    %64 = vst.msk [vmem:[#allocation0] sm:$0x1] %vm63, %v62
    %s65 = scalar_lea.vmem %s0, 5
    %v66 = vld [vmem:[%s65] sm:$0x1]
    %67 = vrot.lane.b32.xlu0 %v66, 20
    %v68 = vpop.permute.xlu0 %67
    %vm69 = vcmask 195744
    %70 = vst.msk [vmem:[#allocation0] sm:$0x1] %vm69, %v68
    %s71 = scalar_lea.vmem %s0, 4
    %v72 = vld [vmem:[%s71] sm:$0x1]
    %73 = vrot.lane.b32.xlu0 %v72, 16
    %v74 = vpop.permute.xlu0 %73
    %vm75 = vcmask 162944
    %76 = vst.msk [vmem:[#allocation0] sm:$0x1] %vm75, %v74
    %s77 = scalar_lea.vmem %s0, 3
    %v78 = vld [vmem:[%s77] sm:$0x1]
    %79 = vrot.lane.b32.xlu0 %v78, 12
    %v80 = vpop.permute.xlu0 %79
    %vm81 = vcmask 130144
    %82 = vst.msk [vmem:[#allocation0] sm:$0x1] %vm81, %v80
    %s83 = scalar_lea.vmem %s0, 2
    %v84 = vld [vmem:[%s83] sm:$0x1]
    %85 = vrot.lane.b32.xlu0 %v84, 8
    %v86 = vpop.permute.xlu0 %85
    %vm87 = vcmask 97344
    %88 = vst.msk [vmem:[#allocation0] sm:$0x1] %vm87, %v86
    %s89 = scalar_lea.vmem %s0, 1
    %v90 = vld [vmem:[%s89] sm:$0x1]
    %91 = vrot.lane.b32.xlu0 %v90, 4
    %v92 = vpop.permute.xlu0 %91
    %vm93 = vcmask 64544
    %94 = vst.msk [vmem:[#allocation0] sm:$0x1] %vm93, %v92
    %s96 = sshllo.u32 0, 1
    %v98 = vld [vmem:[#allocation0] sm:%s96]
    %s99 = sshllo.u32 0, 1
    %100 = vst [vmem:[%s1] sm:%s99] %v98

// kernel: specadapter_forward.1
$region0: #{specadapter_forward.1}
  #allocation0 [shape = 'u32[]', space=smem, size = 0x4, offset = 0x4, fixed_abs, tag = 'smem constant byte address 0x4 - core index']
  #allocation1 [shape = 'u32[144,128]{1,0:T(1,128)}', space=vmem, size = 0x12000, scoped, tag = 'internal scratch']
  %s0 = inlined_call_operand.vmem [shape: f32[48,16], index: 0, kind: input, shape index: {}]
  %s1 = inlined_call_operand.vmem [shape: f32[22,1], index: 1, kind: input, shape index: {}]
  %s2 = inlined_call_operand.vmem [shape: f32[20,1], index: 2, kind: input, shape index: {}]
  %s3 = inlined_call_operand.vmem [shape: bf16[3,16,64], index: 3, kind: input, shape index: {}]
  %s4 = inlined_call_operand.vmem [shape: f32[1,64], index: 4, kind: input, shape index: {}]
  %s5 = inlined_call_operand.vmem [shape: f32[1,64], index: 5, kind: input, shape index: {}]
  %s6 = inlined_call_operand.vmem [shape: bf16[3,64,256], index: 6, kind: input, shape index: {}]
  %s7 = inlined_call_operand.vmem [shape: f32[1,256], index: 7, kind: input, shape index: {}]
  %s8 = inlined_call_operand.vmem [shape: f32[1,256], index: 8, kind: input, shape index: {}]
  %s9 = inlined_call_operand.vmem [shape: bf16[3,256,1024], index: 9, kind: input, shape index: {}]
  %s10 = inlined_call_operand.vmem [shape: f32[1,1024], index: 10, kind: input, shape index: {}]
  %s11 = inlined_call_operand.vmem [shape: f32[1,1024], index: 11, kind: input, shape index: {}]
  %s12 = inlined_call_operand.vmem [shape: f32[32,1024], index: 12, kind: output, shape index: {}]
  %s13 = sld [smem:[#allocation0]]
  $region81: #{specadapter_forward.1} parent=0
    _
  %s15 = ssub.s32 1, %s13
  %s16 = scalar_select 0, %s15, %s13
  loop: start=0, step=1, limit=4
  $region2: #{specadapter_forward.1} parent=0 // loop_pre_header
    _
  $region3: #{specadapter_forward.1} parent=0 // loop_header
    %s18 = sphi 0, %s22
    %p19 = scmp.ge.s32.totalorder %s18, 4
    %s28 = sphi 0, %s30
    %s31 = sphi 0, %s28
    %s32 = sphi 0, %s31
    %s48 = sphi 0, %s32
    %s52 = sphi 0, %s52
    %s54 = sphi 0, %s52
    %s55 = sphi 0, %s54
    %s69 = sphi 0, %s55
    %s73 = sphi 0, %s73
    %s75 = sphi 0, %s73
    %s76 = sphi 0, %s75
    %s90 = sphi 0, %s76
    %s94 = sphi 0, %s94
    %s96 = sphi 0, %s94
    %s97 = sphi 0, %s96
    %s111 = sphi 0, %s97
    %s115 = sphi 0, %s115
    %s117 = sphi 0, %s115
    %s118 = sphi 0, %s117
    %s132 = sphi 0, %s118
    %s136 = sphi 0, %s136
    %s138 = sphi 0, %s136
    %s139 = sphi 0, %s138
    %s153 = sphi 0, %s139
    %s157 = sphi 0, %s157
    %s159 = sphi 0, %s157
    %s160 = sphi 0, %s159
    %s174 = sphi 0, %s160
    %s178 = sphi 0, %s178
    %s180 = sphi 0, %s178
    %s181 = sphi 0, %s180
    %s195 = sphi 0, %s181
    %s199 = sphi 0, %s199
    %s201 = sphi 0, %s199
    %s202 = sphi 0, %s201
    %s216 = sphi 0, %s202
    %s220 = sphi 0, %s220
    %s222 = sphi 0, %s220
    %s223 = sphi 0, %s222
    %s237 = sphi 0, %s223
    %s241 = sphi 0, %s241
    %s243 = sphi 0, %s241
    %s244 = sphi 0, %s243
    %s258 = sphi 0, %s244
    %s262 = sphi 0, %s262
    %s264 = sphi 0, %s262
    %s265 = sphi 0, %s264
    %s279 = sphi 0, %s265
    %s285 = sphi 0, %s287
    %s288 = sphi 0, %s285
    %s289 = sphi 0, %s288
    %s305 = sphi 0, %s289
  $region4: #{specadapter_forward.1} parent=0 // loop_header_branch
    %21 = sbr.rel (%p19) target = $region8
  $region5: #{specadapter_forward.1} parent=0 // loop_body
    %s23 = ssub.s32 %s18, 1
    %s24 = ssub.s32 %s18, 2
    %s25 = sadd.s32 %s18, 1
    %s26 = ssub.s32 %s18, %s25
    %p27 = scmp.eq.s32.totalorder %s26, 0
    %s29 = sadd.s32 %s28, 1
    %s30 = scalar_select %p27, %s28, %s29
    %p33 = pneg %p27
    %p34 = scmp.eq.s32.totalorder %s18, 1
    %p35 = por %p33, %p34
    %p36 = scmp.ne.s32.totalorder %s28, %s31
    %p37 = scmp.eq.s32.totalorder %s18, 0
    %p38 = por %p36, %p37
    %p39 = scmp.ne.s32.totalorder %s28, %s31
    %p40 = scmp.eq.s32.totalorder %s23, 1
    %p41 = por %p39, %p40
    %p42 = scmp.ne.s32.totalorder %s31, %s32
    %p43 = scmp.eq.s32.totalorder %s23, 0
    %p44 = por %p42, %p43
    %p45 = scmp.ne.s32.totalorder %s31, %s32
    %p46 = scmp.eq.s32.totalorder %s24, 1
    %p47 = por %p45, %p46
    %p49 = scmp.ne.s32.totalorder %s32, %s48
    %p50 = scmp.eq.s32.totalorder %s24, 0
    %p51 = por %p49, %p50
    %s53 = sadd.s32 %s52, 1
    %p56 = scmp.eq.s32.totalorder %s18, 1
    %p57 = scmp.ne.s32.totalorder %s52, %s54
    %p58 = scmp.eq.s32.totalorder %s18, 0
    %p59 = por %p57, %p58
    %p60 = scmp.ne.s32.totalorder %s52, %s54
    %p61 = scmp.eq.s32.totalorder %s23, 1
    %p62 = por %p60, %p61
    %p63 = scmp.ne.s32.totalorder %s54, %s55
    %p64 = scmp.eq.s32.totalorder %s23, 0
    %p65 = por %p63, %p64
    %p66 = scmp.ne.s32.totalorder %s54, %s55
    %p67 = scmp.eq.s32.totalorder %s24, 1
    %p68 = por %p66, %p67
    %p70 = scmp.ne.s32.totalorder %s55, %s69
    %p71 = scmp.eq.s32.totalorder %s24, 0
    %p72 = por %p70, %p71
    %s74 = sadd.s32 %s73, 1
    %p77 = scmp.eq.s32.totalorder %s18, 1
    %p78 = scmp.ne.s32.totalorder %s73, %s75
    %p79 = scmp.eq.s32.totalorder %s18, 0
    %p80 = por %p78, %p79
    %p81 = scmp.ne.s32.totalorder %s73, %s75
    %p82 = scmp.eq.s32.totalorder %s23, 1
    %p83 = por %p81, %p82
    %p84 = scmp.ne.s32.totalorder %s75, %s76
    %p85 = scmp.eq.s32.totalorder %s23, 0
    %p86 = por %p84, %p85
    %p87 = scmp.ne.s32.totalorder %s75, %s76
    %p88 = scmp.eq.s32.totalorder %s24, 1
    %p89 = por %p87, %p88
    %p91 = scmp.ne.s32.totalorder %s76, %s90
    %p92 = scmp.eq.s32.totalorder %s24, 0
    %p93 = por %p91, %p92
    %s95 = sadd.s32 %s94, 1
    %p98 = scmp.eq.s32.totalorder %s18, 1
    %p99 = scmp.ne.s32.totalorder %s94, %s96
    %p100 = scmp.eq.s32.totalorder %s18, 0
    %p101 = por %p99, %p100
    %p102 = scmp.ne.s32.totalorder %s94, %s96
    %p103 = scmp.eq.s32.totalorder %s23, 1
    %p104 = por %p102, %p103
    %p105 = scmp.ne.s32.totalorder %s96, %s97
    %p106 = scmp.eq.s32.totalorder %s23, 0
    %p107 = por %p105, %p106
    %p108 = scmp.ne.s32.totalorder %s96, %s97
    %p109 = scmp.eq.s32.totalorder %s24, 1
    %p110 = por %p108, %p109
    %p112 = scmp.ne.s32.totalorder %s97, %s111
    %p113 = scmp.eq.s32.totalorder %s24, 0
    %p114 = por %p112, %p113
    %s116 = sadd.s32 %s115, 1
    %p119 = scmp.eq.s32.totalorder %s18, 1
    %p120 = scmp.ne.s32.totalorder %s115, %s117
    %p121 = scmp.eq.s32.totalorder %s18, 0
    %p122 = por %p120, %p121
    %p123 = scmp.ne.s32.totalorder %s115, %s117
    %p124 = scmp.eq.s32.totalorder %s23, 1
    %p125 = por %p123, %p124
    %p126 = scmp.ne.s32.totalorder %s117, %s118
    %p127 = scmp.eq.s32.totalorder %s23, 0
    %p128 = por %p126, %p127
    %p129 = scmp.ne.s32.totalorder %s117, %s118
    %p130 = scmp.eq.s32.totalorder %s24, 1
    %p131 = por %p129, %p130
    %p133 = scmp.ne.s32.totalorder %s118, %s132
    %p134 = scmp.eq.s32.totalorder %s24, 0
    %p135 = por %p133, %p134
    %s137 = sadd.s32 %s136, 1
    %p140 = scmp.eq.s32.totalorder %s18, 1
    %p141 = scmp.ne.s32.totalorder %s136, %s138
    %p142 = scmp.eq.s32.totalorder %s18, 0
    %p143 = por %p141, %p142
    %p144 = scmp.ne.s32.totalorder %s136, %s138
    %p145 = scmp.eq.s32.totalorder %s23, 1
    %p146 = por %p144, %p145
    %p147 = scmp.ne.s32.totalorder %s138, %s139
    %p148 = scmp.eq.s32.totalorder %s23, 0
    %p149 = por %p147, %p148
    %p150 = scmp.ne.s32.totalorder %s138, %s139
    %p151 = scmp.eq.s32.totalorder %s24, 1
    %p152 = por %p150, %p151
    %p154 = scmp.ne.s32.totalorder %s139, %s153
    %p155 = scmp.eq.s32.totalorder %s24, 0
    %p156 = por %p154, %p155
    %s158 = sadd.s32 %s157, 1
    %p161 = scmp.eq.s32.totalorder %s18, 1
    %p162 = scmp.ne.s32.totalorder %s157, %s159
    %p163 = scmp.eq.s32.totalorder %s18, 0
    %p164 = por %p162, %p163
    %p165 = scmp.ne.s32.totalorder %s157, %s159
    %p166 = scmp.eq.s32.totalorder %s23, 1
    %p167 = por %p165, %p166
    %p168 = scmp.ne.s32.totalorder %s159, %s160
    %p169 = scmp.eq.s32.totalorder %s23, 0
    %p170 = por %p168, %p169
    %p171 = scmp.ne.s32.totalorder %s159, %s160
    %p172 = scmp.eq.s32.totalorder %s24, 1
    %p173 = por %p171, %p172
    %p175 = scmp.ne.s32.totalorder %s160, %s174
    %p176 = scmp.eq.s32.totalorder %s24, 0
    %p177 = por %p175, %p176
    %s179 = sadd.s32 %s178, 1
    %p182 = scmp.eq.s32.totalorder %s18, 1
    %p183 = scmp.ne.s32.totalorder %s178, %s180
    %p184 = scmp.eq.s32.totalorder %s18, 0
    %p185 = por %p183, %p184
    %p186 = scmp.ne.s32.totalorder %s178, %s180
    %p187 = scmp.eq.s32.totalorder %s23, 1
    %p188 = por %p186, %p187
    %p189 = scmp.ne.s32.totalorder %s180, %s181
    %p190 = scmp.eq.s32.totalorder %s23, 0
    %p191 = por %p189, %p190
    %p192 = scmp.ne.s32.totalorder %s180, %s181
    %p193 = scmp.eq.s32.totalorder %s24, 1
    %p194 = por %p192, %p193
    %p196 = scmp.ne.s32.totalorder %s181, %s195
    %p197 = scmp.eq.s32.totalorder %s24, 0
    %p198 = por %p196, %p197
    %s200 = sadd.s32 %s199, 1
    %p203 = scmp.eq.s32.totalorder %s18, 1
    %p204 = scmp.ne.s32.totalorder %s199, %s201
    %p205 = scmp.eq.s32.totalorder %s18, 0
    %p206 = por %p204, %p205
    %p207 = scmp.ne.s32.totalorder %s199, %s201
    %p208 = scmp.eq.s32.totalorder %s23, 1
    %p209 = por %p207, %p208
    %p210 = scmp.ne.s32.totalorder %s201, %s202
    %p211 = scmp.eq.s32.totalorder %s23, 0
    %p212 = por %p210, %p211
    %p213 = scmp.ne.s32.totalorder %s201, %s202
    %p214 = scmp.eq.s32.totalorder %s24, 1
    %p215 = por %p213, %p214
    %p217 = scmp.ne.s32.totalorder %s202, %s216
    %p218 = scmp.eq.s32.totalorder %s24, 0
    %p219 = por %p217, %p218
    %s221 = sadd.s32 %s220, 1
    %p224 = scmp.eq.s32.totalorder %s18, 1
    %p225 = scmp.ne.s32.totalorder %s220, %s222
    %p226 = scmp.eq.s32.totalorder %s18, 0
    %p227 = por %p225, %p226
    %p228 = scmp.ne.s32.totalorder %s220, %s222
    %p229 = scmp.eq.s32.totalorder %s23, 1
    %p230 = por %p228, %p229
    %p231 = scmp.ne.s32.totalorder %s222, %s223
    %p232 = scmp.eq.s32.totalorder %s23, 0
    %p233 = por %p231, %p232
    %p234 = scmp.ne.s32.totalorder %s222, %s223
    %p235 = scmp.eq.s32.totalorder %s24, 1
    %p236 = por %p234, %p235
    %p238 = scmp.ne.s32.totalorder %s223, %s237
    %p239 = scmp.eq.s32.totalorder %s24, 0
    %p240 = por %p238, %p239
    %s242 = sadd.s32 %s241, 1
    %p245 = scmp.eq.s32.totalorder %s18, 1
    %p246 = scmp.ne.s32.totalorder %s241, %s243
    %p247 = scmp.eq.s32.totalorder %s18, 0
    %p248 = por %p246, %p247
    %p249 = scmp.ne.s32.totalorder %s241, %s243
    %p250 = scmp.eq.s32.totalorder %s23, 1
    %p251 = por %p249, %p250
    %p252 = scmp.ne.s32.totalorder %s243, %s244
    %p253 = scmp.eq.s32.totalorder %s23, 0
    %p254 = por %p252, %p253
    %p255 = scmp.ne.s32.totalorder %s243, %s244
    %p256 = scmp.eq.s32.totalorder %s24, 1
    %p257 = por %p255, %p256
    %p259 = scmp.ne.s32.totalorder %s244, %s258
    %p260 = scmp.eq.s32.totalorder %s24, 0
    %p261 = por %p259, %p260
    %s263 = sadd.s32 %s262, 1
    %p266 = scmp.eq.s32.totalorder %s18, 1
    %p267 = scmp.ne.s32.totalorder %s262, %s264
    %p268 = scmp.eq.s32.totalorder %s18, 0
    %p269 = por %p267, %p268
    %p270 = scmp.ne.s32.totalorder %s262, %s264
    %p271 = scmp.eq.s32.totalorder %s23, 1
    %p272 = por %p270, %p271
    %p273 = scmp.ne.s32.totalorder %s264, %s265
    %p274 = scmp.eq.s32.totalorder %s23, 0
    %p275 = por %p273, %p274
    %p276 = scmp.ne.s32.totalorder %s264, %s265
    %p277 = scmp.eq.s32.totalorder %s24, 1
    %p278 = por %p276, %p277
    %p280 = scmp.ne.s32.totalorder %s265, %s279
    %p281 = scmp.eq.s32.totalorder %s24, 0
    %p282 = por %p280, %p281
    %s283 = ssub.s32 %s18, %s25
    %p284 = scmp.eq.s32.totalorder %s283, 0
    %s286 = sadd.s32 %s285, 1
    %s287 = scalar_select %p284, %s285, %s286
    %p290 = pneg %p284
    %p291 = scmp.eq.s32.totalorder %s18, 1
    %p292 = por %p290, %p291
    %p293 = scmp.ne.s32.totalorder %s285, %s288
    %p294 = scmp.eq.s32.totalorder %s18, 0
    %p295 = por %p293, %p294
    %p296 = scmp.ne.s32.totalorder %s285, %s288
    %p297 = scmp.eq.s32.totalorder %s23, 1
    %p298 = por %p296, %p297
    %p299 = scmp.ne.s32.totalorder %s288, %s289
    %p300 = scmp.eq.s32.totalorder %s23, 0
    %p301 = por %p299, %p300
    %p302 = scmp.ne.s32.totalorder %s288, %s289
    %p303 = scmp.eq.s32.totalorder %s24, 1
    %p304 = por %p302, %p303
    %p306 = scmp.ne.s32.totalorder %s289, %s305
    %p307 = scmp.eq.s32.totalorder %s24, 0
    %p308 = por %p306, %p307
    %p309 = scmp.le.s32.totalorder 1, %s18
    %p310 = scmp.lt.s32.totalorder %s18, 3
    %p311 = pnand %p309, %p310
    %p312 = pneg %p311
    // Predicated region
    $region9: #{specadapter_forward.1} parent=5 // pred_check
      _
    $region10: #{specadapter_forward.1} parent=5 // pred_check_branch
      %314 = sbr.rel (%p311) target = $region12
    $region11: #{specadapter_forward.1} parent=5 // pred_region
      %s315 = ssub.s32 %s18, 1
      // Predicated region
      $region13: #{specadapter_forward.1} parent=11 // pred_check
        %p316 = pneg %p65
      $region14: #{specadapter_forward.1} parent=11 // pred_check_branch
        %318 = sbr.rel (%p316) target = $region16
      $region15: #{specadapter_forward.1} parent=11 // pred_region
        _
      $region16: #{specadapter_forward.1} parent=11 // pred_fallthru
        _
      // Predicated region
      $region17: #{specadapter_forward.1} parent=11 // pred_check
        %p319 = pneg %p86
      $region18: #{specadapter_forward.1} parent=11 // pred_check_branch
        %321 = sbr.rel (%p319) target = $region20
      $region19: #{specadapter_forward.1} parent=11 // pred_region
        _
      $region20: #{specadapter_forward.1} parent=11 // pred_fallthru
        _
      // Predicated region
      $region21: #{specadapter_forward.1} parent=11 // pred_check
        %p322 = pneg %p107
      $region22: #{specadapter_forward.1} parent=11 // pred_check_branch
        %324 = sbr.rel (%p322) target = $region24
      $region23: #{specadapter_forward.1} parent=11 // pred_region
        _
      $region24: #{specadapter_forward.1} parent=11 // pred_fallthru
        _
      // Predicated region
      $region25: #{specadapter_forward.1} parent=11 // pred_check
        %p325 = pneg %p128
      $region26: #{specadapter_forward.1} parent=11 // pred_check_branch
        %327 = sbr.rel (%p325) target = $region28
      $region27: #{specadapter_forward.1} parent=11 // pred_region
        _
      $region28: #{specadapter_forward.1} parent=11 // pred_fallthru
        _
      // Predicated region
      $region29: #{specadapter_forward.1} parent=11 // pred_check
        %p328 = pneg %p149
      $region30: #{specadapter_forward.1} parent=11 // pred_check_branch
        %330 = sbr.rel (%p328) target = $region32
      $region31: #{specadapter_forward.1} parent=11 // pred_region
        _
      $region32: #{specadapter_forward.1} parent=11 // pred_fallthru
        _
      // Predicated region
      $region33: #{specadapter_forward.1} parent=11 // pred_check
        %p331 = pneg %p170
      $region34: #{specadapter_forward.1} parent=11 // pred_check_branch
        %333 = sbr.rel (%p331) target = $region36
      $region35: #{specadapter_forward.1} parent=11 // pred_region
        _
      $region36: #{specadapter_forward.1} parent=11 // pred_fallthru
        _
      // Predicated region
      $region37: #{specadapter_forward.1} parent=11 // pred_check
        %p334 = pneg %p191
      $region38: #{specadapter_forward.1} parent=11 // pred_check_branch
        %336 = sbr.rel (%p334) target = $region40
      $region39: #{specadapter_forward.1} parent=11 // pred_region
        _
      $region40: #{specadapter_forward.1} parent=11 // pred_fallthru
        _
      // Predicated region
      $region41: #{specadapter_forward.1} parent=11 // pred_check
        %p337 = pneg %p212
      $region42: #{specadapter_forward.1} parent=11 // pred_check_branch
        %339 = sbr.rel (%p337) target = $region44
      $region43: #{specadapter_forward.1} parent=11 // pred_region
        _
      $region44: #{specadapter_forward.1} parent=11 // pred_fallthru
        _
      // Predicated region
      $region45: #{specadapter_forward.1} parent=11 // pred_check
        %p340 = pneg %p233
      $region46: #{specadapter_forward.1} parent=11 // pred_check_branch
        %342 = sbr.rel (%p340) target = $region48
      $region47: #{specadapter_forward.1} parent=11 // pred_region
        _
      $region48: #{specadapter_forward.1} parent=11 // pred_fallthru
        _
      // Predicated region
      $region49: #{specadapter_forward.1} parent=11 // pred_check
        %p343 = pneg %p254
      $region50: #{specadapter_forward.1} parent=11 // pred_check_branch
        %345 = sbr.rel (%p343) target = $region52
      $region51: #{specadapter_forward.1} parent=11 // pred_region
        _
      $region52: #{specadapter_forward.1} parent=11 // pred_fallthru
        _
      // Predicated region
      $region53: #{specadapter_forward.1} parent=11 // pred_check
        %p346 = pneg %p275
      $region54: #{specadapter_forward.1} parent=11 // pred_check_branch
        %348 = sbr.rel (%p346) target = $region56
      $region55: #{specadapter_forward.1} parent=11 // pred_region
        _
      $region56: #{specadapter_forward.1} parent=11 // pred_fallthru
        _
    $region12: #{specadapter_forward.1} parent=5 // pred_fallthru
      _
    %p349 = scmp.lt.s32.totalorder %s18, 2
    // Predicated region
    $region57: #{specadapter_forward.1} parent=5 // pred_check
      %p350 = pneg %p349
    $region58: #{specadapter_forward.1} parent=5 // pred_check_branch
      %352 = sbr.rel (%p350) target = $region60
    $region59: #{specadapter_forward.1} parent=5 // pred_region
      // Predicated region
      $region61: #{specadapter_forward.1} parent=59 // pred_check
        %p353 = pneg %p38
      $region62: #{specadapter_forward.1} parent=59 // pred_check_branch
        %355 = sbr.rel (%p353) target = $region64
      $region63: #{specadapter_forward.1} parent=59 // pred_region
        %s356 = smul.u32 3, %s18
        %p357 = scmp.lt.s32.totalorder %s356, 5
        %s358 = scalar_select %p357, %s356, 5
        %s359 = smul.addr %s358, 8
        %s360 = scalar_lea.vmem %s0, %s359
        %s361 = smul.u32 3, %s18
      $region64: #{specadapter_forward.1} parent=59 // pred_fallthru
        _
    $region60: #{specadapter_forward.1} parent=5 // pred_fallthru
      _
    %p362 = scmp.le.s32.totalorder 1, %s18
    %p363 = scmp.lt.s32.totalorder %s18, 3
    %p364 = pnand %p362, %p363
    %p365 = pneg %p364
    // Predicated region
    $region65: #{specadapter_forward.1} parent=5 // pred_check
      _
    $region66: #{specadapter_forward.1} parent=5 // pred_check_branch
      %367 = sbr.rel (%p364) target = $region68
    $region67: #{specadapter_forward.1} parent=5 // pred_region
      %s368 = ssub.s32 %s18, 1
      %s369 = smul.u32 3, %s23
      %p370 = scmp.lt.s32.totalorder %s369, 5
      %s371 = scalar_select %p370, %s369, 5
      %s372 = smul.addr %s371, 8
      %s373 = scalar_lea.vmem %s0, %s372
      %p374 = pneg %p44
      %p375 = pneg %p41
      %p376 = pneg %p65
      %p377 = pneg %p62
      %p378 = pneg %p86
      %p379 = pneg %p83
      %p380 = pneg %p107
      %p381 = pneg %p104
      %p382 = pneg %p128
      %p383 = pneg %p125
      %p384 = pneg %p149
      %p385 = pneg %p146
      %p386 = pneg %p170
      %p387 = pneg %p167
      %p388 = pneg %p191
      %p389 = pneg %p188
      %p390 = pneg %p212
      %p391 = pneg %p209
      %p392 = pneg %p233
      %p393 = pneg %p230
      %p394 = pneg %p254
      %p395 = pneg %p251
      %p396 = pneg %p275
      %p397 = pneg %p272
      %p398 = pneg %p301
      %p399 = pneg %p298
      %s400 = smul.u32 2, %s23
      %p401 = scmp.lt.s32.totalorder %s400, 3
      %s402 = scalar_select %p401, %s400, 3
      %s403 = smul.addr %s402, 8
      %s404 = smul.addr %s403, 8
      %s405 = scalar_lea.vmem %s12, %s404
      %s406 = smul.u32 3, %s23
      %p407 = scmp.lt.s32.totalorder %s406, 5
      %s408 = scalar_select %p407, %s406, 5
      %s409 = smul.addr %s408, 8
      %s410 = scalar_lea.vmem %s0, %s409
      %s411 = smul.u32 3, %s23
      %s412 = smul.u32 2, %s23
      %p413 = scmp.lt.s32.totalorder %s412, 3
      %s414 = scalar_select %p413, %s412, 3
      %s415 = smul.addr %s414, 8
      %s416 = smul.addr %s415, 8
      %s417 = scalar_lea.vmem %s12, %s416
      %s418 = smul.u32 2, %s23
      %v420 = vld [vmem:[%s410] sm:$0xff]
      %v421 = vld [vmem:[%s410 + $0x8] sm:$0xff]
      %v422 = vld [vmem:[%s410 + $0x10] sm:$0xff]
      %v423 = vld [vmem:[%s1] sm:$0xff]
      %v424 = vld [vmem:[%s1 + $0x8] sm:$0xff]
      %v425 = vld [vmem:[%s1 + $0x10] sm:$0x3f]
      %v426 = vpack.c.bf16 %v421, %v420
      %v427 = vpack.c.bf16 %v422, %v422
      %v428 = vld [vmem:[%s3] sm:$0xf]
      %v429 = vld [vmem:[%s3 + $0x4] sm:$0xf]
      %s430 = scalar_lea.vmem %s3, 8
      %v431 = vld [vmem:[%s430] sm:$0xf]
      %v432 = vld [vmem:[%s430 + $0x4] sm:$0xf]
      %vm433 = vsmask.f32 7424
      %v435 = vshrl.u32 %v426, 16
      %v437 = vshll.u32 %v426, 16
      %v439 = vrot.slane %v437, 1
      %v440 = vor.u32 %v435, %v439
      %v442 = vshll.u32 %v427, 16
      %v444 = vrot.slane %v442, 1
      %v445 = vsel %vm433, %v440, %v444
      %v446 = vshrl.u32 %v427, 16
      %v448 = vor.u32 %v446, %v444
      %v451 = vunpack.c.l.b16 %v431
      %v452 = vunpack.c.l.b16 %v432
      %v453 = vpack.c.b16 %v452, %v451
      %vm455 = vcmask 130048
      %v457 = vsel %vm455, %v445, 0
      %v460 = vsel %vm455, %v448, 0
      %462 = vmatprep.subr.bf16.mxu0 0
      %463 = vmatpush1.bf16.msra.mxu0 %v453
      %464 = vmatprep.subr.bf16.mxu0 0
      %465 = vmatpush1.bf16.msra.mxu0 0
      %466 = vmatprep.subr.bf16.mxu0 0
      %467 = vmatpush1.bf16.msra.mxu0 0
      %468 = vmatprep.subr.bf16.mxu0 0
      %469 = vmatpush1.bf16.msra.mxu0 0
      %470 = vmatprep.subr.bf16.mxu0 0
      %471 = vmatpush1.bf16.msra.mxu0 0
      %472 = vmatprep.subr.bf16.mxu0 0
      %473 = vmatpush1.bf16.msra.mxu0 0
      %474 = vmatprep.subr.bf16.mxu0 0
      %475 = vmatpush1.bf16.msra.mxu0 0
      %476 = vmatprep.subr.bf16.mxu0 0
      %477 = vmatpush1.bf16.msra.mxu0 0
      %478 = vmatprep.subr.bf16.mxu0 0
      %479 = vmatpush1.bf16.msra.mxu0 0
      %480 = vmatprep.subr.bf16.mxu0 0
      %481 = vmatpush1.bf16.msra.mxu0 0
      %482 = vmatprep.subr.bf16.mxu0 0
      %483 = vmatpush1.bf16.msra.mxu0 0
      %484 = vmatprep.subr.bf16.mxu0 0
      %485 = vmatpush1.bf16.msra.mxu0 0
      %486 = vmatprep.subr.bf16.mxu0 0
      %487 = vmatpush1.bf16.msra.mxu0 0
      %488 = vmatprep.subr.bf16.mxu0 0
      %489 = vmatpush1.bf16.msra.mxu0 0
      %490 = vmatprep.subr.bf16.mxu0 0
      %491 = vmatpush1.bf16.msra.mxu0 0
      %492 = vmatprep.subr.bf16.mxu0 0
      %493 = vmatpush1.bf16.msra.mxu0 0
      %494 = vmatprep.mubr.bf16.mxu0 0
      %495 = vmatmul.mubr.bf16.gmra.mrb[0].mxu0 %v457
      %v496 = vpop.f32.mrb[0].mxu0
      %v497 = vadd.f32 0.0, %v496
      %v498 = vpop.f32.mrb[0].mxu0
      %v499 = vpop.f32.mrb[0].mxu0
      %v500 = vadd.f32 0.0, %v499
      %v501 = vpop.f32.mrb[0].mxu0
      %502 = vmatprep.mubr.bf16.mxu0 0
      %503 = vmatmul.mubr.bf16.gmra.mrb[0].mxu0 %v460
      %v504 = vpop.f32.mrb[0].mxu0
      %v505 = vadd.f32 0.0, %v504
      %v506 = vpop.f32.mrb[0].mxu0
      %v507 = vpop.f32.mrb[0].mxu0
      %v508 = vpop.f32.mrb[0].mxu0
      %509 = vdwg.mxu0
      %v512 = vunpack.c.l.b16 %v428
      %v513 = vunpack.c.l.b16 %v429
      %v514 = vpack.c.b16 %v513, %v512
      %v516 = vsel %vm455, %v426, 0
      %v518 = vsel %vm455, %v427, 0
      %520 = vmatprep.subr.bf16.mxu0 0
      %521 = vmatpush1.bf16.msra.mxu0 %v514
      %522 = vmatprep.subr.bf16.mxu0 0
      %523 = vmatpush1.bf16.msra.mxu0 0
      %524 = vmatprep.subr.bf16.mxu0 0
      %525 = vmatpush1.bf16.msra.mxu0 0
      %526 = vmatprep.subr.bf16.mxu0 0
      %527 = vmatpush1.bf16.msra.mxu0 0
      %528 = vmatprep.subr.bf16.mxu0 0
      %529 = vmatpush1.bf16.msra.mxu0 0
      %530 = vmatprep.subr.bf16.mxu0 0
      %531 = vmatpush1.bf16.msra.mxu0 0
      %532 = vmatprep.subr.bf16.mxu0 0
      %533 = vmatpush1.bf16.msra.mxu0 0
      %534 = vmatprep.subr.bf16.mxu0 0
      %535 = vmatpush1.bf16.msra.mxu0 0
      %536 = vmatprep.subr.bf16.mxu0 0
      %537 = vmatpush1.bf16.msra.mxu0 0
      %538 = vmatprep.subr.bf16.mxu0 0
      %539 = vmatpush1.bf16.msra.mxu0 0
      %540 = vmatprep.subr.bf16.mxu0 0
      %541 = vmatpush1.bf16.msra.mxu0 0
      %542 = vmatprep.subr.bf16.mxu0 0
      %543 = vmatpush1.bf16.msra.mxu0 0
      %544 = vmatprep.subr.bf16.mxu0 0
      %545 = vmatpush1.bf16.msra.mxu0 0
      %546 = vmatprep.subr.bf16.mxu0 0
      %547 = vmatpush1.bf16.msra.mxu0 0
      %548 = vmatprep.subr.bf16.mxu0 0
      %549 = vmatpush1.bf16.msra.mxu0 0
      %550 = vmatprep.subr.bf16.mxu0 0
      %551 = vmatpush1.bf16.msra.mxu0 0
      %552 = vmatprep.mubr.bf16.mxu0 0
      %553 = vmatmul.mubr.bf16.gmra.mrb[0].mxu0 %v516
      %v554 = vpop.f32.mrb[0].mxu0
      %v555 = vadd.f32 %v497, %v554
      %v556 = vpop.f32.mrb[0].mxu0
      %v557 = vpop.f32.mrb[0].mxu0
      %v558 = vadd.f32 %v500, %v557
      %v559 = vpop.f32.mrb[0].mxu0
      %560 = vmatprep.mubr.bf16.mxu0 0
      %561 = vmatmul.mubr.bf16.gmra.mrb[0].mxu0 %v518
      %v562 = vpop.f32.mrb[0].mxu0
      %v563 = vadd.f32 %v505, %v562
      %v564 = vpop.f32.mrb[0].mxu0
      %v565 = vpop.f32.mrb[0].mxu0
      %v566 = vpop.f32.mrb[0].mxu0
      %567 = vdwg.mxu0
      %s568 = scalar_lea.vmem %s3, 16
      %v569 = vld [vmem:[%s568] sm:$0xf]
      %v570 = vld [vmem:[%s568 + $0x4] sm:$0xf]
      %vm573 = vcmask 1046528
      %v574 = vrot.slane %v426, 1
      %v575 = vrot.slane %v427, 1
      %v576 = vsel %vm573, %v574, %v575
      %v579 = vunpack.c.l.b16 %v569
      %v580 = vunpack.c.l.b16 %v570
      %v581 = vpack.c.b16 %v580, %v579
      %v584 = vsel %vm455, %v576, 0
      %v587 = vsel %vm455, %v575, 0
      %589 = vmatprep.subr.bf16.mxu0 0
      %590 = vmatpush1.bf16.msra.mxu0 %v581
      %591 = vmatprep.subr.bf16.mxu0 0
      %592 = vmatpush1.bf16.msra.mxu0 0
      %593 = vmatprep.subr.bf16.mxu0 0
      %594 = vmatpush1.bf16.msra.mxu0 0
      %595 = vmatprep.subr.bf16.mxu0 0
      %596 = vmatpush1.bf16.msra.mxu0 0
      %597 = vmatprep.subr.bf16.mxu0 0
      %598 = vmatpush1.bf16.msra.mxu0 0
      %599 = vmatprep.subr.bf16.mxu0 0
      %600 = vmatpush1.bf16.msra.mxu0 0
      %601 = vmatprep.subr.bf16.mxu0 0
      %602 = vmatpush1.bf16.msra.mxu0 0
      %603 = vmatprep.subr.bf16.mxu0 0
      %604 = vmatpush1.bf16.msra.mxu0 0
      %605 = vmatprep.subr.bf16.mxu0 0
      %606 = vmatpush1.bf16.msra.mxu0 0
      %607 = vmatprep.subr.bf16.mxu0 0
      %608 = vmatpush1.bf16.msra.mxu0 0
      %609 = vmatprep.subr.bf16.mxu0 0
      %610 = vmatpush1.bf16.msra.mxu0 0
      %611 = vmatprep.subr.bf16.mxu0 0
      %612 = vmatpush1.bf16.msra.mxu0 0
      %613 = vmatprep.subr.bf16.mxu0 0
      %614 = vmatpush1.bf16.msra.mxu0 0
      %615 = vmatprep.subr.bf16.mxu0 0
      %616 = vmatpush1.bf16.msra.mxu0 0
      %617 = vmatprep.subr.bf16.mxu0 0
      %618 = vmatpush1.bf16.msra.mxu0 0
      %619 = vmatprep.subr.bf16.mxu0 0
      %620 = vmatpush1.bf16.msra.mxu0 0
      %621 = vmatprep.mubr.bf16.mxu0 0
      %622 = vmatmul.mubr.bf16.gmra.mrb[0].mxu0 %v584
      %v623 = vpop.f32.mrb[0].mxu0
      %v624 = vadd.f32 0.0, %v623
      %v625 = vpop.f32.mrb[0].mxu0
      %v626 = vpop.f32.mrb[0].mxu0
      %v627 = vadd.f32 0.0, %v626
      %v628 = vpop.f32.mrb[0].mxu0
      %629 = vmatprep.mubr.bf16.mxu0 0
      %630 = vmatmul.mubr.bf16.gmra.mrb[0].mxu0 %v587
      %v631 = vpop.f32.mrb[0].mxu0
      %v632 = vadd.f32 0.0, %v631
      %v633 = vpop.f32.mrb[0].mxu0
      %v634 = vpop.f32.mrb[0].mxu0
      %v635 = vpop.f32.mrb[0].mxu0
      %636 = vdwg.mxu0
      %v637 = vadd.f32 %v555, %v624
      %v638 = vadd.f32 %v558, %v627
      %v639 = vadd.f32 %v563, %v632
      %v640 = vld [vmem:[%s4] sm:$0x1]
      %v642 = vlaneseq
      %v643 = vshrl.u32 %v642, 7
      %v644 = vsub.s32 0, %v643
      %v645 = vrot.slane %v640, %v644
      %v647 = vmul.f32 %v637, %v645
      %v648 = vmul.f32 %v638, %v645
      %v649 = vmul.f32 %v639, %v645
      %v650 = vld [vmem:[%s5] sm:$0x1]
      %v652 = vlaneseq
      %v653 = vshrl.u32 %v652, 7
      %v654 = vsub.s32 0, %v653
      %v655 = vrot.slane %v650, %v654
      %v657 = vadd.f32 %v647, %v655
      %v658 = vadd.f32 %v648, %v655
      %v659 = vadd.f32 %v649, %v655
      %vm660 = vcmp.gt.f32.partialorder %v657, 0.0
      %vm661 = vcmp.gt.f32.partialorder %v658, 0.0
      %vm662 = vcmp.gt.f32.partialorder %v659, 0.0
      %v663 = vmul.f32 %v657, 0.2
      %v664 = vmul.f32 %v658, 0.2
      %v665 = vmul.f32 %v659, 0.2
      %v666 = vsel %vm660, %v657, %v663
      %v667 = vsel %vm661, %v658, %v664
      %v668 = vsel %vm662, %v659, %v665
      %670 = vset.pattern.permute.xlu0 0
      %671 = vperm.xlu0 %670, %v423
      %v672 = vpop.permute.xlu0 %671
      %675 = vset.pattern.permute.xlu0 0
      %676 = vperm.xlu0 %675, %v424
      %v677 = vpop.permute.xlu0 %676
      %680 = vset.pattern.permute.xlu0 0
      %681 = vperm.xlu0 %680, %v425
      %v682 = vpop.permute.xlu0 %681
      %v684 = vmul.f32 %v666, %v672
      %v685 = vmul.f32 %v667, %v677
      %v686 = vmul.f32 %v668, %v682
      %v687 = vld [vmem:[%s2] sm:$0xff]
      %v688 = vld [vmem:[%s2 + $0x8] sm:$0xff]
      %v689 = vld [vmem:[%s2 + $0x10] sm:$0xf]
      %v690 = vpack.c.bf16 %v685, %v684
      %v691 = vpack.c.bf16 %v686, %v686
      %v692 = vld [vmem:[%s6] sm:$0xff]
      %v693 = vld [vmem:[%s6 + $0x8] sm:$0xff]
      %v694 = vld [vmem:[%s6 + $0x10] sm:$0xff]
      %v695 = vld [vmem:[%s6 + $0x18] sm:$0xff]
      %v696 = vld [vmem:[%s6 + $0x20] sm:$0xff]
      %v697 = vld [vmem:[%s6 + $0x28] sm:$0xff]
      %v698 = vld [vmem:[%s6 + $0x30] sm:$0xff]
      %v699 = vld [vmem:[%s6 + $0x38] sm:$0xff]
      %s700 = scalar_lea.vmem %s6, 64
      %v701 = vld [vmem:[%s700] sm:$0xff]
      %v702 = vld [vmem:[%s700 + $0x8] sm:$0xff]
      %v703 = vld [vmem:[%s700 + $0x10] sm:$0xff]
      %v704 = vld [vmem:[%s700 + $0x18] sm:$0xff]
      %v705 = vld [vmem:[%s700 + $0x20] sm:$0xff]
      %v706 = vld [vmem:[%s700 + $0x28] sm:$0xff]
      %v707 = vld [vmem:[%s700 + $0x30] sm:$0xff]
      %v708 = vld [vmem:[%s700 + $0x38] sm:$0xff]
      %v710 = vshrl.u32 %v690, 16
      %v712 = vshll.u32 %v690, 16
      %v714 = vrot.slane %v712, 1
      %v715 = vor.u32 %v710, %v714
      %v717 = vshll.u32 %v691, 16
      %v719 = vrot.slane %v717, 1
      %v720 = vsel %vm433, %v715, %v719
      %v721 = vshrl.u32 %v691, 16
      %v723 = vor.u32 %v721, %v719
      %v732 = vunpack.c.l.b16 %v701
      %v733 = vunpack.c.h.b16 %v701
      %v734 = vunpack.c.l.b16 %v702
      %v735 = vunpack.c.h.b16 %v702
      %v736 = vunpack.c.l.b16 %v703
      %v737 = vunpack.c.h.b16 %v703
      %v738 = vunpack.c.l.b16 %v704
      %v739 = vunpack.c.h.b16 %v704
      %v740 = vunpack.c.l.b16 %v705
      %v741 = vunpack.c.h.b16 %v705
      %v742 = vunpack.c.l.b16 %v706
      %v743 = vunpack.c.h.b16 %v706
      %v744 = vunpack.c.l.b16 %v707
      %v745 = vunpack.c.h.b16 %v707
      %v746 = vunpack.c.l.b16 %v708
      %v747 = vunpack.c.h.b16 %v708
      %v748 = vpack.c.b16 %v734, %v732
      %v749 = vpack.c.b16 %v735, %v733
      %v750 = vpack.c.b16 %v738, %v736
      %v751 = vpack.c.b16 %v739, %v737
      %v752 = vpack.c.b16 %v742, %v740
      %v753 = vpack.c.b16 %v743, %v741
      %v754 = vpack.c.b16 %v746, %v744
      %v755 = vpack.c.b16 %v747, %v745
      %vm764 = vcmask 523264
      %v766 = vsel %vm764, %v720, 0
      %v769 = vsel %vm764, %v723, 0
      %771 = vmatprep.subr.bf16.mxu0 %v749
      %772 = vmatpush1.bf16.msra.mxu0 %v748
      %773 = vmatprep.subr.bf16.mxu0 %v751
      %774 = vmatpush1.bf16.msra.mxu0 %v750
      %775 = vmatprep.subr.bf16.mxu0 %v753
      %776 = vmatpush1.bf16.msra.mxu0 %v752
      %777 = vmatprep.subr.bf16.mxu0 %v755
      %778 = vmatpush1.bf16.msra.mxu0 %v754
      %779 = vmatprep.subr.bf16.mxu0 0
      %780 = vmatpush1.bf16.msra.mxu0 0
      %781 = vmatprep.subr.bf16.mxu0 0
      %782 = vmatpush1.bf16.msra.mxu0 0
      %783 = vmatprep.subr.bf16.mxu0 0
      %784 = vmatpush1.bf16.msra.mxu0 0
      %785 = vmatprep.subr.bf16.mxu0 0
      %786 = vmatpush1.bf16.msra.mxu0 0
      %787 = vmatprep.subr.bf16.mxu0 0
      %788 = vmatpush1.bf16.msra.mxu0 0
      %789 = vmatprep.subr.bf16.mxu0 0
      %790 = vmatpush1.bf16.msra.mxu0 0
      %791 = vmatprep.subr.bf16.mxu0 0
      %792 = vmatpush1.bf16.msra.mxu0 0
      %793 = vmatprep.subr.bf16.mxu0 0
      %794 = vmatpush1.bf16.msra.mxu0 0
      %795 = vmatprep.subr.bf16.mxu0 0
      %796 = vmatpush1.bf16.msra.mxu0 0
      %797 = vmatprep.subr.bf16.mxu0 0
      %798 = vmatpush1.bf16.msra.mxu0 0
      %799 = vmatprep.subr.bf16.mxu0 0
      %800 = vmatpush1.bf16.msra.mxu0 0
      %801 = vmatprep.subr.bf16.mxu0 0
      %802 = vmatpush1.bf16.msra.mxu0 0
      %803 = vmatprep.mubr.bf16.mxu0 0
      %804 = vmatmul.mubr.bf16.gmra.mrb[0].mxu0 %v766
      %v805 = vpop.f32.mrb[0].mxu0
      %v806 = vadd.f32 0.0, %v805
      %v807 = vpop.f32.mrb[0].mxu0
      %v808 = vadd.f32 0.0, %v807
      %v809 = vpop.f32.mrb[0].mxu0
      %v810 = vadd.f32 0.0, %v809
      %v811 = vpop.f32.mrb[0].mxu0
      %v812 = vadd.f32 0.0, %v811
      %813 = vmatprep.mubr.bf16.mxu0 0
      %814 = vmatmul.mubr.bf16.gmra.mrb[0].mxu0 %v769
      %v815 = vpop.f32.mrb[0].mxu0
      %v816 = vadd.f32 0.0, %v815
      %v817 = vpop.f32.mrb[0].mxu0
      %v818 = vadd.f32 0.0, %v817
      %v819 = vpop.f32.mrb[0].mxu0
      %v820 = vpop.f32.mrb[0].mxu0
      %821 = vdwg.mxu0
      %v830 = vunpack.c.l.b16 %v692
      %v831 = vunpack.c.h.b16 %v692
      %v832 = vunpack.c.l.b16 %v693
      %v833 = vunpack.c.h.b16 %v693
      %v834 = vunpack.c.l.b16 %v694
      %v835 = vunpack.c.h.b16 %v694
      %v836 = vunpack.c.l.b16 %v695
      %v837 = vunpack.c.h.b16 %v695
      %v838 = vunpack.c.l.b16 %v696
      %v839 = vunpack.c.h.b16 %v696
      %v840 = vunpack.c.l.b16 %v697
      %v841 = vunpack.c.h.b16 %v697
      %v842 = vunpack.c.l.b16 %v698
      %v843 = vunpack.c.h.b16 %v698
      %v844 = vunpack.c.l.b16 %v699
      %v845 = vunpack.c.h.b16 %v699
      %v846 = vpack.c.b16 %v832, %v830
      %v847 = vpack.c.b16 %v833, %v831
      %v848 = vpack.c.b16 %v836, %v834
      %v849 = vpack.c.b16 %v837, %v835
      %v850 = vpack.c.b16 %v840, %v838
      %v851 = vpack.c.b16 %v841, %v839
      %v852 = vpack.c.b16 %v844, %v842
      %v853 = vpack.c.b16 %v845, %v843
      %v862 = vsel %vm764, %v690, 0
      %v864 = vsel %vm764, %v691, 0
      %866 = vmatprep.subr.bf16.mxu0 %v847
      %867 = vmatpush1.bf16.msra.mxu0 %v846
      %868 = vmatprep.subr.bf16.mxu0 %v849
      %869 = vmatpush1.bf16.msra.mxu0 %v848
      %870 = vmatprep.subr.bf16.mxu0 %v851
      %871 = vmatpush1.bf16.msra.mxu0 %v850
      %872 = vmatprep.subr.bf16.mxu0 %v853
      %873 = vmatpush1.bf16.msra.mxu0 %v852
      %874 = vmatprep.subr.bf16.mxu0 0
      %875 = vmatpush1.bf16.msra.mxu0 0
      %876 = vmatprep.subr.bf16.mxu0 0
      %877 = vmatpush1.bf16.msra.mxu0 0
      %878 = vmatprep.subr.bf16.mxu0 0
      %879 = vmatpush1.bf16.msra.mxu0 0
      %880 = vmatprep.subr.bf16.mxu0 0
      %881 = vmatpush1.bf16.msra.mxu0 0
      %882 = vmatprep.subr.bf16.mxu0 0
      %883 = vmatpush1.bf16.msra.mxu0 0
      %884 = vmatprep.subr.bf16.mxu0 0
      %885 = vmatpush1.bf16.msra.mxu0 0
      %886 = vmatprep.subr.bf16.mxu0 0
      %887 = vmatpush1.bf16.msra.mxu0 0
      %888 = vmatprep.subr.bf16.mxu0 0
      %889 = vmatpush1.bf16.msra.mxu0 0
      %890 = vmatprep.subr.bf16.mxu0 0
      %891 = vmatpush1.bf16.msra.mxu0 0
      %892 = vmatprep.subr.bf16.mxu0 0
      %893 = vmatpush1.bf16.msra.mxu0 0
      %894 = vmatprep.subr.bf16.mxu0 0
      %895 = vmatpush1.bf16.msra.mxu0 0
      %896 = vmatprep.subr.bf16.mxu0 0
      %897 = vmatpush1.bf16.msra.mxu0 0
      %898 = vmatprep.mubr.bf16.mxu0 0
      %899 = vmatmul.mubr.bf16.gmra.mrb[0].mxu0 %v862
      %v900 = vpop.f32.mrb[0].mxu0
      %v901 = vadd.f32 %v806, %v900
      %v902 = vpop.f32.mrb[0].mxu0
      %v903 = vadd.f32 %v808, %v902
      %v904 = vpop.f32.mrb[0].mxu0
      %v905 = vadd.f32 %v810, %v904
      %v906 = vpop.f32.mrb[0].mxu0
      %v907 = vadd.f32 %v812, %v906
      %908 = vmatprep.mubr.bf16.mxu0 0
      %909 = vmatmul.mubr.bf16.gmra.mrb[0].mxu0 %v864
      %v910 = vpop.f32.mrb[0].mxu0
      %v911 = vadd.f32 %v816, %v910
      %v912 = vpop.f32.mrb[0].mxu0
      %v913 = vadd.f32 %v818, %v912
      %v914 = vpop.f32.mrb[0].mxu0
      %v915 = vpop.f32.mrb[0].mxu0
      %916 = vdwg.mxu0
      %s917 = scalar_lea.vmem %s6, 128
      %v918 = vld [vmem:[%s917] sm:$0xff]
      %v919 = vld [vmem:[%s917 + $0x8] sm:$0xff]
      %v920 = vld [vmem:[%s917 + $0x10] sm:$0xff]
      %v921 = vld [vmem:[%s917 + $0x18] sm:$0xff]
      %v922 = vld [vmem:[%s917 + $0x20] sm:$0xff]
      %v923 = vld [vmem:[%s917 + $0x28] sm:$0xff]
      %v924 = vld [vmem:[%s917 + $0x30] sm:$0xff]
      %v925 = vld [vmem:[%s917 + $0x38] sm:$0xff]
      %v928 = vrot.slane %v690, 1
      %v929 = vrot.slane %v691, 1
      %v930 = vsel %vm573, %v928, %v929
      %v939 = vunpack.c.l.b16 %v918
      %v940 = vunpack.c.h.b16 %v918
      %v941 = vunpack.c.l.b16 %v919
      %v942 = vunpack.c.h.b16 %v919
      %v943 = vunpack.c.l.b16 %v920
      %v944 = vunpack.c.h.b16 %v920
      %v945 = vunpack.c.l.b16 %v921
      %v946 = vunpack.c.h.b16 %v921
      %v947 = vunpack.c.l.b16 %v922
      %v948 = vunpack.c.h.b16 %v922
      %v949 = vunpack.c.l.b16 %v923
      %v950 = vunpack.c.h.b16 %v923
      %v951 = vunpack.c.l.b16 %v924
      %v952 = vunpack.c.h.b16 %v924
      %v953 = vunpack.c.l.b16 %v925
      %v954 = vunpack.c.h.b16 %v925
      %v955 = vpack.c.b16 %v941, %v939
      %v956 = vpack.c.b16 %v942, %v940
      %v957 = vpack.c.b16 %v945, %v943
      %v958 = vpack.c.b16 %v946, %v944
      %v959 = vpack.c.b16 %v949, %v947
      %v960 = vpack.c.b16 %v950, %v948
      %v961 = vpack.c.b16 %v953, %v951
      %v962 = vpack.c.b16 %v954, %v952
      %v972 = vsel %vm764, %v930, 0
      %v975 = vsel %vm764, %v929, 0
      %977 = vmatprep.subr.bf16.mxu0 %v956
      %978 = vmatpush1.bf16.msra.mxu0 %v955
      %979 = vmatprep.subr.bf16.mxu0 %v958
      %980 = vmatpush1.bf16.msra.mxu0 %v957
      %981 = vmatprep.subr.bf16.mxu0 %v960
      %982 = vmatpush1.bf16.msra.mxu0 %v959
      %983 = vmatprep.subr.bf16.mxu0 %v962
      %984 = vmatpush1.bf16.msra.mxu0 %v961
      %985 = vmatprep.subr.bf16.mxu0 0
      %986 = vmatpush1.bf16.msra.mxu0 0
      %987 = vmatprep.subr.bf16.mxu0 0
      %988 = vmatpush1.bf16.msra.mxu0 0
      %989 = vmatprep.subr.bf16.mxu0 0
      %990 = vmatpush1.bf16.msra.mxu0 0
      %991 = vmatprep.subr.bf16.mxu0 0
      %992 = vmatpush1.bf16.msra.mxu0 0
      %993 = vmatprep.subr.bf16.mxu0 0
      %994 = vmatpush1.bf16.msra.mxu0 0
      %995 = vmatprep.subr.bf16.mxu0 0
      %996 = vmatpush1.bf16.msra.mxu0 0
      %997 = vmatprep.subr.bf16.mxu0 0
      %998 = vmatpush1.bf16.msra.mxu0 0
      %999 = vmatprep.subr.bf16.mxu0 0
      %1000 = vmatpush1.bf16.msra.mxu0 0
      %1001 = vmatprep.subr.bf16.mxu0 0
      %1002 = vmatpush1.bf16.msra.mxu0 0
      %1003 = vmatprep.subr.bf16.mxu0 0
      %1004 = vmatpush1.bf16.msra.mxu0 0
      %1005 = vmatprep.subr.bf16.mxu0 0
      %1006 = vmatpush1.bf16.msra.mxu0 0
      %1007 = vmatprep.subr.bf16.mxu0 0
      %1008 = vmatpush1.bf16.msra.mxu0 0
      %1009 = vmatprep.mubr.bf16.mxu0 0
      %1010 = vmatmul.mubr.bf16.gmra.mrb[0].mxu0 %v972
      %v1011 = vpop.f32.mrb[0].mxu0
      %v1012 = vadd.f32 0.0, %v1011
      %v1013 = vpop.f32.mrb[0].mxu0
      %v1014 = vadd.f32 0.0, %v1013
      %v1015 = vpop.f32.mrb[0].mxu0
      %v1016 = vadd.f32 0.0, %v1015
      %v1017 = vpop.f32.mrb[0].mxu0
      %v1018 = vadd.f32 0.0, %v1017
      %1019 = vmatprep.mubr.bf16.mxu0 0
      %1020 = vmatmul.mubr.bf16.gmra.mrb[0].mxu0 %v975
      %v1021 = vpop.f32.mrb[0].mxu0
      %v1022 = vadd.f32 0.0, %v1021
      %v1023 = vpop.f32.mrb[0].mxu0
      %v1024 = vadd.f32 0.0, %v1023
      %v1025 = vpop.f32.mrb[0].mxu0
      %v1026 = vpop.f32.mrb[0].mxu0
      %1027 = vdwg.mxu0
      %v1028 = vadd.f32 %v901, %v1012
      %v1029 = vadd.f32 %v903, %v1014
      %v1030 = vadd.f32 %v905, %v1016
      %v1031 = vadd.f32 %v907, %v1018
      %v1032 = vadd.f32 %v911, %v1022
      %v1033 = vadd.f32 %v913, %v1024
      %v1034 = vld [vmem:[%s7] sm:$0x3]
      %v1036 = vlaneseq
      %v1037 = vshrl.u32 %v1036, 7
      %v1038 = vsub.s32 0, %v1037
      %v1039 = vrot.slane %v1034, %v1038
      %v1040 = vlaneseq
      %v1041 = vshrl.u32 %v1040, 7
      %v1042 = vsub.s32 1, %v1041
      %v1043 = vrot.slane %v1034, %v1042
      %v1046 = vmul.f32 %v1028, %v1039
      %v1047 = vmul.f32 %v1029, %v1043
      %v1048 = vmul.f32 %v1030, %v1039
      %v1049 = vmul.f32 %v1031, %v1043
      %v1050 = vmul.f32 %v1032, %v1039
      %v1051 = vmul.f32 %v1033, %v1043
      %v1052 = vld [vmem:[%s8] sm:$0x3]
      %v1054 = vlaneseq
      %v1055 = vshrl.u32 %v1054, 7
      %v1056 = vsub.s32 0, %v1055
      %v1057 = vrot.slane %v1052, %v1056
      %v1058 = vlaneseq
      %v1059 = vshrl.u32 %v1058, 7
      %v1060 = vsub.s32 1, %v1059
      %v1061 = vrot.slane %v1052, %v1060
      %v1064 = vadd.f32 %v1046, %v1057
      %v1065 = vadd.f32 %v1047, %v1061
      %v1066 = vadd.f32 %v1048, %v1057
      %v1067 = vadd.f32 %v1049, %v1061
      %v1068 = vadd.f32 %v1050, %v1057
      %v1069 = vadd.f32 %v1051, %v1061
      %1071 = vset.pattern.permute.xlu0 0
      %1072 = vperm.xlu0 %1071, %v687
      %v1073 = vpop.permute.xlu0 %1072
      %1076 = vset.pattern.permute.xlu0 0
      %1077 = vperm.xlu0 %1076, %v688
      %v1078 = vpop.permute.xlu0 %1077
      %1081 = vset.pattern.permute.xlu0 0
      %1082 = vperm.xlu0 %1081, %v689
      %v1083 = vpop.permute.xlu0 %1082
      %v1085 = vmul.f32 %v1064, %v1073
      %v1086 = vmul.f32 %v1065, %v1073
      %v1087 = vmul.f32 %v1066, %v1078
      %v1088 = vmul.f32 %v1067, %v1078
      %v1089 = vmul.f32 %v1068, %v1083
      %v1090 = vmul.f32 %v1069, %v1083
      %v1091 = vpack.c.bf16 %v1087, %v1085
      %v1092 = vpack.c.bf16 %v1088, %v1086
      %v1093 = vpack.c.bf16 %v1089, %v1089
      %v1094 = vpack.c.bf16 %v1090, %v1090
      %v1095 = vld [vmem:[%s9] sm:$0xff]
      %v1096 = vld [vmem:[%s9 + $0x8] sm:$0xff]
      %v1097 = vld [vmem:[%s9 + $0x10] sm:$0xff]
      %v1098 = vld [vmem:[%s9 + $0x18] sm:$0xff]
      %v1099 = vld [vmem:[%s9 + $0x20] sm:$0xff]
      %v1100 = vld [vmem:[%s9 + $0x28] sm:$0xff]
      %v1101 = vld [vmem:[%s9 + $0x30] sm:$0xff]
      %v1102 = vld [vmem:[%s9 + $0x38] sm:$0xff]
      %v1103 = vld [vmem:[%s9 + $0x40] sm:$0xff]
      %v1104 = vld [vmem:[%s9 + $0x48] sm:$0xff]
      %v1105 = vld [vmem:[%s9 + $0x50] sm:$0xff]
      %v1106 = vld [vmem:[%s9 + $0x58] sm:$0xff]
      %v1107 = vld [vmem:[%s9 + $0x60] sm:$0xff]
      %v1108 = vld [vmem:[%s9 + $0x68] sm:$0xff]
      %v1109 = vld [vmem:[%s9 + $0x70] sm:$0xff]
      %v1110 = vld [vmem:[%s9 + $0x78] sm:$0xff]
      %v1111 = vld [vmem:[%s9 + $0x80] sm:$0xff]
      %v1112 = vld [vmem:[%s9 + $0x88] sm:$0xff]
      %v1113 = vld [vmem:[%s9 + $0x90] sm:$0xff]
      %v1114 = vld [vmem:[%s9 + $0x98] sm:$0xff]
      %v1115 = vld [vmem:[%s9 + $0xa0] sm:$0xff]
      %v1116 = vld [vmem:[%s9 + $0xa8] sm:$0xff]
      %v1117 = vld [vmem:[%s9 + $0xb0] sm:$0xff]
      %v1118 = vld [vmem:[%s9 + $0xb8] sm:$0xff]
      %v1119 = vld [vmem:[%s9 + $0xc0] sm:$0xff]
      %v1120 = vld [vmem:[%s9 + $0xc8] sm:$0xff]
      %v1121 = vld [vmem:[%s9 + $0xd0] sm:$0xff]
      %v1122 = vld [vmem:[%s9 + $0xd8] sm:$0xff]
      %v1123 = vld [vmem:[%s9 + $0xe0] sm:$0xff]
      %v1124 = vld [vmem:[%s9 + $0xe8] sm:$0xff]
      %v1125 = vld [vmem:[%s9 + $0xf0] sm:$0xff]
      %v1126 = vld [vmem:[%s9 + $0xf8] sm:$0xff]
      %v1127 = vld [vmem:[%s9 + $0x100] sm:$0xff]
      %v1128 = vld [vmem:[%s9 + $0x108] sm:$0xff]
      %v1129 = vld [vmem:[%s9 + $0x110] sm:$0xff]
      %v1130 = vld [vmem:[%s9 + $0x118] sm:$0xff]
      %v1131 = vld [vmem:[%s9 + $0x120] sm:$0xff]
      %v1132 = vld [vmem:[%s9 + $0x128] sm:$0xff]
      %v1133 = vld [vmem:[%s9 + $0x130] sm:$0xff]
      %v1134 = vld [vmem:[%s9 + $0x138] sm:$0xff]
      %v1135 = vld [vmem:[%s9 + $0x140] sm:$0xff]
      %v1136 = vld [vmem:[%s9 + $0x148] sm:$0xff]
      %v1137 = vld [vmem:[%s9 + $0x150] sm:$0xff]
      %v1138 = vld [vmem:[%s9 + $0x158] sm:$0xff]
      %v1139 = vld [vmem:[%s9 + $0x160] sm:$0xff]
      %v1140 = vld [vmem:[%s9 + $0x168] sm:$0xff]
      %v1141 = vld [vmem:[%s9 + $0x170] sm:$0xff]
      %v1142 = vld [vmem:[%s9 + $0x178] sm:$0xff]
      %v1143 = vld [vmem:[%s9 + $0x180] sm:$0xff]
      %v1144 = vld [vmem:[%s9 + $0x188] sm:$0xff]
      %v1145 = vld [vmem:[%s9 + $0x190] sm:$0xff]
      %v1146 = vld [vmem:[%s9 + $0x198] sm:$0xff]
      %v1147 = vld [vmem:[%s9 + $0x1a0] sm:$0xff]
      %v1148 = vld [vmem:[%s9 + $0x1a8] sm:$0xff]
      %v1149 = vld [vmem:[%s9 + $0x1b0] sm:$0xff]
      %v1150 = vld [vmem:[%s9 + $0x1b8] sm:$0xff]
      %v1151 = vld [vmem:[%s9 + $0x1c0] sm:$0xff]
      %v1152 = vld [vmem:[%s9 + $0x1c8] sm:$0xff]
      %v1153 = vld [vmem:[%s9 + $0x1d0] sm:$0xff]
      %v1154 = vld [vmem:[%s9 + $0x1d8] sm:$0xff]
      %v1155 = vld [vmem:[%s9 + $0x1e0] sm:$0xff]
      %v1156 = vld [vmem:[%s9 + $0x1e8] sm:$0xff]
      %v1157 = vld [vmem:[%s9 + $0x1f0] sm:$0xff]
      %v1158 = vld [vmem:[%s9 + $0x1f8] sm:$0xff]
      %v1159 = vld [vmem:[%s9 + $0x200] sm:$0xff]
      %v1160 = vld [vmem:[%s9 + $0x208] sm:$0xff]
      %v1161 = vld [vmem:[%s9 + $0x210] sm:$0xff]
      %v1162 = vld [vmem:[%s9 + $0x218] sm:$0xff]
      %v1163 = vld [vmem:[%s9 + $0x220] sm:$0xff]
      %v1164 = vld [vmem:[%s9 + $0x228] sm:$0xff]
      %v1165 = vld [vmem:[%s9 + $0x230] sm:$0xff]
      %v1166 = vld [vmem:[%s9 + $0x238] sm:$0xff]
      %v1167 = vld [vmem:[%s9 + $0x240] sm:$0xff]
      %v1168 = vld [vmem:[%s9 + $0x248] sm:$0xff]
      %v1169 = vld [vmem:[%s9 + $0x250] sm:$0xff]
      %v1170 = vld [vmem:[%s9 + $0x258] sm:$0xff]
      %v1171 = vld [vmem:[%s9 + $0x260] sm:$0xff]
      %v1172 = vld [vmem:[%s9 + $0x268] sm:$0xff]
      %v1173 = vld [vmem:[%s9 + $0x270] sm:$0xff]
      %v1174 = vld [vmem:[%s9 + $0x278] sm:$0xff]
      %v1175 = vld [vmem:[%s9 + $0x280] sm:$0xff]
      %v1176 = vld [vmem:[%s9 + $0x288] sm:$0xff]
      %v1177 = vld [vmem:[%s9 + $0x290] sm:$0xff]
      %v1178 = vld [vmem:[%s9 + $0x298] sm:$0xff]
      %v1179 = vld [vmem:[%s9 + $0x2a0] sm:$0xff]
      %v1180 = vld [vmem:[%s9 + $0x2a8] sm:$0xff]
      %v1181 = vld [vmem:[%s9 + $0x2b0] sm:$0xff]
      %v1182 = vld [vmem:[%s9 + $0x2b8] sm:$0xff]
      %v1183 = vld [vmem:[%s9 + $0x2c0] sm:$0xff]
      %v1184 = vld [vmem:[%s9 + $0x2c8] sm:$0xff]
      %v1185 = vld [vmem:[%s9 + $0x2d0] sm:$0xff]
      %v1186 = vld [vmem:[%s9 + $0x2d8] sm:$0xff]
      %v1187 = vld [vmem:[%s9 + $0x2e0] sm:$0xff]
      %v1188 = vld [vmem:[%s9 + $0x2e8] sm:$0xff]
      %v1189 = vld [vmem:[%s9 + $0x2f0] sm:$0xff]
      %v1190 = vld [vmem:[%s9 + $0x2f8] sm:$0xff]
      %v1191 = vld [vmem:[%s9 + $0x300] sm:$0xff]
      %v1192 = vld [vmem:[%s9 + $0x308] sm:$0xff]
      %v1193 = vld [vmem:[%s9 + $0x310] sm:$0xff]
      %v1194 = vld [vmem:[%s9 + $0x318] sm:$0xff]
      %v1195 = vld [vmem:[%s9 + $0x320] sm:$0xff]
      %v1196 = vld [vmem:[%s9 + $0x328] sm:$0xff]
      %v1197 = vld [vmem:[%s9 + $0x330] sm:$0xff]
      %v1198 = vld [vmem:[%s9 + $0x338] sm:$0xff]
      %v1199 = vld [vmem:[%s9 + $0x340] sm:$0xff]
      %v1200 = vld [vmem:[%s9 + $0x348] sm:$0xff]
      %v1201 = vld [vmem:[%s9 + $0x350] sm:$0xff]
      %v1202 = vld [vmem:[%s9 + $0x358] sm:$0xff]
      %v1203 = vld [vmem:[%s9 + $0x360] sm:$0xff]
      %v1204 = vld [vmem:[%s9 + $0x368] sm:$0xff]
      %v1205 = vld [vmem:[%s9 + $0x370] sm:$0xff]
      %v1206 = vld [vmem:[%s9 + $0x378] sm:$0xff]
      %v1207 = vld [vmem:[%s9 + $0x380] sm:$0xff]
      %v1208 = vld [vmem:[%s9 + $0x388] sm:$0xff]
      %v1209 = vld [vmem:[%s9 + $0x390] sm:$0xff]
      %v1210 = vld [vmem:[%s9 + $0x398] sm:$0xff]
      %v1211 = vld [vmem:[%s9 + $0x3a0] sm:$0xff]
      %v1212 = vld [vmem:[%s9 + $0x3a8] sm:$0xff]
      %v1213 = vld [vmem:[%s9 + $0x3b0] sm:$0xff]
      %v1214 = vld [vmem:[%s9 + $0x3b8] sm:$0xff]
      %v1215 = vld [vmem:[%s9 + $0x3c0] sm:$0xff]
      %v1216 = vld [vmem:[%s9 + $0x3c8] sm:$0xff]
      %v1217 = vld [vmem:[%s9 + $0x3d0] sm:$0xff]
      %v1218 = vld [vmem:[%s9 + $0x3d8] sm:$0xff]
      %v1219 = vld [vmem:[%s9 + $0x3e0] sm:$0xff]
      %v1220 = vld [vmem:[%s9 + $0x3e8] sm:$0xff]
      %v1221 = vld [vmem:[%s9 + $0x3f0] sm:$0xff]
      %v1222 = vld [vmem:[%s9 + $0x3f8] sm:$0xff]
      %s1223 = scalar_lea.vmem %s9, 1024
      %v1224 = vld [vmem:[%s1223] sm:$0xff]
      %v1225 = vld [vmem:[%s1223 + $0x8] sm:$0xff]
      %v1226 = vld [vmem:[%s1223 + $0x10] sm:$0xff]
      %v1227 = vld [vmem:[%s1223 + $0x18] sm:$0xff]
      %v1228 = vld [vmem:[%s1223 + $0x20] sm:$0xff]
      %v1229 = vld [vmem:[%s1223 + $0x28] sm:$0xff]
      %v1230 = vld [vmem:[%s1223 + $0x30] sm:$0xff]
      %v1231 = vld [vmem:[%s1223 + $0x38] sm:$0xff]
      %v1232 = vld [vmem:[%s1223 + $0x40] sm:$0xff]
      %v1233 = vld [vmem:[%s1223 + $0x48] sm:$0xff]
      %v1234 = vld [vmem:[%s1223 + $0x50] sm:$0xff]
      %v1235 = vld [vmem:[%s1223 + $0x58] sm:$0xff]
      %v1236 = vld [vmem:[%s1223 + $0x60] sm:$0xff]
      %v1237 = vld [vmem:[%s1223 + $0x68] sm:$0xff]
      %v1238 = vld [vmem:[%s1223 + $0x70] sm:$0xff]
      %v1239 = vld [vmem:[%s1223 + $0x78] sm:$0xff]
      %v1240 = vld [vmem:[%s1223 + $0x80] sm:$0xff]
      %v1241 = vld [vmem:[%s1223 + $0x88] sm:$0xff]
      %v1242 = vld [vmem:[%s1223 + $0x90] sm:$0xff]
      %v1243 = vld [vmem:[%s1223 + $0x98] sm:$0xff]
      %v1244 = vld [vmem:[%s1223 + $0xa0] sm:$0xff]
      %v1245 = vld [vmem:[%s1223 + $0xa8] sm:$0xff]
      %v1246 = vld [vmem:[%s1223 + $0xb0] sm:$0xff]
      %v1247 = vld [vmem:[%s1223 + $0xb8] sm:$0xff]
      %v1248 = vld [vmem:[%s1223 + $0xc0] sm:$0xff]
      %v1249 = vld [vmem:[%s1223 + $0xc8] sm:$0xff]
      %v1250 = vld [vmem:[%s1223 + $0xd0] sm:$0xff]
      %v1251 = vld [vmem:[%s1223 + $0xd8] sm:$0xff]
      %v1252 = vld [vmem:[%s1223 + $0xe0] sm:$0xff]
      %v1253 = vld [vmem:[%s1223 + $0xe8] sm:$0xff]
      %v1254 = vld [vmem:[%s1223 + $0xf0] sm:$0xff]
      %v1255 = vld [vmem:[%s1223 + $0xf8] sm:$0xff]
      %v1256 = vld [vmem:[%s1223 + $0x100] sm:$0xff]
      %v1257 = vld [vmem:[%s1223 + $0x108] sm:$0xff]
      %v1258 = vld [vmem:[%s1223 + $0x110] sm:$0xff]
      %v1259 = vld [vmem:[%s1223 + $0x118] sm:$0xff]
      %v1260 = vld [vmem:[%s1223 + $0x120] sm:$0xff]
      %v1261 = vld [vmem:[%s1223 + $0x128] sm:$0xff]
      %v1262 = vld [vmem:[%s1223 + $0x130] sm:$0xff]
      %v1263 = vld [vmem:[%s1223 + $0x138] sm:$0xff]
      %v1264 = vld [vmem:[%s1223 + $0x140] sm:$0xff]
      %v1265 = vld [vmem:[%s1223 + $0x148] sm:$0xff]
      %v1266 = vld [vmem:[%s1223 + $0x150] sm:$0xff]
      %v1267 = vld [vmem:[%s1223 + $0x158] sm:$0xff]
      %v1268 = vld [vmem:[%s1223 + $0x160] sm:$0xff]
      %v1269 = vld [vmem:[%s1223 + $0x168] sm:$0xff]
      %v1270 = vld [vmem:[%s1223 + $0x170] sm:$0xff]
      %v1271 = vld [vmem:[%s1223 + $0x178] sm:$0xff]
      %v1272 = vld [vmem:[%s1223 + $0x180] sm:$0xff]
      %v1273 = vld [vmem:[%s1223 + $0x188] sm:$0xff]
      %v1274 = vld [vmem:[%s1223 + $0x190] sm:$0xff]
      %v1275 = vld [vmem:[%s1223 + $0x198] sm:$0xff]
      %v1276 = vld [vmem:[%s1223 + $0x1a0] sm:$0xff]
      %v1277 = vld [vmem:[%s1223 + $0x1a8] sm:$0xff]
      %v1278 = vld [vmem:[%s1223 + $0x1b0] sm:$0xff]
      %v1279 = vld [vmem:[%s1223 + $0x1b8] sm:$0xff]
      %v1280 = vld [vmem:[%s1223 + $0x1c0] sm:$0xff]
      %v1281 = vld [vmem:[%s1223 + $0x1c8] sm:$0xff]
      %v1282 = vld [vmem:[%s1223 + $0x1d0] sm:$0xff]
      %v1283 = vld [vmem:[%s1223 + $0x1d8] sm:$0xff]
      %v1284 = vld [vmem:[%s1223 + $0x1e0] sm:$0xff]
      %v1285 = vld [vmem:[%s1223 + $0x1e8] sm:$0xff]
      %v1286 = vld [vmem:[%s1223 + $0x1f0] sm:$0xff]
      %v1287 = vld [vmem:[%s1223 + $0x1f8] sm:$0xff]
      %v1288 = vld [vmem:[%s1223 + $0x200] sm:$0xff]
      %v1289 = vld [vmem:[%s1223 + $0x208] sm:$0xff]
      %v1290 = vld [vmem:[%s1223 + $0x210] sm:$0xff]
      %v1291 = vld [vmem:[%s1223 + $0x218] sm:$0xff]
      %v1292 = vld [vmem:[%s1223 + $0x220] sm:$0xff]
      %v1293 = vld [vmem:[%s1223 + $0x228] sm:$0xff]
      %v1294 = vld [vmem:[%s1223 + $0x230] sm:$0xff]
      %v1295 = vld [vmem:[%s1223 + $0x238] sm:$0xff]
      %v1296 = vld [vmem:[%s1223 + $0x240] sm:$0xff]
      %v1297 = vld [vmem:[%s1223 + $0x248] sm:$0xff]
      %v1298 = vld [vmem:[%s1223 + $0x250] sm:$0xff]
      %v1299 = vld [vmem:[%s1223 + $0x258] sm:$0xff]
      %v1300 = vld [vmem:[%s1223 + $0x260] sm:$0xff]
      %v1301 = vld [vmem:[%s1223 + $0x268] sm:$0xff]
      %v1302 = vld [vmem:[%s1223 + $0x270] sm:$0xff]
      %v1303 = vld [vmem:[%s1223 + $0x278] sm:$0xff]
      %v1304 = vld [vmem:[%s1223 + $0x280] sm:$0xff]
      %v1305 = vld [vmem:[%s1223 + $0x288] sm:$0xff]
      %v1306 = vld [vmem:[%s1223 + $0x290] sm:$0xff]
      %v1307 = vld [vmem:[%s1223 + $0x298] sm:$0xff]
      %v1308 = vld [vmem:[%s1223 + $0x2a0] sm:$0xff]
      %v1309 = vld [vmem:[%s1223 + $0x2a8] sm:$0xff]
      %v1310 = vld [vmem:[%s1223 + $0x2b0] sm:$0xff]
      %v1311 = vld [vmem:[%s1223 + $0x2b8] sm:$0xff]
      %v1312 = vld [vmem:[%s1223 + $0x2c0] sm:$0xff]
      %v1313 = vld [vmem:[%s1223 + $0x2c8] sm:$0xff]
      %v1314 = vld [vmem:[%s1223 + $0x2d0] sm:$0xff]
      %v1315 = vld [vmem:[%s1223 + $0x2d8] sm:$0xff]
      %v1316 = vld [vmem:[%s1223 + $0x2e0] sm:$0xff]
      %v1317 = vld [vmem:[%s1223 + $0x2e8] sm:$0xff]
      %v1318 = vld [vmem:[%s1223 + $0x2f0] sm:$0xff]
      %v1319 = vld [vmem:[%s1223 + $0x2f8] sm:$0xff]
      %v1320 = vld [vmem:[%s1223 + $0x300] sm:$0xff]
      %v1321 = vld [vmem:[%s1223 + $0x308] sm:$0xff]
      %v1322 = vld [vmem:[%s1223 + $0x310] sm:$0xff]
      %v1323 = vld [vmem:[%s1223 + $0x318] sm:$0xff]
      %v1324 = vld [vmem:[%s1223 + $0x320] sm:$0xff]
      %v1325 = vld [vmem:[%s1223 + $0x328] sm:$0xff]
      %v1326 = vld [vmem:[%s1223 + $0x330] sm:$0xff]
      %v1327 = vld [vmem:[%s1223 + $0x338] sm:$0xff]
      %v1328 = vld [vmem:[%s1223 + $0x340] sm:$0xff]
      %v1329 = vld [vmem:[%s1223 + $0x348] sm:$0xff]
      %v1330 = vld [vmem:[%s1223 + $0x350] sm:$0xff]
      %v1331 = vld [vmem:[%s1223 + $0x358] sm:$0xff]
      %v1332 = vld [vmem:[%s1223 + $0x360] sm:$0xff]
      %v1333 = vld [vmem:[%s1223 + $0x368] sm:$0xff]
      %v1334 = vld [vmem:[%s1223 + $0x370] sm:$0xff]
      %v1335 = vld [vmem:[%s1223 + $0x378] sm:$0xff]
      %v1336 = vld [vmem:[%s1223 + $0x380] sm:$0xff]
      %v1337 = vld [vmem:[%s1223 + $0x388] sm:$0xff]
      %v1338 = vld [vmem:[%s1223 + $0x390] sm:$0xff]
      %v1339 = vld [vmem:[%s1223 + $0x398] sm:$0xff]
      %v1340 = vld [vmem:[%s1223 + $0x3a0] sm:$0xff]
      %v1341 = vld [vmem:[%s1223 + $0x3a8] sm:$0xff]
      %v1342 = vld [vmem:[%s1223 + $0x3b0] sm:$0xff]
      %v1343 = vld [vmem:[%s1223 + $0x3b8] sm:$0xff]
      %v1344 = vld [vmem:[%s1223 + $0x3c0] sm:$0xff]
      %v1345 = vld [vmem:[%s1223 + $0x3c8] sm:$0xff]
      %v1346 = vld [vmem:[%s1223 + $0x3d0] sm:$0xff]
      %v1347 = vld [vmem:[%s1223 + $0x3d8] sm:$0xff]
      %v1348 = vld [vmem:[%s1223 + $0x3e0] sm:$0xff]
      %v1349 = vld [vmem:[%s1223 + $0x3e8] sm:$0xff]
      %v1350 = vld [vmem:[%s1223 + $0x3f0] sm:$0xff]
      %v1351 = vld [vmem:[%s1223 + $0x3f8] sm:$0xff]
      %v1353 = vshrl.u32 %v1091, 16
      %v1355 = vshll.u32 %v1091, 16
      %v1357 = vrot.slane %v1355, 1
      %v1358 = vor.u32 %v1353, %v1357
      %v1360 = vshll.u32 %v1093, 16
      %v1362 = vrot.slane %v1360, 1
      %v1363 = vsel %vm433, %v1358, %v1362
      %v1365 = vshrl.u32 %v1092, 16
      %v1367 = vshll.u32 %v1092, 16
      %v1369 = vrot.slane %v1367, 1
      %v1370 = vor.u32 %v1365, %v1369
      %v1372 = vshll.u32 %v1094, 16
      %v1374 = vrot.slane %v1372, 1
      %v1375 = vsel %vm433, %v1370, %v1374
      %v1376 = vshrl.u32 %v1093, 16
      %v1378 = vor.u32 %v1376, %v1362
      %v1379 = vshrl.u32 %v1094, 16
      %v1381 = vor.u32 %v1379, %v1374
      %v1514 = vunpack.c.l.b16 %v1224
      %v1515 = vunpack.c.h.b16 %v1224
      %v1516 = vunpack.c.l.b16 %v1225
      %v1517 = vunpack.c.h.b16 %v1225
      %v1518 = vunpack.c.l.b16 %v1226
      %v1519 = vunpack.c.h.b16 %v1226
      %v1520 = vunpack.c.l.b16 %v1227
      %v1521 = vunpack.c.h.b16 %v1227
      %v1522 = vunpack.c.l.b16 %v1228
      %v1523 = vunpack.c.h.b16 %v1228
      %v1524 = vunpack.c.l.b16 %v1229
      %v1525 = vunpack.c.h.b16 %v1229
      %v1526 = vunpack.c.l.b16 %v1230
      %v1527 = vunpack.c.h.b16 %v1230
      %v1528 = vunpack.c.l.b16 %v1231
      %v1529 = vunpack.c.h.b16 %v1231
      %v1530 = vunpack.c.l.b16 %v1232
      %v1531 = vunpack.c.h.b16 %v1232
      %v1532 = vunpack.c.l.b16 %v1233
      %v1533 = vunpack.c.h.b16 %v1233
      %v1534 = vunpack.c.l.b16 %v1234
      %v1535 = vunpack.c.h.b16 %v1234
      %v1536 = vunpack.c.l.b16 %v1235
      %v1537 = vunpack.c.h.b16 %v1235
      %v1538 = vunpack.c.l.b16 %v1236
      %v1539 = vunpack.c.h.b16 %v1236
      %v1540 = vunpack.c.l.b16 %v1237
      %v1541 = vunpack.c.h.b16 %v1237
      %v1542 = vunpack.c.l.b16 %v1238
      %v1543 = vunpack.c.h.b16 %v1238
      %v1544 = vunpack.c.l.b16 %v1239
      %v1545 = vunpack.c.h.b16 %v1239
      %v1546 = vunpack.c.l.b16 %v1240
      %v1547 = vunpack.c.h.b16 %v1240
      %v1548 = vunpack.c.l.b16 %v1241
      %v1549 = vunpack.c.h.b16 %v1241
      %v1550 = vunpack.c.l.b16 %v1242
      %v1551 = vunpack.c.h.b16 %v1242
      %v1552 = vunpack.c.l.b16 %v1243
      %v1553 = vunpack.c.h.b16 %v1243
      %v1554 = vunpack.c.l.b16 %v1244
      %v1555 = vunpack.c.h.b16 %v1244
      %v1556 = vunpack.c.l.b16 %v1245
      %v1557 = vunpack.c.h.b16 %v1245
      %v1558 = vunpack.c.l.b16 %v1246
      %v1559 = vunpack.c.h.b16 %v1246
      %v1560 = vunpack.c.l.b16 %v1247
      %v1561 = vunpack.c.h.b16 %v1247
      %v1562 = vunpack.c.l.b16 %v1248
      %v1563 = vunpack.c.h.b16 %v1248
      %v1564 = vunpack.c.l.b16 %v1249
      %v1565 = vunpack.c.h.b16 %v1249
      %v1566 = vunpack.c.l.b16 %v1250
      %v1567 = vunpack.c.h.b16 %v1250
      %v1568 = vunpack.c.l.b16 %v1251
      %v1569 = vunpack.c.h.b16 %v1251
      %v1570 = vunpack.c.l.b16 %v1252
      %v1571 = vunpack.c.h.b16 %v1252
      %v1572 = vunpack.c.l.b16 %v1253
      %v1573 = vunpack.c.h.b16 %v1253
      %v1574 = vunpack.c.l.b16 %v1254
      %v1575 = vunpack.c.h.b16 %v1254
      %v1576 = vunpack.c.l.b16 %v1255
      %v1577 = vunpack.c.h.b16 %v1255
      %v1578 = vunpack.c.l.b16 %v1256
      %v1579 = vunpack.c.h.b16 %v1256
      %v1580 = vunpack.c.l.b16 %v1257
      %v1581 = vunpack.c.h.b16 %v1257
      %v1582 = vunpack.c.l.b16 %v1258
      %v1583 = vunpack.c.h.b16 %v1258
      %v1584 = vunpack.c.l.b16 %v1259
      %v1585 = vunpack.c.h.b16 %v1259
      %v1586 = vunpack.c.l.b16 %v1260
      %v1587 = vunpack.c.h.b16 %v1260
      %v1588 = vunpack.c.l.b16 %v1261
      %v1589 = vunpack.c.h.b16 %v1261
      %v1590 = vunpack.c.l.b16 %v1262
      %v1591 = vunpack.c.h.b16 %v1262
      %v1592 = vunpack.c.l.b16 %v1263
      %v1593 = vunpack.c.h.b16 %v1263
      %v1594 = vunpack.c.l.b16 %v1264
      %v1595 = vunpack.c.h.b16 %v1264
      %v1596 = vunpack.c.l.b16 %v1265
      %v1597 = vunpack.c.h.b16 %v1265
      %v1598 = vunpack.c.l.b16 %v1266
      %v1599 = vunpack.c.h.b16 %v1266
      %v1600 = vunpack.c.l.b16 %v1267
      %v1601 = vunpack.c.h.b16 %v1267
      %v1602 = vunpack.c.l.b16 %v1268
      %v1603 = vunpack.c.h.b16 %v1268
      %v1604 = vunpack.c.l.b16 %v1269
      %v1605 = vunpack.c.h.b16 %v1269
      %v1606 = vunpack.c.l.b16 %v1270
      %v1607 = vunpack.c.h.b16 %v1270
      %v1608 = vunpack.c.l.b16 %v1271
      %v1609 = vunpack.c.h.b16 %v1271
      %v1610 = vunpack.c.l.b16 %v1272
      %v1611 = vunpack.c.h.b16 %v1272
      %v1612 = vunpack.c.l.b16 %v1273
      %v1613 = vunpack.c.h.b16 %v1273
      %v1614 = vunpack.c.l.b16 %v1274
      %v1615 = vunpack.c.h.b16 %v1274
      %v1616 = vunpack.c.l.b16 %v1275
      %v1617 = vunpack.c.h.b16 %v1275
      %v1618 = vunpack.c.l.b16 %v1276
      %v1619 = vunpack.c.h.b16 %v1276
      %v1620 = vunpack.c.l.b16 %v1277
      %v1621 = vunpack.c.h.b16 %v1277
      %v1622 = vunpack.c.l.b16 %v1278
      %v1623 = vunpack.c.h.b16 %v1278
      %v1624 = vunpack.c.l.b16 %v1279
      %v1625 = vunpack.c.h.b16 %v1279
      %v1626 = vunpack.c.l.b16 %v1280
      %v1627 = vunpack.c.h.b16 %v1280
      %v1628 = vunpack.c.l.b16 %v1281
      %v1629 = vunpack.c.h.b16 %v1281
      %v1630 = vunpack.c.l.b16 %v1282
      %v1631 = vunpack.c.h.b16 %v1282
      %v1632 = vunpack.c.l.b16 %v1283
      %v1633 = vunpack.c.h.b16 %v1283
      %v1634 = vunpack.c.l.b16 %v1284
      %v1635 = vunpack.c.h.b16 %v1284
      %v1636 = vunpack.c.l.b16 %v1285
      %v1637 = vunpack.c.h.b16 %v1285
      %v1638 = vunpack.c.l.b16 %v1286
      %v1639 = vunpack.c.h.b16 %v1286
      %v1640 = vunpack.c.l.b16 %v1287
      %v1641 = vunpack.c.h.b16 %v1287
      %v1642 = vunpack.c.l.b16 %v1288
      %v1643 = vunpack.c.h.b16 %v1288
      %v1644 = vunpack.c.l.b16 %v1289
      %v1645 = vunpack.c.h.b16 %v1289
      %v1646 = vunpack.c.l.b16 %v1290
      %v1647 = vunpack.c.h.b16 %v1290
      %v1648 = vunpack.c.l.b16 %v1291
      %v1649 = vunpack.c.h.b16 %v1291
      %v1650 = vunpack.c.l.b16 %v1292
      %v1651 = vunpack.c.h.b16 %v1292
      %v1652 = vunpack.c.l.b16 %v1293
      %v1653 = vunpack.c.h.b16 %v1293
      %v1654 = vunpack.c.l.b16 %v1294
      %v1655 = vunpack.c.h.b16 %v1294
      %v1656 = vunpack.c.l.b16 %v1295
      %v1657 = vunpack.c.h.b16 %v1295
      %v1658 = vunpack.c.l.b16 %v1296
      %v1659 = vunpack.c.h.b16 %v1296
      %v1660 = vunpack.c.l.b16 %v1297
      %v1661 = vunpack.c.h.b16 %v1297
      %v1662 = vunpack.c.l.b16 %v1298
      %v1663 = vunpack.c.h.b16 %v1298
      %v1664 = vunpack.c.l.b16 %v1299
      %v1665 = vunpack.c.h.b16 %v1299
      %v1666 = vunpack.c.l.b16 %v1300
      %v1667 = vunpack.c.h.b16 %v1300
      %v1668 = vunpack.c.l.b16 %v1301
      %v1669 = vunpack.c.h.b16 %v1301
      %v1670 = vunpack.c.l.b16 %v1302
      %v1671 = vunpack.c.h.b16 %v1302
      %v1672 = vunpack.c.l.b16 %v1303
      %v1673 = vunpack.c.h.b16 %v1303
      %v1674 = vunpack.c.l.b16 %v1304
      %v1675 = vunpack.c.h.b16 %v1304
      %v1676 = vunpack.c.l.b16 %v1305
      %v1677 = vunpack.c.h.b16 %v1305
      %v1678 = vunpack.c.l.b16 %v1306
      %v1679 = vunpack.c.h.b16 %v1306
      %v1680 = vunpack.c.l.b16 %v1307
      %v1681 = vunpack.c.h.b16 %v1307
      %v1682 = vunpack.c.l.b16 %v1308
      %v1683 = vunpack.c.h.b16 %v1308
      %v1684 = vunpack.c.l.b16 %v1309
      %v1685 = vunpack.c.h.b16 %v1309
      %v1686 = vunpack.c.l.b16 %v1310
      %v1687 = vunpack.c.h.b16 %v1310
      %v1688 = vunpack.c.l.b16 %v1311
      %v1689 = vunpack.c.h.b16 %v1311
      %v1690 = vunpack.c.l.b16 %v1312
      %v1691 = vunpack.c.h.b16 %v1312
      %v1692 = vunpack.c.l.b16 %v1313
      %v1693 = vunpack.c.h.b16 %v1313
      %v1694 = vunpack.c.l.b16 %v1314
      %v1695 = vunpack.c.h.b16 %v1314
      %v1696 = vunpack.c.l.b16 %v1315
      %v1697 = vunpack.c.h.b16 %v1315
      %v1698 = vunpack.c.l.b16 %v1316
      %v1699 = vunpack.c.h.b16 %v1316
      %v1700 = vunpack.c.l.b16 %v1317
      %v1701 = vunpack.c.h.b16 %v1317
      %v1702 = vunpack.c.l.b16 %v1318
      %v1703 = vunpack.c.h.b16 %v1318
      %v1704 = vunpack.c.l.b16 %v1319
      %v1705 = vunpack.c.h.b16 %v1319
      %v1706 = vunpack.c.l.b16 %v1320
      %v1707 = vunpack.c.h.b16 %v1320
      %v1708 = vunpack.c.l.b16 %v1321
      %v1709 = vunpack.c.h.b16 %v1321
      %v1710 = vunpack.c.l.b16 %v1322
      %v1711 = vunpack.c.h.b16 %v1322
      %v1712 = vunpack.c.l.b16 %v1323
      %v1713 = vunpack.c.h.b16 %v1323
      %v1714 = vunpack.c.l.b16 %v1324
      %v1715 = vunpack.c.h.b16 %v1324
      %v1716 = vunpack.c.l.b16 %v1325
      %v1717 = vunpack.c.h.b16 %v1325
      %v1718 = vunpack.c.l.b16 %v1326
      %v1719 = vunpack.c.h.b16 %v1326
      %v1720 = vunpack.c.l.b16 %v1327
      %v1721 = vunpack.c.h.b16 %v1327
      %v1722 = vunpack.c.l.b16 %v1328
      %v1723 = vunpack.c.h.b16 %v1328
      %v1724 = vunpack.c.l.b16 %v1329
      %v1725 = vunpack.c.h.b16 %v1329
      %v1726 = vunpack.c.l.b16 %v1330
      %v1727 = vunpack.c.h.b16 %v1330
      %v1728 = vunpack.c.l.b16 %v1331
      %v1729 = vunpack.c.h.b16 %v1331
      %v1730 = vunpack.c.l.b16 %v1332
      %v1731 = vunpack.c.h.b16 %v1332
      %v1732 = vunpack.c.l.b16 %v1333
      %v1733 = vunpack.c.h.b16 %v1333
      %v1734 = vunpack.c.l.b16 %v1334
      %v1735 = vunpack.c.h.b16 %v1334
      %v1736 = vunpack.c.l.b16 %v1335
      %v1737 = vunpack.c.h.b16 %v1335
      %v1738 = vunpack.c.l.b16 %v1336
      %v1739 = vunpack.c.h.b16 %v1336
      %v1740 = vunpack.c.l.b16 %v1337
      %v1741 = vunpack.c.h.b16 %v1337
      %v1742 = vunpack.c.l.b16 %v1338
      %v1743 = vunpack.c.h.b16 %v1338
      %v1744 = vunpack.c.l.b16 %v1339
      %v1745 = vunpack.c.h.b16 %v1339
      %v1746 = vunpack.c.l.b16 %v1340
      %v1747 = vunpack.c.h.b16 %v1340
      %v1748 = vunpack.c.l.b16 %v1341
      %v1749 = vunpack.c.h.b16 %v1341
      %v1750 = vunpack.c.l.b16 %v1342
      %v1751 = vunpack.c.h.b16 %v1342
      %v1752 = vunpack.c.l.b16 %v1343
      %v1753 = vunpack.c.h.b16 %v1343
      %v1754 = vunpack.c.l.b16 %v1344
      %v1755 = vunpack.c.h.b16 %v1344
      %v1756 = vunpack.c.l.b16 %v1345
      %v1757 = vunpack.c.h.b16 %v1345
      %v1758 = vunpack.c.l.b16 %v1346
      %v1759 = vunpack.c.h.b16 %v1346
      %v1760 = vunpack.c.l.b16 %v1347
      %v1761 = vunpack.c.h.b16 %v1347
      %v1762 = vunpack.c.l.b16 %v1348
      %v1763 = vunpack.c.h.b16 %v1348
      %v1764 = vunpack.c.l.b16 %v1349
      %v1765 = vunpack.c.h.b16 %v1349
      %v1766 = vunpack.c.l.b16 %v1350
      %v1767 = vunpack.c.h.b16 %v1350
      %v1768 = vunpack.c.l.b16 %v1351
      %v1769 = vunpack.c.h.b16 %v1351
      %v1770 = vpack.c.b16 %v1522, %v1514
      %v1771 = vpack.c.b16 %v1523, %v1515
      %v1772 = vpack.c.b16 %v1524, %v1516
      %v1773 = vpack.c.b16 %v1525, %v1517
      %v1774 = vpack.c.b16 %v1526, %v1518
      %v1775 = vpack.c.b16 %v1527, %v1519
      %v1776 = vpack.c.b16 %v1528, %v1520
      %v1777 = vpack.c.b16 %v1529, %v1521
      %v1778 = vpack.c.b16 %v1538, %v1530
      %v1779 = vpack.c.b16 %v1539, %v1531
      %v1780 = vpack.c.b16 %v1540, %v1532
      %v1781 = vpack.c.b16 %v1541, %v1533
      %v1782 = vpack.c.b16 %v1542, %v1534
      %v1783 = vpack.c.b16 %v1543, %v1535
      %v1784 = vpack.c.b16 %v1544, %v1536
      %v1785 = vpack.c.b16 %v1545, %v1537
      %v1786 = vpack.c.b16 %v1554, %v1546
      %v1787 = vpack.c.b16 %v1555, %v1547
      %v1788 = vpack.c.b16 %v1556, %v1548
      %v1789 = vpack.c.b16 %v1557, %v1549
      %v1790 = vpack.c.b16 %v1558, %v1550
      %v1791 = vpack.c.b16 %v1559, %v1551
      %v1792 = vpack.c.b16 %v1560, %v1552
      %v1793 = vpack.c.b16 %v1561, %v1553
      %v1794 = vpack.c.b16 %v1570, %v1562
      %v1795 = vpack.c.b16 %v1571, %v1563
      %v1796 = vpack.c.b16 %v1572, %v1564
      %v1797 = vpack.c.b16 %v1573, %v1565
      %v1798 = vpack.c.b16 %v1574, %v1566
      %v1799 = vpack.c.b16 %v1575, %v1567
      %v1800 = vpack.c.b16 %v1576, %v1568
      %v1801 = vpack.c.b16 %v1577, %v1569
      %v1802 = vpack.c.b16 %v1586, %v1578
      %v1803 = vpack.c.b16 %v1587, %v1579
      %v1804 = vpack.c.b16 %v1588, %v1580
      %v1805 = vpack.c.b16 %v1589, %v1581
      %v1806 = vpack.c.b16 %v1590, %v1582
      %v1807 = vpack.c.b16 %v1591, %v1583
      %v1808 = vpack.c.b16 %v1592, %v1584
      %v1809 = vpack.c.b16 %v1593, %v1585
      %v1810 = vpack.c.b16 %v1602, %v1594
      %v1811 = vpack.c.b16 %v1603, %v1595
      %v1812 = vpack.c.b16 %v1604, %v1596
      %v1813 = vpack.c.b16 %v1605, %v1597
      %v1814 = vpack.c.b16 %v1606, %v1598
      %v1815 = vpack.c.b16 %v1607, %v1599
      %v1816 = vpack.c.b16 %v1608, %v1600
      %v1817 = vpack.c.b16 %v1609, %v1601
      %v1818 = vpack.c.b16 %v1618, %v1610
      %v1819 = vpack.c.b16 %v1619, %v1611
      %v1820 = vpack.c.b16 %v1620, %v1612
      %v1821 = vpack.c.b16 %v1621, %v1613
      %v1822 = vpack.c.b16 %v1622, %v1614
      %v1823 = vpack.c.b16 %v1623, %v1615
      %v1824 = vpack.c.b16 %v1624, %v1616
      %v1825 = vpack.c.b16 %v1625, %v1617
      %v1826 = vpack.c.b16 %v1634, %v1626
      %v1827 = vpack.c.b16 %v1635, %v1627
      %v1828 = vpack.c.b16 %v1636, %v1628
      %v1829 = vpack.c.b16 %v1637, %v1629
      %v1830 = vpack.c.b16 %v1638, %v1630
      %v1831 = vpack.c.b16 %v1639, %v1631
      %v1832 = vpack.c.b16 %v1640, %v1632
      %v1833 = vpack.c.b16 %v1641, %v1633
      %v1834 = vpack.c.b16 %v1650, %v1642
      %v1835 = vpack.c.b16 %v1651, %v1643
      %v1836 = vpack.c.b16 %v1652, %v1644
      %v1837 = vpack.c.b16 %v1653, %v1645
      %v1838 = vpack.c.b16 %v1654, %v1646
      %v1839 = vpack.c.b16 %v1655, %v1647
      %v1840 = vpack.c.b16 %v1656, %v1648
      %v1841 = vpack.c.b16 %v1657, %v1649
      %v1842 = vpack.c.b16 %v1666, %v1658
      %v1843 = vpack.c.b16 %v1667, %v1659
      %v1844 = vpack.c.b16 %v1668, %v1660
      %v1845 = vpack.c.b16 %v1669, %v1661
      %v1846 = vpack.c.b16 %v1670, %v1662
      %v1847 = vpack.c.b16 %v1671, %v1663
      %v1848 = vpack.c.b16 %v1672, %v1664
      %v1849 = vpack.c.b16 %v1673, %v1665
      %v1850 = vpack.c.b16 %v1682, %v1674
      %v1851 = vpack.c.b16 %v1683, %v1675
      %v1852 = vpack.c.b16 %v1684, %v1676
      %v1853 = vpack.c.b16 %v1685, %v1677
      %v1854 = vpack.c.b16 %v1686, %v1678
      %v1855 = vpack.c.b16 %v1687, %v1679
      %v1856 = vpack.c.b16 %v1688, %v1680
      %v1857 = vpack.c.b16 %v1689, %v1681
      %v1858 = vpack.c.b16 %v1698, %v1690
      %v1859 = vpack.c.b16 %v1699, %v1691
      %v1860 = vpack.c.b16 %v1700, %v1692
      %v1861 = vpack.c.b16 %v1701, %v1693
      %v1862 = vpack.c.b16 %v1702, %v1694
      %v1863 = vpack.c.b16 %v1703, %v1695
      %v1864 = vpack.c.b16 %v1704, %v1696
      %v1865 = vpack.c.b16 %v1705, %v1697
      %v1866 = vpack.c.b16 %v1714, %v1706
      %v1867 = vpack.c.b16 %v1715, %v1707
      %v1868 = vpack.c.b16 %v1716, %v1708
      %v1869 = vpack.c.b16 %v1717, %v1709
      %v1870 = vpack.c.b16 %v1718, %v1710
      %v1871 = vpack.c.b16 %v1719, %v1711
      %v1872 = vpack.c.b16 %v1720, %v1712
      %v1873 = vpack.c.b16 %v1721, %v1713
      %v1874 = vpack.c.b16 %v1730, %v1722
      %v1875 = vpack.c.b16 %v1731, %v1723
      %v1876 = vpack.c.b16 %v1732, %v1724
      %v1877 = vpack.c.b16 %v1733, %v1725
      %v1878 = vpack.c.b16 %v1734, %v1726
      %v1879 = vpack.c.b16 %v1735, %v1727
      %v1880 = vpack.c.b16 %v1736, %v1728
      %v1881 = vpack.c.b16 %v1737, %v1729
      %v1882 = vpack.c.b16 %v1746, %v1738
      %v1883 = vpack.c.b16 %v1747, %v1739
      %v1884 = vpack.c.b16 %v1748, %v1740
      %v1885 = vpack.c.b16 %v1749, %v1741
      %v1886 = vpack.c.b16 %v1750, %v1742
      %v1887 = vpack.c.b16 %v1751, %v1743
      %v1888 = vpack.c.b16 %v1752, %v1744
      %v1889 = vpack.c.b16 %v1753, %v1745
      %v1890 = vpack.c.b16 %v1762, %v1754
      %v1891 = vpack.c.b16 %v1763, %v1755
      %v1892 = vpack.c.b16 %v1764, %v1756
      %v1893 = vpack.c.b16 %v1765, %v1757
      %v1894 = vpack.c.b16 %v1766, %v1758
      %v1895 = vpack.c.b16 %v1767, %v1759
      %v1896 = vpack.c.b16 %v1768, %v1760
      %v1897 = vpack.c.b16 %v1769, %v1761
      %2026 = vmatprep.subr.bf16.mxu0 %v1771
      %2027 = vmatpush1.bf16.msra.mxu0 %v1770
      %2028 = vmatprep.subr.bf16.mxu0 %v1779
      %2029 = vmatpush1.bf16.msra.mxu0 %v1778
      %2030 = vmatprep.subr.bf16.mxu0 %v1787
      %2031 = vmatpush1.bf16.msra.mxu0 %v1786
      %2032 = vmatprep.subr.bf16.mxu0 %v1795
      %2033 = vmatpush1.bf16.msra.mxu0 %v1794
      %2034 = vmatprep.subr.bf16.mxu0 %v1803
      %2035 = vmatpush1.bf16.msra.mxu0 %v1802
      %2036 = vmatprep.subr.bf16.mxu0 %v1811
      %2037 = vmatpush1.bf16.msra.mxu0 %v1810
      %2038 = vmatprep.subr.bf16.mxu0 %v1819
      %2039 = vmatpush1.bf16.msra.mxu0 %v1818
      %2040 = vmatprep.subr.bf16.mxu0 %v1827
      %2041 = vmatpush1.bf16.msra.mxu0 %v1826
      %2042 = vmatprep.subr.bf16.mxu0 %v1835
      %2043 = vmatpush1.bf16.msra.mxu0 %v1834
      %2044 = vmatprep.subr.bf16.mxu0 %v1843
      %2045 = vmatpush1.bf16.msra.mxu0 %v1842
      %2046 = vmatprep.subr.bf16.mxu0 %v1851
      %2047 = vmatpush1.bf16.msra.mxu0 %v1850
      %2048 = vmatprep.subr.bf16.mxu0 %v1859
      %2049 = vmatpush1.bf16.msra.mxu0 %v1858
      %2050 = vmatprep.subr.bf16.mxu0 %v1867
      %2051 = vmatpush1.bf16.msra.mxu0 %v1866
      %2052 = vmatprep.subr.bf16.mxu0 %v1875
      %2053 = vmatpush1.bf16.msra.mxu0 %v1874
      %2054 = vmatprep.subr.bf16.mxu0 %v1883
      %2055 = vmatpush1.bf16.msra.mxu0 %v1882
      %2056 = vmatprep.subr.bf16.mxu0 %v1891
      %2057 = vmatpush1.bf16.msra.mxu0 %v1890
      %2058 = vmatprep.mubr.bf16.mxu0 %v1375
      %2059 = vmatmul.mubr.bf16.gmra.mrb[0].mxu0 %v1363
      %v2060 = vpop.f32.mrb[0].mxu0
      %v2061 = vadd.f32 0.0, %v2060
      %v2062 = vpop.f32.mrb[0].mxu0
      %v2063 = vadd.f32 0.0, %v2062
      %v2064 = vpop.f32.mrb[0].mxu0
      %v2065 = vadd.f32 0.0, %v2064
      %v2066 = vpop.f32.mrb[0].mxu0
      %v2067 = vadd.f32 0.0, %v2066
      %2068 = vmatprep.mubr.bf16.mxu0 %v1381
      %2069 = vmatmul.mubr.bf16.gmra.mrb[0].mxu0 %v1378
      %v2070 = vpop.f32.mrb[0].mxu0
      %v2071 = vpop.f32.mrb[0].mxu0
      %v2072 = vpop.f32.mrb[0].mxu0
      %v2073 = vpop.f32.mrb[0].mxu0
      %2074 = vdwg.mxu0
      %2075 = vmatprep.subr.bf16.mxu0 %v1773
      %2076 = vmatpush1.bf16.msra.mxu0 %v1772
      %2077 = vmatprep.subr.bf16.mxu0 %v1781
      %2078 = vmatpush1.bf16.msra.mxu0 %v1780
      %2079 = vmatprep.subr.bf16.mxu0 %v1789
      %2080 = vmatpush1.bf16.msra.mxu0 %v1788
      %2081 = vmatprep.subr.bf16.mxu0 %v1797
      %2082 = vmatpush1.bf16.msra.mxu0 %v1796
      %2083 = vmatprep.subr.bf16.mxu0 %v1805
      %2084 = vmatpush1.bf16.msra.mxu0 %v1804
      %2085 = vmatprep.subr.bf16.mxu0 %v1813
      %2086 = vmatpush1.bf16.msra.mxu0 %v1812
      %2087 = vmatprep.subr.bf16.mxu0 %v1821
      %2088 = vmatpush1.bf16.msra.mxu0 %v1820
      %2089 = vmatprep.subr.bf16.mxu0 %v1829
      %2090 = vmatpush1.bf16.msra.mxu0 %v1828
      %2091 = vmatprep.subr.bf16.mxu0 %v1837
      %2092 = vmatpush1.bf16.msra.mxu0 %v1836
      %2093 = vmatprep.subr.bf16.mxu0 %v1845
      %2094 = vmatpush1.bf16.msra.mxu0 %v1844
      %2095 = vmatprep.subr.bf16.mxu0 %v1853
      %2096 = vmatpush1.bf16.msra.mxu0 %v1852
      %2097 = vmatprep.subr.bf16.mxu0 %v1861
      %2098 = vmatpush1.bf16.msra.mxu0 %v1860
      %2099 = vmatprep.subr.bf16.mxu0 %v1869
      %2100 = vmatpush1.bf16.msra.mxu0 %v1868
      %2101 = vmatprep.subr.bf16.mxu0 %v1877
      %2102 = vmatpush1.bf16.msra.mxu0 %v1876
      %2103 = vmatprep.subr.bf16.mxu0 %v1885
      %2104 = vmatpush1.bf16.msra.mxu0 %v1884
      %2105 = vmatprep.subr.bf16.mxu0 %v1893
      %2106 = vmatpush1.bf16.msra.mxu0 %v1892
      %2107 = vmatprep.mubr.bf16.mxu0 %v1375
      %2108 = vmatmul.mubr.bf16.gmra.mrb[0].mxu0 %v1363
      %v2109 = vpop.f32.mrb[0].mxu0
      %v2110 = vadd.f32 0.0, %v2109
      %v2111 = vpop.f32.mrb[0].mxu0
      %v2112 = vadd.f32 0.0, %v2111
      %v2113 = vpop.f32.mrb[0].mxu0
      %v2114 = vadd.f32 0.0, %v2113
      %v2115 = vpop.f32.mrb[0].mxu0
      %v2116 = vadd.f32 0.0, %v2115
      %2117 = vmatprep.mubr.bf16.mxu0 %v1381
      %2118 = vmatmul.mubr.bf16.gmra.mrb[0].mxu0 %v1378
      %v2119 = vpop.f32.mrb[0].mxu0
      %v2120 = vpop.f32.mrb[0].mxu0
      %v2121 = vpop.f32.mrb[0].mxu0
      %v2122 = vpop.f32.mrb[0].mxu0
      %2123 = vdwg.mxu0
      %2124 = vmatprep.subr.bf16.mxu0 %v1775
      %2125 = vmatpush1.bf16.msra.mxu0 %v1774
      %2126 = vmatprep.subr.bf16.mxu0 %v1783
      %2127 = vmatpush1.bf16.msra.mxu0 %v1782
      %2128 = vmatprep.subr.bf16.mxu0 %v1791
      %2129 = vmatpush1.bf16.msra.mxu0 %v1790
      %2130 = vmatprep.subr.bf16.mxu0 %v1799
      %2131 = vmatpush1.bf16.msra.mxu0 %v1798
      %2132 = vmatprep.subr.bf16.mxu0 %v1807
      %2133 = vmatpush1.bf16.msra.mxu0 %v1806
      %2134 = vmatprep.subr.bf16.mxu0 %v1815
      %2135 = vmatpush1.bf16.msra.mxu0 %v1814
      %2136 = vmatprep.subr.bf16.mxu0 %v1823
      %2137 = vmatpush1.bf16.msra.mxu0 %v1822
      %2138 = vmatprep.subr.bf16.mxu0 %v1831
      %2139 = vmatpush1.bf16.msra.mxu0 %v1830
      %2140 = vmatprep.subr.bf16.mxu0 %v1839
      %2141 = vmatpush1.bf16.msra.mxu0 %v1838
      %2142 = vmatprep.subr.bf16.mxu0 %v1847
      %2143 = vmatpush1.bf16.msra.mxu0 %v1846
      %2144 = vmatprep.subr.bf16.mxu0 %v1855
      %2145 = vmatpush1.bf16.msra.mxu0 %v1854
      %2146 = vmatprep.subr.bf16.mxu0 %v1863
      %2147 = vmatpush1.bf16.msra.mxu0 %v1862
      %2148 = vmatprep.subr.bf16.mxu0 %v1871
      %2149 = vmatpush1.bf16.msra.mxu0 %v1870
      %2150 = vmatprep.subr.bf16.mxu0 %v1879
      %2151 = vmatpush1.bf16.msra.mxu0 %v1878
      %2152 = vmatprep.subr.bf16.mxu0 %v1887
      %2153 = vmatpush1.bf16.msra.mxu0 %v1886
      %2154 = vmatprep.subr.bf16.mxu0 %v1895
      %2155 = vmatpush1.bf16.msra.mxu0 %v1894
      %2156 = vmatprep.mubr.bf16.mxu0 %v1375
      %2157 = vmatmul.mubr.bf16.gmra.mrb[0].mxu0 %v1363
      %v2158 = vpop.f32.mrb[0].mxu0
      %v2159 = vadd.f32 0.0, %v2158
      %v2160 = vpop.f32.mrb[0].mxu0
      %v2161 = vadd.f32 0.0, %v2160
      %v2162 = vpop.f32.mrb[0].mxu0
      %v2163 = vadd.f32 0.0, %v2162
      %v2164 = vpop.f32.mrb[0].mxu0
      %v2165 = vadd.f32 0.0, %v2164
      %2166 = vmatprep.mubr.bf16.mxu0 %v1381
      %2167 = vmatmul.mubr.bf16.gmra.mrb[0].mxu0 %v1378
      %v2168 = vpop.f32.mrb[0].mxu0
      %v2169 = vpop.f32.mrb[0].mxu0
      %v2170 = vpop.f32.mrb[0].mxu0
      %v2171 = vpop.f32.mrb[0].mxu0
      %2172 = vdwg.mxu0
      %2173 = vmatprep.subr.bf16.mxu0 %v1777
      %2174 = vmatpush1.bf16.msra.mxu0 %v1776
      %2175 = vmatprep.subr.bf16.mxu0 %v1785
      %2176 = vmatpush1.bf16.msra.mxu0 %v1784
      %2177 = vmatprep.subr.bf16.mxu0 %v1793
      %2178 = vmatpush1.bf16.msra.mxu0 %v1792
      %2179 = vmatprep.subr.bf16.mxu0 %v1801
      %2180 = vmatpush1.bf16.msra.mxu0 %v1800
      %2181 = vmatprep.subr.bf16.mxu0 %v1809
      %2182 = vmatpush1.bf16.msra.mxu0 %v1808
      %2183 = vmatprep.subr.bf16.mxu0 %v1817
      %2184 = vmatpush1.bf16.msra.mxu0 %v1816
      %2185 = vmatprep.subr.bf16.mxu0 %v1825
      %2186 = vmatpush1.bf16.msra.mxu0 %v1824
      %2187 = vmatprep.subr.bf16.mxu0 %v1833
      %2188 = vmatpush1.bf16.msra.mxu0 %v1832
      %2189 = vmatprep.subr.bf16.mxu0 %v1841
      %2190 = vmatpush1.bf16.msra.mxu0 %v1840
      %2191 = vmatprep.subr.bf16.mxu0 %v1849
      %2192 = vmatpush1.bf16.msra.mxu0 %v1848
      %2193 = vmatprep.subr.bf16.mxu0 %v1857
      %2194 = vmatpush1.bf16.msra.mxu0 %v1856
      %2195 = vmatprep.subr.bf16.mxu0 %v1865
      %2196 = vmatpush1.bf16.msra.mxu0 %v1864
      %2197 = vmatprep.subr.bf16.mxu0 %v1873
      %2198 = vmatpush1.bf16.msra.mxu0 %v1872
      %2199 = vmatprep.subr.bf16.mxu0 %v1881
      %2200 = vmatpush1.bf16.msra.mxu0 %v1880
      %2201 = vmatprep.subr.bf16.mxu0 %v1889
      %2202 = vmatpush1.bf16.msra.mxu0 %v1888
      %2203 = vmatprep.subr.bf16.mxu0 %v1897
      %2204 = vmatpush1.bf16.msra.mxu0 %v1896
      %2205 = vmatprep.mubr.bf16.mxu0 %v1375
      %2206 = vmatmul.mubr.bf16.gmra.mrb[0].mxu0 %v1363
      %v2207 = vpop.f32.mrb[0].mxu0
      %v2208 = vadd.f32 0.0, %v2207
      %v2209 = vpop.f32.mrb[0].mxu0
      %v2210 = vadd.f32 0.0, %v2209
      %v2211 = vpop.f32.mrb[0].mxu0
      %v2212 = vadd.f32 0.0, %v2211
      %v2213 = vpop.f32.mrb[0].mxu0
      %v2214 = vadd.f32 0.0, %v2213
      %2215 = vmatprep.mubr.bf16.mxu0 %v1381
      %2216 = vmatmul.mubr.bf16.gmra.mrb[0].mxu0 %v1378
      %v2217 = vpop.f32.mrb[0].mxu0
      %v2218 = vpop.f32.mrb[0].mxu0
      %v2219 = vpop.f32.mrb[0].mxu0
      %v2220 = vpop.f32.mrb[0].mxu0
      %2221 = vdwg.mxu0
      %v2350 = vunpack.c.l.b16 %v1095
      %v2351 = vunpack.c.h.b16 %v1095
      %v2352 = vunpack.c.l.b16 %v1096
      %v2353 = vunpack.c.h.b16 %v1096
      %v2354 = vunpack.c.l.b16 %v1097
      %v2355 = vunpack.c.h.b16 %v1097
      %v2356 = vunpack.c.l.b16 %v1098
      %v2357 = vunpack.c.h.b16 %v1098
      %v2358 = vunpack.c.l.b16 %v1099
      %v2359 = vunpack.c.h.b16 %v1099
      %v2360 = vunpack.c.l.b16 %v1100
      %v2361 = vunpack.c.h.b16 %v1100
      %v2362 = vunpack.c.l.b16 %v1101
      %v2363 = vunpack.c.h.b16 %v1101
      %v2364 = vunpack.c.l.b16 %v1102
      %v2365 = vunpack.c.h.b16 %v1102
      %v2366 = vunpack.c.l.b16 %v1103
      %v2367 = vunpack.c.h.b16 %v1103
      %v2368 = vunpack.c.l.b16 %v1104
      %v2369 = vunpack.c.h.b16 %v1104
      %v2370 = vunpack.c.l.b16 %v1105
      %v2371 = vunpack.c.h.b16 %v1105
      %v2372 = vunpack.c.l.b16 %v1106
      %v2373 = vunpack.c.h.b16 %v1106
      %v2374 = vunpack.c.l.b16 %v1107
      %v2375 = vunpack.c.h.b16 %v1107
      %v2376 = vunpack.c.l.b16 %v1108
      %v2377 = vunpack.c.h.b16 %v1108
      %v2378 = vunpack.c.l.b16 %v1109
      %v2379 = vunpack.c.h.b16 %v1109
      %v2380 = vunpack.c.l.b16 %v1110
      %v2381 = vunpack.c.h.b16 %v1110
      %v2382 = vunpack.c.l.b16 %v1111
      %v2383 = vunpack.c.h.b16 %v1111
      %v2384 = vunpack.c.l.b16 %v1112
      %v2385 = vunpack.c.h.b16 %v1112
      %v2386 = vunpack.c.l.b16 %v1113
      %v2387 = vunpack.c.h.b16 %v1113
      %v2388 = vunpack.c.l.b16 %v1114
      %v2389 = vunpack.c.h.b16 %v1114
      %v2390 = vunpack.c.l.b16 %v1115
      %v2391 = vunpack.c.h.b16 %v1115
      %v2392 = vunpack.c.l.b16 %v1116
      %v2393 = vunpack.c.h.b16 %v1116
      %v2394 = vunpack.c.l.b16 %v1117
      %v2395 = vunpack.c.h.b16 %v1117
      %v2396 = vunpack.c.l.b16 %v1118
      %v2397 = vunpack.c.h.b16 %v1118
      %v2398 = vunpack.c.l.b16 %v1119
      %v2399 = vunpack.c.h.b16 %v1119
      %v2400 = vunpack.c.l.b16 %v1120
      %v2401 = vunpack.c.h.b16 %v1120
      %v2402 = vunpack.c.l.b16 %v1121
      %v2403 = vunpack.c.h.b16 %v1121
      %v2404 = vunpack.c.l.b16 %v1122
      %v2405 = vunpack.c.h.b16 %v1122
      %v2406 = vunpack.c.l.b16 %v1123
      %v2407 = vunpack.c.h.b16 %v1123
      %v2408 = vunpack.c.l.b16 %v1124
      %v2409 = vunpack.c.h.b16 %v1124
      %v2410 = vunpack.c.l.b16 %v1125
      %v2411 = vunpack.c.h.b16 %v1125
      %v2412 = vunpack.c.l.b16 %v1126
      %v2413 = vunpack.c.h.b16 %v1126
      %v2414 = vunpack.c.l.b16 %v1127
      %v2415 = vunpack.c.h.b16 %v1127
      %v2416 = vunpack.c.l.b16 %v1128
      %v2417 = vunpack.c.h.b16 %v1128
      %v2418 = vunpack.c.l.b16 %v1129
      %v2419 = vunpack.c.h.b16 %v1129
      %v2420 = vunpack.c.l.b16 %v1130
      %v2421 = vunpack.c.h.b16 %v1130
      %v2422 = vunpack.c.l.b16 %v1131
      %v2423 = vunpack.c.h.b16 %v1131
      %v2424 = vunpack.c.l.b16 %v1132
      %v2425 = vunpack.c.h.b16 %v1132
      %v2426 = vunpack.c.l.b16 %v1133
      %v2427 = vunpack.c.h.b16 %v1133
      %v2428 = vunpack.c.l.b16 %v1134
      %v2429 = vunpack.c.h.b16 %v1134
      %v2430 = vunpack.c.l.b16 %v1135
      %v2431 = vunpack.c.h.b16 %v1135
      %v2432 = vunpack.c.l.b16 %v1136
      %v2433 = vunpack.c.h.b16 %v1136
      %v2434 = vunpack.c.l.b16 %v1137
      %v2435 = vunpack.c.h.b16 %v1137
      %v2436 = vunpack.c.l.b16 %v1138
      %v2437 = vunpack.c.h.b16 %v1138
      %v2438 = vunpack.c.l.b16 %v1139
      %v2439 = vunpack.c.h.b16 %v1139
      %v2440 = vunpack.c.l.b16 %v1140
      %v2441 = vunpack.c.h.b16 %v1140
      %v2442 = vunpack.c.l.b16 %v1141
      %v2443 = vunpack.c.h.b16 %v1141
      %v2444 = vunpack.c.l.b16 %v1142
      %v2445 = vunpack.c.h.b16 %v1142
      %v2446 = vunpack.c.l.b16 %v1143
      %v2447 = vunpack.c.h.b16 %v1143
      %v2448 = vunpack.c.l.b16 %v1144
      %v2449 = vunpack.c.h.b16 %v1144
      %v2450 = vunpack.c.l.b16 %v1145
      %v2451 = vunpack.c.h.b16 %v1145
      %v2452 = vunpack.c.l.b16 %v1146
      %v2453 = vunpack.c.h.b16 %v1146
      %v2454 = vunpack.c.l.b16 %v1147
      %v2455 = vunpack.c.h.b16 %v1147
      %v2456 = vunpack.c.l.b16 %v1148
      %v2457 = vunpack.c.h.b16 %v1148
      %v2458 = vunpack.c.l.b16 %v1149
      %v2459 = vunpack.c.h.b16 %v1149
      %v2460 = vunpack.c.l.b16 %v1150
      %v2461 = vunpack.c.h.b16 %v1150
      %v2462 = vunpack.c.l.b16 %v1151
      %v2463 = vunpack.c.h.b16 %v1151
      %v2464 = vunpack.c.l.b16 %v1152
      %v2465 = vunpack.c.h.b16 %v1152
      %v2466 = vunpack.c.l.b16 %v1153
      %v2467 = vunpack.c.h.b16 %v1153
      %v2468 = vunpack.c.l.b16 %v1154
      %v2469 = vunpack.c.h.b16 %v1154
      %v2470 = vunpack.c.l.b16 %v1155
      %v2471 = vunpack.c.h.b16 %v1155
      %v2472 = vunpack.c.l.b16 %v1156
      %v2473 = vunpack.c.h.b16 %v1156
      %v2474 = vunpack.c.l.b16 %v1157
      %v2475 = vunpack.c.h.b16 %v1157
      %v2476 = vunpack.c.l.b16 %v1158
      %v2477 = vunpack.c.h.b16 %v1158
      %v2478 = vunpack.c.l.b16 %v1159
      %v2479 = vunpack.c.h.b16 %v1159
      %v2480 = vunpack.c.l.b16 %v1160
      %v2481 = vunpack.c.h.b16 %v1160
      %v2482 = vunpack.c.l.b16 %v1161
      %v2483 = vunpack.c.h.b16 %v1161
      %v2484 = vunpack.c.l.b16 %v1162
      %v2485 = vunpack.c.h.b16 %v1162
      %v2486 = vunpack.c.l.b16 %v1163
      %v2487 = vunpack.c.h.b16 %v1163
      %v2488 = vunpack.c.l.b16 %v1164
      %v2489 = vunpack.c.h.b16 %v1164
      %v2490 = vunpack.c.l.b16 %v1165
      %v2491 = vunpack.c.h.b16 %v1165
      %v2492 = vunpack.c.l.b16 %v1166
      %v2493 = vunpack.c.h.b16 %v1166
      %v2494 = vunpack.c.l.b16 %v1167
      %v2495 = vunpack.c.h.b16 %v1167
      %v2496 = vunpack.c.l.b16 %v1168
      %v2497 = vunpack.c.h.b16 %v1168
      %v2498 = vunpack.c.l.b16 %v1169
      %v2499 = vunpack.c.h.b16 %v1169
      %v2500 = vunpack.c.l.b16 %v1170
      %v2501 = vunpack.c.h.b16 %v1170
      %v2502 = vunpack.c.l.b16 %v1171
      %v2503 = vunpack.c.h.b16 %v1171
      %v2504 = vunpack.c.l.b16 %v1172
      %v2505 = vunpack.c.h.b16 %v1172
      %v2506 = vunpack.c.l.b16 %v1173
      %v2507 = vunpack.c.h.b16 %v1173
      %v2508 = vunpack.c.l.b16 %v1174
      %v2509 = vunpack.c.h.b16 %v1174
      %v2510 = vunpack.c.l.b16 %v1175
      %v2511 = vunpack.c.h.b16 %v1175
      %v2512 = vunpack.c.l.b16 %v1176
      %v2513 = vunpack.c.h.b16 %v1176
      %v2514 = vunpack.c.l.b16 %v1177
      %v2515 = vunpack.c.h.b16 %v1177
      %v2516 = vunpack.c.l.b16 %v1178
      %v2517 = vunpack.c.h.b16 %v1178
      %v2518 = vunpack.c.l.b16 %v1179
      %v2519 = vunpack.c.h.b16 %v1179
      %v2520 = vunpack.c.l.b16 %v1180
      %v2521 = vunpack.c.h.b16 %v1180
      %v2522 = vunpack.c.l.b16 %v1181
      %v2523 = vunpack.c.h.b16 %v1181
      %v2524 = vunpack.c.l.b16 %v1182
      %v2525 = vunpack.c.h.b16 %v1182
      %v2526 = vunpack.c.l.b16 %v1183
      %v2527 = vunpack.c.h.b16 %v1183
      %v2528 = vunpack.c.l.b16 %v1184
      %v2529 = vunpack.c.h.b16 %v1184
      %v2530 = vunpack.c.l.b16 %v1185
      %v2531 = vunpack.c.h.b16 %v1185
      %v2532 = vunpack.c.l.b16 %v1186
      %v2533 = vunpack.c.h.b16 %v1186
      %v2534 = vunpack.c.l.b16 %v1187
      %v2535 = vunpack.c.h.b16 %v1187
      %v2536 = vunpack.c.l.b16 %v1188
      %v2537 = vunpack.c.h.b16 %v1188
      %v2538 = vunpack.c.l.b16 %v1189
      %v2539 = vunpack.c.h.b16 %v1189
      %v2540 = vunpack.c.l.b16 %v1190
      %v2541 = vunpack.c.h.b16 %v1190
      %v2542 = vunpack.c.l.b16 %v1191
      %v2543 = vunpack.c.h.b16 %v1191
      %v2544 = vunpack.c.l.b16 %v1192
      %v2545 = vunpack.c.h.b16 %v1192
      %v2546 = vunpack.c.l.b16 %v1193
      %v2547 = vunpack.c.h.b16 %v1193
      %v2548 = vunpack.c.l.b16 %v1194
      %v2549 = vunpack.c.h.b16 %v1194
      %v2550 = vunpack.c.l.b16 %v1195
      %v2551 = vunpack.c.h.b16 %v1195
      %v2552 = vunpack.c.l.b16 %v1196
      %v2553 = vunpack.c.h.b16 %v1196
      %v2554 = vunpack.c.l.b16 %v1197
      %v2555 = vunpack.c.h.b16 %v1197
      %v2556 = vunpack.c.l.b16 %v1198
      %v2557 = vunpack.c.h.b16 %v1198
      %v2558 = vunpack.c.l.b16 %v1199
      %v2559 = vunpack.c.h.b16 %v1199
      %v2560 = vunpack.c.l.b16 %v1200
      %v2561 = vunpack.c.h.b16 %v1200
      %v2562 = vunpack.c.l.b16 %v1201
      %v2563 = vunpack.c.h.b16 %v1201
      %v2564 = vunpack.c.l.b16 %v1202
      %v2565 = vunpack.c.h.b16 %v1202
      %v2566 = vunpack.c.l.b16 %v1203
      %v2567 = vunpack.c.h.b16 %v1203
      %v2568 = vunpack.c.l.b16 %v1204
      %v2569 = vunpack.c.h.b16 %v1204
      %v2570 = vunpack.c.l.b16 %v1205
      %v2571 = vunpack.c.h.b16 %v1205
      %v2572 = vunpack.c.l.b16 %v1206
      %v2573 = vunpack.c.h.b16 %v1206
      %v2574 = vunpack.c.l.b16 %v1207
      %v2575 = vunpack.c.h.b16 %v1207
      %v2576 = vunpack.c.l.b16 %v1208
      %v2577 = vunpack.c.h.b16 %v1208
      %v2578 = vunpack.c.l.b16 %v1209
      %v2579 = vunpack.c.h.b16 %v1209
      %v2580 = vunpack.c.l.b16 %v1210
      %v2581 = vunpack.c.h.b16 %v1210
      %v2582 = vunpack.c.l.b16 %v1211
      %v2583 = vunpack.c.h.b16 %v1211
      %v2584 = vunpack.c.l.b16 %v1212
      %v2585 = vunpack.c.h.b16 %v1212
      %v2586 = vunpack.c.l.b16 %v1213
      %v2587 = vunpack.c.h.b16 %v1213
      %v2588 = vunpack.c.l.b16 %v1214
      %v2589 = vunpack.c.h.b16 %v1214
      %v2590 = vunpack.c.l.b16 %v1215
      %v2591 = vunpack.c.h.b16 %v1215
      %v2592 = vunpack.c.l.b16 %v1216
      %v2593 = vunpack.c.h.b16 %v1216
      %v2594 = vunpack.c.l.b16 %v1217
      %v2595 = vunpack.c.h.b16 %v1217
      %v2596 = vunpack.c.l.b16 %v1218
      %v2597 = vunpack.c.h.b16 %v1218
      %v2598 = vunpack.c.l.b16 %v1219
      %v2599 = vunpack.c.h.b16 %v1219
      %v2600 = vunpack.c.l.b16 %v1220
      %v2601 = vunpack.c.h.b16 %v1220
      %v2602 = vunpack.c.l.b16 %v1221
      %v2603 = vunpack.c.h.b16 %v1221
      %v2604 = vunpack.c.l.b16 %v1222
      %v2605 = vunpack.c.h.b16 %v1222
      %v2606 = vpack.c.b16 %v2358, %v2350
      %v2607 = vpack.c.b16 %v2359, %v2351
      %v2608 = vpack.c.b16 %v2360, %v2352
      %v2609 = vpack.c.b16 %v2361, %v2353
      %v2610 = vpack.c.b16 %v2362, %v2354
      %v2611 = vpack.c.b16 %v2363, %v2355
      %v2612 = vpack.c.b16 %v2364, %v2356
      %v2613 = vpack.c.b16 %v2365, %v2357
      %v2614 = vpack.c.b16 %v2374, %v2366
      %v2615 = vpack.c.b16 %v2375, %v2367
      %v2616 = vpack.c.b16 %v2376, %v2368
      %v2617 = vpack.c.b16 %v2377, %v2369
      %v2618 = vpack.c.b16 %v2378, %v2370
      %v2619 = vpack.c.b16 %v2379, %v2371
      %v2620 = vpack.c.b16 %v2380, %v2372
      %v2621 = vpack.c.b16 %v2381, %v2373
      %v2622 = vpack.c.b16 %v2390, %v2382
      %v2623 = vpack.c.b16 %v2391, %v2383
      %v2624 = vpack.c.b16 %v2392, %v2384
      %v2625 = vpack.c.b16 %v2393, %v2385
      %v2626 = vpack.c.b16 %v2394, %v2386
      %v2627 = vpack.c.b16 %v2395, %v2387
      %v2628 = vpack.c.b16 %v2396, %v2388
      %v2629 = vpack.c.b16 %v2397, %v2389
      %v2630 = vpack.c.b16 %v2406, %v2398
      %v2631 = vpack.c.b16 %v2407, %v2399
      %v2632 = vpack.c.b16 %v2408, %v2400
      %v2633 = vpack.c.b16 %v2409, %v2401
      %v2634 = vpack.c.b16 %v2410, %v2402
      %v2635 = vpack.c.b16 %v2411, %v2403
      %v2636 = vpack.c.b16 %v2412, %v2404
      %v2637 = vpack.c.b16 %v2413, %v2405
      %v2638 = vpack.c.b16 %v2422, %v2414
      %v2639 = vpack.c.b16 %v2423, %v2415
      %v2640 = vpack.c.b16 %v2424, %v2416
      %v2641 = vpack.c.b16 %v2425, %v2417
      %v2642 = vpack.c.b16 %v2426, %v2418
      %v2643 = vpack.c.b16 %v2427, %v2419
      %v2644 = vpack.c.b16 %v2428, %v2420
      %v2645 = vpack.c.b16 %v2429, %v2421
      %v2646 = vpack.c.b16 %v2438, %v2430
      %v2647 = vpack.c.b16 %v2439, %v2431
      %v2648 = vpack.c.b16 %v2440, %v2432
      %v2649 = vpack.c.b16 %v2441, %v2433
      %v2650 = vpack.c.b16 %v2442, %v2434
      %v2651 = vpack.c.b16 %v2443, %v2435
      %v2652 = vpack.c.b16 %v2444, %v2436
      %v2653 = vpack.c.b16 %v2445, %v2437
      %v2654 = vpack.c.b16 %v2454, %v2446
      %v2655 = vpack.c.b16 %v2455, %v2447
      %v2656 = vpack.c.b16 %v2456, %v2448
      %v2657 = vpack.c.b16 %v2457, %v2449
      %v2658 = vpack.c.b16 %v2458, %v2450
      %v2659 = vpack.c.b16 %v2459, %v2451
      %v2660 = vpack.c.b16 %v2460, %v2452
      %v2661 = vpack.c.b16 %v2461, %v2453
      %v2662 = vpack.c.b16 %v2470, %v2462
      %v2663 = vpack.c.b16 %v2471, %v2463
      %v2664 = vpack.c.b16 %v2472, %v2464
      %v2665 = vpack.c.b16 %v2473, %v2465
      %v2666 = vpack.c.b16 %v2474, %v2466
      %v2667 = vpack.c.b16 %v2475, %v2467
      %v2668 = vpack.c.b16 %v2476, %v2468
      %v2669 = vpack.c.b16 %v2477, %v2469
      %v2670 = vpack.c.b16 %v2486, %v2478
      %v2671 = vpack.c.b16 %v2487, %v2479
      %v2672 = vpack.c.b16 %v2488, %v2480
      %v2673 = vpack.c.b16 %v2489, %v2481
      %v2674 = vpack.c.b16 %v2490, %v2482
      %v2675 = vpack.c.b16 %v2491, %v2483
      %v2676 = vpack.c.b16 %v2492, %v2484
      %v2677 = vpack.c.b16 %v2493, %v2485
      %v2678 = vpack.c.b16 %v2502, %v2494
      %v2679 = vpack.c.b16 %v2503, %v2495
      %v2680 = vpack.c.b16 %v2504, %v2496
      %v2681 = vpack.c.b16 %v2505, %v2497
      %v2682 = vpack.c.b16 %v2506, %v2498
      %v2683 = vpack.c.b16 %v2507, %v2499
      %v2684 = vpack.c.b16 %v2508, %v2500
      %v2685 = vpack.c.b16 %v2509, %v2501
      %v2686 = vpack.c.b16 %v2518, %v2510
      %v2687 = vpack.c.b16 %v2519, %v2511
      %v2688 = vpack.c.b16 %v2520, %v2512
      %v2689 = vpack.c.b16 %v2521, %v2513
      %v2690 = vpack.c.b16 %v2522, %v2514
      %v2691 = vpack.c.b16 %v2523, %v2515
      %v2692 = vpack.c.b16 %v2524, %v2516
      %v2693 = vpack.c.b16 %v2525, %v2517
      %v2694 = vpack.c.b16 %v2534, %v2526
      %v2695 = vpack.c.b16 %v2535, %v2527
      %v2696 = vpack.c.b16 %v2536, %v2528
      %v2697 = vpack.c.b16 %v2537, %v2529
      %v2698 = vpack.c.b16 %v2538, %v2530
      %v2699 = vpack.c.b16 %v2539, %v2531
      %v2700 = vpack.c.b16 %v2540, %v2532
      %v2701 = vpack.c.b16 %v2541, %v2533
      %v2702 = vpack.c.b16 %v2550, %v2542
      %v2703 = vpack.c.b16 %v2551, %v2543
      %v2704 = vpack.c.b16 %v2552, %v2544
      %v2705 = vpack.c.b16 %v2553, %v2545
      %v2706 = vpack.c.b16 %v2554, %v2546
      %v2707 = vpack.c.b16 %v2555, %v2547
      %v2708 = vpack.c.b16 %v2556, %v2548
      %v2709 = vpack.c.b16 %v2557, %v2549
      %v2710 = vpack.c.b16 %v2566, %v2558
      %v2711 = vpack.c.b16 %v2567, %v2559
      %v2712 = vpack.c.b16 %v2568, %v2560
      %v2713 = vpack.c.b16 %v2569, %v2561
      %v2714 = vpack.c.b16 %v2570, %v2562
      %v2715 = vpack.c.b16 %v2571, %v2563
      %v2716 = vpack.c.b16 %v2572, %v2564
      %v2717 = vpack.c.b16 %v2573, %v2565
      %v2718 = vpack.c.b16 %v2582, %v2574
      %v2719 = vpack.c.b16 %v2583, %v2575
      %v2720 = vpack.c.b16 %v2584, %v2576
      %v2721 = vpack.c.b16 %v2585, %v2577
      %v2722 = vpack.c.b16 %v2586, %v2578
      %v2723 = vpack.c.b16 %v2587, %v2579
      %v2724 = vpack.c.b16 %v2588, %v2580
      %v2725 = vpack.c.b16 %v2589, %v2581
      %v2726 = vpack.c.b16 %v2598, %v2590
      %v2727 = vpack.c.b16 %v2599, %v2591
      %v2728 = vpack.c.b16 %v2600, %v2592
      %v2729 = vpack.c.b16 %v2601, %v2593
      %v2730 = vpack.c.b16 %v2602, %v2594
      %v2731 = vpack.c.b16 %v2603, %v2595
      %v2732 = vpack.c.b16 %v2604, %v2596
      %v2733 = vpack.c.b16 %v2605, %v2597
      %2862 = vmatprep.subr.bf16.mxu0 %v2607
      %2863 = vmatpush1.bf16.msra.mxu0 %v2606
      %2864 = vmatprep.subr.bf16.mxu0 %v2615
      %2865 = vmatpush1.bf16.msra.mxu0 %v2614
      %2866 = vmatprep.subr.bf16.mxu0 %v2623
      %2867 = vmatpush1.bf16.msra.mxu0 %v2622
      %2868 = vmatprep.subr.bf16.mxu0 %v2631
      %2869 = vmatpush1.bf16.msra.mxu0 %v2630
      %2870 = vmatprep.subr.bf16.mxu0 %v2639
      %2871 = vmatpush1.bf16.msra.mxu0 %v2638
      %2872 = vmatprep.subr.bf16.mxu0 %v2647
      %2873 = vmatpush1.bf16.msra.mxu0 %v2646
      %2874 = vmatprep.subr.bf16.mxu0 %v2655
      %2875 = vmatpush1.bf16.msra.mxu0 %v2654
      %2876 = vmatprep.subr.bf16.mxu0 %v2663
      %2877 = vmatpush1.bf16.msra.mxu0 %v2662
      %2878 = vmatprep.subr.bf16.mxu0 %v2671
      %2879 = vmatpush1.bf16.msra.mxu0 %v2670
      %2880 = vmatprep.subr.bf16.mxu0 %v2679
      %2881 = vmatpush1.bf16.msra.mxu0 %v2678
      %2882 = vmatprep.subr.bf16.mxu0 %v2687
      %2883 = vmatpush1.bf16.msra.mxu0 %v2686
      %2884 = vmatprep.subr.bf16.mxu0 %v2695
      %2885 = vmatpush1.bf16.msra.mxu0 %v2694
      %2886 = vmatprep.subr.bf16.mxu0 %v2703
      %2887 = vmatpush1.bf16.msra.mxu0 %v2702
      %2888 = vmatprep.subr.bf16.mxu0 %v2711
      %2889 = vmatpush1.bf16.msra.mxu0 %v2710
      %2890 = vmatprep.subr.bf16.mxu0 %v2719
      %2891 = vmatpush1.bf16.msra.mxu0 %v2718
      %2892 = vmatprep.subr.bf16.mxu0 %v2727
      %2893 = vmatpush1.bf16.msra.mxu0 %v2726
      %2894 = vmatprep.mubr.bf16.mxu0 %v1092
      %2895 = vmatmul.mubr.bf16.gmra.mrb[0].mxu0 %v1091
      %v2896 = vpop.f32.mrb[0].mxu0
      %v2897 = vadd.f32 %v2061, %v2896
      %v2898 = vpop.f32.mrb[0].mxu0
      %v2899 = vadd.f32 %v2063, %v2898
      %v2900 = vpop.f32.mrb[0].mxu0
      %v2901 = vadd.f32 %v2065, %v2900
      %v2902 = vpop.f32.mrb[0].mxu0
      %v2903 = vadd.f32 %v2067, %v2902
      %2904 = vmatprep.mubr.bf16.mxu0 %v1094
      %2905 = vmatmul.mubr.bf16.gmra.mrb[0].mxu0 %v1093
      %v2906 = vpop.f32.mrb[0].mxu0
      %v2907 = vpop.f32.mrb[0].mxu0
      %v2908 = vpop.f32.mrb[0].mxu0
      %v2909 = vpop.f32.mrb[0].mxu0
      %2910 = vdwg.mxu0
      %2911 = vmatprep.subr.bf16.mxu0 %v2609
      %2912 = vmatpush1.bf16.msra.mxu0 %v2608
      %2913 = vmatprep.subr.bf16.mxu0 %v2617
      %2914 = vmatpush1.bf16.msra.mxu0 %v2616
      %2915 = vmatprep.subr.bf16.mxu0 %v2625
      %2916 = vmatpush1.bf16.msra.mxu0 %v2624
      %2917 = vmatprep.subr.bf16.mxu0 %v2633
      %2918 = vmatpush1.bf16.msra.mxu0 %v2632
      %2919 = vmatprep.subr.bf16.mxu0 %v2641
      %2920 = vmatpush1.bf16.msra.mxu0 %v2640
      %2921 = vmatprep.subr.bf16.mxu0 %v2649
      %2922 = vmatpush1.bf16.msra.mxu0 %v2648
      %2923 = vmatprep.subr.bf16.mxu0 %v2657
      %2924 = vmatpush1.bf16.msra.mxu0 %v2656
      %2925 = vmatprep.subr.bf16.mxu0 %v2665
      %2926 = vmatpush1.bf16.msra.mxu0 %v2664
      %2927 = vmatprep.subr.bf16.mxu0 %v2673
      %2928 = vmatpush1.bf16.msra.mxu0 %v2672
      %2929 = vmatprep.subr.bf16.mxu0 %v2681
      %2930 = vmatpush1.bf16.msra.mxu0 %v2680
      %2931 = vmatprep.subr.bf16.mxu0 %v2689
      %2932 = vmatpush1.bf16.msra.mxu0 %v2688
      %2933 = vmatprep.subr.bf16.mxu0 %v2697
      %2934 = vmatpush1.bf16.msra.mxu0 %v2696
      %2935 = vmatprep.subr.bf16.mxu0 %v2705
      %2936 = vmatpush1.bf16.msra.mxu0 %v2704
      %2937 = vmatprep.subr.bf16.mxu0 %v2713
      %2938 = vmatpush1.bf16.msra.mxu0 %v2712
      %2939 = vmatprep.subr.bf16.mxu0 %v2721
      %2940 = vmatpush1.bf16.msra.mxu0 %v2720
      %2941 = vmatprep.subr.bf16.mxu0 %v2729
      %2942 = vmatpush1.bf16.msra.mxu0 %v2728
      %2943 = vmatprep.mubr.bf16.mxu0 %v1092
      %2944 = vmatmul.mubr.bf16.gmra.mrb[0].mxu0 %v1091
      %v2945 = vpop.f32.mrb[0].mxu0
      %v2946 = vadd.f32 %v2110, %v2945
      %v2947 = vpop.f32.mrb[0].mxu0
      %v2948 = vadd.f32 %v2112, %v2947
      %v2949 = vpop.f32.mrb[0].mxu0
      %v2950 = vadd.f32 %v2114, %v2949
      %v2951 = vpop.f32.mrb[0].mxu0
      %v2952 = vadd.f32 %v2116, %v2951
      %2953 = vmatprep.mubr.bf16.mxu0 %v1094
      %2954 = vmatmul.mubr.bf16.gmra.mrb[0].mxu0 %v1093
      %v2955 = vpop.f32.mrb[0].mxu0
      %v2956 = vpop.f32.mrb[0].mxu0
      %v2957 = vpop.f32.mrb[0].mxu0
      %v2958 = vpop.f32.mrb[0].mxu0
      %2959 = vdwg.mxu0
      %2960 = vmatprep.subr.bf16.mxu0 %v2611
      %2961 = vmatpush1.bf16.msra.mxu0 %v2610
      %2962 = vmatprep.subr.bf16.mxu0 %v2619
      %2963 = vmatpush1.bf16.msra.mxu0 %v2618
      %2964 = vmatprep.subr.bf16.mxu0 %v2627
      %2965 = vmatpush1.bf16.msra.mxu0 %v2626
      %2966 = vmatprep.subr.bf16.mxu0 %v2635
      %2967 = vmatpush1.bf16.msra.mxu0 %v2634
      %2968 = vmatprep.subr.bf16.mxu0 %v2643
      %2969 = vmatpush1.bf16.msra.mxu0 %v2642
      %2970 = vmatprep.subr.bf16.mxu0 %v2651
      %2971 = vmatpush1.bf16.msra.mxu0 %v2650
      %2972 = vmatprep.subr.bf16.mxu0 %v2659
      %2973 = vmatpush1.bf16.msra.mxu0 %v2658
      %2974 = vmatprep.subr.bf16.mxu0 %v2667
      %2975 = vmatpush1.bf16.msra.mxu0 %v2666
      %2976 = vmatprep.subr.bf16.mxu0 %v2675
      %2977 = vmatpush1.bf16.msra.mxu0 %v2674
      %2978 = vmatprep.subr.bf16.mxu0 %v2683
      %2979 = vmatpush1.bf16.msra.mxu0 %v2682
      %2980 = vmatprep.subr.bf16.mxu0 %v2691
      %2981 = vmatpush1.bf16.msra.mxu0 %v2690
      %2982 = vmatprep.subr.bf16.mxu0 %v2699
      %2983 = vmatpush1.bf16.msra.mxu0 %v2698
      %2984 = vmatprep.subr.bf16.mxu0 %v2707
      %2985 = vmatpush1.bf16.msra.mxu0 %v2706
      %2986 = vmatprep.subr.bf16.mxu0 %v2715
      %2987 = vmatpush1.bf16.msra.mxu0 %v2714
      %2988 = vmatprep.subr.bf16.mxu0 %v2723
      %2989 = vmatpush1.bf16.msra.mxu0 %v2722
      %2990 = vmatprep.subr.bf16.mxu0 %v2731
      %2991 = vmatpush1.bf16.msra.mxu0 %v2730
      %2992 = vmatprep.mubr.bf16.mxu0 %v1092
      %2993 = vmatmul.mubr.bf16.gmra.mrb[0].mxu0 %v1091
      %v2994 = vpop.f32.mrb[0].mxu0
      %v2995 = vadd.f32 %v2159, %v2994
      %v2996 = vpop.f32.mrb[0].mxu0
      %v2997 = vadd.f32 %v2161, %v2996
      %v2998 = vpop.f32.mrb[0].mxu0
      %v2999 = vadd.f32 %v2163, %v2998
      %v3000 = vpop.f32.mrb[0].mxu0
      %v3001 = vadd.f32 %v2165, %v3000
      %3002 = vmatprep.mubr.bf16.mxu0 %v1094
      %3003 = vmatmul.mubr.bf16.gmra.mrb[0].mxu0 %v1093
      %v3004 = vpop.f32.mrb[0].mxu0
      %v3005 = vpop.f32.mrb[0].mxu0
      %v3006 = vpop.f32.mrb[0].mxu0
      %v3007 = vpop.f32.mrb[0].mxu0
      %3008 = vdwg.mxu0
      %3009 = vmatprep.subr.bf16.mxu0 %v2613
      %3010 = vmatpush1.bf16.msra.mxu0 %v2612
      %3011 = vmatprep.subr.bf16.mxu0 %v2621
      %3012 = vmatpush1.bf16.msra.mxu0 %v2620
      %3013 = vmatprep.subr.bf16.mxu0 %v2629
      %3014 = vmatpush1.bf16.msra.mxu0 %v2628
      %3015 = vmatprep.subr.bf16.mxu0 %v2637
      %3016 = vmatpush1.bf16.msra.mxu0 %v2636
      %3017 = vmatprep.subr.bf16.mxu0 %v2645
      %3018 = vmatpush1.bf16.msra.mxu0 %v2644
      %3019 = vmatprep.subr.bf16.mxu0 %v2653
      %3020 = vmatpush1.bf16.msra.mxu0 %v2652
      %3021 = vmatprep.subr.bf16.mxu0 %v2661
      %3022 = vmatpush1.bf16.msra.mxu0 %v2660
      %3023 = vmatprep.subr.bf16.mxu0 %v2669
      %3024 = vmatpush1.bf16.msra.mxu0 %v2668
      %3025 = vmatprep.subr.bf16.mxu0 %v2677
      %3026 = vmatpush1.bf16.msra.mxu0 %v2676
      %3027 = vmatprep.subr.bf16.mxu0 %v2685
      %3028 = vmatpush1.bf16.msra.mxu0 %v2684
      %3029 = vmatprep.subr.bf16.mxu0 %v2693
      %3030 = vmatpush1.bf16.msra.mxu0 %v2692
      %3031 = vmatprep.subr.bf16.mxu0 %v2701
      %3032 = vmatpush1.bf16.msra.mxu0 %v2700
      %3033 = vmatprep.subr.bf16.mxu0 %v2709
      %3034 = vmatpush1.bf16.msra.mxu0 %v2708
      %3035 = vmatprep.subr.bf16.mxu0 %v2717
      %3036 = vmatpush1.bf16.msra.mxu0 %v2716
      %3037 = vmatprep.subr.bf16.mxu0 %v2725
      %3038 = vmatpush1.bf16.msra.mxu0 %v2724
      %3039 = vmatprep.subr.bf16.mxu0 %v2733
      %3040 = vmatpush1.bf16.msra.mxu0 %v2732
      %3041 = vmatprep.mubr.bf16.mxu0 %v1092
      %3042 = vmatmul.mubr.bf16.gmra.mrb[0].mxu0 %v1091
      %v3043 = vpop.f32.mrb[0].mxu0
      %v3044 = vadd.f32 %v2208, %v3043
      %v3045 = vpop.f32.mrb[0].mxu0
      %v3046 = vadd.f32 %v2210, %v3045
      %v3047 = vpop.f32.mrb[0].mxu0
      %v3048 = vadd.f32 %v2212, %v3047
      %v3049 = vpop.f32.mrb[0].mxu0
      %v3050 = vadd.f32 %v2214, %v3049
      %3051 = vmatprep.mubr.bf16.mxu0 %v1094
      %3052 = vmatmul.mubr.bf16.gmra.mrb[0].mxu0 %v1093
      %v3053 = vpop.f32.mrb[0].mxu0
      %v3054 = vpop.f32.mrb[0].mxu0
      %v3055 = vpop.f32.mrb[0].mxu0
      %v3056 = vpop.f32.mrb[0].mxu0
      %3057 = vdwg.mxu0
      %s3058 = scalar_lea.vmem %s9, 2048
      %v3059 = vld [vmem:[%s3058] sm:$0xff]
      %v3060 = vld [vmem:[%s3058 + $0x8] sm:$0xff]
      %v3061 = vld [vmem:[%s3058 + $0x10] sm:$0xff]
      %v3062 = vld [vmem:[%s3058 + $0x18] sm:$0xff]
      %v3063 = vld [vmem:[%s3058 + $0x20] sm:$0xff]
      %v3064 = vld [vmem:[%s3058 + $0x28] sm:$0xff]
      %v3065 = vld [vmem:[%s3058 + $0x30] sm:$0xff]
      %v3066 = vld [vmem:[%s3058 + $0x38] sm:$0xff]
      %v3067 = vld [vmem:[%s3058 + $0x40] sm:$0xff]
      %v3068 = vld [vmem:[%s3058 + $0x48] sm:$0xff]
      %v3069 = vld [vmem:[%s3058 + $0x50] sm:$0xff]
      %v3070 = vld [vmem:[%s3058 + $0x58] sm:$0xff]
      %v3071 = vld [vmem:[%s3058 + $0x60] sm:$0xff]
      %v3072 = vld [vmem:[%s3058 + $0x68] sm:$0xff]
      %v3073 = vld [vmem:[%s3058 + $0x70] sm:$0xff]
      %v3074 = vld [vmem:[%s3058 + $0x78] sm:$0xff]
      %v3075 = vld [vmem:[%s3058 + $0x80] sm:$0xff]
      %v3076 = vld [vmem:[%s3058 + $0x88] sm:$0xff]
      %v3077 = vld [vmem:[%s3058 + $0x90] sm:$0xff]
      %v3078 = vld [vmem:[%s3058 + $0x98] sm:$0xff]
      %v3079 = vld [vmem:[%s3058 + $0xa0] sm:$0xff]
      %v3080 = vld [vmem:[%s3058 + $0xa8] sm:$0xff]
      %v3081 = vld [vmem:[%s3058 + $0xb0] sm:$0xff]
      %v3082 = vld [vmem:[%s3058 + $0xb8] sm:$0xff]
      %v3083 = vld [vmem:[%s3058 + $0xc0] sm:$0xff]
      %v3084 = vld [vmem:[%s3058 + $0xc8] sm:$0xff]
      %v3085 = vld [vmem:[%s3058 + $0xd0] sm:$0xff]
      %v3086 = vld [vmem:[%s3058 + $0xd8] sm:$0xff]
      %v3087 = vld [vmem:[%s3058 + $0xe0] sm:$0xff]
      %v3088 = vld [vmem:[%s3058 + $0xe8] sm:$0xff]
      %v3089 = vld [vmem:[%s3058 + $0xf0] sm:$0xff]
      %v3090 = vld [vmem:[%s3058 + $0xf8] sm:$0xff]
      %v3091 = vld [vmem:[%s3058 + $0x100] sm:$0xff]
      %v3092 = vld [vmem:[%s3058 + $0x108] sm:$0xff]
      %v3093 = vld [vmem:[%s3058 + $0x110] sm:$0xff]
      %v3094 = vld [vmem:[%s3058 + $0x118] sm:$0xff]
      %v3095 = vld [vmem:[%s3058 + $0x120] sm:$0xff]
      %v3096 = vld [vmem:[%s3058 + $0x128] sm:$0xff]
      %v3097 = vld [vmem:[%s3058 + $0x130] sm:$0xff]
      %v3098 = vld [vmem:[%s3058 + $0x138] sm:$0xff]
      %v3099 = vld [vmem:[%s3058 + $0x140] sm:$0xff]
      %v3100 = vld [vmem:[%s3058 + $0x148] sm:$0xff]
      %v3101 = vld [vmem:[%s3058 + $0x150] sm:$0xff]
      %v3102 = vld [vmem:[%s3058 + $0x158] sm:$0xff]
      %v3103 = vld [vmem:[%s3058 + $0x160] sm:$0xff]
      %v3104 = vld [vmem:[%s3058 + $0x168] sm:$0xff]
      %v3105 = vld [vmem:[%s3058 + $0x170] sm:$0xff]
      %v3106 = vld [vmem:[%s3058 + $0x178] sm:$0xff]
      %v3107 = vld [vmem:[%s3058 + $0x180] sm:$0xff]
      %v3108 = vld [vmem:[%s3058 + $0x188] sm:$0xff]
      %v3109 = vld [vmem:[%s3058 + $0x190] sm:$0xff]
      %v3110 = vld [vmem:[%s3058 + $0x198] sm:$0xff]
      %v3111 = vld [vmem:[%s3058 + $0x1a0] sm:$0xff]
      %v3112 = vld [vmem:[%s3058 + $0x1a8] sm:$0xff]
      %v3113 = vld [vmem:[%s3058 + $0x1b0] sm:$0xff]
      %v3114 = vld [vmem:[%s3058 + $0x1b8] sm:$0xff]
      %v3115 = vld [vmem:[%s3058 + $0x1c0] sm:$0xff]
      %v3116 = vld [vmem:[%s3058 + $0x1c8] sm:$0xff]
      %v3117 = vld [vmem:[%s3058 + $0x1d0] sm:$0xff]
      %v3118 = vld [vmem:[%s3058 + $0x1d8] sm:$0xff]
      %v3119 = vld [vmem:[%s3058 + $0x1e0] sm:$0xff]
      %v3120 = vld [vmem:[%s3058 + $0x1e8] sm:$0xff]
      %v3121 = vld [vmem:[%s3058 + $0x1f0] sm:$0xff]
      %v3122 = vld [vmem:[%s3058 + $0x1f8] sm:$0xff]
      %v3123 = vld [vmem:[%s3058 + $0x200] sm:$0xff]
      %v3124 = vld [vmem:[%s3058 + $0x208] sm:$0xff]
      %v3125 = vld [vmem:[%s3058 + $0x210] sm:$0xff]
      %v3126 = vld [vmem:[%s3058 + $0x218] sm:$0xff]
      %v3127 = vld [vmem:[%s3058 + $0x220] sm:$0xff]
      %v3128 = vld [vmem:[%s3058 + $0x228] sm:$0xff]
      %v3129 = vld [vmem:[%s3058 + $0x230] sm:$0xff]
      %v3130 = vld [vmem:[%s3058 + $0x238] sm:$0xff]
      %v3131 = vld [vmem:[%s3058 + $0x240] sm:$0xff]
      %v3132 = vld [vmem:[%s3058 + $0x248] sm:$0xff]
      %v3133 = vld [vmem:[%s3058 + $0x250] sm:$0xff]
      %v3134 = vld [vmem:[%s3058 + $0x258] sm:$0xff]
      %v3135 = vld [vmem:[%s3058 + $0x260] sm:$0xff]
      %v3136 = vld [vmem:[%s3058 + $0x268] sm:$0xff]
      %v3137 = vld [vmem:[%s3058 + $0x270] sm:$0xff]
      %v3138 = vld [vmem:[%s3058 + $0x278] sm:$0xff]
      %v3139 = vld [vmem:[%s3058 + $0x280] sm:$0xff]
      %v3140 = vld [vmem:[%s3058 + $0x288] sm:$0xff]
      %v3141 = vld [vmem:[%s3058 + $0x290] sm:$0xff]
      %v3142 = vld [vmem:[%s3058 + $0x298] sm:$0xff]
      %v3143 = vld [vmem:[%s3058 + $0x2a0] sm:$0xff]
      %v3144 = vld [vmem:[%s3058 + $0x2a8] sm:$0xff]
      %v3145 = vld [vmem:[%s3058 + $0x2b0] sm:$0xff]
      %v3146 = vld [vmem:[%s3058 + $0x2b8] sm:$0xff]
      %v3147 = vld [vmem:[%s3058 + $0x2c0] sm:$0xff]
      %v3148 = vld [vmem:[%s3058 + $0x2c8] sm:$0xff]
      %v3149 = vld [vmem:[%s3058 + $0x2d0] sm:$0xff]
      %v3150 = vld [vmem:[%s3058 + $0x2d8] sm:$0xff]
      %v3151 = vld [vmem:[%s3058 + $0x2e0] sm:$0xff]
      %v3152 = vld [vmem:[%s3058 + $0x2e8] sm:$0xff]
      %v3153 = vld [vmem:[%s3058 + $0x2f0] sm:$0xff]
      %v3154 = vld [vmem:[%s3058 + $0x2f8] sm:$0xff]
      %v3155 = vld [vmem:[%s3058 + $0x300] sm:$0xff]
      %v3156 = vld [vmem:[%s3058 + $0x308] sm:$0xff]
      %v3157 = vld [vmem:[%s3058 + $0x310] sm:$0xff]
      %v3158 = vld [vmem:[%s3058 + $0x318] sm:$0xff]
      %v3159 = vld [vmem:[%s3058 + $0x320] sm:$0xff]
      %v3160 = vld [vmem:[%s3058 + $0x328] sm:$0xff]
      %v3161 = vld [vmem:[%s3058 + $0x330] sm:$0xff]
      %v3162 = vld [vmem:[%s3058 + $0x338] sm:$0xff]
      %v3163 = vld [vmem:[%s3058 + $0x340] sm:$0xff]
      %v3164 = vld [vmem:[%s3058 + $0x348] sm:$0xff]
      %v3165 = vld [vmem:[%s3058 + $0x350] sm:$0xff]
      %v3166 = vld [vmem:[%s3058 + $0x358] sm:$0xff]
      %v3167 = vld [vmem:[%s3058 + $0x360] sm:$0xff]
      %v3168 = vld [vmem:[%s3058 + $0x368] sm:$0xff]
      %v3169 = vld [vmem:[%s3058 + $0x370] sm:$0xff]
      %v3170 = vld [vmem:[%s3058 + $0x378] sm:$0xff]
      %v3171 = vld [vmem:[%s3058 + $0x380] sm:$0xff]
      %v3172 = vld [vmem:[%s3058 + $0x388] sm:$0xff]
      %v3173 = vld [vmem:[%s3058 + $0x390] sm:$0xff]
      %v3174 = vld [vmem:[%s3058 + $0x398] sm:$0xff]
      %v3175 = vld [vmem:[%s3058 + $0x3a0] sm:$0xff]
      %v3176 = vld [vmem:[%s3058 + $0x3a8] sm:$0xff]
      %v3177 = vld [vmem:[%s3058 + $0x3b0] sm:$0xff]
      %v3178 = vld [vmem:[%s3058 + $0x3b8] sm:$0xff]
      %v3179 = vld [vmem:[%s3058 + $0x3c0] sm:$0xff]
      %v3180 = vld [vmem:[%s3058 + $0x3c8] sm:$0xff]
      %v3181 = vld [vmem:[%s3058 + $0x3d0] sm:$0xff]
      %v3182 = vld [vmem:[%s3058 + $0x3d8] sm:$0xff]
      %v3183 = vld [vmem:[%s3058 + $0x3e0] sm:$0xff]
      %v3184 = vld [vmem:[%s3058 + $0x3e8] sm:$0xff]
      %v3185 = vld [vmem:[%s3058 + $0x3f0] sm:$0xff]
      %v3186 = vld [vmem:[%s3058 + $0x3f8] sm:$0xff]
      %v3191 = vrot.slane %v1091, 1
      %v3192 = vrot.slane %v1093, 1
      %v3193 = vsel %vm573, %v3191, %v3192
      %v3194 = vrot.slane %v1092, 1
      %v3195 = vrot.slane %v1094, 1
      %v3196 = vsel %vm573, %v3194, %v3195
      %v3329 = vunpack.c.l.b16 %v3059
      %v3330 = vunpack.c.h.b16 %v3059
      %v3331 = vunpack.c.l.b16 %v3060
      %v3332 = vunpack.c.h.b16 %v3060
      %v3333 = vunpack.c.l.b16 %v3061
      %v3334 = vunpack.c.h.b16 %v3061
      %v3335 = vunpack.c.l.b16 %v3062
      %v3336 = vunpack.c.h.b16 %v3062
      %v3337 = vunpack.c.l.b16 %v3063
      %v3338 = vunpack.c.h.b16 %v3063
      %v3339 = vunpack.c.l.b16 %v3064
      %v3340 = vunpack.c.h.b16 %v3064
      %v3341 = vunpack.c.l.b16 %v3065
      %v3342 = vunpack.c.h.b16 %v3065
      %v3343 = vunpack.c.l.b16 %v3066
      %v3344 = vunpack.c.h.b16 %v3066
      %v3345 = vunpack.c.l.b16 %v3067
      %v3346 = vunpack.c.h.b16 %v3067
      %v3347 = vunpack.c.l.b16 %v3068
      %v3348 = vunpack.c.h.b16 %v3068
      %v3349 = vunpack.c.l.b16 %v3069
      %v3350 = vunpack.c.h.b16 %v3069
      %v3351 = vunpack.c.l.b16 %v3070
      %v3352 = vunpack.c.h.b16 %v3070
      %v3353 = vunpack.c.l.b16 %v3071
      %v3354 = vunpack.c.h.b16 %v3071
      %v3355 = vunpack.c.l.b16 %v3072
      %v3356 = vunpack.c.h.b16 %v3072
      %v3357 = vunpack.c.l.b16 %v3073
      %v3358 = vunpack.c.h.b16 %v3073
      %v3359 = vunpack.c.l.b16 %v3074
      %v3360 = vunpack.c.h.b16 %v3074
      %v3361 = vunpack.c.l.b16 %v3075
      %v3362 = vunpack.c.h.b16 %v3075
      %v3363 = vunpack.c.l.b16 %v3076
      %v3364 = vunpack.c.h.b16 %v3076
      %v3365 = vunpack.c.l.b16 %v3077
      %v3366 = vunpack.c.h.b16 %v3077
      %v3367 = vunpack.c.l.b16 %v3078
      %v3368 = vunpack.c.h.b16 %v3078
      %v3369 = vunpack.c.l.b16 %v3079
      %v3370 = vunpack.c.h.b16 %v3079
      %v3371 = vunpack.c.l.b16 %v3080
      %v3372 = vunpack.c.h.b16 %v3080
      %v3373 = vunpack.c.l.b16 %v3081
      %v3374 = vunpack.c.h.b16 %v3081
      %v3375 = vunpack.c.l.b16 %v3082
      %v3376 = vunpack.c.h.b16 %v3082
      %v3377 = vunpack.c.l.b16 %v3083
      %v3378 = vunpack.c.h.b16 %v3083
      %v3379 = vunpack.c.l.b16 %v3084
      %v3380 = vunpack.c.h.b16 %v3084
      %v3381 = vunpack.c.l.b16 %v3085
      %v3382 = vunpack.c.h.b16 %v3085
      %v3383 = vunpack.c.l.b16 %v3086
      %v3384 = vunpack.c.h.b16 %v3086
      %v3385 = vunpack.c.l.b16 %v3087
      %v3386 = vunpack.c.h.b16 %v3087
      %v3387 = vunpack.c.l.b16 %v3088
      %v3388 = vunpack.c.h.b16 %v3088
      %v3389 = vunpack.c.l.b16 %v3089
      %v3390 = vunpack.c.h.b16 %v3089
      %v3391 = vunpack.c.l.b16 %v3090
      %v3392 = vunpack.c.h.b16 %v3090
      %v3393 = vunpack.c.l.b16 %v3091
      %v3394 = vunpack.c.h.b16 %v3091
      %v3395 = vunpack.c.l.b16 %v3092
      %v3396 = vunpack.c.h.b16 %v3092
      %v3397 = vunpack.c.l.b16 %v3093
      %v3398 = vunpack.c.h.b16 %v3093
      %v3399 = vunpack.c.l.b16 %v3094
      %v3400 = vunpack.c.h.b16 %v3094
      %v3401 = vunpack.c.l.b16 %v3095
      %v3402 = vunpack.c.h.b16 %v3095
      %v3403 = vunpack.c.l.b16 %v3096
      %v3404 = vunpack.c.h.b16 %v3096
      %v3405 = vunpack.c.l.b16 %v3097
      %v3406 = vunpack.c.h.b16 %v3097
      %v3407 = vunpack.c.l.b16 %v3098
      %v3408 = vunpack.c.h.b16 %v3098
      %v3409 = vunpack.c.l.b16 %v3099
      %v3410 = vunpack.c.h.b16 %v3099
      %v3411 = vunpack.c.l.b16 %v3100
      %v3412 = vunpack.c.h.b16 %v3100
      %v3413 = vunpack.c.l.b16 %v3101
      %v3414 = vunpack.c.h.b16 %v3101
      %v3415 = vunpack.c.l.b16 %v3102
      %v3416 = vunpack.c.h.b16 %v3102
      %v3417 = vunpack.c.l.b16 %v3103
      %v3418 = vunpack.c.h.b16 %v3103
      %v3419 = vunpack.c.l.b16 %v3104
      %v3420 = vunpack.c.h.b16 %v3104
      %v3421 = vunpack.c.l.b16 %v3105
      %v3422 = vunpack.c.h.b16 %v3105
      %v3423 = vunpack.c.l.b16 %v3106
      %v3424 = vunpack.c.h.b16 %v3106
      %v3425 = vunpack.c.l.b16 %v3107
      %v3426 = vunpack.c.h.b16 %v3107
      %v3427 = vunpack.c.l.b16 %v3108
      %v3428 = vunpack.c.h.b16 %v3108
      %v3429 = vunpack.c.l.b16 %v3109
      %v3430 = vunpack.c.h.b16 %v3109
      %v3431 = vunpack.c.l.b16 %v3110
      %v3432 = vunpack.c.h.b16 %v3110
      %v3433 = vunpack.c.l.b16 %v3111
      %v3434 = vunpack.c.h.b16 %v3111
      %v3435 = vunpack.c.l.b16 %v3112
      %v3436 = vunpack.c.h.b16 %v3112
      %v3437 = vunpack.c.l.b16 %v3113
      %v3438 = vunpack.c.h.b16 %v3113
      %v3439 = vunpack.c.l.b16 %v3114
      %v3440 = vunpack.c.h.b16 %v3114
      %v3441 = vunpack.c.l.b16 %v3115
      %v3442 = vunpack.c.h.b16 %v3115
      %v3443 = vunpack.c.l.b16 %v3116
      %v3444 = vunpack.c.h.b16 %v3116
      %v3445 = vunpack.c.l.b16 %v3117
      %v3446 = vunpack.c.h.b16 %v3117
      %v3447 = vunpack.c.l.b16 %v3118
      %v3448 = vunpack.c.h.b16 %v3118
      %v3449 = vunpack.c.l.b16 %v3119
      %v3450 = vunpack.c.h.b16 %v3119
      %v3451 = vunpack.c.l.b16 %v3120
      %v3452 = vunpack.c.h.b16 %v3120
      %v3453 = vunpack.c.l.b16 %v3121
      %v3454 = vunpack.c.h.b16 %v3121
      %v3455 = vunpack.c.l.b16 %v3122
      %v3456 = vunpack.c.h.b16 %v3122
      %v3457 = vunpack.c.l.b16 %v3123
      %v3458 = vunpack.c.h.b16 %v3123
      %v3459 = vunpack.c.l.b16 %v3124
      %v3460 = vunpack.c.h.b16 %v3124
      %v3461 = vunpack.c.l.b16 %v3125
      %v3462 = vunpack.c.h.b16 %v3125
      %v3463 = vunpack.c.l.b16 %v3126
      %v3464 = vunpack.c.h.b16 %v3126
      %v3465 = vunpack.c.l.b16 %v3127
      %v3466 = vunpack.c.h.b16 %v3127
      %v3467 = vunpack.c.l.b16 %v3128
      %v3468 = vunpack.c.h.b16 %v3128
      %v3469 = vunpack.c.l.b16 %v3129
      %v3470 = vunpack.c.h.b16 %v3129
      %v3471 = vunpack.c.l.b16 %v3130
      %v3472 = vunpack.c.h.b16 %v3130
      %v3473 = vunpack.c.l.b16 %v3131
      %v3474 = vunpack.c.h.b16 %v3131
      %v3475 = vunpack.c.l.b16 %v3132
      %v3476 = vunpack.c.h.b16 %v3132
      %v3477 = vunpack.c.l.b16 %v3133
      %v3478 = vunpack.c.h.b16 %v3133
      %v3479 = vunpack.c.l.b16 %v3134
      %v3480 = vunpack.c.h.b16 %v3134
      %v3481 = vunpack.c.l.b16 %v3135
      %v3482 = vunpack.c.h.b16 %v3135
      %v3483 = vunpack.c.l.b16 %v3136
      %v3484 = vunpack.c.h.b16 %v3136
      %v3485 = vunpack.c.l.b16 %v3137
      %v3486 = vunpack.c.h.b16 %v3137
      %v3487 = vunpack.c.l.b16 %v3138
      %v3488 = vunpack.c.h.b16 %v3138
      %v3489 = vunpack.c.l.b16 %v3139
      %v3490 = vunpack.c.h.b16 %v3139
      %v3491 = vunpack.c.l.b16 %v3140
      %v3492 = vunpack.c.h.b16 %v3140
      %v3493 = vunpack.c.l.b16 %v3141
      %v3494 = vunpack.c.h.b16 %v3141
      %v3495 = vunpack.c.l.b16 %v3142
      %v3496 = vunpack.c.h.b16 %v3142
      %v3497 = vunpack.c.l.b16 %v3143
      %v3498 = vunpack.c.h.b16 %v3143
      %v3499 = vunpack.c.l.b16 %v3144
      %v3500 = vunpack.c.h.b16 %v3144
      %v3501 = vunpack.c.l.b16 %v3145
      %v3502 = vunpack.c.h.b16 %v3145
      %v3503 = vunpack.c.l.b16 %v3146
      %v3504 = vunpack.c.h.b16 %v3146
      %v3505 = vunpack.c.l.b16 %v3147
      %v3506 = vunpack.c.h.b16 %v3147
      %v3507 = vunpack.c.l.b16 %v3148
      %v3508 = vunpack.c.h.b16 %v3148
      %v3509 = vunpack.c.l.b16 %v3149
      %v3510 = vunpack.c.h.b16 %v3149
      %v3511 = vunpack.c.l.b16 %v3150
      %v3512 = vunpack.c.h.b16 %v3150
      %v3513 = vunpack.c.l.b16 %v3151
      %v3514 = vunpack.c.h.b16 %v3151
      %v3515 = vunpack.c.l.b16 %v3152
      %v3516 = vunpack.c.h.b16 %v3152
      %v3517 = vunpack.c.l.b16 %v3153
      %v3518 = vunpack.c.h.b16 %v3153
      %v3519 = vunpack.c.l.b16 %v3154
      %v3520 = vunpack.c.h.b16 %v3154
      %v3521 = vunpack.c.l.b16 %v3155
      %v3522 = vunpack.c.h.b16 %v3155
      %v3523 = vunpack.c.l.b16 %v3156
      %v3524 = vunpack.c.h.b16 %v3156
      %v3525 = vunpack.c.l.b16 %v3157
      %v3526 = vunpack.c.h.b16 %v3157
      %v3527 = vunpack.c.l.b16 %v3158
      %v3528 = vunpack.c.h.b16 %v3158
      %v3529 = vunpack.c.l.b16 %v3159
      %v3530 = vunpack.c.h.b16 %v3159
      %v3531 = vunpack.c.l.b16 %v3160
      %v3532 = vunpack.c.h.b16 %v3160
      %v3533 = vunpack.c.l.b16 %v3161
      %v3534 = vunpack.c.h.b16 %v3161
      %v3535 = vunpack.c.l.b16 %v3162
      %v3536 = vunpack.c.h.b16 %v3162
      %v3537 = vunpack.c.l.b16 %v3163
      %v3538 = vunpack.c.h.b16 %v3163
      %v3539 = vunpack.c.l.b16 %v3164
      %v3540 = vunpack.c.h.b16 %v3164
      %v3541 = vunpack.c.l.b16 %v3165
      %v3542 = vunpack.c.h.b16 %v3165
      %v3543 = vunpack.c.l.b16 %v3166
      %v3544 = vunpack.c.h.b16 %v3166
      %v3545 = vunpack.c.l.b16 %v3167
      %v3546 = vunpack.c.h.b16 %v3167
      %v3547 = vunpack.c.l.b16 %v3168
      %v3548 = vunpack.c.h.b16 %v3168
      %v3549 = vunpack.c.l.b16 %v3169
      %v3550 = vunpack.c.h.b16 %v3169
      %v3551 = vunpack.c.l.b16 %v3170
      %v3552 = vunpack.c.h.b16 %v3170
      %v3553 = vunpack.c.l.b16 %v3171
      %v3554 = vunpack.c.h.b16 %v3171
      %v3555 = vunpack.c.l.b16 %v3172
      %v3556 = vunpack.c.h.b16 %v3172
      %v3557 = vunpack.c.l.b16 %v3173
      %v3558 = vunpack.c.h.b16 %v3173
      %v3559 = vunpack.c.l.b16 %v3174
      %v3560 = vunpack.c.h.b16 %v3174
      %v3561 = vunpack.c.l.b16 %v3175
      %v3562 = vunpack.c.h.b16 %v3175
      %v3563 = vunpack.c.l.b16 %v3176
      %v3564 = vunpack.c.h.b16 %v3176
      %v3565 = vunpack.c.l.b16 %v3177
      %v3566 = vunpack.c.h.b16 %v3177
      %v3567 = vunpack.c.l.b16 %v3178
      %v3568 = vunpack.c.h.b16 %v3178
      %v3569 = vunpack.c.l.b16 %v3179
      %v3570 = vunpack.c.h.b16 %v3179
      %v3571 = vunpack.c.l.b16 %v3180
      %v3572 = vunpack.c.h.b16 %v3180
      %v3573 = vunpack.c.l.b16 %v3181
      %v3574 = vunpack.c.h.b16 %v3181
      %v3575 = vunpack.c.l.b16 %v3182
      %v3576 = vunpack.c.h.b16 %v3182
      %v3577 = vunpack.c.l.b16 %v3183
      %v3578 = vunpack.c.h.b16 %v3183
      %v3579 = vunpack.c.l.b16 %v3184
      %v3580 = vunpack.c.h.b16 %v3184
      %v3581 = vunpack.c.l.b16 %v3185
      %v3582 = vunpack.c.h.b16 %v3185
      %v3583 = vunpack.c.l.b16 %v3186
      %v3584 = vunpack.c.h.b16 %v3186
      %v3585 = vpack.c.b16 %v3337, %v3329
      %v3586 = vpack.c.b16 %v3338, %v3330
      %v3587 = vpack.c.b16 %v3339, %v3331
      %v3588 = vpack.c.b16 %v3340, %v3332
      %v3589 = vpack.c.b16 %v3341, %v3333
      %v3590 = vpack.c.b16 %v3342, %v3334
      %v3591 = vpack.c.b16 %v3343, %v3335
      %v3592 = vpack.c.b16 %v3344, %v3336
      %v3593 = vpack.c.b16 %v3353, %v3345
      %v3594 = vpack.c.b16 %v3354, %v3346
      %v3595 = vpack.c.b16 %v3355, %v3347
      %v3596 = vpack.c.b16 %v3356, %v3348
      %v3597 = vpack.c.b16 %v3357, %v3349
      %v3598 = vpack.c.b16 %v3358, %v3350
      %v3599 = vpack.c.b16 %v3359, %v3351
      %v3600 = vpack.c.b16 %v3360, %v3352
      %v3601 = vpack.c.b16 %v3369, %v3361
      %v3602 = vpack.c.b16 %v3370, %v3362
      %v3603 = vpack.c.b16 %v3371, %v3363
      %v3604 = vpack.c.b16 %v3372, %v3364
      %v3605 = vpack.c.b16 %v3373, %v3365
      %v3606 = vpack.c.b16 %v3374, %v3366
      %v3607 = vpack.c.b16 %v3375, %v3367
      %v3608 = vpack.c.b16 %v3376, %v3368
      %v3609 = vpack.c.b16 %v3385, %v3377
      %v3610 = vpack.c.b16 %v3386, %v3378
      %v3611 = vpack.c.b16 %v3387, %v3379
      %v3612 = vpack.c.b16 %v3388, %v3380
      %v3613 = vpack.c.b16 %v3389, %v3381
      %v3614 = vpack.c.b16 %v3390, %v3382
      %v3615 = vpack.c.b16 %v3391, %v3383
      %v3616 = vpack.c.b16 %v3392, %v3384
      %v3617 = vpack.c.b16 %v3401, %v3393
      %v3618 = vpack.c.b16 %v3402, %v3394
      %v3619 = vpack.c.b16 %v3403, %v3395
      %v3620 = vpack.c.b16 %v3404, %v3396
      %v3621 = vpack.c.b16 %v3405, %v3397
      %v3622 = vpack.c.b16 %v3406, %v3398
      %v3623 = vpack.c.b16 %v3407, %v3399
      %v3624 = vpack.c.b16 %v3408, %v3400
      %v3625 = vpack.c.b16 %v3417, %v3409
      %v3626 = vpack.c.b16 %v3418, %v3410
      %v3627 = vpack.c.b16 %v3419, %v3411
      %v3628 = vpack.c.b16 %v3420, %v3412
      %v3629 = vpack.c.b16 %v3421, %v3413
      %v3630 = vpack.c.b16 %v3422, %v3414
      %v3631 = vpack.c.b16 %v3423, %v3415
      %v3632 = vpack.c.b16 %v3424, %v3416
      %v3633 = vpack.c.b16 %v3433, %v3425
      %v3634 = vpack.c.b16 %v3434, %v3426
      %v3635 = vpack.c.b16 %v3435, %v3427
      %v3636 = vpack.c.b16 %v3436, %v3428
      %v3637 = vpack.c.b16 %v3437, %v3429
      %v3638 = vpack.c.b16 %v3438, %v3430
      %v3639 = vpack.c.b16 %v3439, %v3431
      %v3640 = vpack.c.b16 %v3440, %v3432
      %v3641 = vpack.c.b16 %v3449, %v3441
      %v3642 = vpack.c.b16 %v3450, %v3442
      %v3643 = vpack.c.b16 %v3451, %v3443
      %v3644 = vpack.c.b16 %v3452, %v3444
      %v3645 = vpack.c.b16 %v3453, %v3445
      %v3646 = vpack.c.b16 %v3454, %v3446
      %v3647 = vpack.c.b16 %v3455, %v3447
      %v3648 = vpack.c.b16 %v3456, %v3448
      %v3649 = vpack.c.b16 %v3465, %v3457
      %v3650 = vpack.c.b16 %v3466, %v3458
      %v3651 = vpack.c.b16 %v3467, %v3459
      %v3652 = vpack.c.b16 %v3468, %v3460
      %v3653 = vpack.c.b16 %v3469, %v3461
      %v3654 = vpack.c.b16 %v3470, %v3462
      %v3655 = vpack.c.b16 %v3471, %v3463
      %v3656 = vpack.c.b16 %v3472, %v3464
      %v3657 = vpack.c.b16 %v3481, %v3473
      %v3658 = vpack.c.b16 %v3482, %v3474
      %v3659 = vpack.c.b16 %v3483, %v3475
      %v3660 = vpack.c.b16 %v3484, %v3476
      %v3661 = vpack.c.b16 %v3485, %v3477
      %v3662 = vpack.c.b16 %v3486, %v3478
      %v3663 = vpack.c.b16 %v3487, %v3479
      %v3664 = vpack.c.b16 %v3488, %v3480
      %v3665 = vpack.c.b16 %v3497, %v3489
      %v3666 = vpack.c.b16 %v3498, %v3490
      %v3667 = vpack.c.b16 %v3499, %v3491
      %v3668 = vpack.c.b16 %v3500, %v3492
      %v3669 = vpack.c.b16 %v3501, %v3493
      %v3670 = vpack.c.b16 %v3502, %v3494
      %v3671 = vpack.c.b16 %v3503, %v3495
      %v3672 = vpack.c.b16 %v3504, %v3496
      %v3673 = vpack.c.b16 %v3513, %v3505
      %v3674 = vpack.c.b16 %v3514, %v3506
      %v3675 = vpack.c.b16 %v3515, %v3507
      %v3676 = vpack.c.b16 %v3516, %v3508
      %v3677 = vpack.c.b16 %v3517, %v3509
      %v3678 = vpack.c.b16 %v3518, %v3510
      %v3679 = vpack.c.b16 %v3519, %v3511
      %v3680 = vpack.c.b16 %v3520, %v3512
      %v3681 = vpack.c.b16 %v3529, %v3521
      %v3682 = vpack.c.b16 %v3530, %v3522
      %v3683 = vpack.c.b16 %v3531, %v3523
      %v3684 = vpack.c.b16 %v3532, %v3524
      %v3685 = vpack.c.b16 %v3533, %v3525
      %v3686 = vpack.c.b16 %v3534, %v3526
      %v3687 = vpack.c.b16 %v3535, %v3527
      %v3688 = vpack.c.b16 %v3536, %v3528
      %v3689 = vpack.c.b16 %v3545, %v3537
      %v3690 = vpack.c.b16 %v3546, %v3538
      %v3691 = vpack.c.b16 %v3547, %v3539
      %v3692 = vpack.c.b16 %v3548, %v3540
      %v3693 = vpack.c.b16 %v3549, %v3541
      %v3694 = vpack.c.b16 %v3550, %v3542
      %v3695 = vpack.c.b16 %v3551, %v3543
      %v3696 = vpack.c.b16 %v3552, %v3544
      %v3697 = vpack.c.b16 %v3561, %v3553
      %v3698 = vpack.c.b16 %v3562, %v3554
      %v3699 = vpack.c.b16 %v3563, %v3555
      %v3700 = vpack.c.b16 %v3564, %v3556
      %v3701 = vpack.c.b16 %v3565, %v3557
      %v3702 = vpack.c.b16 %v3566, %v3558
      %v3703 = vpack.c.b16 %v3567, %v3559
      %v3704 = vpack.c.b16 %v3568, %v3560
      %v3705 = vpack.c.b16 %v3577, %v3569
      %v3706 = vpack.c.b16 %v3578, %v3570
      %v3707 = vpack.c.b16 %v3579, %v3571
      %v3708 = vpack.c.b16 %v3580, %v3572
      %v3709 = vpack.c.b16 %v3581, %v3573
      %v3710 = vpack.c.b16 %v3582, %v3574
      %v3711 = vpack.c.b16 %v3583, %v3575
      %v3712 = vpack.c.b16 %v3584, %v3576
      %3841 = vmatprep.subr.bf16.mxu0 %v3586
      %3842 = vmatpush1.bf16.msra.mxu0 %v3585
      %3843 = vmatprep.subr.bf16.mxu0 %v3594
      %3844 = vmatpush1.bf16.msra.mxu0 %v3593
      %3845 = vmatprep.subr.bf16.mxu0 %v3602
      %3846 = vmatpush1.bf16.msra.mxu0 %v3601
      %3847 = vmatprep.subr.bf16.mxu0 %v3610
      %3848 = vmatpush1.bf16.msra.mxu0 %v3609
      %3849 = vmatprep.subr.bf16.mxu0 %v3618
      %3850 = vmatpush1.bf16.msra.mxu0 %v3617
      %3851 = vmatprep.subr.bf16.mxu0 %v3626
      %3852 = vmatpush1.bf16.msra.mxu0 %v3625
      %3853 = vmatprep.subr.bf16.mxu0 %v3634
      %3854 = vmatpush1.bf16.msra.mxu0 %v3633
      %3855 = vmatprep.subr.bf16.mxu0 %v3642
      %3856 = vmatpush1.bf16.msra.mxu0 %v3641
      %3857 = vmatprep.subr.bf16.mxu0 %v3650
      %3858 = vmatpush1.bf16.msra.mxu0 %v3649
      %3859 = vmatprep.subr.bf16.mxu0 %v3658
      %3860 = vmatpush1.bf16.msra.mxu0 %v3657
      %3861 = vmatprep.subr.bf16.mxu0 %v3666
      %3862 = vmatpush1.bf16.msra.mxu0 %v3665
      %3863 = vmatprep.subr.bf16.mxu0 %v3674
      %3864 = vmatpush1.bf16.msra.mxu0 %v3673
      %3865 = vmatprep.subr.bf16.mxu0 %v3682
      %3866 = vmatpush1.bf16.msra.mxu0 %v3681
      %3867 = vmatprep.subr.bf16.mxu0 %v3690
      %3868 = vmatpush1.bf16.msra.mxu0 %v3689
      %3869 = vmatprep.subr.bf16.mxu0 %v3698
      %3870 = vmatpush1.bf16.msra.mxu0 %v3697
      %3871 = vmatprep.subr.bf16.mxu0 %v3706
      %3872 = vmatpush1.bf16.msra.mxu0 %v3705
      %3873 = vmatprep.mubr.bf16.mxu0 %v3196
      %3874 = vmatmul.mubr.bf16.gmra.mrb[0].mxu0 %v3193
      %v3875 = vpop.f32.mrb[0].mxu0
      %v3876 = vadd.f32 0.0, %v3875
      %v3877 = vpop.f32.mrb[0].mxu0
      %v3878 = vadd.f32 0.0, %v3877
      %v3879 = vpop.f32.mrb[0].mxu0
      %v3880 = vadd.f32 0.0, %v3879
      %v3881 = vpop.f32.mrb[0].mxu0
      %v3882 = vadd.f32 0.0, %v3881
      %3883 = vmatprep.mubr.bf16.mxu0 %v3195
      %3884 = vmatmul.mubr.bf16.gmra.mrb[0].mxu0 %v3192
      %v3885 = vpop.f32.mrb[0].mxu0
      %v3886 = vpop.f32.mrb[0].mxu0
      %v3887 = vpop.f32.mrb[0].mxu0
      %v3888 = vpop.f32.mrb[0].mxu0
      %3889 = vdwg.mxu0
      %3890 = vmatprep.subr.bf16.mxu0 %v3588
      %3891 = vmatpush1.bf16.msra.mxu0 %v3587
      %3892 = vmatprep.subr.bf16.mxu0 %v3596
      %3893 = vmatpush1.bf16.msra.mxu0 %v3595
      %3894 = vmatprep.subr.bf16.mxu0 %v3604
      %3895 = vmatpush1.bf16.msra.mxu0 %v3603
      %3896 = vmatprep.subr.bf16.mxu0 %v3612
      %3897 = vmatpush1.bf16.msra.mxu0 %v3611
      %3898 = vmatprep.subr.bf16.mxu0 %v3620
      %3899 = vmatpush1.bf16.msra.mxu0 %v3619
      %3900 = vmatprep.subr.bf16.mxu0 %v3628
      %3901 = vmatpush1.bf16.msra.mxu0 %v3627
      %3902 = vmatprep.subr.bf16.mxu0 %v3636
      %3903 = vmatpush1.bf16.msra.mxu0 %v3635
      %3904 = vmatprep.subr.bf16.mxu0 %v3644
      %3905 = vmatpush1.bf16.msra.mxu0 %v3643
      %3906 = vmatprep.subr.bf16.mxu0 %v3652
      %3907 = vmatpush1.bf16.msra.mxu0 %v3651
      %3908 = vmatprep.subr.bf16.mxu0 %v3660
      %3909 = vmatpush1.bf16.msra.mxu0 %v3659
      %3910 = vmatprep.subr.bf16.mxu0 %v3668
      %3911 = vmatpush1.bf16.msra.mxu0 %v3667
      %3912 = vmatprep.subr.bf16.mxu0 %v3676
      %3913 = vmatpush1.bf16.msra.mxu0 %v3675
      %3914 = vmatprep.subr.bf16.mxu0 %v3684
      %3915 = vmatpush1.bf16.msra.mxu0 %v3683
      %3916 = vmatprep.subr.bf16.mxu0 %v3692
      %3917 = vmatpush1.bf16.msra.mxu0 %v3691
      %3918 = vmatprep.subr.bf16.mxu0 %v3700
      %3919 = vmatpush1.bf16.msra.mxu0 %v3699
      %3920 = vmatprep.subr.bf16.mxu0 %v3708
      %3921 = vmatpush1.bf16.msra.mxu0 %v3707
      %3922 = vmatprep.mubr.bf16.mxu0 %v3196
      %3923 = vmatmul.mubr.bf16.gmra.mrb[0].mxu0 %v3193
      %v3924 = vpop.f32.mrb[0].mxu0
      %v3925 = vadd.f32 0.0, %v3924
      %v3926 = vpop.f32.mrb[0].mxu0
      %v3927 = vadd.f32 0.0, %v3926
      %v3928 = vpop.f32.mrb[0].mxu0
      %v3929 = vadd.f32 0.0, %v3928
      %v3930 = vpop.f32.mrb[0].mxu0
      %v3931 = vadd.f32 0.0, %v3930
      %3932 = vmatprep.mubr.bf16.mxu0 %v3195
      %3933 = vmatmul.mubr.bf16.gmra.mrb[0].mxu0 %v3192
      %v3934 = vpop.f32.mrb[0].mxu0
      %v3935 = vpop.f32.mrb[0].mxu0
      %v3936 = vpop.f32.mrb[0].mxu0
      %v3937 = vpop.f32.mrb[0].mxu0
      %3938 = vdwg.mxu0
      %3939 = vmatprep.subr.bf16.mxu0 %v3590
      %3940 = vmatpush1.bf16.msra.mxu0 %v3589
      %3941 = vmatprep.subr.bf16.mxu0 %v3598
      %3942 = vmatpush1.bf16.msra.mxu0 %v3597
      %3943 = vmatprep.subr.bf16.mxu0 %v3606
      %3944 = vmatpush1.bf16.msra.mxu0 %v3605
      %3945 = vmatprep.subr.bf16.mxu0 %v3614
      %3946 = vmatpush1.bf16.msra.mxu0 %v3613
      %3947 = vmatprep.subr.bf16.mxu0 %v3622
      %3948 = vmatpush1.bf16.msra.mxu0 %v3621
      %3949 = vmatprep.subr.bf16.mxu0 %v3630
      %3950 = vmatpush1.bf16.msra.mxu0 %v3629
      %3951 = vmatprep.subr.bf16.mxu0 %v3638
      %3952 = vmatpush1.bf16.msra.mxu0 %v3637
      %3953 = vmatprep.subr.bf16.mxu0 %v3646
      %3954 = vmatpush1.bf16.msra.mxu0 %v3645
      %3955 = vmatprep.subr.bf16.mxu0 %v3654
      %3956 = vmatpush1.bf16.msra.mxu0 %v3653
      %3957 = vmatprep.subr.bf16.mxu0 %v3662
      %3958 = vmatpush1.bf16.msra.mxu0 %v3661
      %3959 = vmatprep.subr.bf16.mxu0 %v3670
      %3960 = vmatpush1.bf16.msra.mxu0 %v3669
      %3961 = vmatprep.subr.bf16.mxu0 %v3678
      %3962 = vmatpush1.bf16.msra.mxu0 %v3677
      %3963 = vmatprep.subr.bf16.mxu0 %v3686
      %3964 = vmatpush1.bf16.msra.mxu0 %v3685
      %3965 = vmatprep.subr.bf16.mxu0 %v3694
      %3966 = vmatpush1.bf16.msra.mxu0 %v3693
      %3967 = vmatprep.subr.bf16.mxu0 %v3702
      %3968 = vmatpush1.bf16.msra.mxu0 %v3701
      %3969 = vmatprep.subr.bf16.mxu0 %v3710
      %3970 = vmatpush1.bf16.msra.mxu0 %v3709
      %3971 = vmatprep.mubr.bf16.mxu0 %v3196
      %3972 = vmatmul.mubr.bf16.gmra.mrb[0].mxu0 %v3193
      %v3973 = vpop.f32.mrb[0].mxu0
      %v3974 = vadd.f32 0.0, %v3973
      %v3975 = vpop.f32.mrb[0].mxu0
      %v3976 = vadd.f32 0.0, %v3975
      %v3977 = vpop.f32.mrb[0].mxu0
      %v3978 = vadd.f32 0.0, %v3977
      %v3979 = vpop.f32.mrb[0].mxu0
      %v3980 = vadd.f32 0.0, %v3979
      %3981 = vmatprep.mubr.bf16.mxu0 %v3195
      %3982 = vmatmul.mubr.bf16.gmra.mrb[0].mxu0 %v3192
      %v3983 = vpop.f32.mrb[0].mxu0
      %v3984 = vpop.f32.mrb[0].mxu0
      %v3985 = vpop.f32.mrb[0].mxu0
      %v3986 = vpop.f32.mrb[0].mxu0
      %3987 = vdwg.mxu0
      %3988 = vmatprep.subr.bf16.mxu0 %v3592
      %3989 = vmatpush1.bf16.msra.mxu0 %v3591
      %3990 = vmatprep.subr.bf16.mxu0 %v3600
      %3991 = vmatpush1.bf16.msra.mxu0 %v3599
      %3992 = vmatprep.subr.bf16.mxu0 %v3608
      %3993 = vmatpush1.bf16.msra.mxu0 %v3607
      %3994 = vmatprep.subr.bf16.mxu0 %v3616
      %3995 = vmatpush1.bf16.msra.mxu0 %v3615
      %3996 = vmatprep.subr.bf16.mxu0 %v3624
      %3997 = vmatpush1.bf16.msra.mxu0 %v3623
      %3998 = vmatprep.subr.bf16.mxu0 %v3632
      %3999 = vmatpush1.bf16.msra.mxu0 %v3631
      %4000 = vmatprep.subr.bf16.mxu0 %v3640
      %4001 = vmatpush1.bf16.msra.mxu0 %v3639
      %4002 = vmatprep.subr.bf16.mxu0 %v3648
      %4003 = vmatpush1.bf16.msra.mxu0 %v3647
      %4004 = vmatprep.subr.bf16.mxu0 %v3656
      %4005 = vmatpush1.bf16.msra.mxu0 %v3655
      %4006 = vmatprep.subr.bf16.mxu0 %v3664
      %4007 = vmatpush1.bf16.msra.mxu0 %v3663
      %4008 = vmatprep.subr.bf16.mxu0 %v3672
      %4009 = vmatpush1.bf16.msra.mxu0 %v3671
      %4010 = vmatprep.subr.bf16.mxu0 %v3680
      %4011 = vmatpush1.bf16.msra.mxu0 %v3679
      %4012 = vmatprep.subr.bf16.mxu0 %v3688
      %4013 = vmatpush1.bf16.msra.mxu0 %v3687
      %4014 = vmatprep.subr.bf16.mxu0 %v3696
      %4015 = vmatpush1.bf16.msra.mxu0 %v3695
      %4016 = vmatprep.subr.bf16.mxu0 %v3704
      %4017 = vmatpush1.bf16.msra.mxu0 %v3703
      %4018 = vmatprep.subr.bf16.mxu0 %v3712
      %4019 = vmatpush1.bf16.msra.mxu0 %v3711
      %4020 = vmatprep.mubr.bf16.mxu0 %v3196
      %4021 = vmatmul.mubr.bf16.gmra.mrb[0].mxu0 %v3193
      %v4022 = vpop.f32.mrb[0].mxu0
      %v4023 = vadd.f32 0.0, %v4022
      %v4024 = vpop.f32.mrb[0].mxu0
      %v4025 = vadd.f32 0.0, %v4024
      %v4026 = vpop.f32.mrb[0].mxu0
      %v4027 = vadd.f32 0.0, %v4026
      %v4028 = vpop.f32.mrb[0].mxu0
      %v4029 = vadd.f32 0.0, %v4028
      %4030 = vmatprep.mubr.bf16.mxu0 %v3195
      %4031 = vmatmul.mubr.bf16.gmra.mrb[0].mxu0 %v3192
      %v4032 = vpop.f32.mrb[0].mxu0
      %v4033 = vpop.f32.mrb[0].mxu0
      %v4034 = vpop.f32.mrb[0].mxu0
      %v4035 = vpop.f32.mrb[0].mxu0
      %4036 = vdwg.mxu0
      %v4037 = vadd.f32 %v2897, %v3876
      %v4038 = vadd.f32 %v2899, %v3878
      %v4039 = vadd.f32 %v2946, %v3925
      %v4040 = vadd.f32 %v2948, %v3927
      %v4041 = vadd.f32 %v2995, %v3974
      %v4042 = vadd.f32 %v2997, %v3976
      %v4043 = vadd.f32 %v3044, %v4023
      %v4044 = vadd.f32 %v3046, %v4025
      %v4045 = vadd.f32 %v2901, %v3880
      %v4046 = vadd.f32 %v2903, %v3882
      %v4047 = vadd.f32 %v2950, %v3929
      %v4048 = vadd.f32 %v2952, %v3931
      %v4049 = vadd.f32 %v2999, %v3978
      %v4050 = vadd.f32 %v3001, %v3980
      %v4051 = vadd.f32 %v3048, %v4027
      %v4052 = vadd.f32 %v3050, %v4029
      %v4053 = vld [vmem:[%s10] sm:$0xff]
      %v4055 = vlaneseq
      %v4056 = vshrl.u32 %v4055, 7
      %v4057 = vsub.s32 0, %v4056
      %v4058 = vrot.slane %v4053, %v4057
      %v4059 = vlaneseq
      %v4060 = vshrl.u32 %v4059, 7
      %v4061 = vsub.s32 1, %v4060
      %v4062 = vrot.slane %v4053, %v4061
      %v4063 = vlaneseq
      %v4064 = vshrl.u32 %v4063, 7
      %v4065 = vsub.s32 2, %v4064
      %v4066 = vrot.slane %v4053, %v4065
      %v4067 = vlaneseq
      %v4068 = vshrl.u32 %v4067, 7
      %v4069 = vsub.s32 3, %v4068
      %v4070 = vrot.slane %v4053, %v4069
      %v4071 = vlaneseq
      %v4072 = vshrl.u32 %v4071, 7
      %v4073 = vsub.s32 4, %v4072
      %v4074 = vrot.slane %v4053, %v4073
      %v4075 = vlaneseq
      %v4076 = vshrl.u32 %v4075, 7
      %v4077 = vsub.s32 5, %v4076
      %v4078 = vrot.slane %v4053, %v4077
      %v4079 = vlaneseq
      %v4080 = vshrl.u32 %v4079, 7
      %v4081 = vsub.s32 6, %v4080
      %v4082 = vrot.slane %v4053, %v4081
      %v4083 = vlaneseq
      %v4084 = vshrl.u32 %v4083, 7
      %v4085 = vsub.s32 7, %v4084
      %v4086 = vrot.slane %v4053, %v4085
      %v4095 = vmul.f32 %v4037, %v4058
      %v4096 = vmul.f32 %v4038, %v4062
      %v4097 = vmul.f32 %v4039, %v4066
      %v4098 = vmul.f32 %v4040, %v4070
      %v4099 = vmul.f32 %v4041, %v4074
      %v4100 = vmul.f32 %v4042, %v4078
      %v4101 = vmul.f32 %v4043, %v4082
      %v4102 = vmul.f32 %v4044, %v4086
      %v4103 = vmul.f32 %v4045, %v4058
      %v4104 = vmul.f32 %v4046, %v4062
      %v4105 = vmul.f32 %v4047, %v4066
      %v4106 = vmul.f32 %v4048, %v4070
      %v4107 = vmul.f32 %v4049, %v4074
      %v4108 = vmul.f32 %v4050, %v4078
      %v4109 = vmul.f32 %v4051, %v4082
      %v4110 = vmul.f32 %v4052, %v4086
      %v4111 = vld [vmem:[%s11] sm:$0xff]
      %v4113 = vlaneseq
      %v4114 = vshrl.u32 %v4113, 7
      %v4115 = vsub.s32 0, %v4114
      %v4116 = vrot.slane %v4111, %v4115
      %v4117 = vlaneseq
      %v4118 = vshrl.u32 %v4117, 7
      %v4119 = vsub.s32 1, %v4118
      %v4120 = vrot.slane %v4111, %v4119
      %v4121 = vlaneseq
      %v4122 = vshrl.u32 %v4121, 7
      %v4123 = vsub.s32 2, %v4122
      %v4124 = vrot.slane %v4111, %v4123
      %v4125 = vlaneseq
      %v4126 = vshrl.u32 %v4125, 7
      %v4127 = vsub.s32 3, %v4126
      %v4128 = vrot.slane %v4111, %v4127
      %v4129 = vlaneseq
      %v4130 = vshrl.u32 %v4129, 7
      %v4131 = vsub.s32 4, %v4130
      %v4132 = vrot.slane %v4111, %v4131
      %v4133 = vlaneseq
      %v4134 = vshrl.u32 %v4133, 7
      %v4135 = vsub.s32 5, %v4134
      %v4136 = vrot.slane %v4111, %v4135
      %v4137 = vlaneseq
      %v4138 = vshrl.u32 %v4137, 7
      %v4139 = vsub.s32 6, %v4138
      %v4140 = vrot.slane %v4111, %v4139
      %v4141 = vlaneseq
      %v4142 = vshrl.u32 %v4141, 7
      %v4143 = vsub.s32 7, %v4142
      %v4144 = vrot.slane %v4111, %v4143
      %v4153 = vadd.f32 %v4095, %v4116
      %v4154 = vadd.f32 %v4096, %v4120
      %v4155 = vadd.f32 %v4097, %v4124
      %v4156 = vadd.f32 %v4098, %v4128
      %v4157 = vadd.f32 %v4099, %v4132
      %v4158 = vadd.f32 %v4100, %v4136
      %v4159 = vadd.f32 %v4101, %v4140
      %v4160 = vadd.f32 %v4102, %v4144
      %v4161 = vadd.f32 %v4103, %v4116
      %v4162 = vadd.f32 %v4104, %v4120
      %v4163 = vadd.f32 %v4105, %v4124
      %v4164 = vadd.f32 %v4106, %v4128
      %v4165 = vadd.f32 %v4107, %v4132
      %v4166 = vadd.f32 %v4108, %v4136
      %v4167 = vadd.f32 %v4109, %v4140
      %v4168 = vadd.f32 %v4110, %v4144
      %vm4169 = vcmp.gt.f32.partialorder %v4153, 0.0
      %vm4170 = vcmp.gt.f32.partialorder %v4154, 0.0
      %vm4171 = vcmp.gt.f32.partialorder %v4155, 0.0
      %vm4172 = vcmp.gt.f32.partialorder %v4156, 0.0
      %vm4173 = vcmp.gt.f32.partialorder %v4157, 0.0
      %vm4174 = vcmp.gt.f32.partialorder %v4158, 0.0
      %vm4175 = vcmp.gt.f32.partialorder %v4159, 0.0
      %vm4176 = vcmp.gt.f32.partialorder %v4160, 0.0
      %vm4177 = vcmp.gt.f32.partialorder %v4161, 0.0
      %vm4178 = vcmp.gt.f32.partialorder %v4162, 0.0
      %vm4179 = vcmp.gt.f32.partialorder %v4163, 0.0
      %vm4180 = vcmp.gt.f32.partialorder %v4164, 0.0
      %vm4181 = vcmp.gt.f32.partialorder %v4165, 0.0
      %vm4182 = vcmp.gt.f32.partialorder %v4166, 0.0
      %vm4183 = vcmp.gt.f32.partialorder %v4167, 0.0
      %vm4184 = vcmp.gt.f32.partialorder %v4168, 0.0
      %v4185 = vmul.f32 %v4153, 0.2
      %v4186 = vmul.f32 %v4154, 0.2
      %v4187 = vmul.f32 %v4155, 0.2
      %v4188 = vmul.f32 %v4156, 0.2
      %v4189 = vmul.f32 %v4157, 0.2
      %v4190 = vmul.f32 %v4158, 0.2
      %v4191 = vmul.f32 %v4159, 0.2
      %v4192 = vmul.f32 %v4160, 0.2
      %v4193 = vmul.f32 %v4161, 0.2
      %v4194 = vmul.f32 %v4162, 0.2
      %v4195 = vmul.f32 %v4163, 0.2
      %v4196 = vmul.f32 %v4164, 0.2
      %v4197 = vmul.f32 %v4165, 0.2
      %v4198 = vmul.f32 %v4166, 0.2
      %v4199 = vmul.f32 %v4167, 0.2
      %v4200 = vmul.f32 %v4168, 0.2
      %v4201 = vsel %vm4169, %v4153, %v4185
      %v4202 = vsel %vm4170, %v4154, %v4186
      %v4203 = vsel %vm4171, %v4155, %v4187
      %v4204 = vsel %vm4172, %v4156, %v4188
      %v4205 = vsel %vm4173, %v4157, %v4189
      %v4206 = vsel %vm4174, %v4158, %v4190
      %v4207 = vsel %vm4175, %v4159, %v4191
      %v4208 = vsel %vm4176, %v4160, %v4192
      %v4209 = vsel %vm4177, %v4161, %v4193
      %v4210 = vsel %vm4178, %v4162, %v4194
      %v4211 = vsel %vm4179, %v4163, %v4195
      %v4212 = vsel %vm4180, %v4164, %v4196
      %v4213 = vsel %vm4181, %v4165, %v4197
      %v4214 = vsel %vm4182, %v4166, %v4198
      %v4215 = vsel %vm4183, %v4167, %v4199
      %v4216 = vsel %vm4184, %v4168, %v4200
      %4217 = vst [vmem:[%s417] sm:$0xff] %v4201
      %4218 = vst [vmem:[%s417 + $0x8] sm:$0xff] %v4202
      %4219 = vst [vmem:[%s417 + $0x10] sm:$0xff] %v4203
      %4220 = vst [vmem:[%s417 + $0x18] sm:$0xff] %v4204
      %4221 = vst [vmem:[%s417 + $0x20] sm:$0xff] %v4205
      %4222 = vst [vmem:[%s417 + $0x28] sm:$0xff] %v4206
      %4223 = vst [vmem:[%s417 + $0x30] sm:$0xff] %v4207
      %4224 = vst [vmem:[%s417 + $0x38] sm:$0xff] %v4208
      %4225 = vst [vmem:[%s417 + $0x40] sm:$0xff] %v4209
      %4226 = vst [vmem:[%s417 + $0x48] sm:$0xff] %v4210
      %4227 = vst [vmem:[%s417 + $0x50] sm:$0xff] %v4211
      %4228 = vst [vmem:[%s417 + $0x58] sm:$0xff] %v4212
      %4229 = vst [vmem:[%s417 + $0x60] sm:$0xff] %v4213
      %4230 = vst [vmem:[%s417 + $0x68] sm:$0xff] %v4214
      %4231 = vst [vmem:[%s417 + $0x70] sm:$0xff] %v4215
      %4232 = vst [vmem:[%s417 + $0x78] sm:$0xff] %v4216
      %s4233 = smul.u32 2, %s23
      %p4234 = scmp.lt.s32.totalorder %s4233, 3
      %s4235 = scalar_select %p4234, %s4233, 3
      %s4236 = smul.addr %s4235, 8
      %s4237 = smul.addr %s4236, 8
      %s4238 = scalar_lea.vmem %s12, %s4237
      // Predicated region
      $region69: #{specadapter_forward.1} parent=67 // pred_check
        %p4239 = pneg %p298
      $region70: #{specadapter_forward.1} parent=67 // pred_check_branch
        %4241 = sbr.rel (%p4239) target = $region72
      $region71: #{specadapter_forward.1} parent=67 // pred_region
        %s4242 = smul.u32 2, %s23
      $region72: #{specadapter_forward.1} parent=67 // pred_fallthru
        _
    $region68: #{specadapter_forward.1} parent=5 // pred_fallthru
      _
    %p4243 = scmp.le.s32.totalorder 2, %s18
    // Predicated region
    $region73: #{specadapter_forward.1} parent=5 // pred_check
      %p4244 = pneg %p4243
    $region74: #{specadapter_forward.1} parent=5 // pred_check_branch
      %4246 = sbr.rel (%p4244) target = $region76
    $region75: #{specadapter_forward.1} parent=5 // pred_region
      %s4247 = ssub.s32 %s18, 2
      // Predicated region
      $region77: #{specadapter_forward.1} parent=75 // pred_check
        %p4248 = pneg %p304
      $region78: #{specadapter_forward.1} parent=75 // pred_check_branch
        %4250 = sbr.rel (%p4248) target = $region80
      $region79: #{specadapter_forward.1} parent=75 // pred_region
        %s4251 = smul.u32 2, %s24
        %p4252 = scmp.lt.s32.totalorder %s4251, 3
        %s4253 = scalar_select %p4252, %s4251, 3
        %s4254 = smul.addr %s4253, 8
        %s4255 = smul.addr %s4254, 8
        %s4256 = scalar_lea.vmem %s12, %s4255
      $region80: #{specadapter_forward.1} parent=75 // pred_fallthru
        _
    $region76: #{specadapter_forward.1} parent=5 // pred_fallthru
      _
  $region6: #{specadapter_forward.1} parent=0 // loop_footer
    %s22 = sadd.s32 1, %s18
  $region7: #{specadapter_forward.1} parent=0 // loop_footer_branch
    %17 = sbr.rel target = $region3
  $region8: #{specadapter_forward.1} parent=0 // loop_exit
    _

// kernel: tile.53
$region0: #{tile.53}
  #allocation0 [shape = 's32[1]{0}', space=sflag, size = 0x4, scoped, tag = 'scoped memory for tile.53']
  %s0 = inlined_call_operand.vmem [shape: f32[64], index: 0, kind: input, shape index: {}]
  %s1 = inlined_call_operand.vmem [shape: f32[16,64], index: 1, kind: output, shape index: {}]
  // Predicated region
  $region2: #{tile.53} parent=0 // pred_check
    _
  $region3: #{tile.53} parent=0 // pred_check_branch
    %3 = sbr.rel (0) target = $region5
  $region4: #{tile.53} parent=0 // pred_region
    _
  $region5: #{tile.53} parent=0 // pred_fallthru
    _
  %v4 = vld [vmem:[%s0] ss:$0 sm:$0xff]
  %5 = vst [vmem:[%s1] sm:$0xff] %v4
  %s6 = scalar_lea.vmem %s1, 8
  %7 = vst [vmem:[%s6] sm:$0xff] %v4

// kernel: tile.54
$region0: #{tile.54}
  %s0 = inlined_call_operand.vmem [shape: f32[16,64], index: 0, kind: input, shape index: {}]
  %s1 = inlined_call_operand.vmem [shape: f32[1,1024], index: 1, kind: output, shape index: {}]
  $region1: #{tile.54} parent=0
    #allocation0 [shape = 'u8[32768]{0}', space=vmem, size = 0x8000, scoped, tag = 'scoped mem for output reshape']
    %v2 = vld [vmem:[%s0] ss:$2 sm:$0xff]
    %vm3 = vcmask 523264
    %4 = vst.msk [vmem:[#allocation0] ss:$8 sm:$0xf] %vm3, %v2
    %5 = vst.msk [vmem:[#allocation0] ss:$8 sm:$0xf0] %vm3, %v2
    %s6 = scalar_lea.vmem %s0, 1
    %v7 = vld [vmem:[%s6] ss:$2 sm:$0xff]
    %8 = vrot.lane.b32.xlu0 %v7, 64
    %v9 = vpop.permute.xlu0 %8
    %vm10 = vcmask 1048064
    %11 = vst.msk [vmem:[#allocation0] ss:$8 sm:$0xf] %vm10, %v9
    %12 = vst.msk [vmem:[#allocation0] ss:$8 sm:$0xf0] %vm10, %v9
    %s14 = sshllo.u32 0, 1
    %v16 = vld [vmem:[#allocation0] sm:%s14]
    %s17 = sshllo.u32 0, 1
    %18 = vst [vmem:[%s1] sm:%s17] %v16
    %s19 = scalar_lea.vmem [#allocation0], 8
    %v20 = vld [vmem:[%s19] sm:%s14]
    %s21 = sshllo.u32 0, 1
    %s22 = scalar_lea.vmem %s1, 1
    %23 = vst [vmem:[%s22] sm:%s21] %v20
    %s24 = scalar_lea.vmem [#allocation0], 16
    %v25 = vld [vmem:[%s24] sm:%s14]
    %s26 = sshllo.u32 0, 1
    %s27 = smul.addr 1, 2
    %s28 = scalar_lea.vmem %s1, %s27
    %29 = vst [vmem:[%s28] sm:%s26] %v25
    %s30 = scalar_lea.vmem [#allocation0], 24
    %v31 = vld [vmem:[%s30] sm:%s14]
    %s32 = sshllo.u32 0, 1
    %s33 = smul.addr 1, 3
    %s34 = scalar_lea.vmem %s1, %s33
    %35 = vst [vmem:[%s34] sm:%s32] %v31
    %s36 = scalar_lea.vmem [#allocation0], 32
    %v37 = vld [vmem:[%s36] sm:%s14]
    %s38 = sshllo.u32 0, 1
    %s39 = smul.addr 1, 4
    %s40 = scalar_lea.vmem %s1, %s39
    %41 = vst [vmem:[%s40] sm:%s38] %v37
    %s42 = scalar_lea.vmem [#allocation0], 40
    %v43 = vld [vmem:[%s42] sm:%s14]
    %s44 = sshllo.u32 0, 1
    %s45 = smul.addr 1, 5
    %s46 = scalar_lea.vmem %s1, %s45
    %47 = vst [vmem:[%s46] sm:%s44] %v43
    %s48 = scalar_lea.vmem [#allocation0], 48
    %v49 = vld [vmem:[%s48] sm:%s14]
    %s50 = sshllo.u32 0, 1
    %s51 = smul.addr 1, 6
    %s52 = scalar_lea.vmem %s1, %s51
    %53 = vst [vmem:[%s52] sm:%s50] %v49
    %s54 = scalar_lea.vmem [#allocation0], 56
    %v55 = vld [vmem:[%s54] sm:%s14]
    %s56 = sshllo.u32 0, 1
    %s57 = smul.addr 1, 7
    %s58 = scalar_lea.vmem %s1, %s57
    %59 = vst [vmem:[%s58] sm:%s56] %v55

// kernel: tile.43
$region0: #{tile.43}
  #allocation0 [shape = 's32[1]{0}', space=sflag, size = 0x4, scoped, tag = 'scoped memory for tile.43']
  %s0 = inlined_call_operand.vmem [shape: f32[16], index: 0, kind: input, shape index: {}]
  %s1 = inlined_call_operand.vmem [shape: f32[16,16], index: 1, kind: output, shape index: {}]
  // Predicated region
  $region2: #{tile.43} parent=0 // pred_check
    _
  $region3: #{tile.43} parent=0 // pred_check_branch
    %3 = sbr.rel (0) target = $region5
  $region4: #{tile.43} parent=0 // pred_region
    _
  $region5: #{tile.43} parent=0 // pred_fallthru
    _
  %v4 = vld [vmem:[%s0] ss:$0 sm:$0xff]
  %5 = vst [vmem:[%s1] sm:$0xff] %v4
  %s6 = scalar_lea.vmem %s1, 8
  %7 = vst [vmem:[%s6] sm:$0xff] %v4

// kernel: tile.44
$region0: #{tile.44}
  %s0 = inlined_call_operand.vmem [shape: f32[16,16], index: 0, kind: input, shape index: {}]
  %s1 = inlined_call_operand.vmem [shape: f32[1,256], index: 1, kind: output, shape index: {}]
  $region1: #{tile.44} parent=0
    #allocation0 [shape = 'u8[8192]{0}', space=vmem, size = 0x2000, scoped, tag = 'scoped mem for output reshape']
    %s2 = smov 3
    %v3 = vld [vmem:[%s0] ss:$8 sm:%s2]
    %vm4 = vcmask 130048
    %5 = vst.msk [vmem:[#allocation0] ss:$8 sm:$0x3] %vm4, %v3
    %s6 = scalar_lea.vmem %s0, 7
    %s7 = smov 3
    %v8 = vld [vmem:[%s6] ss:$8 sm:%s7]
    %9 = vrot.lane.b32.xlu0 %v8, 112
    %v10 = vpop.permute.xlu0 %9
    %vm11 = vcmask 1048448
    %12 = vst.msk [vmem:[#allocation0] ss:$8 sm:$0x3] %vm11, %v10
    %s13 = scalar_lea.vmem %s0, 6
    %s14 = smov 3
    %v15 = vld [vmem:[%s13] ss:$8 sm:%s14]
    %16 = vrot.lane.b32.xlu0 %v15, 96
    %v17 = vpop.permute.xlu0 %16
    %vm18 = vcmask 917248
    %19 = vst.msk [vmem:[#allocation0] ss:$8 sm:$0x3] %vm18, %v17
    %s20 = scalar_lea.vmem %s0, 5
    %s21 = smov 3
    %v22 = vld [vmem:[%s20] ss:$8 sm:%s21]
    %23 = vrot.lane.b32.xlu0 %v22, 80
    %v24 = vpop.permute.xlu0 %23
    %vm25 = vcmask 786048
    %26 = vst.msk [vmem:[#allocation0] ss:$8 sm:$0x3] %vm25, %v24
    %s27 = scalar_lea.vmem %s0, 4
    %s28 = smov 3
    %v29 = vld [vmem:[%s27] ss:$8 sm:%s28]
    %30 = vrot.lane.b32.xlu0 %v29, 64
    %v31 = vpop.permute.xlu0 %30
    %vm32 = vcmask 654848
    %33 = vst.msk [vmem:[#allocation0] ss:$8 sm:$0x3] %vm32, %v31
    %s34 = scalar_lea.vmem %s0, 3
    %s35 = smov 3
    %v36 = vld [vmem:[%s34] ss:$8 sm:%s35]
    %37 = vrot.lane.b32.xlu0 %v36, 48
    %v38 = vpop.permute.xlu0 %37
    %vm39 = vcmask 523648
    %40 = vst.msk [vmem:[#allocation0] ss:$8 sm:$0x3] %vm39, %v38
    %s41 = scalar_lea.vmem %s0, 2
    %s42 = smov 3
    %v43 = vld [vmem:[%s41] ss:$8 sm:%s42]
    %44 = vrot.lane.b32.xlu0 %v43, 32
    %v45 = vpop.permute.xlu0 %44
    %vm46 = vcmask 392448
    %47 = vst.msk [vmem:[#allocation0] ss:$8 sm:$0x3] %vm46, %v45
    %s48 = scalar_lea.vmem %s0, 1
    %s49 = smov 3
    %v50 = vld [vmem:[%s48] ss:$8 sm:%s49]
    %51 = vrot.lane.b32.xlu0 %v50, 16
    %v52 = vpop.permute.xlu0 %51
    %vm53 = vcmask 261248
    %54 = vst.msk [vmem:[#allocation0] ss:$8 sm:$0x3] %vm53, %v52
    %s56 = sshllo.u32 0, 1
    %v58 = vld [vmem:[#allocation0] sm:%s56]
    %s59 = sshllo.u32 0, 1
    %60 = vst [vmem:[%s1] sm:%s59] %v58
    %s61 = scalar_lea.vmem [#allocation0], 8
    %v62 = vld [vmem:[%s61] sm:%s56]
    %s63 = sshllo.u32 0, 1
    %s64 = scalar_lea.vmem %s1, 1
    %65 = vst [vmem:[%s64] sm:%s63] %v62

// kernel: tile.33
$region0: #{tile.33}
  #allocation0 [shape = 's32[1]{0}', space=sflag, size = 0x4, scoped, tag = 'scoped memory for tile.33']
  %s0 = inlined_call_operand.vmem [shape: f32[4], index: 0, kind: input, shape index: {}]
  %s1 = inlined_call_operand.vmem [shape: f32[16,4], index: 1, kind: output, shape index: {}]
  // Predicated region
  $region2: #{tile.33} parent=0 // pred_check
    _
  $region3: #{tile.33} parent=0 // pred_check_branch
    %3 = sbr.rel (0) target = $region5
  $region4: #{tile.33} parent=0 // pred_region
    _
  $region5: #{tile.33} parent=0 // pred_fallthru
    _
  %v4 = vld [vmem:[%s0] ss:$0 sm:$0xff]
  %5 = vst [vmem:[%s1] sm:$0xff] %v4
  %s6 = scalar_lea.vmem %s1, 8
  %7 = vst [vmem:[%s6] sm:$0xff] %v4

// kernel: tile.34
$region0: #{tile.34}
  %s0 = inlined_call_operand.vmem [shape: f32[16,4], index: 0, kind: input, shape index: {}]
  %s1 = inlined_call_operand.vmem [shape: f32[1,64], index: 1, kind: output, shape index: {}]
  $region1: #{tile.34} parent=0
    #allocation0 [shape = 'u8[4096]{0}', space=vmem, size = 0x1000, scoped, tag = 'scoped mem for output reshape']
    %v2 = vld [vmem:[%s0] sm:$0x1]
    %vm3 = vcmask 31744
    %4 = vst.msk [vmem:[#allocation0] sm:$0x1] %vm3, %v2
    %s5 = scalar_lea.vmem %s0, 15
    %v6 = vld [vmem:[%s5] sm:$0x1]
    %7 = vrot.lane.b32.xlu0 %v6, 60
    %v8 = vpop.permute.xlu0 %7
    %vm9 = vcmask 523744
    %10 = vst.msk [vmem:[#allocation0] sm:$0x1] %vm9, %v8
    %s11 = scalar_lea.vmem %s0, 14
    %v12 = vld [vmem:[%s11] sm:$0x1]
    %13 = vrot.lane.b32.xlu0 %v12, 56
    %v14 = vpop.permute.xlu0 %13
    %vm15 = vcmask 490944
    %16 = vst.msk [vmem:[#allocation0] sm:$0x1] %vm15, %v14
    %s17 = scalar_lea.vmem %s0, 13
    %v18 = vld [vmem:[%s17] sm:$0x1]
    %19 = vrot.lane.b32.xlu0 %v18, 52
    %v20 = vpop.permute.xlu0 %19
    %vm21 = vcmask 458144
    %22 = vst.msk [vmem:[#allocation0] sm:$0x1] %vm21, %v20
    %s23 = scalar_lea.vmem %s0, 12
    %v24 = vld [vmem:[%s23] sm:$0x1]
    %25 = vrot.lane.b32.xlu0 %v24, 48
    %v26 = vpop.permute.xlu0 %25
    %vm27 = vcmask 425344
    %28 = vst.msk [vmem:[#allocation0] sm:$0x1] %vm27, %v26
    %s29 = scalar_lea.vmem %s0, 11
    %v30 = vld [vmem:[%s29] sm:$0x1]
    %31 = vrot.lane.b32.xlu0 %v30, 44
    %v32 = vpop.permute.xlu0 %31
    %vm33 = vcmask 392544
    %34 = vst.msk [vmem:[#allocation0] sm:$0x1] %vm33, %v32
    %s35 = scalar_lea.vmem %s0, 10
    %v36 = vld [vmem:[%s35] sm:$0x1]
    %37 = vrot.lane.b32.xlu0 %v36, 40
    %v38 = vpop.permute.xlu0 %37
    %vm39 = vcmask 359744
    %40 = vst.msk [vmem:[#allocation0] sm:$0x1] %vm39, %v38
    %s41 = scalar_lea.vmem %s0, 9
    %v42 = vld [vmem:[%s41] sm:$0x1]
    %43 = vrot.lane.b32.xlu0 %v42, 36
    %v44 = vpop.permute.xlu0 %43
    %vm45 = vcmask 326944
    %46 = vst.msk [vmem:[#allocation0] sm:$0x1] %vm45, %v44
    %s47 = scalar_lea.vmem %s0, 8
    %v48 = vld [vmem:[%s47] sm:$0x1]
    %49 = vrot.lane.b32.xlu0 %v48, 32
    %v50 = vpop.permute.xlu0 %49
    %vm51 = vcmask 294144
    %52 = vst.msk [vmem:[#allocation0] sm:$0x1] %vm51, %v50
    %s53 = scalar_lea.vmem %s0, 7
    %v54 = vld [vmem:[%s53] sm:$0x1]
    %55 = vrot.lane.b32.xlu0 %v54, 28
    %v56 = vpop.permute.xlu0 %55
    %vm57 = vcmask 261344
    %58 = vst.msk [vmem:[#allocation0] sm:$0x1] %vm57, %v56
    %s59 = scalar_lea.vmem %s0, 6
    %v60 = vld [vmem:[%s59] sm:$0x1]
    %61 = vrot.lane.b32.xlu0 %v60, 24
    %v62 = vpop.permute.xlu0 %61
    %vm63 = vcmask 228544
    %64 = vst.msk [vmem:[#allocation0] sm:$0x1] %vm63, %v62
    %s65 = scalar_lea.vmem %s0, 5
    %v66 = vld [vmem:[%s65] sm:$0x1]
    %67 = vrot.lane.b32.xlu0 %v66, 20
    %v68 = vpop.permute.xlu0 %67
    %vm69 = vcmask 195744
    %70 = vst.msk [vmem:[#allocation0] sm:$0x1] %vm69, %v68
    %s71 = scalar_lea.vmem %s0, 4
    %v72 = vld [vmem:[%s71] sm:$0x1]
    %73 = vrot.lane.b32.xlu0 %v72, 16
    %v74 = vpop.permute.xlu0 %73
    %vm75 = vcmask 162944
    %76 = vst.msk [vmem:[#allocation0] sm:$0x1] %vm75, %v74
    %s77 = scalar_lea.vmem %s0, 3
    %v78 = vld [vmem:[%s77] sm:$0x1]
    %79 = vrot.lane.b32.xlu0 %v78, 12
    %v80 = vpop.permute.xlu0 %79
    %vm81 = vcmask 130144
    %82 = vst.msk [vmem:[#allocation0] sm:$0x1] %vm81, %v80
    %s83 = scalar_lea.vmem %s0, 2
    %v84 = vld [vmem:[%s83] sm:$0x1]
    %85 = vrot.lane.b32.xlu0 %v84, 8
    %v86 = vpop.permute.xlu0 %85
    %vm87 = vcmask 97344
    %88 = vst.msk [vmem:[#allocation0] sm:$0x1] %vm87, %v86
    %s89 = scalar_lea.vmem %s0, 1
    %v90 = vld [vmem:[%s89] sm:$0x1]
    %91 = vrot.lane.b32.xlu0 %v90, 4
    %v92 = vpop.permute.xlu0 %91
    %vm93 = vcmask 64544
    %94 = vst.msk [vmem:[#allocation0] sm:$0x1] %vm93, %v92
    %s96 = sshllo.u32 0, 1
    %v98 = vld [vmem:[#allocation0] sm:%s96]
    %s99 = sshllo.u32 0, 1
    %100 = vst [vmem:[%s1] sm:%s99] %v98

// kernel: specadapter_forward.1
$region0: #{specadapter_forward.1}
  #allocation0 [shape = 'u32[]', space=smem, size = 0x4, offset = 0x4, fixed_abs, tag = 'smem constant byte address 0x4 - core index']
  #allocation1 [shape = 'u32[144,128]{1,0:T(1,128)}', space=vmem, size = 0x12000, scoped, tag = 'internal scratch']
  %s0 = inlined_call_operand.vmem [shape: f32[48,16], index: 0, kind: input, shape index: {}]
  %s1 = inlined_call_operand.vmem [shape: f32[22,1], index: 1, kind: input, shape index: {}]
  %s2 = inlined_call_operand.vmem [shape: f32[20,1], index: 2, kind: input, shape index: {}]
  %s3 = inlined_call_operand.vmem [shape: bf16[3,16,64], index: 3, kind: input, shape index: {}]
  %s4 = inlined_call_operand.vmem [shape: f32[1,64], index: 4, kind: input, shape index: {}]
  %s5 = inlined_call_operand.vmem [shape: f32[1,64], index: 5, kind: input, shape index: {}]
  %s6 = inlined_call_operand.vmem [shape: bf16[3,64,256], index: 6, kind: input, shape index: {}]
  %s7 = inlined_call_operand.vmem [shape: f32[1,256], index: 7, kind: input, shape index: {}]
  %s8 = inlined_call_operand.vmem [shape: f32[1,256], index: 8, kind: input, shape index: {}]
  %s9 = inlined_call_operand.vmem [shape: bf16[3,256,1024], index: 9, kind: input, shape index: {}]
  %s10 = inlined_call_operand.vmem [shape: f32[1,1024], index: 10, kind: input, shape index: {}]
  %s11 = inlined_call_operand.vmem [shape: f32[1,1024], index: 11, kind: input, shape index: {}]
  %s12 = inlined_call_operand.vmem [shape: f32[32,1024], index: 12, kind: output, shape index: {}]
  %s13 = sld [smem:[#allocation0]]
  $region81: #{specadapter_forward.1} parent=0
    _
  %s15 = ssub.s32 1, %s13
  %s16 = scalar_select 0, %s15, %s13
  loop: start=0, step=1, limit=4
  $region2: #{specadapter_forward.1} parent=0 // loop_pre_header
    _
  $region3: #{specadapter_forward.1} parent=0 // loop_header
    %s18 = sphi 0, %s22
    %p19 = scmp.ge.s32.totalorder %s18, 4
    %s28 = sphi 0, %s30
    %s31 = sphi 0, %s28
    %s32 = sphi 0, %s31
    %s48 = sphi 0, %s32
    %s52 = sphi 0, %s52
    %s54 = sphi 0, %s52
    %s55 = sphi 0, %s54
    %s69 = sphi 0, %s55
    %s73 = sphi 0, %s73
    %s75 = sphi 0, %s73
    %s76 = sphi 0, %s75
    %s90 = sphi 0, %s76
    %s94 = sphi 0, %s94
    %s96 = sphi 0, %s94
    %s97 = sphi 0, %s96
    %s111 = sphi 0, %s97
    %s115 = sphi 0, %s115
    %s117 = sphi 0, %s115
    %s118 = sphi 0, %s117
    %s132 = sphi 0, %s118
    %s136 = sphi 0, %s136
    %s138 = sphi 0, %s136
    %s139 = sphi 0, %s138
    %s153 = sphi 0, %s139
    %s157 = sphi 0, %s157
    %s159 = sphi 0, %s157
    %s160 = sphi 0, %s159
    %s174 = sphi 0, %s160
    %s178 = sphi 0, %s178
    %s180 = sphi 0, %s178
    %s181 = sphi 0, %s180
    %s195 = sphi 0, %s181
    %s199 = sphi 0, %s199
    %s201 = sphi 0, %s199
    %s202 = sphi 0, %s201
    %s216 = sphi 0, %s202
    %s220 = sphi 0, %s220
    %s222 = sphi 0, %s220
    %s223 = sphi 0, %s222
    %s237 = sphi 0, %s223
    %s241 = sphi 0, %s241
    %s243 = sphi 0, %s241
    %s244 = sphi 0, %s243
    %s258 = sphi 0, %s244
    %s262 = sphi 0, %s262
    %s264 = sphi 0, %s262
    %s265 = sphi 0, %s264
    %s279 = sphi 0, %s265
    %s285 = sphi 0, %s287
    %s288 = sphi 0, %s285
    %s289 = sphi 0, %s288
    %s305 = sphi 0, %s289
  $region4: #{specadapter_forward.1} parent=0 // loop_header_branch
    %21 = sbr.rel (%p19) target = $region8
  $region5: #{specadapter_forward.1} parent=0 // loop_body
    %s23 = ssub.s32 %s18, 1
    %s24 = ssub.s32 %s18, 2
    %s25 = sadd.s32 %s18, 1
    %s26 = ssub.s32 %s18, %s25
    %p27 = scmp.eq.s32.totalorder %s26, 0
    %s29 = sadd.s32 %s28, 1
    %s30 = scalar_select %p27, %s28, %s29
    %p33 = pneg %p27
    %p34 = scmp.eq.s32.totalorder %s18, 1
    %p35 = por %p33, %p34
    %p36 = scmp.ne.s32.totalorder %s28, %s31
    %p37 = scmp.eq.s32.totalorder %s18, 0
    %p38 = por %p36, %p37
    %p39 = scmp.ne.s32.totalorder %s28, %s31
    %p40 = scmp.eq.s32.totalorder %s23, 1
    %p41 = por %p39, %p40
    %p42 = scmp.ne.s32.totalorder %s31, %s32
    %p43 = scmp.eq.s32.totalorder %s23, 0
    %p44 = por %p42, %p43
    %p45 = scmp.ne.s32.totalorder %s31, %s32
    %p46 = scmp.eq.s32.totalorder %s24, 1
    %p47 = por %p45, %p46
    %p49 = scmp.ne.s32.totalorder %s32, %s48
    %p50 = scmp.eq.s32.totalorder %s24, 0
    %p51 = por %p49, %p50
    %s53 = sadd.s32 %s52, 1
    %p56 = scmp.eq.s32.totalorder %s18, 1
    %p57 = scmp.ne.s32.totalorder %s52, %s54
    %p58 = scmp.eq.s32.totalorder %s18, 0
    %p59 = por %p57, %p58
    %p60 = scmp.ne.s32.totalorder %s52, %s54
    %p61 = scmp.eq.s32.totalorder %s23, 1
    %p62 = por %p60, %p61
    %p63 = scmp.ne.s32.totalorder %s54, %s55
    %p64 = scmp.eq.s32.totalorder %s23, 0
    %p65 = por %p63, %p64
    %p66 = scmp.ne.s32.totalorder %s54, %s55
    %p67 = scmp.eq.s32.totalorder %s24, 1
    %p68 = por %p66, %p67
    %p70 = scmp.ne.s32.totalorder %s55, %s69
    %p71 = scmp.eq.s32.totalorder %s24, 0
    %p72 = por %p70, %p71
    %s74 = sadd.s32 %s73, 1
    %p77 = scmp.eq.s32.totalorder %s18, 1
    %p78 = scmp.ne.s32.totalorder %s73, %s75
    %p79 = scmp.eq.s32.totalorder %s18, 0
    %p80 = por %p78, %p79
    %p81 = scmp.ne.s32.totalorder %s73, %s75
    %p82 = scmp.eq.s32.totalorder %s23, 1
    %p83 = por %p81, %p82
    %p84 = scmp.ne.s32.totalorder %s75, %s76
    %p85 = scmp.eq.s32.totalorder %s23, 0
    %p86 = por %p84, %p85
    %p87 = scmp.ne.s32.totalorder %s75, %s76
    %p88 = scmp.eq.s32.totalorder %s24, 1
    %p89 = por %p87, %p88
    %p91 = scmp.ne.s32.totalorder %s76, %s90
    %p92 = scmp.eq.s32.totalorder %s24, 0
    %p93 = por %p91, %p92
    %s95 = sadd.s32 %s94, 1
    %p98 = scmp.eq.s32.totalorder %s18, 1
    %p99 = scmp.ne.s32.totalorder %s94, %s96
    %p100 = scmp.eq.s32.totalorder %s18, 0
    %p101 = por %p99, %p100
    %p102 = scmp.ne.s32.totalorder %s94, %s96
    %p103 = scmp.eq.s32.totalorder %s23, 1
    %p104 = por %p102, %p103
    %p105 = scmp.ne.s32.totalorder %s96, %s97
    %p106 = scmp.eq.s32.totalorder %s23, 0
    %p107 = por %p105, %p106
    %p108 = scmp.ne.s32.totalorder %s96, %s97
    %p109 = scmp.eq.s32.totalorder %s24, 1
    %p110 = por %p108, %p109
    %p112 = scmp.ne.s32.totalorder %s97, %s111
    %p113 = scmp.eq.s32.totalorder %s24, 0
    %p114 = por %p112, %p113
    %s116 = sadd.s32 %s115, 1
    %p119 = scmp.eq.s32.totalorder %s18, 1
    %p120 = scmp.ne.s32.totalorder %s115, %s117
    %p121 = scmp.eq.s32.totalorder %s18, 0
    %p122 = por %p120, %p121
    %p123 = scmp.ne.s32.totalorder %s115, %s117
    %p124 = scmp.eq.s32.totalorder %s23, 1
    %p125 = por %p123, %p124
    %p126 = scmp.ne.s32.totalorder %s117, %s118
    %p127 = scmp.eq.s32.totalorder %s23, 0
    %p128 = por %p126, %p127
    %p129 = scmp.ne.s32.totalorder %s117, %s118
    %p130 = scmp.eq.s32.totalorder %s24, 1
    %p131 = por %p129, %p130
    %p133 = scmp.ne.s32.totalorder %s118, %s132
    %p134 = scmp.eq.s32.totalorder %s24, 0
    %p135 = por %p133, %p134
    %s137 = sadd.s32 %s136, 1
    %p140 = scmp.eq.s32.totalorder %s18, 1
    %p141 = scmp.ne.s32.totalorder %s136, %s138
    %p142 = scmp.eq.s32.totalorder %s18, 0
    %p143 = por %p141, %p142
    %p144 = scmp.ne.s32.totalorder %s136, %s138
    %p145 = scmp.eq.s32.totalorder %s23, 1
    %p146 = por %p144, %p145
    %p147 = scmp.ne.s32.totalorder %s138, %s139
    %p148 = scmp.eq.s32.totalorder %s23, 0
    %p149 = por %p147, %p148
    %p150 = scmp.ne.s32.totalorder %s138, %s139
    %p151 = scmp.eq.s32.totalorder %s24, 1
    %p152 = por %p150, %p151
    %p154 = scmp.ne.s32.totalorder %s139, %s153
    %p155 = scmp.eq.s32.totalorder %s24, 0
    %p156 = por %p154, %p155
    %s158 = sadd.s32 %s157, 1
    %p161 = scmp.eq.s32.totalorder %s18, 1
    %p162 = scmp.ne.s32.totalorder %s157, %s159
    %p163 = scmp.eq.s32.totalorder %s18, 0
    %p164 = por %p162, %p163
    %p165 = scmp.ne.s32.totalorder %s157, %s159
    %p166 = scmp.eq.s32.totalorder %s23, 1
    %p167 = por %p165, %p166
    %p168 = scmp.ne.s32.totalorder %s159, %s160
    %p169 = scmp.eq.s32.totalorder %s23, 0
    %p170 = por %p168, %p169
    %p171 = scmp.ne.s32.totalorder %s159, %s160
    %p172 = scmp.eq.s32.totalorder %s24, 1
    %p173 = por %p171, %p172
    %p175 = scmp.ne.s32.totalorder %s160, %s174
    %p176 = scmp.eq.s32.totalorder %s24, 0
    %p177 = por %p175, %p176
    %s179 = sadd.s32 %s178, 1
    %p182 = scmp.eq.s32.totalorder %s18, 1
    %p183 = scmp.ne.s32.totalorder %s178, %s180
    %p184 = scmp.eq.s32.totalorder %s18, 0
    %p185 = por %p183, %p184
    %p186 = scmp.ne.s32.totalorder %s178, %s180
    %p187 = scmp.eq.s32.totalorder %s23, 1
    %p188 = por %p186, %p187
    %p189 = scmp.ne.s32.totalorder %s180, %s181
    %p190 = scmp.eq.s32.totalorder %s23, 0
    %p191 = por %p189, %p190
    %p192 = scmp.ne.s32.totalorder %s180, %s181
    %p193 = scmp.eq.s32.totalorder %s24, 1
    %p194 = por %p192, %p193
    %p196 = scmp.ne.s32.totalorder %s181, %s195
    %p197 = scmp.eq.s32.totalorder %s24, 0
    %p198 = por %p196, %p197
    %s200 = sadd.s32 %s199, 1
    %p203 = scmp.eq.s32.totalorder %s18, 1
    %p204 = scmp.ne.s32.totalorder %s199, %s201
    %p205 = scmp.eq.s32.totalorder %s18, 0
    %p206 = por %p204, %p205
    %p207 = scmp.ne.s32.totalorder %s199, %s201
    %p208 = scmp.eq.s32.totalorder %s23, 1
    %p209 = por %p207, %p208
    %p210 = scmp.ne.s32.totalorder %s201, %s202
    %p211 = scmp.eq.s32.totalorder %s23, 0
    %p212 = por %p210, %p211
    %p213 = scmp.ne.s32.totalorder %s201, %s202
    %p214 = scmp.eq.s32.totalorder %s24, 1
    %p215 = por %p213, %p214
    %p217 = scmp.ne.s32.totalorder %s202, %s216
    %p218 = scmp.eq.s32.totalorder %s24, 0
    %p219 = por %p217, %p218
    %s221 = sadd.s32 %s220, 1
    %p224 = scmp.eq.s32.totalorder %s18, 1
    %p225 = scmp.ne.s32.totalorder %s220, %s222
    %p226 = scmp.eq.s32.totalorder %s18, 0
    %p227 = por %p225, %p226
    %p228 = scmp.ne.s32.totalorder %s220, %s222
    %p229 = scmp.eq.s32.totalorder %s23, 1
    %p230 = por %p228, %p229
    %p231 = scmp.ne.s32.totalorder %s222, %s223
    %p232 = scmp.eq.s32.totalorder %s23, 0
    %p233 = por %p231, %p232
    %p234 = scmp.ne.s32.totalorder %s222, %s223
    %p235 = scmp.eq.s32.totalorder %s24, 1
    %p236 = por %p234, %p235
    %p238 = scmp.ne.s32.totalorder %s223, %s237
    %p239 = scmp.eq.s32.totalorder %s24, 0
    %p240 = por %p238, %p239
    %s242 = sadd.s32 %s241, 1
    %p245 = scmp.eq.s32.totalorder %s18, 1
    %p246 = scmp.ne.s32.totalorder %s241, %s243
    %p247 = scmp.eq.s32.totalorder %s18, 0
    %p248 = por %p246, %p247
    %p249 = scmp.ne.s32.totalorder %s241, %s243
    %p250 = scmp.eq.s32.totalorder %s23, 1
    %p251 = por %p249, %p250
    %p252 = scmp.ne.s32.totalorder %s243, %s244
    %p253 = scmp.eq.s32.totalorder %s23, 0
    %p254 = por %p252, %p253
    %p255 = scmp.ne.s32.totalorder %s243, %s244
    %p256 = scmp.eq.s32.totalorder %s24, 1
    %p257 = por %p255, %p256
    %p259 = scmp.ne.s32.totalorder %s244, %s258
    %p260 = scmp.eq.s32.totalorder %s24, 0
    %p261 = por %p259, %p260
    %s263 = sadd.s32 %s262, 1
    %p266 = scmp.eq.s32.totalorder %s18, 1
    %p267 = scmp.ne.s32.totalorder %s262, %s264
    %p268 = scmp.eq.s32.totalorder %s18, 0
    %p269 = por %p267, %p268
    %p270 = scmp.ne.s32.totalorder %s262, %s264
    %p271 = scmp.eq.s32.totalorder %s23, 1
    %p272 = por %p270, %p271
    %p273 = scmp.ne.s32.totalorder %s264, %s265
    %p274 = scmp.eq.s32.totalorder %s23, 0
    %p275 = por %p273, %p274
    %p276 = scmp.ne.s32.totalorder %s264, %s265
    %p277 = scmp.eq.s32.totalorder %s24, 1
    %p278 = por %p276, %p277
    %p280 = scmp.ne.s32.totalorder %s265, %s279
    %p281 = scmp.eq.s32.totalorder %s24, 0
    %p282 = por %p280, %p281
    %s283 = ssub.s32 %s18, %s25
    %p284 = scmp.eq.s32.totalorder %s283, 0
    %s286 = sadd.s32 %s285, 1
    %s287 = scalar_select %p284, %s285, %s286
    %p290 = pneg %p284
    %p291 = scmp.eq.s32.totalorder %s18, 1
    %p292 = por %p290, %p291
    %p293 = scmp.ne.s32.totalorder %s285, %s288
    %p294 = scmp.eq.s32.totalorder %s18, 0
    %p295 = por %p293, %p294
    %p296 = scmp.ne.s32.totalorder %s285, %s288
    %p297 = scmp.eq.s32.totalorder %s23, 1
    %p298 = por %p296, %p297
    %p299 = scmp.ne.s32.totalorder %s288, %s289
    %p300 = scmp.eq.s32.totalorder %s23, 0
    %p301 = por %p299, %p300
    %p302 = scmp.ne.s32.totalorder %s288, %s289
    %p303 = scmp.eq.s32.totalorder %s24, 1
    %p304 = por %p302, %p303
    %p306 = scmp.ne.s32.totalorder %s289, %s305
    %p307 = scmp.eq.s32.totalorder %s24, 0
    %p308 = por %p306, %p307
    %p309 = scmp.le.s32.totalorder 1, %s18
    %p310 = scmp.lt.s32.totalorder %s18, 3
    %p311 = pnand %p309, %p310
    %p312 = pneg %p311
    // Predicated region
    $region9: #{specadapter_forward.1} parent=5 // pred_check
      _
    $region10: #{specadapter_forward.1} parent=5 // pred_check_branch
      %314 = sbr.rel (%p311) target = $region12
    $region11: #{specadapter_forward.1} parent=5 // pred_region
      %s315 = ssub.s32 %s18, 1
      // Predicated region
      $region13: #{specadapter_forward.1} parent=11 // pred_check
        %p316 = pneg %p65
      $region14: #{specadapter_forward.1} parent=11 // pred_check_branch
        %318 = sbr.rel (%p316) target = $region16
      $region15: #{specadapter_forward.1} parent=11 // pred_region
        _
      $region16: #{specadapter_forward.1} parent=11 // pred_fallthru
        _
      // Predicated region
      $region17: #{specadapter_forward.1} parent=11 // pred_check
        %p319 = pneg %p86
      $region18: #{specadapter_forward.1} parent=11 // pred_check_branch
        %321 = sbr.rel (%p319) target = $region20
      $region19: #{specadapter_forward.1} parent=11 // pred_region
        _
      $region20: #{specadapter_forward.1} parent=11 // pred_fallthru
        _
      // Predicated region
      $region21: #{specadapter_forward.1} parent=11 // pred_check
        %p322 = pneg %p107
      $region22: #{specadapter_forward.1} parent=11 // pred_check_branch
        %324 = sbr.rel (%p322) target = $region24
      $region23: #{specadapter_forward.1} parent=11 // pred_region
        _
      $region24: #{specadapter_forward.1} parent=11 // pred_fallthru
        _
      // Predicated region
      $region25: #{specadapter_forward.1} parent=11 // pred_check
        %p325 = pneg %p128
      $region26: #{specadapter_forward.1} parent=11 // pred_check_branch
        %327 = sbr.rel (%p325) target = $region28
      $region27: #{specadapter_forward.1} parent=11 // pred_region
        _
      $region28: #{specadapter_forward.1} parent=11 // pred_fallthru
        _
      // Predicated region
      $region29: #{specadapter_forward.1} parent=11 // pred_check
        %p328 = pneg %p149
      $region30: #{specadapter_forward.1} parent=11 // pred_check_branch
        %330 = sbr.rel (%p328) target = $region32
      $region31: #{specadapter_forward.1} parent=11 // pred_region
        _
      $region32: #{specadapter_forward.1} parent=11 // pred_fallthru
        _
      // Predicated region
      $region33: #{specadapter_forward.1} parent=11 // pred_check
        %p331 = pneg %p170
      $region34: #{specadapter_forward.1} parent=11 // pred_check_branch
        %333 = sbr.rel (%p331) target = $region36
      $region35: #{specadapter_forward.1} parent=11 // pred_region
        _
      $region36: #{specadapter_forward.1} parent=11 // pred_fallthru
        _
      // Predicated region
      $region37: #{specadapter_forward.1} parent=11 // pred_check
        %p334 = pneg %p191
      $region38: #{specadapter_forward.1} parent=11 // pred_check_branch
        %336 = sbr.rel (%p334) target = $region40
      $region39: #{specadapter_forward.1} parent=11 // pred_region
        _
      $region40: #{specadapter_forward.1} parent=11 // pred_fallthru
        _
      // Predicated region
      $region41: #{specadapter_forward.1} parent=11 // pred_check
        %p337 = pneg %p212
      $region42: #{specadapter_forward.1} parent=11 // pred_check_branch
        %339 = sbr.rel (%p337) target = $region44
      $region43: #{specadapter_forward.1} parent=11 // pred_region
        _
      $region44: #{specadapter_forward.1} parent=11 // pred_fallthru
        _
      // Predicated region
      $region45: #{specadapter_forward.1} parent=11 // pred_check
        %p340 = pneg %p233
      $region46: #{specadapter_forward.1} parent=11 // pred_check_branch
        %342 = sbr.rel (%p340) target = $region48
      $region47: #{specadapter_forward.1} parent=11 // pred_region
        _
      $region48: #{specadapter_forward.1} parent=11 // pred_fallthru
        _
      // Predicated region
      $region49: #{specadapter_forward.1} parent=11 // pred_check
        %p343 = pneg %p254
      $region50: #{specadapter_forward.1} parent=11 // pred_check_branch
        %345 = sbr.rel (%p343) target = $region52
      $region51: #{specadapter_forward.1} parent=11 // pred_region
        _
      $region52: #{specadapter_forward.1} parent=11 // pred_fallthru
        _
      // Predicated region
      $region53: #{specadapter_forward.1} parent=11 // pred_check
        %p346 = pneg %p275
      $region54: #{specadapter_forward.1} parent=11 // pred_check_branch
        %348 = sbr.rel (%p346) target = $region56
      $region55: #{specadapter_forward.1} parent=11 // pred_region
        _
      $region56: #{specadapter_forward.1} parent=11 // pred_fallthru
        _
    $region12: #{specadapter_forward.1} parent=5 // pred_fallthru
      _
    %p349 = scmp.lt.s32.totalorder %s18, 2
    // Predicated region
    $region57: #{specadapter_forward.1} parent=5 // pred_check
      %p350 = pneg %p349
    $region58: #{specadapter_forward.1} parent=5 // pred_check_branch
      %352 = sbr.rel (%p350) target = $region60
    $region59: #{specadapter_forward.1} parent=5 // pred_region
      // Predicated region
      $region61: #{specadapter_forward.1} parent=59 // pred_check
        %p353 = pneg %p38
      $region62: #{specadapter_forward.1} parent=59 // pred_check_branch
        %355 = sbr.rel (%p353) target = $region64
      $region63: #{specadapter_forward.1} parent=59 // pred_region
        %s356 = smul.u32 3, %s18
        %p357 = scmp.lt.s32.totalorder %s356, 5
        %s358 = scalar_select %p357, %s356, 5
        %s359 = smul.addr %s358, 8
        %s360 = scalar_lea.vmem %s0, %s359
        %s361 = smul.u32 3, %s18
      $region64: #{specadapter_forward.1} parent=59 // pred_fallthru
        _
    $region60: #{specadapter_forward.1} parent=5 // pred_fallthru
      _
    %p362 = scmp.le.s32.totalorder 1, %s18
    %p363 = scmp.lt.s32.totalorder %s18, 3
    %p364 = pnand %p362, %p363
    %p365 = pneg %p364
    // Predicated region
    $region65: #{specadapter_forward.1} parent=5 // pred_check
      _
    $region66: #{specadapter_forward.1} parent=5 // pred_check_branch
      %367 = sbr.rel (%p364) target = $region68
    $region67: #{specadapter_forward.1} parent=5 // pred_region
      %s368 = ssub.s32 %s18, 1
      %s369 = smul.u32 3, %s23
      %p370 = scmp.lt.s32.totalorder %s369, 5
      %s371 = scalar_select %p370, %s369, 5
      %s372 = smul.addr %s371, 8
      %s373 = scalar_lea.vmem %s0, %s372
      %p374 = pneg %p44
      %p375 = pneg %p41
      %p376 = pneg %p65
      %p377 = pneg %p62
      %p378 = pneg %p86
      %p379 = pneg %p83
      %p380 = pneg %p107
      %p381 = pneg %p104
      %p382 = pneg %p128
      %p383 = pneg %p125
      %p384 = pneg %p149
      %p385 = pneg %p146
      %p386 = pneg %p170
      %p387 = pneg %p167
      %p388 = pneg %p191
      %p389 = pneg %p188
      %p390 = pneg %p212
      %p391 = pneg %p209
      %p392 = pneg %p233
      %p393 = pneg %p230
      %p394 = pneg %p254
      %p395 = pneg %p251
      %p396 = pneg %p275
      %p397 = pneg %p272
      %p398 = pneg %p301
      %p399 = pneg %p298
      %s400 = smul.u32 2, %s23
      %p401 = scmp.lt.s32.totalorder %s400, 3
      %s402 = scalar_select %p401, %s400, 3
      %s403 = smul.addr %s402, 8
      %s404 = smul.addr %s403, 8
      %s405 = scalar_lea.vmem %s12, %s404
      %s406 = smul.u32 3, %s23
      %p407 = scmp.lt.s32.totalorder %s406, 5
      %s408 = scalar_select %p407, %s406, 5
      %s409 = smul.addr %s408, 8
      %s410 = scalar_lea.vmem %s0, %s409
      %s411 = smul.u32 3, %s23
      %s412 = smul.u32 2, %s23
      %p413 = scmp.lt.s32.totalorder %s412, 3
      %s414 = scalar_select %p413, %s412, 3
      %s415 = smul.addr %s414, 8
      %s416 = smul.addr %s415, 8
      %s417 = scalar_lea.vmem %s12, %s416
      %s418 = smul.u32 2, %s23
      %v420 = vld [vmem:[%s410] sm:$0xff]
      %v421 = vld [vmem:[%s410 + $0x8] sm:$0xff]
      %v422 = vld [vmem:[%s410 + $0x10] sm:$0xff]
      %v423 = vld [vmem:[%s1] sm:$0xff]
      %v424 = vld [vmem:[%s1 + $0x8] sm:$0xff]
      %v425 = vld [vmem:[%s1 + $0x10] sm:$0x3f]
      %v426 = vpack.c.bf16 %v421, %v420
      %v427 = vpack.c.bf16 %v422, %v422
      %v428 = vld [vmem:[%s3] sm:$0xf]
      %v429 = vld [vmem:[%s3 + $0x4] sm:$0xf]
      %s430 = scalar_lea.vmem %s3, 8
      %v431 = vld [vmem:[%s430] sm:$0xf]
      %v432 = vld [vmem:[%s430 + $0x4] sm:$0xf]
      %vm433 = vsmask.f32 7424
      %v435 = vshrl.u32 %v426, 16
      %v437 = vshll.u32 %v426, 16
      %v439 = vrot.slane %v437, 1
      %v440 = vor.u32 %v435, %v439
      %v442 = vshll.u32 %v427, 16
      %v444 = vrot.slane %v442, 1
      %v445 = vsel %vm433, %v440, %v444
      %v446 = vshrl.u32 %v427, 16
      %v448 = vor.u32 %v446, %v444
      %v451 = vunpack.c.l.b16 %v431
      %v452 = vunpack.c.l.b16 %v432
      %v453 = vpack.c.b16 %v452, %v451
      %vm455 = vcmask 130048
      %v457 = vsel %vm455, %v445, 0
      %v460 = vsel %vm455, %v448, 0
      %462 = vmatprep.subr.bf16.mxu0 0
      %463 = vmatpush1.bf16.msra.mxu0 %v453
      %464 = vmatprep.subr.bf16.mxu0 0
      %465 = vmatpush1.bf16.msra.mxu0 0
      %466 = vmatprep.subr.bf16.mxu0 0
      %467 = vmatpush1.bf16.msra.mxu0 0
      %468 = vmatprep.subr.bf16.mxu0 0
      %469 = vmatpush1.bf16.msra.mxu0 0
      %470 = vmatprep.subr.bf16.mxu0 0
      %471 = vmatpush1.bf16.msra.mxu0 0
      %472 = vmatprep.subr.bf16.mxu0 0
      %473 = vmatpush1.bf16.msra.mxu0 0
      %474 = vmatprep.subr.bf16.mxu0 0
      %475 = vmatpush1.bf16.msra.mxu0 0
      %476 = vmatprep.subr.bf16.mxu0 0
      %477 = vmatpush1.bf16.msra.mxu0 0
      %478 = vmatprep.subr.bf16.mxu0 0
      %479 = vmatpush1.bf16.msra.mxu0 0
      %480 = vmatprep.subr.bf16.mxu0 0
      %481 = vmatpush1.bf16.msra.mxu0 0
      %482 = vmatprep.subr.bf16.mxu0 0
      %483 = vmatpush1.bf16.msra.mxu0 0
      %484 = vmatprep.subr.bf16.mxu0 0
      %485 = vmatpush1.bf16.msra.mxu0 0
      %486 = vmatprep.subr.bf16.mxu0 0
      %487 = vmatpush1.bf16.msra.mxu0 0
      %488 = vmatprep.subr.bf16.mxu0 0
      %489 = vmatpush1.bf16.msra.mxu0 0
      %490 = vmatprep.subr.bf16.mxu0 0
      %491 = vmatpush1.bf16.msra.mxu0 0
      %492 = vmatprep.subr.bf16.mxu0 0
      %493 = vmatpush1.bf16.msra.mxu0 0
      %494 = vmatprep.mubr.bf16.mxu0 0
      %495 = vmatmul.mubr.bf16.gmra.mrb[0].mxu0 %v457
      %v496 = vpop.f32.mrb[0].mxu0
      %v497 = vadd.f32 0.0, %v496
      %v498 = vpop.f32.mrb[0].mxu0
      %v499 = vpop.f32.mrb[0].mxu0
      %v500 = vadd.f32 0.0, %v499
      %v501 = vpop.f32.mrb[0].mxu0
      %502 = vmatprep.mubr.bf16.mxu0 0
      %503 = vmatmul.mubr.bf16.gmra.mrb[0].mxu0 %v460
      %v504 = vpop.f32.mrb[0].mxu0
      %v505 = vadd.f32 0.0, %v504
      %v506 = vpop.f32.mrb[0].mxu0
      %v507 = vpop.f32.mrb[0].mxu0
      %v508 = vpop.f32.mrb[0].mxu0
      %509 = vdwg.mxu0
      %v512 = vunpack.c.l.b16 %v428
      %v513 = vunpack.c.l.b16 %v429
      %v514 = vpack.c.b16 %v513, %v512
      %v516 = vsel %vm455, %v426, 0
      %v518 = vsel %vm455, %v427, 0
      %520 = vmatprep.subr.bf16.mxu0 0
      %521 = vmatpush1.bf16.msra.mxu0 %v514
      %522 = vmatprep.subr.bf16.mxu0 0
      %523 = vmatpush1.bf16.msra.mxu0 0
      %524 = vmatprep.subr.bf16.mxu0 0
      %525 = vmatpush1.bf16.msra.mxu0 0
      %526 = vmatprep.subr.bf16.mxu0 0
      %527 = vmatpush1.bf16.msra.mxu0 0
      %528 = vmatprep.subr.bf16.mxu0 0
      %529 = vmatpush1.bf16.msra.mxu0 0
      %530 = vmatprep.subr.bf16.mxu0 0
      %531 = vmatpush1.bf16.msra.mxu0 0
      %532 = vmatprep.subr.bf16.mxu0 0
      %533 = vmatpush1.bf16.msra.mxu0 0
      %534 = vmatprep.subr.bf16.mxu0 0
      %535 = vmatpush1.bf16.msra.mxu0 0
      %536 = vmatprep.subr.bf16.mxu0 0
      %537 = vmatpush1.bf16.msra.mxu0 0
      %538 = vmatprep.subr.bf16.mxu0 0
      %539 = vmatpush1.bf16.msra.mxu0 0
      %540 = vmatprep.subr.bf16.mxu0 0
      %541 = vmatpush1.bf16.msra.mxu0 0
      %542 = vmatprep.subr.bf16.mxu0 0
      %543 = vmatpush1.bf16.msra.mxu0 0
      %544 = vmatprep.subr.bf16.mxu0 0
      %545 = vmatpush1.bf16.msra.mxu0 0
      %546 = vmatprep.subr.bf16.mxu0 0
      %547 = vmatpush1.bf16.msra.mxu0 0
      %548 = vmatprep.subr.bf16.mxu0 0
      %549 = vmatpush1.bf16.msra.mxu0 0
      %550 = vmatprep.subr.bf16.mxu0 0
      %551 = vmatpush1.bf16.msra.mxu0 0
      %552 = vmatprep.mubr.bf16.mxu0 0
      %553 = vmatmul.mubr.bf16.gmra.mrb[0].mxu0 %v516
      %v554 = vpop.f32.mrb[0].mxu0
      %v555 = vadd.f32 %v497, %v554
      %v556 = vpop.f32.mrb[0].mxu0
      %v557 = vpop.f32.mrb[0].mxu0
      %v558 = vadd.f32 %v500, %v557
      %v559 = vpop.f32.mrb[0].mxu0
      %560 = vmatprep.mubr.bf16.mxu0 0
      %561 = vmatmul.mubr.bf16.gmra.mrb[0].mxu0 %v518
      %v562 = vpop.f32.mrb[0].mxu0
      %v563 = vadd.f32 %v505, %v562
      %v564 = vpop.f32.mrb[0].mxu0
      %v565 = vpop.f32.mrb[0].mxu0
      %v566 = vpop.f32.mrb[0].mxu0
      %567 = vdwg.mxu0
      %s568 = scalar_lea.vmem %s3, 16
      %v569 = vld [vmem:[%s568] sm:$0xf]
      %v570 = vld [vmem:[%s568 + $0x4] sm:$0xf]
      %vm573 = vcmask 1046528
      %v574 = vrot.slane %v426, 1
      %v575 = vrot.slane %v427, 1
      %v576 = vsel %vm573, %v574, %v575
      %v579 = vunpack.c.l.b16 %v569
      %v580 = vunpack.c.l.b16 %v570
      %v581 = vpack.c.b16 %v580, %v579
      %v584 = vsel %vm455, %v576, 0
      %v587 = vsel %vm455, %v575, 0
      %589 = vmatprep.subr.bf16.mxu0 0
      %590 = vmatpush1.bf16.msra.mxu0 %v581
      %591 = vmatprep.subr.bf16.mxu0 0
      %592 = vmatpush1.bf16.msra.mxu0 0
      %593 = vmatprep.subr.bf16.mxu0 0
      %594 = vmatpush1.bf16.msra.mxu0 0
      %595 = vmatprep.subr.bf16.mxu0 0
      %596 = vmatpush1.bf16.msra.mxu0 0
      %597 = vmatprep.subr.bf16.mxu0 0
      %598 = vmatpush1.bf16.msra.mxu0 0
      %599 = vmatprep.subr.bf16.mxu0 0
      %600 = vmatpush1.bf16.msra.mxu0 0
      %601 = vmatprep.subr.bf16.mxu0 0
      %602 = vmatpush1.bf16.msra.mxu0 0
      %603 = vmatprep.subr.bf16.mxu0 0
      %604 = vmatpush1.bf16.msra.mxu0 0
      %605 = vmatprep.subr.bf16.mxu0 0
      %606 = vmatpush1.bf16.msra.mxu0 0
      %607 = vmatprep.subr.bf16.mxu0 0
      %608 = vmatpush1.bf16.msra.mxu0 0
      %609 = vmatprep.subr.bf16.mxu0 0
      %610 = vmatpush1.bf16.msra.mxu0 0
      %611 = vmatprep.subr.bf16.mxu0 0
      %612 = vmatpush1.bf16.msra.mxu0 0
      %613 = vmatprep.subr.bf16.mxu0 0
      %614 = vmatpush1.bf16.msra.mxu0 0
      %615 = vmatprep.subr.bf16.mxu0 0
      %616 = vmatpush1.bf16.msra.mxu0 0
      %617 = vmatprep.subr.bf16.mxu0 0
      %618 = vmatpush1.bf16.msra.mxu0 0
      %619 = vmatprep.subr.bf16.mxu0 0
      %620 = vmatpush1.bf16.msra.mxu0 0
      %621 = vmatprep.mubr.bf16.mxu0 0
      %622 = vmatmul.mubr.bf16.gmra.mrb[0].mxu0 %v584
      %v623 = vpop.f32.mrb[0].mxu0
      %v624 = vadd.f32 0.0, %v623
      %v625 = vpop.f32.mrb[0].mxu0
      %v626 = vpop.f32.mrb[0].mxu0
      %v627 = vadd.f32 0.0, %v626
      %v628 = vpop.f32.mrb[0].mxu0
      %629 = vmatprep.mubr.bf16.mxu0 0
      %630 = vmatmul.mubr.bf16.gmra.mrb[0].mxu0 %v587
      %v631 = vpop.f32.mrb[0].mxu0
      %v632 = vadd.f32 0.0, %v631
      %v633 = vpop.f32.mrb[0].mxu0
      %v634 = vpop.f32.mrb[0].mxu0
      %v635 = vpop.f32.mrb[0].mxu0
      %636 = vdwg.mxu0
      %v637 = vadd.f32 %v555, %v624
      %v638 = vadd.f32 %v558, %v627
      %v639 = vadd.f32 %v563, %v632
      %v640 = vld [vmem:[%s4] sm:$0x1]
      %v642 = vlaneseq
      %v643 = vshrl.u32 %v642, 7
      %v644 = vsub.s32 0, %v643
      %v645 = vrot.slane %v640, %v644
      %v647 = vmul.f32 %v637, %v645
      %v648 = vmul.f32 %v638, %v645
      %v649 = vmul.f32 %v639, %v645
      %v650 = vld [vmem:[%s5] sm:$0x1]
      %v652 = vlaneseq
      %v653 = vshrl.u32 %v652, 7
      %v654 = vsub.s32 0, %v653
      %v655 = vrot.slane %v650, %v654
      %v657 = vadd.f32 %v647, %v655
      %v658 = vadd.f32 %v648, %v655
      %v659 = vadd.f32 %v649, %v655
      %vm660 = vcmp.gt.f32.partialorder %v657, 0.0
      %vm661 = vcmp.gt.f32.partialorder %v658, 0.0
      %vm662 = vcmp.gt.f32.partialorder %v659, 0.0
      %v663 = vmul.f32 %v657, 0.2
      %v664 = vmul.f32 %v658, 0.2
      %v665 = vmul.f32 %v659, 0.2
      %v666 = vsel %vm660, %v657, %v663
      %v667 = vsel %vm661, %v658, %v664
      %v668 = vsel %vm662, %v659, %v665
      %670 = vset.pattern.permute.xlu0 0
      %671 = vperm.xlu0 %670, %v423
      %v672 = vpop.permute.xlu0 %671
      %675 = vset.pattern.permute.xlu0 0
      %676 = vperm.xlu0 %675, %v424
      %v677 = vpop.permute.xlu0 %676
      %680 = vset.pattern.permute.xlu0 0
      %681 = vperm.xlu0 %680, %v425
      %v682 = vpop.permute.xlu0 %681
      %v684 = vmul.f32 %v666, %v672
      %v685 = vmul.f32 %v667, %v677
      %v686 = vmul.f32 %v668, %v682
      %v687 = vld [vmem:[%s2] sm:$0xff]
      %v688 = vld [vmem:[%s2 + $0x8] sm:$0xff]
      %v689 = vld [vmem:[%s2 + $0x10] sm:$0xf]
      %v690 = vpack.c.bf16 %v685, %v684
      %v691 = vpack.c.bf16 %v686, %v686
      %v692 = vld [vmem:[%s6] sm:$0xff]
      %v693 = vld [vmem:[%s6 + $0x8] sm:$0xff]
      %v694 = vld [vmem:[%s6 + $0x10] sm:$0xff]
      %v695 = vld [vmem:[%s6 + $0x18] sm:$0xff]
      %v696 = vld [vmem:[%s6 + $0x20] sm:$0xff]
      %v697 = vld [vmem:[%s6 + $0x28] sm:$0xff]
      %v698 = vld [vmem:[%s6 + $0x30] sm:$0xff]
      %v699 = vld [vmem:[%s6 + $0x38] sm:$0xff]
      %s700 = scalar_lea.vmem %s6, 64
      %v701 = vld [vmem:[%s700] sm:$0xff]
      %v702 = vld [vmem:[%s700 + $0x8] sm:$0xff]
      %v703 = vld [vmem:[%s700 + $0x10] sm:$0xff]
      %v704 = vld [vmem:[%s700 + $0x18] sm:$0xff]
      %v705 = vld [vmem:[%s700 + $0x20] sm:$0xff]
      %v706 = vld [vmem:[%s700 + $0x28] sm:$0xff]
      %v707 = vld [vmem:[%s700 + $0x30] sm:$0xff]
      %v708 = vld [vmem:[%s700 + $0x38] sm:$0xff]
      %v710 = vshrl.u32 %v690, 16
      %v712 = vshll.u32 %v690, 16
      %v714 = vrot.slane %v712, 1
      %v715 = vor.u32 %v710, %v714
      %v717 = vshll.u32 %v691, 16
      %v719 = vrot.slane %v717, 1
      %v720 = vsel %vm433, %v715, %v719
      %v721 = vshrl.u32 %v691, 16
      %v723 = vor.u32 %v721, %v719
      %v732 = vunpack.c.l.b16 %v701
      %v733 = vunpack.c.h.b16 %v701
      %v734 = vunpack.c.l.b16 %v702
      %v735 = vunpack.c.h.b16 %v702
      %v736 = vunpack.c.l.b16 %v703
      %v737 = vunpack.c.h.b16 %v703
      %v738 = vunpack.c.l.b16 %v704
      %v739 = vunpack.c.h.b16 %v704
      %v740 = vunpack.c.l.b16 %v705
      %v741 = vunpack.c.h.b16 %v705
      %v742 = vunpack.c.l.b16 %v706
      %v743 = vunpack.c.h.b16 %v706
      %v744 = vunpack.c.l.b16 %v707
      %v745 = vunpack.c.h.b16 %v707
      %v746 = vunpack.c.l.b16 %v708
      %v747 = vunpack.c.h.b16 %v708
      %v748 = vpack.c.b16 %v734, %v732
      %v749 = vpack.c.b16 %v735, %v733
      %v750 = vpack.c.b16 %v738, %v736
      %v751 = vpack.c.b16 %v739, %v737
      %v752 = vpack.c.b16 %v742, %v740
      %v753 = vpack.c.b16 %v743, %v741
      %v754 = vpack.c.b16 %v746, %v744
      %v755 = vpack.c.b16 %v747, %v745
      %vm764 = vcmask 523264
      %v766 = vsel %vm764, %v720, 0
      %v769 = vsel %vm764, %v723, 0
      %771 = vmatprep.subr.bf16.mxu0 %v749
      %772 = vmatpush1.bf16.msra.mxu0 %v748
      %773 = vmatprep.subr.bf16.mxu0 %v751
      %774 = vmatpush1.bf16.msra.mxu0 %v750
      %775 = vmatprep.subr.bf16.mxu0 %v753
      %776 = vmatpush1.bf16.msra.mxu0 %v752
      %777 = vmatprep.subr.bf16.mxu0 %v755
      %778 = vmatpush1.bf16.msra.mxu0 %v754
      %779 = vmatprep.subr.bf16.mxu0 0
      %780 = vmatpush1.bf16.msra.mxu0 0
      %781 = vmatprep.subr.bf16.mxu0 0
      %782 = vmatpush1.bf16.msra.mxu0 0
      %783 = vmatprep.subr.bf16.mxu0 0
      %784 = vmatpush1.bf16.msra.mxu0 0
      %785 = vmatprep.subr.bf16.mxu0 0
      %786 = vmatpush1.bf16.msra.mxu0 0
      %787 = vmatprep.subr.bf16.mxu0 0
      %788 = vmatpush1.bf16.msra.mxu0 0
      %789 = vmatprep.subr.bf16.mxu0 0
      %790 = vmatpush1.bf16.msra.mxu0 0
      %791 = vmatprep.subr.bf16.mxu0 0
      %792 = vmatpush1.bf16.msra.mxu0 0
      %793 = vmatprep.subr.bf16.mxu0 0
      %794 = vmatpush1.bf16.msra.mxu0 0
      %795 = vmatprep.subr.bf16.mxu0 0
      %796 = vmatpush1.bf16.msra.mxu0 0
      %797 = vmatprep.subr.bf16.mxu0 0
      %798 = vmatpush1.bf16.msra.mxu0 0
      %799 = vmatprep.subr.bf16.mxu0 0
      %800 = vmatpush1.bf16.msra.mxu0 0
      %801 = vmatprep.subr.bf16.mxu0 0
      %802 = vmatpush1.bf16.msra.mxu0 0
      %803 = vmatprep.mubr.bf16.mxu0 0
      %804 = vmatmul.mubr.bf16.gmra.mrb[0].mxu0 %v766
      %v805 = vpop.f32.mrb[0].mxu0
      %v806 = vadd.f32 0.0, %v805
      %v807 = vpop.f32.mrb[0].mxu0
      %v808 = vadd.f32 0.0, %v807
      %v809 = vpop.f32.mrb[0].mxu0
      %v810 = vadd.f32 0.0, %v809
      %v811 = vpop.f32.mrb[0].mxu0
      %v812 = vadd.f32 0.0, %v811
      %813 = vmatprep.mubr.bf16.mxu0 0
      %814 = vmatmul.mubr.bf16.gmra.mrb[0].mxu0 %v769
      %v815 = vpop.f32.mrb[0].mxu0
      %v816 = vadd.f32 0.0, %v815
      %v817 = vpop.f32.mrb[0].mxu0
      %v818 = vadd.f32 0.0, %v817
      %v819 = vpop.f32.mrb[0].mxu0
      %v820 = vpop.f32.mrb[0].mxu0
      %821 = vdwg.mxu0
      %v830 = vunpack.c.l.b16 %v692
      %v831 = vunpack.c.h.b16 %v692
      %v832 = vunpack.c.l.b16 %v693
      %v833 = vunpack.c.h.b16 %v693
      %v834 = vunpack.c.l.b16 %v694
      %v835 = vunpack.c.h.b16 %v694
      %v836 = vunpack.c.l.b16 %v695
      %v837 = vunpack.c.h.b16 %v695
      %v838 = vunpack.c.l.b16 %v696
      %v839 = vunpack.c.h.b16 %v696
      %v840 = vunpack.c.l.b16 %v697
      %v841 = vunpack.c.h.b16 %v697
      %v842 = vunpack.c.l.b16 %v698
      %v843 = vunpack.c.h.b16 %v698
      %v844 = vunpack.c.l.b16 %v699
      %v845 = vunpack.c.h.b16 %v699
      %v846 = vpack.c.b16 %v832, %v830
      %v847 = vpack.c.b16 %v833, %v831
      %v848 = vpack.c.b16 %v836, %v834
      %v849 = vpack.c.b16 %v837, %v835
      %v850 = vpack.c.b16 %v840, %v838
      %v851 = vpack.c.b16 %v841, %v839
      %v852 = vpack.c.b16 %v844, %v842
      %v853 = vpack.c.b16 %v845, %v843
      %v862 = vsel %vm764, %v690, 0
      %v864 = vsel %vm764, %v691, 0
      %866 = vmatprep.subr.bf16.mxu0 %v847
      %867 = vmatpush1.bf16.msra.mxu0 %v846
      %868 = vmatprep.subr.bf16.mxu0 %v849
      %869 = vmatpush1.bf16.msra.mxu0 %v848
      %870 = vmatprep.subr.bf16.mxu0 %v851
      %871 = vmatpush1.bf16.msra.mxu0 %v850
      %872 = vmatprep.subr.bf16.mxu0 %v853
      %873 = vmatpush1.bf16.msra.mxu0 %v852
      %874 = vmatprep.subr.bf16.mxu0 0
      %875 = vmatpush1.bf16.msra.mxu0 0
      %876 = vmatprep.subr.bf16.mxu0 0
      %877 = vmatpush1.bf16.msra.mxu0 0
      %878 = vmatprep.subr.bf16.mxu0 0
      %879 = vmatpush1.bf16.msra.mxu0 0
      %880 = vmatprep.subr.bf16.mxu0 0
      %881 = vmatpush1.bf16.msra.mxu0 0
      %882 = vmatprep.subr.bf16.mxu0 0
      %883 = vmatpush1.bf16.msra.mxu0 0
      %884 = vmatprep.subr.bf16.mxu0 0
      %885 = vmatpush1.bf16.msra.mxu0 0
      %886 = vmatprep.subr.bf16.mxu0 0
      %887 = vmatpush1.bf16.msra.mxu0 0
      %888 = vmatprep.subr.bf16.mxu0 0
      %889 = vmatpush1.bf16.msra.mxu0 0
      %890 = vmatprep.subr.bf16.mxu0 0
      %891 = vmatpush1.bf16.msra.mxu0 0
      %892 = vmatprep.subr.bf16.mxu0 0
      %893 = vmatpush1.bf16.msra.mxu0 0
      %894 = vmatprep.subr.bf16.mxu0 0
      %895 = vmatpush1.bf16.msra.mxu0 0
      %896 = vmatprep.subr.bf16.mxu0 0
      %897 = vmatpush1.bf16.msra.mxu0 0
      %898 = vmatprep.mubr.bf16.mxu0 0
      %899 = vmatmul.mubr.bf16.gmra.mrb[0].mxu0 %v862
      %v900 = vpop.f32.mrb[0].mxu0
      %v901 = vadd.f32 %v806, %v900
      %v902 = vpop.f32.mrb[0].mxu0
      %v903 = vadd.f32 %v808, %v902
      %v904 = vpop.f32.mrb[0].mxu0
      %v905 = vadd.f32 %v810, %v904
      %v906 = vpop.f32.mrb[0].mxu0
      %v907 = vadd.f32 %v812, %v906
      %908 = vmatprep.mubr.bf16.mxu0 0
      %909 = vmatmul.mubr.bf16.gmra.mrb[0].mxu0 %v864
      %v910 = vpop.f32.mrb[0].mxu0
      %v911 = vadd.f32 %v816, %v910
      %v912 = vpop.f32.mrb[0].mxu0
      %v913 = vadd.f32 %v818, %v912
      %v914 = vpop.f32.mrb[0].mxu0
      %v915 = vpop.f32.mrb[0].mxu0
      %916 = vdwg.mxu0
      %s917 = scalar_lea.vmem %s6, 128
      %v918 = vld [vmem:[%s917] sm:$0xff]
      %v919 = vld [vmem:[%s917 + $0x8] sm:$0xff]
      %v920 = vld [vmem:[%s917 + $0x10] sm:$0xff]
      %v921 = vld [vmem:[%s917 + $0x18] sm:$0xff]
      %v922 = vld [vmem:[%s917 + $0x20] sm:$0xff]
      %v923 = vld [vmem:[%s917 + $0x28] sm:$0xff]
      %v924 = vld [vmem:[%s917 + $0x30] sm:$0xff]
      %v925 = vld [vmem:[%s917 + $0x38] sm:$0xff]
      %v928 = vrot.slane %v690, 1
      %v929 = vrot.slane %v691, 1
      %v930 = vsel %vm573, %v928, %v929
      %v939 = vunpack.c.l.b16 %v918
      %v940 = vunpack.c.h.b16 %v918
      %v941 = vunpack.c.l.b16 %v919
      %v942 = vunpack.c.h.b16 %v919
      %v943 = vunpack.c.l.b16 %v920
      %v944 = vunpack.c.h.b16 %v920
      %v945 = vunpack.c.l.b16 %v921
      %v946 = vunpack.c.h.b16 %v921
      %v947 = vunpack.c.l.b16 %v922
      %v948 = vunpack.c.h.b16 %v922
      %v949 = vunpack.c.l.b16 %v923
      %v950 = vunpack.c.h.b16 %v923
      %v951 = vunpack.c.l.b16 %v924
      %v952 = vunpack.c.h.b16 %v924
      %v953 = vunpack.c.l.b16 %v925
      %v954 = vunpack.c.h.b16 %v925
      %v955 = vpack.c.b16 %v941, %v939
      %v956 = vpack.c.b16 %v942, %v940
      %v957 = vpack.c.b16 %v945, %v943
      %v958 = vpack.c.b16 %v946, %v944
      %v959 = vpack.c.b16 %v949, %v947
      %v960 = vpack.c.b16 %v950, %v948
      %v961 = vpack.c.b16 %v953, %v951
      %v962 = vpack.c.b16 %v954, %v952
      %v972 = vsel %vm764, %v930, 0
      %v975 = vsel %vm764, %v929, 0
      %977 = vmatprep.subr.bf16.mxu0 %v956
      %978 = vmatpush1.bf16.msra.mxu0 %v955
      %979 = vmatprep.subr.bf16.mxu0 %v958
      %980 = vmatpush1.bf16.msra.mxu0 %v957
      %981 = vmatprep.subr.bf16.mxu0 %v960
      %982 = vmatpush1.bf16.msra.mxu0 %v959
      %983 = vmatprep.subr.bf16.mxu0 %v962
      %984 = vmatpush1.bf16.msra.mxu0 %v961
      %985 = vmatprep.subr.bf16.mxu0 0
      %986 = vmatpush1.bf16.msra.mxu0 0
      %987 = vmatprep.subr.bf16.mxu0 0
      %988 = vmatpush1.bf16.msra.mxu0 0
      %989 = vmatprep.subr.bf16.mxu0 0
      %990 = vmatpush1.bf16.msra.mxu0 0
      %991 = vmatprep.subr.bf16.mxu0 0
      %992 = vmatpush1.bf16.msra.mxu0 0
      %993 = vmatprep.subr.bf16.mxu0 0
      %994 = vmatpush1.bf16.msra.mxu0 0
      %995 = vmatprep.subr.bf16.mxu0 0
      %996 = vmatpush1.bf16.msra.mxu0 0
      %997 = vmatprep.subr.bf16.mxu0 0
      %998 = vmatpush1.bf16.msra.mxu0 0
      %999 = vmatprep.subr.bf16.mxu0 0
      %1000 = vmatpush1.bf16.msra.mxu0 0
      %1001 = vmatprep.subr.bf16.mxu0 0
      %1002 = vmatpush1.bf16.msra.mxu0 0
      %1003 = vmatprep.subr.bf16.mxu0 0
      %1004 = vmatpush1.bf16.msra.mxu0 0
      %1005 = vmatprep.subr.bf16.mxu0 0
      %1006 = vmatpush1.bf16.msra.mxu0 0
      %1007 = vmatprep.subr.bf16.mxu0 0
      %1008 = vmatpush1.bf16.msra.mxu0 0
      %1009 = vmatprep.mubr.bf16.mxu0 0
      %1010 = vmatmul.mubr.bf16.gmra.mrb[0].mxu0 %v972
      %v1011 = vpop.f32.mrb[0].mxu0
      %v1012 = vadd.f32 0.0, %v1011
      %v1013 = vpop.f32.mrb[0].mxu0
      %v1014 = vadd.f32 0.0, %v1013
      %v1015 = vpop.f32.mrb[0].mxu0
      %v1016 = vadd.f32 0.0, %v1015
      %v1017 = vpop.f32.mrb[0].mxu0
      %v1018 = vadd.f32 0.0, %v1017
      %1019 = vmatprep.mubr.bf16.mxu0 0
      %1020 = vmatmul.mubr.bf16.gmra.mrb[0].mxu0 %v975
      %v1021 = vpop.f32.mrb[0].mxu0
      %v1022 = vadd.f32 0.0, %v1021
      %v1023 = vpop.f32.mrb[0].mxu0
      %v1024 = vadd.f32 0.0, %v1023
      %v1025 = vpop.f32.mrb[0].mxu0
      %v1026 = vpop.f32.mrb[0].mxu0
      %1027 = vdwg.mxu0
      %v1028 = vadd.f32 %v901, %v1012
      %v1029 = vadd.f32 %v903, %v1014
      %v1030 = vadd.f32 %v905, %v1016
      %v1031 = vadd.f32 %v907, %v1018
      %v1032 = vadd.f32 %v911, %v1022
      %v1033 = vadd.f32 %v913, %v1024
      %v1034 = vld [vmem:[%s7] sm:$0x3]
      %v1036 = vlaneseq
      %v1037 = vshrl.u32 %v1036, 7
      %v1038 = vsub.s32 0, %v1037
      %v1039 = vrot.slane %v1034, %v1038
      %v1040 = vlaneseq
      %v1041 = vshrl.u32 %v1040, 7
      %v1042 = vsub.s32 1, %v1041
      %v1043 = vrot.slane %v1034, %v1042
      %v1046 = vmul.f32 %v1028, %v1039
      %v1047 = vmul.f32 %v1029, %v1043
      %v1048 = vmul.f32 %v1030, %v1039
      %v1049 = vmul.f32 %v1031, %v1043
      %v1050 = vmul.f32 %v1032, %v1039
      %v1051 = vmul.f32 %v1033, %v1043
      %v1052 = vld [vmem:[%s8] sm:$0x3]
      %v1054 = vlaneseq
      %v1055 = vshrl.u32 %v1054, 7
      %v1056 = vsub.s32 0, %v1055
      %v1057 = vrot.slane %v1052, %v1056
      %v1058 = vlaneseq
      %v1059 = vshrl.u32 %v1058, 7
      %v1060 = vsub.s32 1, %v1059
      %v1061 = vrot.slane %v1052, %v1060
      %v1064 = vadd.f32 %v1046, %v1057
      %v1065 = vadd.f32 %v1047, %v1061
      %v1066 = vadd.f32 %v1048, %v1057
      %v1067 = vadd.f32 %v1049, %v1061
      %v1068 = vadd.f32 %v1050, %v1057
      %v1069 = vadd.f32 %v1051, %v1061
      %1071 = vset.pattern.permute.xlu0 0
      %1072 = vperm.xlu0 %1071, %v687
      %v1073 = vpop.permute.xlu0 %1072
      %1076 = vset.pattern.permute.xlu0 0
      %1077 = vperm.xlu0 %1076, %v688
      %v1078 = vpop.permute.xlu0 %1077
      %1081 = vset.pattern.permute.xlu0 0
      %1082 = vperm.xlu0 %1081, %v689
      %v1083 = vpop.permute.xlu0 %1082
      %v1085 = vmul.f32 %v1064, %v1073
      %v1086 = vmul.f32 %v1065, %v1073
      %v1087 = vmul.f32 %v1066, %v1078
      %v1088 = vmul.f32 %v1067, %v1078
      %v1089 = vmul.f32 %v1068, %v1083
      %v1090 = vmul.f32 %v1069, %v1083
      %v1091 = vpack.c.bf16 %v1087, %v1085
      %v1092 = vpack.c.bf16 %v1088, %v1086
      %v1093 = vpack.c.bf16 %v1089, %v1089
      %v1094 = vpack.c.bf16 %v1090, %v1090
      %v1095 = vld [vmem:[%s9] sm:$0xff]
      %v1096 = vld [vmem:[%s9 + $0x8] sm:$0xff]
      %v1097 = vld [vmem:[%s9 + $0x10] sm:$0xff]
      %v1098 = vld [vmem:[%s9 + $0x18] sm:$0xff]
      %v1099 = vld [vmem:[%s9 + $0x20] sm:$0xff]
      %v1100 = vld [vmem:[%s9 + $0x28] sm:$0xff]
      %v1101 = vld [vmem:[%s9 + $0x30] sm:$0xff]
      %v1102 = vld [vmem:[%s9 + $0x38] sm:$0xff]
      %v1103 = vld [vmem:[%s9 + $0x40] sm:$0xff]
      %v1104 = vld [vmem:[%s9 + $0x48] sm:$0xff]
      %v1105 = vld [vmem:[%s9 + $0x50] sm:$0xff]
      %v1106 = vld [vmem:[%s9 + $0x58] sm:$0xff]
      %v1107 = vld [vmem:[%s9 + $0x60] sm:$0xff]
      %v1108 = vld [vmem:[%s9 + $0x68] sm:$0xff]
      %v1109 = vld [vmem:[%s9 + $0x70] sm:$0xff]
      %v1110 = vld [vmem:[%s9 + $0x78] sm:$0xff]
      %v1111 = vld [vmem:[%s9 + $0x80] sm:$0xff]
      %v1112 = vld [vmem:[%s9 + $0x88] sm:$0xff]
      %v1113 = vld [vmem:[%s9 + $0x90] sm:$0xff]
      %v1114 = vld [vmem:[%s9 + $0x98] sm:$0xff]
      %v1115 = vld [vmem:[%s9 + $0xa0] sm:$0xff]
      %v1116 = vld [vmem:[%s9 + $0xa8] sm:$0xff]
      %v1117 = vld [vmem:[%s9 + $0xb0] sm:$0xff]
      %v1118 = vld [vmem:[%s9 + $0xb8] sm:$0xff]
      %v1119 = vld [vmem:[%s9 + $0xc0] sm:$0xff]
      %v1120 = vld [vmem:[%s9 + $0xc8] sm:$0xff]
      %v1121 = vld [vmem:[%s9 + $0xd0] sm:$0xff]
      %v1122 = vld [vmem:[%s9 + $0xd8] sm:$0xff]
      %v1123 = vld [vmem:[%s9 + $0xe0] sm:$0xff]
      %v1124 = vld [vmem:[%s9 + $0xe8] sm:$0xff]
      %v1125 = vld [vmem:[%s9 + $0xf0] sm:$0xff]
      %v1126 = vld [vmem:[%s9 + $0xf8] sm:$0xff]
      %v1127 = vld [vmem:[%s9 + $0x100] sm:$0xff]
      %v1128 = vld [vmem:[%s9 + $0x108] sm:$0xff]
      %v1129 = vld [vmem:[%s9 + $0x110] sm:$0xff]
      %v1130 = vld [vmem:[%s9 + $0x118] sm:$0xff]
      %v1131 = vld [vmem:[%s9 + $0x120] sm:$0xff]
      %v1132 = vld [vmem:[%s9 + $0x128] sm:$0xff]
      %v1133 = vld [vmem:[%s9 + $0x130] sm:$0xff]
      %v1134 = vld [vmem:[%s9 + $0x138] sm:$0xff]
      %v1135 = vld [vmem:[%s9 + $0x140] sm:$0xff]
      %v1136 = vld [vmem:[%s9 + $0x148] sm:$0xff]
      %v1137 = vld [vmem:[%s9 + $0x150] sm:$0xff]
      %v1138 = vld [vmem:[%s9 + $0x158] sm:$0xff]
      %v1139 = vld [vmem:[%s9 + $0x160] sm:$0xff]
      %v1140 = vld [vmem:[%s9 + $0x168] sm:$0xff]
      %v1141 = vld [vmem:[%s9 + $0x170] sm:$0xff]
      %v1142 = vld [vmem:[%s9 + $0x178] sm:$0xff]
      %v1143 = vld [vmem:[%s9 + $0x180] sm:$0xff]
      %v1144 = vld [vmem:[%s9 + $0x188] sm:$0xff]
      %v1145 = vld [vmem:[%s9 + $0x190] sm:$0xff]
      %v1146 = vld [vmem:[%s9 + $0x198] sm:$0xff]
      %v1147 = vld [vmem:[%s9 + $0x1a0] sm:$0xff]
      %v1148 = vld [vmem:[%s9 + $0x1a8] sm:$0xff]
      %v1149 = vld [vmem:[%s9 + $0x1b0] sm:$0xff]
      %v1150 = vld [vmem:[%s9 + $0x1b8] sm:$0xff]
      %v1151 = vld [vmem:[%s9 + $0x1c0] sm:$0xff]
      %v1152 = vld [vmem:[%s9 + $0x1c8] sm:$0xff]
      %v1153 = vld [vmem:[%s9 + $0x1d0] sm:$0xff]
      %v1154 = vld [vmem:[%s9 + $0x1d8] sm:$0xff]
      %v1155 = vld [vmem:[%s9 + $0x1e0] sm:$0xff]
      %v1156 = vld [vmem:[%s9 + $0x1e8] sm:$0xff]
      %v1157 = vld [vmem:[%s9 + $0x1f0] sm:$0xff]
      %v1158 = vld [vmem:[%s9 + $0x1f8] sm:$0xff]
      %v1159 = vld [vmem:[%s9 + $0x200] sm:$0xff]
      %v1160 = vld [vmem:[%s9 + $0x208] sm:$0xff]
      %v1161 = vld [vmem:[%s9 + $0x210] sm:$0xff]
      %v1162 = vld [vmem:[%s9 + $0x218] sm:$0xff]
      %v1163 = vld [vmem:[%s9 + $0x220] sm:$0xff]
      %v1164 = vld [vmem:[%s9 + $0x228] sm:$0xff]
      %v1165 = vld [vmem:[%s9 + $0x230] sm:$0xff]
      %v1166 = vld [vmem:[%s9 + $0x238] sm:$0xff]
      %v1167 = vld [vmem:[%s9 + $0x240] sm:$0xff]
      %v1168 = vld [vmem:[%s9 + $0x248] sm:$0xff]
      %v1169 = vld [vmem:[%s9 + $0x250] sm:$0xff]
      %v1170 = vld [vmem:[%s9 + $0x258] sm:$0xff]
      %v1171 = vld [vmem:[%s9 + $0x260] sm:$0xff]
      %v1172 = vld [vmem:[%s9 + $0x268] sm:$0xff]
      %v1173 = vld [vmem:[%s9 + $0x270] sm:$0xff]
      %v1174 = vld [vmem:[%s9 + $0x278] sm:$0xff]
      %v1175 = vld [vmem:[%s9 + $0x280] sm:$0xff]
      %v1176 = vld [vmem:[%s9 + $0x288] sm:$0xff]
      %v1177 = vld [vmem:[%s9 + $0x290] sm:$0xff]
      %v1178 = vld [vmem:[%s9 + $0x298] sm:$0xff]
      %v1179 = vld [vmem:[%s9 + $0x2a0] sm:$0xff]
      %v1180 = vld [vmem:[%s9 + $0x2a8] sm:$0xff]
      %v1181 = vld [vmem:[%s9 + $0x2b0] sm:$0xff]
      %v1182 = vld [vmem:[%s9 + $0x2b8] sm:$0xff]
      %v1183 = vld [vmem:[%s9 + $0x2c0] sm:$0xff]
      %v1184 = vld [vmem:[%s9 + $0x2c8] sm:$0xff]
      %v1185 = vld [vmem:[%s9 + $0x2d0] sm:$0xff]
      %v1186 = vld [vmem:[%s9 + $0x2d8] sm:$0xff]
      %v1187 = vld [vmem:[%s9 + $0x2e0] sm:$0xff]
      %v1188 = vld [vmem:[%s9 + $0x2e8] sm:$0xff]
      %v1189 = vld [vmem:[%s9 + $0x2f0] sm:$0xff]
      %v1190 = vld [vmem:[%s9 + $0x2f8] sm:$0xff]
      %v1191 = vld [vmem:[%s9 + $0x300] sm:$0xff]
      %v1192 = vld [vmem:[%s9 + $0x308] sm:$0xff]
      %v1193 = vld [vmem:[%s9 + $0x310] sm:$0xff]
      %v1194 = vld [vmem:[%s9 + $0x318] sm:$0xff]
      %v1195 = vld [vmem:[%s9 + $0x320] sm:$0xff]
      %v1196 = vld [vmem:[%s9 + $0x328] sm:$0xff]
      %v1197 = vld [vmem:[%s9 + $0x330] sm:$0xff]
      %v1198 = vld [vmem:[%s9 + $0x338] sm:$0xff]
      %v1199 = vld [vmem:[%s9 + $0x340] sm:$0xff]
      %v1200 = vld [vmem:[%s9 + $0x348] sm:$0xff]
      %v1201 = vld [vmem:[%s9 + $0x350] sm:$0xff]
      %v1202 = vld [vmem:[%s9 + $0x358] sm:$0xff]
      %v1203 = vld [vmem:[%s9 + $0x360] sm:$0xff]
      %v1204 = vld [vmem:[%s9 + $0x368] sm:$0xff]
      %v1205 = vld [vmem:[%s9 + $0x370] sm:$0xff]
      %v1206 = vld [vmem:[%s9 + $0x378] sm:$0xff]
      %v1207 = vld [vmem:[%s9 + $0x380] sm:$0xff]
      %v1208 = vld [vmem:[%s9 + $0x388] sm:$0xff]
      %v1209 = vld [vmem:[%s9 + $0x390] sm:$0xff]
      %v1210 = vld [vmem:[%s9 + $0x398] sm:$0xff]
      %v1211 = vld [vmem:[%s9 + $0x3a0] sm:$0xff]
      %v1212 = vld [vmem:[%s9 + $0x3a8] sm:$0xff]
      %v1213 = vld [vmem:[%s9 + $0x3b0] sm:$0xff]
      %v1214 = vld [vmem:[%s9 + $0x3b8] sm:$0xff]
      %v1215 = vld [vmem:[%s9 + $0x3c0] sm:$0xff]
      %v1216 = vld [vmem:[%s9 + $0x3c8] sm:$0xff]
      %v1217 = vld [vmem:[%s9 + $0x3d0] sm:$0xff]
      %v1218 = vld [vmem:[%s9 + $0x3d8] sm:$0xff]
      %v1219 = vld [vmem:[%s9 + $0x3e0] sm:$0xff]
      %v1220 = vld [vmem:[%s9 + $0x3e8] sm:$0xff]
      %v1221 = vld [vmem:[%s9 + $0x3f0] sm:$0xff]
      %v1222 = vld [vmem:[%s9 + $0x3f8] sm:$0xff]
      %s1223 = scalar_lea.vmem %s9, 1024
      %v1224 = vld [vmem:[%s1223] sm:$0xff]
      %v1225 = vld [vmem:[%s1223 + $0x8] sm:$0xff]
      %v1226 = vld [vmem:[%s1223 + $0x10] sm:$0xff]
      %v1227 = vld [vmem:[%s1223 + $0x18] sm:$0xff]
      %v1228 = vld [vmem:[%s1223 + $0x20] sm:$0xff]
      %v1229 = vld [vmem:[%s1223 + $0x28] sm:$0xff]
      %v1230 = vld [vmem:[%s1223 + $0x30] sm:$0xff]
      %v1231 = vld [vmem:[%s1223 + $0x38] sm:$0xff]
      %v1232 = vld [vmem:[%s1223 + $0x40] sm:$0xff]
      %v1233 = vld [vmem:[%s1223 + $0x48] sm:$0xff]
      %v1234 = vld [vmem:[%s1223 + $0x50] sm:$0xff]
      %v1235 = vld [vmem:[%s1223 + $0x58] sm:$0xff]
      %v1236 = vld [vmem:[%s1223 + $0x60] sm:$0xff]
      %v1237 = vld [vmem:[%s1223 + $0x68] sm:$0xff]
      %v1238 = vld [vmem:[%s1223 + $0x70] sm:$0xff]
      %v1239 = vld [vmem:[%s1223 + $0x78] sm:$0xff]
      %v1240 = vld [vmem:[%s1223 + $0x80] sm:$0xff]
      %v1241 = vld [vmem:[%s1223 + $0x88] sm:$0xff]
      %v1242 = vld [vmem:[%s1223 + $0x90] sm:$0xff]
      %v1243 = vld [vmem:[%s1223 + $0x98] sm:$0xff]
      %v1244 = vld [vmem:[%s1223 + $0xa0] sm:$0xff]
      %v1245 = vld [vmem:[%s1223 + $0xa8] sm:$0xff]
      %v1246 = vld [vmem:[%s1223 + $0xb0] sm:$0xff]
      %v1247 = vld [vmem:[%s1223 + $0xb8] sm:$0xff]
      %v1248 = vld [vmem:[%s1223 + $0xc0] sm:$0xff]
      %v1249 = vld [vmem:[%s1223 + $0xc8] sm:$0xff]
      %v1250 = vld [vmem:[%s1223 + $0xd0] sm:$0xff]
      %v1251 = vld [vmem:[%s1223 + $0xd8] sm:$0xff]
      %v1252 = vld [vmem:[%s1223 + $0xe0] sm:$0xff]
      %v1253 = vld [vmem:[%s1223 + $0xe8] sm:$0xff]
      %v1254 = vld [vmem:[%s1223 + $0xf0] sm:$0xff]
      %v1255 = vld [vmem:[%s1223 + $0xf8] sm:$0xff]
      %v1256 = vld [vmem:[%s1223 + $0x100] sm:$0xff]
      %v1257 = vld [vmem:[%s1223 + $0x108] sm:$0xff]
      %v1258 = vld [vmem:[%s1223 + $0x110] sm:$0xff]
      %v1259 = vld [vmem:[%s1223 + $0x118] sm:$0xff]
      %v1260 = vld [vmem:[%s1223 + $0x120] sm:$0xff]
      %v1261 = vld [vmem:[%s1223 + $0x128] sm:$0xff]
      %v1262 = vld [vmem:[%s1223 + $0x130] sm:$0xff]
      %v1263 = vld [vmem:[%s1223 + $0x138] sm:$0xff]
      %v1264 = vld [vmem:[%s1223 + $0x140] sm:$0xff]
      %v1265 = vld [vmem:[%s1223 + $0x148] sm:$0xff]
      %v1266 = vld [vmem:[%s1223 + $0x150] sm:$0xff]
      %v1267 = vld [vmem:[%s1223 + $0x158] sm:$0xff]
      %v1268 = vld [vmem:[%s1223 + $0x160] sm:$0xff]
      %v1269 = vld [vmem:[%s1223 + $0x168] sm:$0xff]
      %v1270 = vld [vmem:[%s1223 + $0x170] sm:$0xff]
      %v1271 = vld [vmem:[%s1223 + $0x178] sm:$0xff]
      %v1272 = vld [vmem:[%s1223 + $0x180] sm:$0xff]
      %v1273 = vld [vmem:[%s1223 + $0x188] sm:$0xff]
      %v1274 = vld [vmem:[%s1223 + $0x190] sm:$0xff]
      %v1275 = vld [vmem:[%s1223 + $0x198] sm:$0xff]
      %v1276 = vld [vmem:[%s1223 + $0x1a0] sm:$0xff]
      %v1277 = vld [vmem:[%s1223 + $0x1a8] sm:$0xff]
      %v1278 = vld [vmem:[%s1223 + $0x1b0] sm:$0xff]
      %v1279 = vld [vmem:[%s1223 + $0x1b8] sm:$0xff]
      %v1280 = vld [vmem:[%s1223 + $0x1c0] sm:$0xff]
      %v1281 = vld [vmem:[%s1223 + $0x1c8] sm:$0xff]
      %v1282 = vld [vmem:[%s1223 + $0x1d0] sm:$0xff]
      %v1283 = vld [vmem:[%s1223 + $0x1d8] sm:$0xff]
      %v1284 = vld [vmem:[%s1223 + $0x1e0] sm:$0xff]
      %v1285 = vld [vmem:[%s1223 + $0x1e8] sm:$0xff]
      %v1286 = vld [vmem:[%s1223 + $0x1f0] sm:$0xff]
      %v1287 = vld [vmem:[%s1223 + $0x1f8] sm:$0xff]
      %v1288 = vld [vmem:[%s1223 + $0x200] sm:$0xff]
      %v1289 = vld [vmem:[%s1223 + $0x208] sm:$0xff]
      %v1290 = vld [vmem:[%s1223 + $0x210] sm:$0xff]
      %v1291 = vld [vmem:[%s1223 + $0x218] sm:$0xff]
      %v1292 = vld [vmem:[%s1223 + $0x220] sm:$0xff]
      %v1293 = vld [vmem:[%s1223 + $0x228] sm:$0xff]
      %v1294 = vld [vmem:[%s1223 + $0x230] sm:$0xff]
      %v1295 = vld [vmem:[%s1223 + $0x238] sm:$0xff]
      %v1296 = vld [vmem:[%s1223 + $0x240] sm:$0xff]
      %v1297 = vld [vmem:[%s1223 + $0x248] sm:$0xff]
      %v1298 = vld [vmem:[%s1223 + $0x250] sm:$0xff]
      %v1299 = vld [vmem:[%s1223 + $0x258] sm:$0xff]
      %v1300 = vld [vmem:[%s1223 + $0x260] sm:$0xff]
      %v1301 = vld [vmem:[%s1223 + $0x268] sm:$0xff]
      %v1302 = vld [vmem:[%s1223 + $0x270] sm:$0xff]
      %v1303 = vld [vmem:[%s1223 + $0x278] sm:$0xff]
      %v1304 = vld [vmem:[%s1223 + $0x280] sm:$0xff]
      %v1305 = vld [vmem:[%s1223 + $0x288] sm:$0xff]
      %v1306 = vld [vmem:[%s1223 + $0x290] sm:$0xff]
      %v1307 = vld [vmem:[%s1223 + $0x298] sm:$0xff]
      %v1308 = vld [vmem:[%s1223 + $0x2a0] sm:$0xff]
      %v1309 = vld [vmem:[%s1223 + $0x2a8] sm:$0xff]
      %v1310 = vld [vmem:[%s1223 + $0x2b0] sm:$0xff]
      %v1311 = vld [vmem:[%s1223 + $0x2b8] sm:$0xff]
      %v1312 = vld [vmem:[%s1223 + $0x2c0] sm:$0xff]
      %v1313 = vld [vmem:[%s1223 + $0x2c8] sm:$0xff]
      %v1314 = vld [vmem:[%s1223 + $0x2d0] sm:$0xff]
      %v1315 = vld [vmem:[%s1223 + $0x2d8] sm:$0xff]
      %v1316 = vld [vmem:[%s1223 + $0x2e0] sm:$0xff]
      %v1317 = vld [vmem:[%s1223 + $0x2e8] sm:$0xff]
      %v1318 = vld [vmem:[%s1223 + $0x2f0] sm:$0xff]
      %v1319 = vld [vmem:[%s1223 + $0x2f8] sm:$0xff]
      %v1320 = vld [vmem:[%s1223 + $0x300] sm:$0xff]
      %v1321 = vld [vmem:[%s1223 + $0x308] sm:$0xff]
      %v1322 = vld [vmem:[%s1223 + $0x310] sm:$0xff]
      %v1323 = vld [vmem:[%s1223 + $0x318] sm:$0xff]
      %v1324 = vld [vmem:[%s1223 + $0x320] sm:$0xff]
      %v1325 = vld [vmem:[%s1223 + $0x328] sm:$0xff]
      %v1326 = vld [vmem:[%s1223 + $0x330] sm:$0xff]
      %v1327 = vld [vmem:[%s1223 + $0x338] sm:$0xff]
      %v1328 = vld [vmem:[%s1223 + $0x340] sm:$0xff]
      %v1329 = vld [vmem:[%s1223 + $0x348] sm:$0xff]
      %v1330 = vld [vmem:[%s1223 + $0x350] sm:$0xff]
      %v1331 = vld [vmem:[%s1223 + $0x358] sm:$0xff]
      %v1332 = vld [vmem:[%s1223 + $0x360] sm:$0xff]
      %v1333 = vld [vmem:[%s1223 + $0x368] sm:$0xff]
      %v1334 = vld [vmem:[%s1223 + $0x370] sm:$0xff]
      %v1335 = vld [vmem:[%s1223 + $0x378] sm:$0xff]
      %v1336 = vld [vmem:[%s1223 + $0x380] sm:$0xff]
      %v1337 = vld [vmem:[%s1223 + $0x388] sm:$0xff]
      %v1338 = vld [vmem:[%s1223 + $0x390] sm:$0xff]
      %v1339 = vld [vmem:[%s1223 + $0x398] sm:$0xff]
      %v1340 = vld [vmem:[%s1223 + $0x3a0] sm:$0xff]
      %v1341 = vld [vmem:[%s1223 + $0x3a8] sm:$0xff]
      %v1342 = vld [vmem:[%s1223 + $0x3b0] sm:$0xff]
      %v1343 = vld [vmem:[%s1223 + $0x3b8] sm:$0xff]
      %v1344 = vld [vmem:[%s1223 + $0x3c0] sm:$0xff]
      %v1345 = vld [vmem:[%s1223 + $0x3c8] sm:$0xff]
      %v1346 = vld [vmem:[%s1223 + $0x3d0] sm:$0xff]
      %v1347 = vld [vmem:[%s1223 + $0x3d8] sm:$0xff]
      %v1348 = vld [vmem:[%s1223 + $0x3e0] sm:$0xff]
      %v1349 = vld [vmem:[%s1223 + $0x3e8] sm:$0xff]
      %v1350 = vld [vmem:[%s1223 + $0x3f0] sm:$0xff]
      %v1351 = vld [vmem:[%s1223 + $0x3f8] sm:$0xff]
      %v1353 = vshrl.u32 %v1091, 16
      %v1355 = vshll.u32 %v1091, 16
      %v1357 = vrot.slane %v1355, 1
      %v1358 = vor.u32 %v1353, %v1357
      %v1360 = vshll.u32 %v1093, 16
      %v1362 = vrot.slane %v1360, 1
      %v1363 = vsel %vm433, %v1358, %v1362
      %v1365 = vshrl.u32 %v1092, 16
      %v1367 = vshll.u32 %v1092, 16
      %v1369 = vrot.slane %v1367, 1
      %v1370 = vor.u32 %v1365, %v1369
      %v1372 = vshll.u32 %v1094, 16
      %v1374 = vrot.slane %v1372, 1
      %v1375 = vsel %vm433, %v1370, %v1374
      %v1376 = vshrl.u32 %v1093, 16
      %v1378 = vor.u32 %v1376, %v1362
      %v1379 = vshrl.u32 %v1094, 16
      %v1381 = vor.u32 %v1379, %v1374
      %v1514 = vunpack.c.l.b16 %v1224
      %v1515 = vunpack.c.h.b16 %v1224
      %v1516 = vunpack.c.l.b16 %v1225
      %v1517 = vunpack.c.h.b16 %v1225
      %v1518 = vunpack.c.l.b16 %v1226
      %v1519 = vunpack.c.h.b16 %v1226
      %v1520 = vunpack.c.l.b16 %v1227
      %v1521 = vunpack.c.h.b16 %v1227
      %v1522 = vunpack.c.l.b16 %v1228
      %v1523 = vunpack.c.h.b16 %v1228
      %v1524 = vunpack.c.l.b16 %v1229
      %v1525 = vunpack.c.h.b16 %v1229
      %v1526 = vunpack.c.l.b16 %v1230
      %v1527 = vunpack.c.h.b16 %v1230
      %v1528 = vunpack.c.l.b16 %v1231
      %v1529 = vunpack.c.h.b16 %v1231
      %v1530 = vunpack.c.l.b16 %v1232
      %v1531 = vunpack.c.h.b16 %v1232
      %v1532 = vunpack.c.l.b16 %v1233
      %v1533 = vunpack.c.h.b16 %v1233
      %v1534 = vunpack.c.l.b16 %v1234
      %v1535 = vunpack.c.h.b16 %v1234
      %v1536 = vunpack.c.l.b16 %v1235
      %v1537 = vunpack.c.h.b16 %v1235
      %v1538 = vunpack.c.l.b16 %v1236
      %v1539 = vunpack.c.h.b16 %v1236
      %v1540 = vunpack.c.l.b16 %v1237
      %v1541 = vunpack.c.h.b16 %v1237
      %v1542 = vunpack.c.l.b16 %v1238
      %v1543 = vunpack.c.h.b16 %v1238
      %v1544 = vunpack.c.l.b16 %v1239
      %v1545 = vunpack.c.h.b16 %v1239
      %v1546 = vunpack.c.l.b16 %v1240
      %v1547 = vunpack.c.h.b16 %v1240
      %v1548 = vunpack.c.l.b16 %v1241
      %v1549 = vunpack.c.h.b16 %v1241
      %v1550 = vunpack.c.l.b16 %v1242
      %v1551 = vunpack.c.h.b16 %v1242
      %v1552 = vunpack.c.l.b16 %v1243
      %v1553 = vunpack.c.h.b16 %v1243
      %v1554 = vunpack.c.l.b16 %v1244
      %v1555 = vunpack.c.h.b16 %v1244
      %v1556 = vunpack.c.l.b16 %v1245
      %v1557 = vunpack.c.h.b16 %v1245
      %v1558 = vunpack.c.l.b16 %v1246
      %v1559 = vunpack.c.h.b16 %v1246
      %v1560 = vunpack.c.l.b16 %v1247
      %v1561 = vunpack.c.h.b16 %v1247
      %v1562 = vunpack.c.l.b16 %v1248
      %v1563 = vunpack.c.h.b16 %v1248
      %v1564 = vunpack.c.l.b16 %v1249
      %v1565 = vunpack.c.h.b16 %v1249
      %v1566 = vunpack.c.l.b16 %v1250
      %v1567 = vunpack.c.h.b16 %v1250
      %v1568 = vunpack.c.l.b16 %v1251
      %v1569 = vunpack.c.h.b16 %v1251
      %v1570 = vunpack.c.l.b16 %v1252
      %v1571 = vunpack.c.h.b16 %v1252
      %v1572 = vunpack.c.l.b16 %v1253
      %v1573 = vunpack.c.h.b16 %v1253
      %v1574 = vunpack.c.l.b16 %v1254
      %v1575 = vunpack.c.h.b16 %v1254
      %v1576 = vunpack.c.l.b16 %v1255
      %v1577 = vunpack.c.h.b16 %v1255
      %v1578 = vunpack.c.l.b16 %v1256
      %v1579 = vunpack.c.h.b16 %v1256
      %v1580 = vunpack.c.l.b16 %v1257
      %v1581 = vunpack.c.h.b16 %v1257
      %v1582 = vunpack.c.l.b16 %v1258
      %v1583 = vunpack.c.h.b16 %v1258
      %v1584 = vunpack.c.l.b16 %v1259
      %v1585 = vunpack.c.h.b16 %v1259
      %v1586 = vunpack.c.l.b16 %v1260
      %v1587 = vunpack.c.h.b16 %v1260
      %v1588 = vunpack.c.l.b16 %v1261
      %v1589 = vunpack.c.h.b16 %v1261
      %v1590 = vunpack.c.l.b16 %v1262
      %v1591 = vunpack.c.h.b16 %v1262
      %v1592 = vunpack.c.l.b16 %v1263
      %v1593 = vunpack.c.h.b16 %v1263
      %v1594 = vunpack.c.l.b16 %v1264
      %v1595 = vunpack.c.h.b16 %v1264
      %v1596 = vunpack.c.l.b16 %v1265
      %v1597 = vunpack.c.h.b16 %v1265
      %v1598 = vunpack.c.l.b16 %v1266
      %v1599 = vunpack.c.h.b16 %v1266
      %v1600 = vunpack.c.l.b16 %v1267
      %v1601 = vunpack.c.h.b16 %v1267
      %v1602 = vunpack.c.l.b16 %v1268
      %v1603 = vunpack.c.h.b16 %v1268
      %v1604 = vunpack.c.l.b16 %v1269
      %v1605 = vunpack.c.h.b16 %v1269
      %v1606 = vunpack.c.l.b16 %v1270
      %v1607 = vunpack.c.h.b16 %v1270
      %v1608 = vunpack.c.l.b16 %v1271
      %v1609 = vunpack.c.h.b16 %v1271
      %v1610 = vunpack.c.l.b16 %v1272
      %v1611 = vunpack.c.h.b16 %v1272
      %v1612 = vunpack.c.l.b16 %v1273
      %v1613 = vunpack.c.h.b16 %v1273
      %v1614 = vunpack.c.l.b16 %v1274
      %v1615 = vunpack.c.h.b16 %v1274
      %v1616 = vunpack.c.l.b16 %v1275
      %v1617 = vunpack.c.h.b16 %v1275
      %v1618 = vunpack.c.l.b16 %v1276
      %v1619 = vunpack.c.h.b16 %v1276
      %v1620 = vunpack.c.l.b16 %v1277
      %v1621 = vunpack.c.h.b16 %v1277
      %v1622 = vunpack.c.l.b16 %v1278
      %v1623 = vunpack.c.h.b16 %v1278
      %v1624 = vunpack.c.l.b16 %v1279
      %v1625 = vunpack.c.h.b16 %v1279
      %v1626 = vunpack.c.l.b16 %v1280
      %v1627 = vunpack.c.h.b16 %v1280
      %v1628 = vunpack.c.l.b16 %v1281
      %v1629 = vunpack.c.h.b16 %v1281
      %v1630 = vunpack.c.l.b16 %v1282
      %v1631 = vunpack.c.h.b16 %v1282
      %v1632 = vunpack.c.l.b16 %v1283
      %v1633 = vunpack.c.h.b16 %v1283
      %v1634 = vunpack.c.l.b16 %v1284
      %v1635 = vunpack.c.h.b16 %v1284
      %v1636 = vunpack.c.l.b16 %v1285
      %v1637 = vunpack.c.h.b16 %v1285
      %v1638 = vunpack.c.l.b16 %v1286
      %v1639 = vunpack.c.h.b16 %v1286
      %v1640 = vunpack.c.l.b16 %v1287
      %v1641 = vunpack.c.h.b16 %v1287
      %v1642 = vunpack.c.l.b16 %v1288
      %v1643 = vunpack.c.h.b16 %v1288
      %v1644 = vunpack.c.l.b16 %v1289
      %v1645 = vunpack.c.h.b16 %v1289
      %v1646 = vunpack.c.l.b16 %v1290
      %v1647 = vunpack.c.h.b16 %v1290
      %v1648 = vunpack.c.l.b16 %v1291
      %v1649 = vunpack.c.h.b16 %v1291
      %v1650 = vunpack.c.l.b16 %v1292
      %v1651 = vunpack.c.h.b16 %v1292
      %v1652 = vunpack.c.l.b16 %v1293
      %v1653 = vunpack.c.h.b16 %v1293
      %v1654 = vunpack.c.l.b16 %v1294
      %v1655 = vunpack.c.h.b16 %v1294
      %v1656 = vunpack.c.l.b16 %v1295
      %v1657 = vunpack.c.h.b16 %v1295
      %v1658 = vunpack.c.l.b16 %v1296
      %v1659 = vunpack.c.h.b16 %v1296
      %v1660 = vunpack.c.l.b16 %v1297
      %v1661 = vunpack.c.h.b16 %v1297
      %v1662 = vunpack.c.l.b16 %v1298
      %v1663 = vunpack.c.h.b16 %v1298
      %v1664 = vunpack.c.l.b16 %v1299
      %v1665 = vunpack.c.h.b16 %v1299
      %v1666 = vunpack.c.l.b16 %v1300
      %v1667 = vunpack.c.h.b16 %v1300
      %v1668 = vunpack.c.l.b16 %v1301
      %v1669 = vunpack.c.h.b16 %v1301
      %v1670 = vunpack.c.l.b16 %v1302
      %v1671 = vunpack.c.h.b16 %v1302
      %v1672 = vunpack.c.l.b16 %v1303
      %v1673 = vunpack.c.h.b16 %v1303
      %v1674 = vunpack.c.l.b16 %v1304
      %v1675 = vunpack.c.h.b16 %v1304
      %v1676 = vunpack.c.l.b16 %v1305
      %v1677 = vunpack.c.h.b16 %v1305
      %v1678 = vunpack.c.l.b16 %v1306
      %v1679 = vunpack.c.h.b16 %v1306
      %v1680 = vunpack.c.l.b16 %v1307
      %v1681 = vunpack.c.h.b16 %v1307
      %v1682 = vunpack.c.l.b16 %v1308
      %v1683 = vunpack.c.h.b16 %v1308
      %v1684 = vunpack.c.l.b16 %v1309
      %v1685 = vunpack.c.h.b16 %v1309
      %v1686 = vunpack.c.l.b16 %v1310
      %v1687 = vunpack.c.h.b16 %v1310
      %v1688 = vunpack.c.l.b16 %v1311
      %v1689 = vunpack.c.h.b16 %v1311
      %v1690 = vunpack.c.l.b16 %v1312
      %v1691 = vunpack.c.h.b16 %v1312
      %v1692 = vunpack.c.l.b16 %v1313
      %v1693 = vunpack.c.h.b16 %v1313
      %v1694 = vunpack.c.l.b16 %v1314
      %v1695 = vunpack.c.h.b16 %v1314
      %v1696 = vunpack.c.l.b16 %v1315
      %v1697 = vunpack.c.h.b16 %v1315
      %v1698 = vunpack.c.l.b16 %v1316
      %v1699 = vunpack.c.h.b16 %v1316
      %v1700 = vunpack.c.l.b16 %v1317
      %v1701 = vunpack.c.h.b16 %v1317
      %v1702 = vunpack.c.l.b16 %v1318
      %v1703 = vunpack.c.h.b16 %v1318
      %v1704 = vunpack.c.l.b16 %v1319
      %v1705 = vunpack.c.h.b16 %v1319
      %v1706 = vunpack.c.l.b16 %v1320
      %v1707 = vunpack.c.h.b16 %v1320
      %v1708 = vunpack.c.l.b16 %v1321
      %v1709 = vunpack.c.h.b16 %v1321
      %v1710 = vunpack.c.l.b16 %v1322
      %v1711 = vunpack.c.h.b16 %v1322
      %v1712 = vunpack.c.l.b16 %v1323
      %v1713 = vunpack.c.h.b16 %v1323
      %v1714 = vunpack.c.l.b16 %v1324
      %v1715 = vunpack.c.h.b16 %v1324
      %v1716 = vunpack.c.l.b16 %v1325
      %v1717 = vunpack.c.h.b16 %v1325
      %v1718 = vunpack.c.l.b16 %v1326
      %v1719 = vunpack.c.h.b16 %v1326
      %v1720 = vunpack.c.l.b16 %v1327
      %v1721 = vunpack.c.h.b16 %v1327
      %v1722 = vunpack.c.l.b16 %v1328
      %v1723 = vunpack.c.h.b16 %v1328
      %v1724 = vunpack.c.l.b16 %v1329
      %v1725 = vunpack.c.h.b16 %v1329
      %v1726 = vunpack.c.l.b16 %v1330
      %v1727 = vunpack.c.h.b16 %v1330
      %v1728 = vunpack.c.l.b16 %v1331
      %v1729 = vunpack.c.h.b16 %v1331
      %v1730 = vunpack.c.l.b16 %v1332
      %v1731 = vunpack.c.h.b16 %v1332
      %v1732 = vunpack.c.l.b16 %v1333
      %v1733 = vunpack.c.h.b16 %v1333
      %v1734 = vunpack.c.l.b16 %v1334
      %v1735 = vunpack.c.h.b16 %v1334
      %v1736 = vunpack.c.l.b16 %v1335
      %v1737 = vunpack.c.h.b16 %v1335
      %v1738 = vunpack.c.l.b16 %v1336
      %v1739 = vunpack.c.h.b16 %v1336
      %v1740 = vunpack.c.l.b16 %v1337
      %v1741 = vunpack.c.h.b16 %v1337
      %v1742 = vunpack.c.l.b16 %v1338
      %v1743 = vunpack.c.h.b16 %v1338
      %v1744 = vunpack.c.l.b16 %v1339
      %v1745 = vunpack.c.h.b16 %v1339
      %v1746 = vunpack.c.l.b16 %v1340
      %v1747 = vunpack.c.h.b16 %v1340
      %v1748 = vunpack.c.l.b16 %v1341
      %v1749 = vunpack.c.h.b16 %v1341
      %v1750 = vunpack.c.l.b16 %v1342
      %v1751 = vunpack.c.h.b16 %v1342
      %v1752 = vunpack.c.l.b16 %v1343
      %v1753 = vunpack.c.h.b16 %v1343
      %v1754 = vunpack.c.l.b16 %v1344
      %v1755 = vunpack.c.h.b16 %v1344
      %v1756 = vunpack.c.l.b16 %v1345
      %v1757 = vunpack.c.h.b16 %v1345
      %v1758 = vunpack.c.l.b16 %v1346
      %v1759 = vunpack.c.h.b16 %v1346
      %v1760 = vunpack.c.l.b16 %v1347
      %v1761 = vunpack.c.h.b16 %v1347
      %v1762 = vunpack.c.l.b16 %v1348
      %v1763 = vunpack.c.h.b16 %v1348
      %v1764 = vunpack.c.l.b16 %v1349
      %v1765 = vunpack.c.h.b16 %v1349
      %v1766 = vunpack.c.l.b16 %v1350
      %v1767 = vunpack.c.h.b16 %v1350
      %v1768 = vunpack.c.l.b16 %v1351
      %v1769 = vunpack.c.h.b16 %v1351
      %v1770 = vpack.c.b16 %v1522, %v1514
      %v1771 = vpack.c.b16 %v1523, %v1515
      %v1772 = vpack.c.b16 %v1524, %v1516
      %v1773 = vpack.c.b16 %v1525, %v1517
      %v1774 = vpack.c.b16 %v1526, %v1518
      %v1775 = vpack.c.b16 %v1527, %v1519
      %v1776 = vpack.c.b16 %v1528, %v1520
      %v1777 = vpack.c.b16 %v1529, %v1521
      %v1778 = vpack.c.b16 %v1538, %v1530
      %v1779 = vpack.c.b16 %v1539, %v1531
      %v1780 = vpack.c.b16 %v1540, %v1532
      %v1781 = vpack.c.b16 %v1541, %v1533
      %v1782 = vpack.c.b16 %v1542, %v1534
      %v1783 = vpack.c.b16 %v1543, %v1535
      %v1784 = vpack.c.b16 %v1544, %v1536
      %v1785 = vpack.c.b16 %v1545, %v1537
      %v1786 = vpack.c.b16 %v1554, %v1546
      %v1787 = vpack.c.b16 %v1555, %v1547
      %v1788 = vpack.c.b16 %v1556, %v1548
      %v1789 = vpack.c.b16 %v1557, %v1549
      %v1790 = vpack.c.b16 %v1558, %v1550
      %v1791 = vpack.c.b16 %v1559, %v1551
      %v1792 = vpack.c.b16 %v1560, %v1552
      %v1793 = vpack.c.b16 %v1561, %v1553
      %v1794 = vpack.c.b16 %v1570, %v1562
      %v1795 = vpack.c.b16 %v1571, %v1563
      %v1796 = vpack.c.b16 %v1572, %v1564
      %v1797 = vpack.c.b16 %v1573, %v1565
      %v1798 = vpack.c.b16 %v1574, %v1566
      %v1799 = vpack.c.b16 %v1575, %v1567
      %v1800 = vpack.c.b16 %v1576, %v1568
      %v1801 = vpack.c.b16 %v1577, %v1569
      %v1802 = vpack.c.b16 %v1586, %v1578
      %v1803 = vpack.c.b16 %v1587, %v1579
      %v1804 = vpack.c.b16 %v1588, %v1580
      %v1805 = vpack.c.b16 %v1589, %v1581
      %v1806 = vpack.c.b16 %v1590, %v1582
      %v1807 = vpack.c.b16 %v1591, %v1583
      %v1808 = vpack.c.b16 %v1592, %v1584
      %v1809 = vpack.c.b16 %v1593, %v1585
      %v1810 = vpack.c.b16 %v1602, %v1594
      %v1811 = vpack.c.b16 %v1603, %v1595
      %v1812 = vpack.c.b16 %v1604, %v1596
      %v1813 = vpack.c.b16 %v1605, %v1597
      %v1814 = vpack.c.b16 %v1606, %v1598
      %v1815 = vpack.c.b16 %v1607, %v1599
      %v1816 = vpack.c.b16 %v1608, %v1600
      %v1817 = vpack.c.b16 %v1609, %v1601
      %v1818 = vpack.c.b16 %v1618, %v1610
      %v1819 = vpack.c.b16 %v1619, %v1611
      %v1820 = vpack.c.b16 %v1620, %v1612
      %v1821 = vpack.c.b16 %v1621, %v1613
      %v1822 = vpack.c.b16 %v1622, %v1614
      %v1823 = vpack.c.b16 %v1623, %v1615
      %v1824 = vpack.c.b16 %v1624, %v1616
      %v1825 = vpack.c.b16 %v1625, %v1617
      %v1826 = vpack.c.b16 %v1634, %v1626
      %v1827 = vpack.c.b16 %v1635, %v1627
      %v1828 = vpack.c.b16 %v1636, %v1628
      %v1829 = vpack.c.b16 %v1637, %v1629
      %v1830 = vpack.c.b16 %v1638, %v1630
      %v1831 = vpack.c.b16 %v1639, %v1631
      %v1832 = vpack.c.b16 %v1640, %v1632
      %v1833 = vpack.c.b16 %v1641, %v1633
      %v1834 = vpack.c.b16 %v1650, %v1642
      %v1835 = vpack.c.b16 %v1651, %v1643
      %v1836 = vpack.c.b16 %v1652, %v1644
      %v1837 = vpack.c.b16 %v1653, %v1645
      %v1838 = vpack.c.b16 %v1654, %v1646
      %v1839 = vpack.c.b16 %v1655, %v1647
      %v1840 = vpack.c.b16 %v1656, %v1648
      %v1841 = vpack.c.b16 %v1657, %v1649
      %v1842 = vpack.c.b16 %v1666, %v1658
      %v1843 = vpack.c.b16 %v1667, %v1659
      %v1844 = vpack.c.b16 %v1668, %v1660
      %v1845 = vpack.c.b16 %v1669, %v1661
      %v1846 = vpack.c.b16 %v1670, %v1662
      %v1847 = vpack.c.b16 %v1671, %v1663
      %v1848 = vpack.c.b16 %v1672, %v1664
      %v1849 = vpack.c.b16 %v1673, %v1665
      %v1850 = vpack.c.b16 %v1682, %v1674
      %v1851 = vpack.c.b16 %v1683, %v1675
      %v1852 = vpack.c.b16 %v1684, %v1676
      %v1853 = vpack.c.b16 %v1685, %v1677
      %v1854 = vpack.c.b16 %v1686, %v1678
      %v1855 = vpack.c.b16 %v1687, %v1679
      %v1856 = vpack.c.b16 %v1688, %v1680
      %v1857 = vpack.c.b16 %v1689, %v1681
      %v1858 = vpack.c.b16 %v1698, %v1690
      %v1859 = vpack.c.b16 %v1699, %v1691
      %v1860 = vpack.c.b16 %v1700, %v1692
      %v1861 = vpack.c.b16 %v1701, %v1693
      %v1862 = vpack.c.b16 %v1702, %v1694
      %v1863 = vpack.c.b16 %v1703, %v1695
      %v1864 = vpack.c.b16 %v1704, %v1696
      %v1865 = vpack.c.b16 %v1705, %v1697
      %v1866 = vpack.c.b16 %v1714, %v1706
      %v1867 = vpack.c.b16 %v1715, %v1707
      %v1868 = vpack.c.b16 %v1716, %v1708
      %v1869 = vpack.c.b16 %v1717, %v1709
      %v1870 = vpack.c.b16 %v1718, %v1710
      %v1871 = vpack.c.b16 %v1719, %v1711
      %v1872 = vpack.c.b16 %v1720, %v1712
      %v1873 = vpack.c.b16 %v1721, %v1713
      %v1874 = vpack.c.b16 %v1730, %v1722
      %v1875 = vpack.c.b16 %v1731, %v1723
      %v1876 = vpack.c.b16 %v1732, %v1724
      %v1877 = vpack.c.b16 %v1733, %v1725
      %v1878 = vpack.c.b16 %v1734, %v1726
      %v1879 = vpack.c.b16 %v1735, %v1727
      %v1880 = vpack.c.b16 %v1736, %v1728
      %v1881 = vpack.c.b16 %v1737, %v1729
      %v1882 = vpack.c.b16 %v1746, %v1738
      %v1883 = vpack.c.b16 %v1747, %v1739
      %v1884 = vpack.c.b16 %v1748, %v1740
      %v1885 = vpack.c.b16 %v1749, %v1741
      %v1886 = vpack.c.b16 %v1750, %v1742
      %v1887 = vpack.c.b16 %v1751, %v1743
      %v1888 = vpack.c.b16 %v1752, %v1744
      %v1889 = vpack.c.b16 %v1753, %v1745
      %v1890 = vpack.c.b16 %v1762, %v1754
      %v1891 = vpack.c.b16 %v1763, %v1755
      %v1892 = vpack.c.b16 %v1764, %v1756
      %v1893 = vpack.c.b16 %v1765, %v1757
      %v1894 = vpack.c.b16 %v1766, %v1758
      %v1895 = vpack.c.b16 %v1767, %v1759
      %v1896 = vpack.c.b16 %v1768, %v1760
      %v1897 = vpack.c.b16 %v1769, %v1761
      %2026 = vmatprep.subr.bf16.mxu0 %v1771
      %2027 = vmatpush1.bf16.msra.mxu0 %v1770
      %2028 = vmatprep.subr.bf16.mxu0 %v1779
      %2029 = vmatpush1.bf16.msra.mxu0 %v1778
      %2030 = vmatprep.subr.bf16.mxu0 %v1787
      %2031 = vmatpush1.bf16.msra.mxu0 %v1786
      %2032 = vmatprep.subr.bf16.mxu0 %v1795
      %2033 = vmatpush1.bf16.msra.mxu0 %v1794
      %2034 = vmatprep.subr.bf16.mxu0 %v1803
      %2035 = vmatpush1.bf16.msra.mxu0 %v1802
      %2036 = vmatprep.subr.bf16.mxu0 %v1811
      %2037 = vmatpush1.bf16.msra.mxu0 %v1810
      %2038 = vmatprep.subr.bf16.mxu0 %v1819
      %2039 = vmatpush1.bf16.msra.mxu0 %v1818
      %2040 = vmatprep.subr.bf16.mxu0 %v1827
      %2041 = vmatpush1.bf16.msra.mxu0 %v1826
      %2042 = vmatprep.subr.bf16.mxu0 %v1835
      %2043 = vmatpush1.bf16.msra.mxu0 %v1834
      %2044 = vmatprep.subr.bf16.mxu0 %v1843
      %2045 = vmatpush1.bf16.msra.mxu0 %v1842
      %2046 = vmatprep.subr.bf16.mxu0 %v1851
      %2047 = vmatpush1.bf16.msra.mxu0 %v1850
      %2048 = vmatprep.subr.bf16.mxu0 %v1859
      %2049 = vmatpush1.bf16.msra.mxu0 %v1858
      %2050 = vmatprep.subr.bf16.mxu0 %v1867
      %2051 = vmatpush1.bf16.msra.mxu0 %v1866
      %2052 = vmatprep.subr.bf16.mxu0 %v1875
      %2053 = vmatpush1.bf16.msra.mxu0 %v1874
      %2054 = vmatprep.subr.bf16.mxu0 %v1883
      %2055 = vmatpush1.bf16.msra.mxu0 %v1882
      %2056 = vmatprep.subr.bf16.mxu0 %v1891
      %2057 = vmatpush1.bf16.msra.mxu0 %v1890
      %2058 = vmatprep.mubr.bf16.mxu0 %v1375
      %2059 = vmatmul.mubr.bf16.gmra.mrb[0].mxu0 %v1363
      %v2060 = vpop.f32.mrb[0].mxu0
      %v2061 = vadd.f32 0.0, %v2060
      %v2062 = vpop.f32.mrb[0].mxu0
      %v2063 = vadd.f32 0.0, %v2062
      %v2064 = vpop.f32.mrb[0].mxu0
      %v2065 = vadd.f32 0.0, %v2064
      %v2066 = vpop.f32.mrb[0].mxu0
      %v2067 = vadd.f32 0.0, %v2066
      %2068 = vmatprep.mubr.bf16.mxu0 %v1381
      %2069 = vmatmul.mubr.bf16.gmra.mrb[0].mxu0 %v1378
      %v2070 = vpop.f32.mrb[0].mxu0
      %v2071 = vpop.f32.mrb[0].mxu0
      %v2072 = vpop.f32.mrb[0].mxu0
      %v2073 = vpop.f32.mrb[0].mxu0
      %2074 = vdwg.mxu0
      %2075 = vmatprep.subr.bf16.mxu0 %v1773
      %2076 = vmatpush1.bf16.msra.mxu0 %v1772
      %2077 = vmatprep.subr.bf16.mxu0 %v1781
      %2078 = vmatpush1.bf16.msra.mxu0 %v1780
      %2079 = vmatprep.subr.bf16.mxu0 %v1789
      %2080 = vmatpush1.bf16.msra.mxu0 %v1788
      %2081 = vmatprep.subr.bf16.mxu0 %v1797
      %2082 = vmatpush1.bf16.msra.mxu0 %v1796
      %2083 = vmatprep.subr.bf16.mxu0 %v1805
      %2084 = vmatpush1.bf16.msra.mxu0 %v1804
      %2085 = vmatprep.subr.bf16.mxu0 %v1813
      %2086 = vmatpush1.bf16.msra.mxu0 %v1812
      %2087 = vmatprep.subr.bf16.mxu0 %v1821
      %2088 = vmatpush1.bf16.msra.mxu0 %v1820
      %2089 = vmatprep.subr.bf16.mxu0 %v1829
      %2090 = vmatpush1.bf16.msra.mxu0 %v1828
      %2091 = vmatprep.subr.bf16.mxu0 %v1837
      %2092 = vmatpush1.bf16.msra.mxu0 %v1836
      %2093 = vmatprep.subr.bf16.mxu0 %v1845
      %2094 = vmatpush1.bf16.msra.mxu0 %v1844
      %2095 = vmatprep.subr.bf16.mxu0 %v1853
      %2096 = vmatpush1.bf16.msra.mxu0 %v1852
      %2097 = vmatprep.subr.bf16.mxu0 %v1861
      %2098 = vmatpush1.bf16.msra.mxu0 %v1860
      %2099 = vmatprep.subr.bf16.mxu0 %v1869
      %2100 = vmatpush1.bf16.msra.mxu0 %v1868
      %2101 = vmatprep.subr.bf16.mxu0 %v1877
      %2102 = vmatpush1.bf16.msra.mxu0 %v1876
      %2103 = vmatprep.subr.bf16.mxu0 %v1885
      %2104 = vmatpush1.bf16.msra.mxu0 %v1884
      %2105 = vmatprep.subr.bf16.mxu0 %v1893
      %2106 = vmatpush1.bf16.msra.mxu0 %v1892
      %2107 = vmatprep.mubr.bf16.mxu0 %v1375
      %2108 = vmatmul.mubr.bf16.gmra.mrb[0].mxu0 %v1363
      %v2109 = vpop.f32.mrb[0].mxu0
      %v2110 = vadd.f32 0.0, %v2109
      %v2111 = vpop.f32.mrb[0].mxu0
      %v2112 = vadd.f32 0.0, %v2111
      %v2113 = vpop.f32.mrb[0].mxu0
      %v2114 = vadd.f32 0.0, %v2113
      %v2115 = vpop.f32.mrb[0].mxu0
      %v2116 = vadd.f32 0.0, %v2115
      %2117 = vmatprep.mubr.bf16.mxu0 %v1381
      %2118 = vmatmul.mubr.bf16.gmra.mrb[0].mxu0 %v1378
      %v2119 = vpop.f32.mrb[0].mxu0
      %v2120 = vpop.f32.mrb[0].mxu0
      %v2121 = vpop.f32.mrb[0].mxu0
      %v2122 = vpop.f32.mrb[0].mxu0
      %2123 = vdwg.mxu0
      %2124 = vmatprep.subr.bf16.mxu0 %v1775
      %2125 = vmatpush1.bf16.msra.mxu0 %v1774
      %2126 = vmatprep.subr.bf16.mxu0 %v1783
      %2127 = vmatpush1.bf16.msra.mxu0 %v1782
      %2128 = vmatprep.subr.bf16.mxu0 %v1791
      %2129 = vmatpush1.bf16.msra.mxu0 %v1790
      %2130 = vmatprep.subr.bf16.mxu0 %v1799
      %2131 = vmatpush1.bf16.msra.mxu0 %v1798
      %2132 = vmatprep.subr.bf16.mxu0 %v1807
      %2133 = vmatpush1.bf16.msra.mxu0 %v1806
      %2134 = vmatprep.subr.bf16.mxu0 %v1815
      %2135 = vmatpush1.bf16.msra.mxu0 %v1814
      %2136 = vmatprep.subr.bf16.mxu0 %v1823
      %2137 = vmatpush1.bf16.msra.mxu0 %v1822
      %2138 = vmatprep.subr.bf16.mxu0 %v1831
      %2139 = vmatpush1.bf16.msra.mxu0 %v1830
      %2140 = vmatprep.subr.bf16.mxu0 %v1839
      %2141 = vmatpush1.bf16.msra.mxu0 %v1838
      %2142 = vmatprep.subr.bf16.mxu0 %v1847
      %2143 = vmatpush1.bf16.msra.mxu0 %v1846
      %2144 = vmatprep.subr.bf16.mxu0 %v1855
      %2145 = vmatpush1.bf16.msra.mxu0 %v1854
      %2146 = vmatprep.subr.bf16.mxu0 %v1863
      %2147 = vmatpush1.bf16.msra.mxu0 %v1862
      %2148 = vmatprep.subr.bf16.mxu0 %v1871
      %2149 = vmatpush1.bf16.msra.mxu0 %v1870
      %2150 = vmatprep.subr.bf16.mxu0 %v1879
      %2151 = vmatpush1.bf16.msra.mxu0 %v1878
      %2152 = vmatprep.subr.bf16.mxu0 %v1887
      %2153 = vmatpush1.bf16.msra.mxu0 %v1886
      %2154 = vmatprep.subr.bf16.mxu0 %v1895
      %2155 = vmatpush1.bf16.msra.mxu0 %v1894
      %2156 = vmatprep.mubr.bf16.mxu0 %v1375
      %2157 = vmatmul.mubr.bf16.gmra.mrb[0].mxu0 %v1363
      %v2158 = vpop.f32.mrb[0].mxu0
      %v2159 = vadd.f32 0.0, %v2158
      %v2160 = vpop.f32.mrb[0].mxu0
      %v2161 = vadd.f32 0.0, %v2160
      %v2162 = vpop.f32.mrb[0].mxu0
      %v2163 = vadd.f32 0.0, %v2162
      %v2164 = vpop.f32.mrb[0].mxu0
      %v2165 = vadd.f32 0.0, %v2164
      %2166 = vmatprep.mubr.bf16.mxu0 %v1381
      %2167 = vmatmul.mubr.bf16.gmra.mrb[0].mxu0 %v1378
      %v2168 = vpop.f32.mrb[0].mxu0
      %v2169 = vpop.f32.mrb[0].mxu0
      %v2170 = vpop.f32.mrb[0].mxu0
      %v2171 = vpop.f32.mrb[0].mxu0
      %2172 = vdwg.mxu0
      %2173 = vmatprep.subr.bf16.mxu0 %v1777
      %2174 = vmatpush1.bf16.msra.mxu0 %v1776
      %2175 = vmatprep.subr.bf16.mxu0 %v1785
      %2176 = vmatpush1.bf16.msra.mxu0 %v1784
      %2177 = vmatprep.subr.bf16.mxu0 %v1793
      %2178 = vmatpush1.bf16.msra.mxu0 %v1792
      %2179 = vmatprep.subr.bf16.mxu0 %v1801
      %2180 = vmatpush1.bf16.msra.mxu0 %v1800
      %2181 = vmatprep.subr.bf16.mxu0 %v1809
      %2182 = vmatpush1.bf16.msra.mxu0 %v1808
      %2183 = vmatprep.subr.bf16.mxu0 %v1817
      %2184 = vmatpush1.bf16.msra.mxu0 %v1816
      %2185 = vmatprep.subr.bf16.mxu0 %v1825
      %2186 = vmatpush1.bf16.msra.mxu0 %v1824
      %2187 = vmatprep.subr.bf16.mxu0 %v1833
      %2188 = vmatpush1.bf16.msra.mxu0 %v1832
      %2189 = vmatprep.subr.bf16.mxu0 %v1841
      %2190 = vmatpush1.bf16.msra.mxu0 %v1840
      %2191 = vmatprep.subr.bf16.mxu0 %v1849
      %2192 = vmatpush1.bf16.msra.mxu0 %v1848
      %2193 = vmatprep.subr.bf16.mxu0 %v1857
      %2194 = vmatpush1.bf16.msra.mxu0 %v1856
      %2195 = vmatprep.subr.bf16.mxu0 %v1865
      %2196 = vmatpush1.bf16.msra.mxu0 %v1864
      %2197 = vmatprep.subr.bf16.mxu0 %v1873
      %2198 = vmatpush1.bf16.msra.mxu0 %v1872
      %2199 = vmatprep.subr.bf16.mxu0 %v1881
      %2200 = vmatpush1.bf16.msra.mxu0 %v1880
      %2201 = vmatprep.subr.bf16.mxu0 %v1889
      %2202 = vmatpush1.bf16.msra.mxu0 %v1888
      %2203 = vmatprep.subr.bf16.mxu0 %v1897
      %2204 = vmatpush1.bf16.msra.mxu0 %v1896
      %2205 = vmatprep.mubr.bf16.mxu0 %v1375
      %2206 = vmatmul.mubr.bf16.gmra.mrb[0].mxu0 %v1363
      %v2207 = vpop.f32.mrb[0].mxu0
      %v2208 = vadd.f32 0.0, %v2207
      %v2209 = vpop.f32.mrb[0].mxu0
      %v2210 = vadd.f32 0.0, %v2209
      %v2211 = vpop.f32.mrb[0].mxu0
      %v2212 = vadd.f32 0.0, %v2211
      %v2213 = vpop.f32.mrb[0].mxu0
      %v2214 = vadd.f32 0.0, %v2213
      %2215 = vmatprep.mubr.bf16.mxu0 %v1381
      %2216 = vmatmul.mubr.bf16.gmra.mrb[0].mxu0 %v1378
      %v2217 = vpop.f32.mrb[0].mxu0
      %v2218 = vpop.f32.mrb[0].mxu0
      %v2219 = vpop.f32.mrb[0].mxu0
      %v2220 = vpop.f32.mrb[0].mxu0
      %2221 = vdwg.mxu0
      %v2350 = vunpack.c.l.b16 %v1095
      %v2351 = vunpack.c.h.b16 %v1095
      %v2352 = vunpack.c.l.b16 %v1096
      %v2353 = vunpack.c.h.b16 %v1096
      %v2354 = vunpack.c.l.b16 %v1097
      %v2355 = vunpack.c.h.b16 %v1097
      %v2356 = vunpack.c.l.b16 %v1098
      %v2357 = vunpack.c.h.b16 %v1098
      %v2358 = vunpack.c.l.b16 %v1099
      %v2359 = vunpack.c.h.b16 %v1099
      %v2360 = vunpack.c.l.b16 %v1100
      %v2361 = vunpack.c.h.b16 %v1100
      %v2362 = vunpack.c.l.b16 %v1101
      %v2363 = vunpack.c.h.b16 %v1101
      %v2364 = vunpack.c.l.b16 %v1102
      %v2365 = vunpack.c.h.b16 %v1102
      %v2366 = vunpack.c.l.b16 %v1103
      %v2367 = vunpack.c.h.b16 %v1103
      %v2368 = vunpack.c.l.b16 %v1104
      %v2369 = vunpack.c.h.b16 %v1104
      %v2370 = vunpack.c.l.b16 %v1105
      %v2371 = vunpack.c.h.b16 %v1105
      %v2372 = vunpack.c.l.b16 %v1106
      %v2373 = vunpack.c.h.b16 %v1106
      %v2374 = vunpack.c.l.b16 %v1107
      %v2375 = vunpack.c.h.b16 %v1107
      %v2376 = vunpack.c.l.b16 %v1108
      %v2377 = vunpack.c.h.b16 %v1108
      %v2378 = vunpack.c.l.b16 %v1109
      %v2379 = vunpack.c.h.b16 %v1109
      %v2380 = vunpack.c.l.b16 %v1110
      %v2381 = vunpack.c.h.b16 %v1110
      %v2382 = vunpack.c.l.b16 %v1111
      %v2383 = vunpack.c.h.b16 %v1111
      %v2384 = vunpack.c.l.b16 %v1112
      %v2385 = vunpack.c.h.b16 %v1112
      %v2386 = vunpack.c.l.b16 %v1113
      %v2387 = vunpack.c.h.b16 %v1113
      %v2388 = vunpack.c.l.b16 %v1114
      %v2389 = vunpack.c.h.b16 %v1114
      %v2390 = vunpack.c.l.b16 %v1115
      %v2391 = vunpack.c.h.b16 %v1115
      %v2392 = vunpack.c.l.b16 %v1116
      %v2393 = vunpack.c.h.b16 %v1116
      %v2394 = vunpack.c.l.b16 %v1117
      %v2395 = vunpack.c.h.b16 %v1117
      %v2396 = vunpack.c.l.b16 %v1118
      %v2397 = vunpack.c.h.b16 %v1118
      %v2398 = vunpack.c.l.b16 %v1119
      %v2399 = vunpack.c.h.b16 %v1119
      %v2400 = vunpack.c.l.b16 %v1120
      %v2401 = vunpack.c.h.b16 %v1120
      %v2402 = vunpack.c.l.b16 %v1121
      %v2403 = vunpack.c.h.b16 %v1121
      %v2404 = vunpack.c.l.b16 %v1122
      %v2405 = vunpack.c.h.b16 %v1122
      %v2406 = vunpack.c.l.b16 %v1123
      %v2407 = vunpack.c.h.b16 %v1123
      %v2408 = vunpack.c.l.b16 %v1124
      %v2409 = vunpack.c.h.b16 %v1124
      %v2410 = vunpack.c.l.b16 %v1125
      %v2411 = vunpack.c.h.b16 %v1125
      %v2412 = vunpack.c.l.b16 %v1126
      %v2413 = vunpack.c.h.b16 %v1126
      %v2414 = vunpack.c.l.b16 %v1127
      %v2415 = vunpack.c.h.b16 %v1127
      %v2416 = vunpack.c.l.b16 %v1128
      %v2417 = vunpack.c.h.b16 %v1128
      %v2418 = vunpack.c.l.b16 %v1129
      %v2419 = vunpack.c.h.b16 %v1129
      %v2420 = vunpack.c.l.b16 %v1130
      %v2421 = vunpack.c.h.b16 %v1130
      %v2422 = vunpack.c.l.b16 %v1131
      %v2423 = vunpack.c.h.b16 %v1131
      %v2424 = vunpack.c.l.b16 %v1132
      %v2425 = vunpack.c.h.b16 %v1132
      %v2426 = vunpack.c.l.b16 %v1133
      %v2427 = vunpack.c.h.b16 %v1133
      %v2428 = vunpack.c.l.b16 %v1134
      %v2429 = vunpack.c.h.b16 %v1134
      %v2430 = vunpack.c.l.b16 %v1135
      %v2431 = vunpack.c.h.b16 %v1135
      %v2432 = vunpack.c.l.b16 %v1136
      %v2433 = vunpack.c.h.b16 %v1136
      %v2434 = vunpack.c.l.b16 %v1137
      %v2435 = vunpack.c.h.b16 %v1137
      %v2436 = vunpack.c.l.b16 %v1138
      %v2437 = vunpack.c.h.b16 %v1138
      %v2438 = vunpack.c.l.b16 %v1139
      %v2439 = vunpack.c.h.b16 %v1139
      %v2440 = vunpack.c.l.b16 %v1140
      %v2441 = vunpack.c.h.b16 %v1140
      %v2442 = vunpack.c.l.b16 %v1141
      %v2443 = vunpack.c.h.b16 %v1141
      %v2444 = vunpack.c.l.b16 %v1142
      %v2445 = vunpack.c.h.b16 %v1142
      %v2446 = vunpack.c.l.b16 %v1143
      %v2447 = vunpack.c.h.b16 %v1143
      %v2448 = vunpack.c.l.b16 %v1144
      %v2449 = vunpack.c.h.b16 %v1144
      %v2450 = vunpack.c.l.b16 %v1145
      %v2451 = vunpack.c.h.b16 %v1145
      %v2452 = vunpack.c.l.b16 %v1146
      %v2453 = vunpack.c.h.b16 %v1146
      %v2454 = vunpack.c.l.b16 %v1147
      %v2455 = vunpack.c.h.b16 %v1147
      %v2456 = vunpack.c.l.b16 %v1148
      %v2457 = vunpack.c.h.b16 %v1148
      %v2458 = vunpack.c.l.b16 %v1149
      %v2459 = vunpack.c.h.b16 %v1149
      %v2460 = vunpack.c.l.b16 %v1150
      %v2461 = vunpack.c.h.b16 %v1150
      %v2462 = vunpack.c.l.b16 %v1151
      %v2463 = vunpack.c.h.b16 %v1151
      %v2464 = vunpack.c.l.b16 %v1152
      %v2465 = vunpack.c.h.b16 %v1152
      %v2466 = vunpack.c.l.b16 %v1153
      %v2467 = vunpack.c.h.b16 %v1153
      %v2468 = vunpack.c.l.b16 %v1154
      %v2469 = vunpack.c.h.b16 %v1154
      %v2470 = vunpack.c.l.b16 %v1155
      %v2471 = vunpack.c.h.b16 %v1155
      %v2472 = vunpack.c.l.b16 %v1156
      %v2473 = vunpack.c.h.b16 %v1156
      %v2474 = vunpack.c.l.b16 %v1157
      %v2475 = vunpack.c.h.b16 %v1157
      %v2476 = vunpack.c.l.b16 %v1158
      %v2477 = vunpack.c.h.b16 %v1158
      %v2478 = vunpack.c.l.b16 %v1159
      %v2479 = vunpack.c.h.b16 %v1159
      %v2480 = vunpack.c.l.b16 %v1160
      %v2481 = vunpack.c.h.b16 %v1160
      %v2482 = vunpack.c.l.b16 %v1161
      %v2483 = vunpack.c.h.b16 %v1161
      %v2484 = vunpack.c.l.b16 %v1162
      %v2485 = vunpack.c.h.b16 %v1162
      %v2486 = vunpack.c.l.b16 %v1163
      %v2487 = vunpack.c.h.b16 %v1163
      %v2488 = vunpack.c.l.b16 %v1164
      %v2489 = vunpack.c.h.b16 %v1164
      %v2490 = vunpack.c.l.b16 %v1165
      %v2491 = vunpack.c.h.b16 %v1165
      %v2492 = vunpack.c.l.b16 %v1166
      %v2493 = vunpack.c.h.b16 %v1166
      %v2494 = vunpack.c.l.b16 %v1167
      %v2495 = vunpack.c.h.b16 %v1167
      %v2496 = vunpack.c.l.b16 %v1168
      %v2497 = vunpack.c.h.b16 %v1168
      %v2498 = vunpack.c.l.b16 %v1169
      %v2499 = vunpack.c.h.b16 %v1169
      %v2500 = vunpack.c.l.b16 %v1170
      %v2501 = vunpack.c.h.b16 %v1170
      %v2502 = vunpack.c.l.b16 %v1171
      %v2503 = vunpack.c.h.b16 %v1171
      %v2504 = vunpack.c.l.b16 %v1172
      %v2505 = vunpack.c.h.b16 %v1172
      %v2506 = vunpack.c.l.b16 %v1173
      %v2507 = vunpack.c.h.b16 %v1173
      %v2508 = vunpack.c.l.b16 %v1174
      %v2509 = vunpack.c.h.b16 %v1174
      %v2510 = vunpack.c.l.b16 %v1175
      %v2511 = vunpack.c.h.b16 %v1175
      %v2512 = vunpack.c.l.b16 %v1176
      %v2513 = vunpack.c.h.b16 %v1176
      %v2514 = vunpack.c.l.b16 %v1177
      %v2515 = vunpack.c.h.b16 %v1177
      %v2516 = vunpack.c.l.b16 %v1178
      %v2517 = vunpack.c.h.b16 %v1178
      %v2518 = vunpack.c.l.b16 %v1179
      %v2519 = vunpack.c.h.b16 %v1179
      %v2520 = vunpack.c.l.b16 %v1180
      %v2521 = vunpack.c.h.b16 %v1180
      %v2522 = vunpack.c.l.b16 %v1181
      %v2523 = vunpack.c.h.b16 %v1181
      %v2524 = vunpack.c.l.b16 %v1182
      %v2525 = vunpack.c.h.b16 %v1182
      %v2526 = vunpack.c.l.b16 %v1183
      %v2527 = vunpack.c.h.b16 %v1183
      %v2528 = vunpack.c.l.b16 %v1184
      %v2529 = vunpack.c.h.b16 %v1184
      %v2530 = vunpack.c.l.b16 %v1185
      %v2531 = vunpack.c.h.b16 %v1185
      %v2532 = vunpack.c.l.b16 %v1186
      %v2533 = vunpack.c.h.b16 %v1186
      %v2534 = vunpack.c.l.b16 %v1187
      %v2535 = vunpack.c.h.b16 %v1187
      %v2536 = vunpack.c.l.b16 %v1188
      %v2537 = vunpack.c.h.b16 %v1188
      %v2538 = vunpack.c.l.b16 %v1189
      %v2539 = vunpack.c.h.b16 %v1189
      %v2540 = vunpack.c.l.b16 %v1190
      %v2541 = vunpack.c.h.b16 %v1190
      %v2542 = vunpack.c.l.b16 %v1191
      %v2543 = vunpack.c.h.b16 %v1191
      %v2544 = vunpack.c.l.b16 %v1192
      %v2545 = vunpack.c.h.b16 %v1192
      %v2546 = vunpack.c.l.b16 %v1193
      %v2547 = vunpack.c.h.b16 %v1193
      %v2548 = vunpack.c.l.b16 %v1194
      %v2549 = vunpack.c.h.b16 %v1194
      %v2550 = vunpack.c.l.b16 %v1195
      %v2551 = vunpack.c.h.b16 %v1195
      %v2552 = vunpack.c.l.b16 %v1196
      %v2553 = vunpack.c.h.b16 %v1196
      %v2554 = vunpack.c.l.b16 %v1197
      %v2555 = vunpack.c.h.b16 %v1197
      %v2556 = vunpack.c.l.b16 %v1198
      %v2557 = vunpack.c.h.b16 %v1198
      %v2558 = vunpack.c.l.b16 %v1199
      %v2559 = vunpack.c.h.b16 %v1199
      %v2560 = vunpack.c.l.b16 %v1200
      %v2561 = vunpack.c.h.b16 %v1200
      %v2562 = vunpack.c.l.b16 %v1201
      %v2563 = vunpack.c.h.b16 %v1201
      %v2564 = vunpack.c.l.b16 %v1202
      %v2565 = vunpack.c.h.b16 %v1202
      %v2566 = vunpack.c.l.b16 %v1203
      %v2567 = vunpack.c.h.b16 %v1203
      %v2568 = vunpack.c.l.b16 %v1204
      %v2569 = vunpack.c.h.b16 %v1204
      %v2570 = vunpack.c.l.b16 %v1205
      %v2571 = vunpack.c.h.b16 %v1205
      %v2572 = vunpack.c.l.b16 %v1206
      %v2573 = vunpack.c.h.b16 %v1206
      %v2574 = vunpack.c.l.b16 %v1207
      %v2575 = vunpack.c.h.b16 %v1207
      %v2576 = vunpack.c.l.b16 %v1208
      %v2577 = vunpack.c.h.b16 %v1208
      %v2578 = vunpack.c.l.b16 %v1209
      %v2579 = vunpack.c.h.b16 %v1209
      %v2580 = vunpack.c.l.b16 %v1210
      %v2581 = vunpack.c.h.b16 %v1210
      %v2582 = vunpack.c.l.b16 %v1211
      %v2583 = vunpack.c.h.b16 %v1211
      %v2584 = vunpack.c.l.b16 %v1212
      %v2585 = vunpack.c.h.b16 %v1212
      %v2586 = vunpack.c.l.b16 %v1213
      %v2587 = vunpack.c.h.b16 %v1213
      %v2588 = vunpack.c.l.b16 %v1214
      %v2589 = vunpack.c.h.b16 %v1214
      %v2590 = vunpack.c.l.b16 %v1215
      %v2591 = vunpack.c.h.b16 %v1215
      %v2592 = vunpack.c.l.b16 %v1216
      %v2593 = vunpack.c.h.b16 %v1216
      %v2594 = vunpack.c.l.b16 %v1217
      %v2595 = vunpack.c.h.b16 %v1217
      %v2596 = vunpack.c.l.b16 %v1218
      %v2597 = vunpack.c.h.b16 %v1218
      %v2598 = vunpack.c.l.b16 %v1219
      %v2599 = vunpack.c.h.b16 %v1219
      %v2600 = vunpack.c.l.b16 %v1220
      %v2601 = vunpack.c.h.b16 %v1220
      %v2602 = vunpack.c.l.b16 %v1221
      %v2603 = vunpack.c.h.b16 %v1221
      %v2604 = vunpack.c.l.b16 %v1222
      %v2605 = vunpack.c.h.b16 %v1222
      %v2606 = vpack.c.b16 %v2358, %v2350
      %v2607 = vpack.c.b16 %v2359, %v2351
      %v2608 = vpack.c.b16 %v2360, %v2352
      %v2609 = vpack.c.b16 %v2361, %v2353
      %v2610 = vpack.c.b16 %v2362, %v2354
      %v2611 = vpack.c.b16 %v2363, %v2355
      %v2612 = vpack.c.b16 %v2364, %v2356
      %v2613 = vpack.c.b16 %v2365, %v2357
      %v2614 = vpack.c.b16 %v2374, %v2366
      %v2615 = vpack.c.b16 %v2375, %v2367
      %v2616 = vpack.c.b16 %v2376, %v2368
      %v2617 = vpack.c.b16 %v2377, %v2369
      %v2618 = vpack.c.b16 %v2378, %v2370
      %v2619 = vpack.c.b16 %v2379, %v2371
      %v2620 = vpack.c.b16 %v2380, %v2372
      %v2621 = vpack.c.b16 %v2381, %v2373
      %v2622 = vpack.c.b16 %v2390, %v2382
      %v2623 = vpack.c.b16 %v2391, %v2383
      %v2624 = vpack.c.b16 %v2392, %v2384
      %v2625 = vpack.c.b16 %v2393, %v2385
      %v2626 = vpack.c.b16 %v2394, %v2386
      %v2627 = vpack.c.b16 %v2395, %v2387
      %v2628 = vpack.c.b16 %v2396, %v2388
      %v2629 = vpack.c.b16 %v2397, %v2389
      %v2630 = vpack.c.b16 %v2406, %v2398
      %v2631 = vpack.c.b16 %v2407, %v2399
      %v2632 = vpack.c.b16 %v2408, %v2400
      %v2633 = vpack.c.b16 %v2409, %v2401
      %v2634 = vpack.c.b16 %v2410, %v2402
      %v2635 = vpack.c.b16 %v2411, %v2403
      %v2636 = vpack.c.b16 %v2412, %v2404
      %v2637 = vpack.c.b16 %v2413, %v2405
      %v2638 = vpack.c.b16 %v2422, %v2414
      %v2639 = vpack.c.b16 %v2423, %v2415
      %v2640 = vpack.c.b16 %v2424, %v2416
      %v2641 = vpack.c.b16 %v2425, %v2417
      %v2642 = vpack.c.b16 %v2426, %v2418
      %v2643 = vpack.c.b16 %v2427, %v2419
      %v2644 = vpack.c.b16 %v2428, %v2420
      %v2645 = vpack.c.b16 %v2429, %v2421
      %v2646 = vpack.c.b16 %v2438, %v2430
      %v2647 = vpack.c.b16 %v2439, %v2431
      %v2648 = vpack.c.b16 %v2440, %v2432
      %v2649 = vpack.c.b16 %v2441, %v2433
      %v2650 = vpack.c.b16 %v2442, %v2434
      %v2651 = vpack.c.b16 %v2443, %v2435
      %v2652 = vpack.c.b16 %v2444, %v2436
      %v2653 = vpack.c.b16 %v2445, %v2437
      %v2654 = vpack.c.b16 %v2454, %v2446
      %v2655 = vpack.c.b16 %v2455, %v2447
      %v2656 = vpack.c.b16 %v2456, %v2448
      %v2657 = vpack.c.b16 %v2457, %v2449
      %v2658 = vpack.c.b16 %v2458, %v2450
      %v2659 = vpack.c.b16 %v2459, %v2451
      %v2660 = vpack.c.b16 %v2460, %v2452
      %v2661 = vpack.c.b16 %v2461, %v2453
      %v2662 = vpack.c.b16 %v2470, %v2462
      %v2663 = vpack.c.b16 %v2471, %v2463
      %v2664 = vpack.c.b16 %v2472, %v2464
      %v2665 = vpack.c.b16 %v2473, %v2465
      %v2666 = vpack.c.b16 %v2474, %v2466
      %v2667 = vpack.c.b16 %v2475, %v2467
      %v2668 = vpack.c.b16 %v2476, %v2468
      %v2669 = vpack.c.b16 %v2477, %v2469
      %v2670 = vpack.c.b16 %v2486, %v2478
      %v2671 = vpack.c.b16 %v2487, %v2479
      %v2672 = vpack.c.b16 %v2488, %v2480
      %v2673 = vpack.c.b16 %v2489, %v2481
      %v2674 = vpack.c.b16 %v2490, %v2482
      %v2675 = vpack.c.b16 %v2491, %v2483
      %v2676 = vpack.c.b16 %v2492, %v2484
      %v2677 = vpack.c.b16 %v2493, %v2485
      %v2678 = vpack.c.b16 %v2502, %v2494
      %v2679 = vpack.c.b16 %v2503, %v2495
      %v2680 = vpack.c.b16 %v2504, %v2496
      %v2681 = vpack.c.b16 %v2505, %v2497
      %v2682 = vpack.c.b16 %v2506, %v2498
      %v2683 = vpack.c.b16 %v2507, %v2499
      %v2684 = vpack.c.b16 %v2508, %v2500
      %v2685 = vpack.c.b16 %v2509, %v2501
      %v2686 = vpack.c.b16 %v2518, %v2510
      %v2687 = vpack.c.b16 %v2519, %v2511
      %v2688 = vpack.c.b16 %v2520, %v2512
      %v2689 = vpack.c.b16 %v2521, %v2513
      %v2690 = vpack.c.b16 %v2522, %v2514
      %v2691 = vpack.c.b16 %v2523, %v2515
      %v2692 = vpack.c.b16 %v2524, %v2516
      %v2693 = vpack.c.b16 %v2525, %v2517
      %v2694 = vpack.c.b16 %v2534, %v2526
      %v2695 = vpack.c.b16 %v2535, %v2527
      %v2696 = vpack.c.b16 %v2536, %v2528
      %v2697 = vpack.c.b16 %v2537, %v2529
      %v2698 = vpack.c.b16 %v2538, %v2530
      %v2699 = vpack.c.b16 %v2539, %v2531
      %v2700 = vpack.c.b16 %v2540, %v2532
      %v2701 = vpack.c.b16 %v2541, %v2533
      %v2702 = vpack.c.b16 %v2550, %v2542
      %v2703 = vpack.c.b16 %v2551, %v2543
      %v2704 = vpack.c.b16 %v2552, %v2544
      %v2705 = vpack.c.b16 %v2553, %v2545
      %v2706 = vpack.c.b16 %v2554, %v2546
      %v2707 = vpack.c.b16 %v2555, %v2547
      %v2708 = vpack.c.b16 %v2556, %v2548
      %v2709 = vpack.c.b16 %v2557, %v2549
      %v2710 = vpack.c.b16 %v2566, %v2558
      %v2711 = vpack.c.b16 %v2567, %v2559
      %v2712 = vpack.c.b16 %v2568, %v2560
      %v2713 = vpack.c.b16 %v2569, %v2561
      %v2714 = vpack.c.b16 %v2570, %v2562
      %v2715 = vpack.c.b16 %v2571, %v2563
      %v2716 = vpack.c.b16 %v2572, %v2564
      %v2717 = vpack.c.b16 %v2573, %v2565
      %v2718 = vpack.c.b16 %v2582, %v2574
      %v2719 = vpack.c.b16 %v2583, %v2575
      %v2720 = vpack.c.b16 %v2584, %v2576
      %v2721 = vpack.c.b16 %v2585, %v2577
      %v2722 = vpack.c.b16 %v2586, %v2578
      %v2723 = vpack.c.b16 %v2587, %v2579
      %v2724 = vpack.c.b16 %v2588, %v2580
      %v2725 = vpack.c.b16 %v2589, %v2581
      %v2726 = vpack.c.b16 %v2598, %v2590
      %v2727 = vpack.c.b16 %v2599, %v2591
      %v2728 = vpack.c.b16 %v2600, %v2592
      %v2729 = vpack.c.b16 %v2601, %v2593
      %v2730 = vpack.c.b16 %v2602, %v2594
      %v2731 = vpack.c.b16 %v2603, %v2595
      %v2732 = vpack.c.b16 %v2604, %v2596
      %v2733 = vpack.c.b16 %v2605, %v2597
      %2862 = vmatprep.subr.bf16.mxu0 %v2607
      %2863 = vmatpush1.bf16.msra.mxu0 %v2606
      %2864 = vmatprep.subr.bf16.mxu0 %v2615
      %2865 = vmatpush1.bf16.msra.mxu0 %v2614
      %2866 = vmatprep.subr.bf16.mxu0 %v2623
      %2867 = vmatpush1.bf16.msra.mxu0 %v2622
      %2868 = vmatprep.subr.bf16.mxu0 %v2631
      %2869 = vmatpush1.bf16.msra.mxu0 %v2630
      %2870 = vmatprep.subr.bf16.mxu0 %v2639
      %2871 = vmatpush1.bf16.msra.mxu0 %v2638
      %2872 = vmatprep.subr.bf16.mxu0 %v2647
      %2873 = vmatpush1.bf16.msra.mxu0 %v2646
      %2874 = vmatprep.subr.bf16.mxu0 %v2655
      %2875 = vmatpush1.bf16.msra.mxu0 %v2654
      %2876 = vmatprep.subr.bf16.mxu0 %v2663
      %2877 = vmatpush1.bf16.msra.mxu0 %v2662
      %2878 = vmatprep.subr.bf16.mxu0 %v2671
      %2879 = vmatpush1.bf16.msra.mxu0 %v2670
      %2880 = vmatprep.subr.bf16.mxu0 %v2679
      %2881 = vmatpush1.bf16.msra.mxu0 %v2678
      %2882 = vmatprep.subr.bf16.mxu0 %v2687
      %2883 = vmatpush1.bf16.msra.mxu0 %v2686
      %2884 = vmatprep.subr.bf16.mxu0 %v2695
      %2885 = vmatpush1.bf16.msra.mxu0 %v2694
      %2886 = vmatprep.subr.bf16.mxu0 %v2703
      %2887 = vmatpush1.bf16.msra.mxu0 %v2702
      %2888 = vmatprep.subr.bf16.mxu0 %v2711
      %2889 = vmatpush1.bf16.msra.mxu0 %v2710
      %2890 = vmatprep.subr.bf16.mxu0 %v2719
      %2891 = vmatpush1.bf16.msra.mxu0 %v2718
      %2892 = vmatprep.subr.bf16.mxu0 %v2727
      %2893 = vmatpush1.bf16.msra.mxu0 %v2726
      %2894 = vmatprep.mubr.bf16.mxu0 %v1092
      %2895 = vmatmul.mubr.bf16.gmra.mrb[0].mxu0 %v1091
      %v2896 = vpop.f32.mrb[0].mxu0
      %v2897 = vadd.f32 %v2061, %v2896
      %v2898 = vpop.f32.mrb[0].mxu0
      %v2899 = vadd.f32 %v2063, %v2898
      %v2900 = vpop.f32.mrb[0].mxu0
      %v2901 = vadd.f32 %v2065, %v2900
      %v2902 = vpop.f32.mrb[0].mxu0
      %v2903 = vadd.f32 %v2067, %v2902
      %2904 = vmatprep.mubr.bf16.mxu0 %v1094
      %2905 = vmatmul.mubr.bf16.gmra.mrb[0].mxu0 %v1093
      %v2906 = vpop.f32.mrb[0].mxu0
      %v2907 = vpop.f32.mrb[0].mxu0
      %v2908 = vpop.f32.mrb[0].mxu0
      %v2909 = vpop.f32.mrb[0].mxu0
      %2910 = vdwg.mxu0
      %2911 = vmatprep.subr.bf16.mxu0 %v2609
      %2912 = vmatpush1.bf16.msra.mxu0 %v2608
      %2913 = vmatprep.subr.bf16.mxu0 %v2617
      %2914 = vmatpush1.bf16.msra.mxu0 %v2616
      %2915 = vmatprep.subr.bf16.mxu0 %v2625
      %2916 = vmatpush1.bf16.msra.mxu0 %v2624
      %2917 = vmatprep.subr.bf16.mxu0 %v2633
      %2918 = vmatpush1.bf16.msra.mxu0 %v2632
      %2919 = vmatprep.subr.bf16.mxu0 %v2641
      %2920 = vmatpush1.bf16.msra.mxu0 %v2640
      %2921 = vmatprep.subr.bf16.mxu0 %v2649
      %2922 = vmatpush1.bf16.msra.mxu0 %v2648
      %2923 = vmatprep.subr.bf16.mxu0 %v2657
      %2924 = vmatpush1.bf16.msra.mxu0 %v2656
      %2925 = vmatprep.subr.bf16.mxu0 %v2665
      %2926 = vmatpush1.bf16.msra.mxu0 %v2664
      %2927 = vmatprep.subr.bf16.mxu0 %v2673
      %2928 = vmatpush1.bf16.msra.mxu0 %v2672
      %2929 = vmatprep.subr.bf16.mxu0 %v2681
      %2930 = vmatpush1.bf16.msra.mxu0 %v2680
      %2931 = vmatprep.subr.bf16.mxu0 %v2689
      %2932 = vmatpush1.bf16.msra.mxu0 %v2688
      %2933 = vmatprep.subr.bf16.mxu0 %v2697
      %2934 = vmatpush1.bf16.msra.mxu0 %v2696
      %2935 = vmatprep.subr.bf16.mxu0 %v2705
      %2936 = vmatpush1.bf16.msra.mxu0 %v2704
      %2937 = vmatprep.subr.bf16.mxu0 %v2713
      %2938 = vmatpush1.bf16.msra.mxu0 %v2712
      %2939 = vmatprep.subr.bf16.mxu0 %v2721
      %2940 = vmatpush1.bf16.msra.mxu0 %v2720
      %2941 = vmatprep.subr.bf16.mxu0 %v2729
      %2942 = vmatpush1.bf16.msra.mxu0 %v2728
      %2943 = vmatprep.mubr.bf16.mxu0 %v1092
      %2944 = vmatmul.mubr.bf16.gmra.mrb[0].mxu0 %v1091
      %v2945 = vpop.f32.mrb[0].mxu0
      %v2946 = vadd.f32 %v2110, %v2945
      %v2947 = vpop.f32.mrb[0].mxu0
      %v2948 = vadd.f32 %v2112, %v2947
      %v2949 = vpop.f32.mrb[0].mxu0
      %v2950 = vadd.f32 %v2114, %v2949
      %v2951 = vpop.f32.mrb[0].mxu0
      %v2952 = vadd.f32 %v2116, %v2951
      %2953 = vmatprep.mubr.bf16.mxu0 %v1094
      %2954 = vmatmul.mubr.bf16.gmra.mrb[0].mxu0 %v1093
      %v2955 = vpop.f32.mrb[0].mxu0
      %v2956 = vpop.f32.mrb[0].mxu0
      %v2957 = vpop.f32.mrb[0].mxu0
      %v2958 = vpop.f32.mrb[0].mxu0
      %2959 = vdwg.mxu0
      %2960 = vmatprep.subr.bf16.mxu0 %v2611
      %2961 = vmatpush1.bf16.msra.mxu0 %v2610
      %2962 = vmatprep.subr.bf16.mxu0 %v2619
      %2963 = vmatpush1.bf16.msra.mxu0 %v2618
      %2964 = vmatprep.subr.bf16.mxu0 %v2627
      %2965 = vmatpush1.bf16.msra.mxu0 %v2626
      %2966 = vmatprep.subr.bf16.mxu0 %v2635
      %2967 = vmatpush1.bf16.msra.mxu0 %v2634
      %2968 = vmatprep.subr.bf16.mxu0 %v2643
      %2969 = vmatpush1.bf16.msra.mxu0 %v2642
      %2970 = vmatprep.subr.bf16.mxu0 %v2651
      %2971 = vmatpush1.bf16.msra.mxu0 %v2650
      %2972 = vmatprep.subr.bf16.mxu0 %v2659
      %2973 = vmatpush1.bf16.msra.mxu0 %v2658
      %2974 = vmatprep.subr.bf16.mxu0 %v2667
      %2975 = vmatpush1.bf16.msra.mxu0 %v2666
      %2976 = vmatprep.subr.bf16.mxu0 %v2675
      %2977 = vmatpush1.bf16.msra.mxu0 %v2674
      %2978 = vmatprep.subr.bf16.mxu0 %v2683
      %2979 = vmatpush1.bf16.msra.mxu0 %v2682
      %2980 = vmatprep.subr.bf16.mxu0 %v2691
      %2981 = vmatpush1.bf16.msra.mxu0 %v2690
      %2982 = vmatprep.subr.bf16.mxu0 %v2699
      %2983 = vmatpush1.bf16.msra.mxu0 %v2698
      %2984 = vmatprep.subr.bf16.mxu0 %v2707
      %2985 = vmatpush1.bf16.msra.mxu0 %v2706
      %2986 = vmatprep.subr.bf16.mxu0 %v2715
      %2987 = vmatpush1.bf16.msra.mxu0 %v2714
      %2988 = vmatprep.subr.bf16.mxu0 %v2723
      %2989 = vmatpush1.bf16.msra.mxu0 %v2722
      %2990 = vmatprep.subr.bf16.mxu0 %v2731
      %2991 = vmatpush1.bf16.msra.mxu0 %v2730
      %2992 = vmatprep.mubr.bf16.mxu0 %v1092
      %2993 = vmatmul.mubr.bf16.gmra.mrb[0].mxu0 %v1091
      %v2994 = vpop.f32.mrb[0].mxu0
      %v2995 = vadd.f32 %v2159, %v2994
      %v2996 = vpop.f32.mrb[0].mxu0
      %v2997 = vadd.f32 %v2161, %v2996
      %v2998 = vpop.f32.mrb[0].mxu0
      %v2999 = vadd.f32 %v2163, %v2998
      %v3000 = vpop.f32.mrb[0].mxu0
      %v3001 = vadd.f32 %v2165, %v3000
      %3002 = vmatprep.mubr.bf16.mxu0 %v1094
      %3003 = vmatmul.mubr.bf16.gmra.mrb[0].mxu0 %v1093
      %v3004 = vpop.f32.mrb[0].mxu0
      %v3005 = vpop.f32.mrb[0].mxu0
      %v3006 = vpop.f32.mrb[0].mxu0
      %v3007 = vpop.f32.mrb[0].mxu0
      %3008 = vdwg.mxu0
      %3009 = vmatprep.subr.bf16.mxu0 %v2613
      %3010 = vmatpush1.bf16.msra.mxu0 %v2612
      %3011 = vmatprep.subr.bf16.mxu0 %v2621
      %3012 = vmatpush1.bf16.msra.mxu0 %v2620
      %3013 = vmatprep.subr.bf16.mxu0 %v2629
      %3014 = vmatpush1.bf16.msra.mxu0 %v2628
      %3015 = vmatprep.subr.bf16.mxu0 %v2637
      %3016 = vmatpush1.bf16.msra.mxu0 %v2636
      %3017 = vmatprep.subr.bf16.mxu0 %v2645
      %3018 = vmatpush1.bf16.msra.mxu0 %v2644
      %3019 = vmatprep.subr.bf16.mxu0 %v2653
      %3020 = vmatpush1.bf16.msra.mxu0 %v2652
      %3021 = vmatprep.subr.bf16.mxu0 %v2661
      %3022 = vmatpush1.bf16.msra.mxu0 %v2660
      %3023 = vmatprep.subr.bf16.mxu0 %v2669
      %3024 = vmatpush1.bf16.msra.mxu0 %v2668
      %3025 = vmatprep.subr.bf16.mxu0 %v2677
      %3026 = vmatpush1.bf16.msra.mxu0 %v2676
      %3027 = vmatprep.subr.bf16.mxu0 %v2685
      %3028 = vmatpush1.bf16.msra.mxu0 %v2684
      %3029 = vmatprep.subr.bf16.mxu0 %v2693
      %3030 = vmatpush1.bf16.msra.mxu0 %v2692
      %3031 = vmatprep.subr.bf16.mxu0 %v2701
      %3032 = vmatpush1.bf16.msra.mxu0 %v2700
      %3033 = vmatprep.subr.bf16.mxu0 %v2709
      %3034 = vmatpush1.bf16.msra.mxu0 %v2708
      %3035 = vmatprep.subr.bf16.mxu0 %v2717
      %3036 = vmatpush1.bf16.msra.mxu0 %v2716
      %3037 = vmatprep.subr.bf16.mxu0 %v2725
      %3038 = vmatpush1.bf16.msra.mxu0 %v2724
      %3039 = vmatprep.subr.bf16.mxu0 %v2733
      %3040 = vmatpush1.bf16.msra.mxu0 %v2732
      %3041 = vmatprep.mubr.bf16.mxu0 %v1092
      %3042 = vmatmul.mubr.bf16.gmra.mrb[0].mxu0 %v1091
      %v3043 = vpop.f32.mrb[0].mxu0
      %v3044 = vadd.f32 %v2208, %v3043
      %v3045 = vpop.f32.mrb[0].mxu0
      %v3046 = vadd.f32 %v2210, %v3045
      %v3047 = vpop.f32.mrb[0].mxu0
      %v3048 = vadd.f32 %v2212, %v3047
      %v3049 = vpop.f32.mrb[0].mxu0
      %v3050 = vadd.f32 %v2214, %v3049
      %3051 = vmatprep.mubr.bf16.mxu0 %v1094
      %3052 = vmatmul.mubr.bf16.gmra.mrb[0].mxu0 %v1093
      %v3053 = vpop.f32.mrb[0].mxu0
      %v3054 = vpop.f32.mrb[0].mxu0
      %v3055 = vpop.f32.mrb[0].mxu0
      %v3056 = vpop.f32.mrb[0].mxu0
      %3057 = vdwg.mxu0
      %s3058 = scalar_lea.vmem %s9, 2048
      %v3059 = vld [vmem:[%s3058] sm:$0xff]
      %v3060 = vld [vmem:[%s3058 + $0x8] sm:$0xff]
      %v3061 = vld [vmem:[%s3058 + $0x10] sm:$0xff]
      %v3062 = vld [vmem:[%s3058 + $0x18] sm:$0xff]
      %v3063 = vld [vmem:[%s3058 + $0x20] sm:$0xff]
      %v3064 = vld [vmem:[%s3058 + $0x28] sm:$0xff]
      %v3065 = vld [vmem:[%s3058 + $0x30] sm:$0xff]
      %v3066 = vld [vmem:[%s3058 + $0x38] sm:$0xff]
      %v3067 = vld [vmem:[%s3058 + $0x40] sm:$0xff]
      %v3068 = vld [vmem:[%s3058 + $0x48] sm:$0xff]
      %v3069 = vld [vmem:[%s3058 + $0x50] sm:$0xff]
      %v3070 = vld [vmem:[%s3058 + $0x58] sm:$0xff]
      %v3071 = vld [vmem:[%s3058 + $0x60] sm:$0xff]
      %v3072 = vld [vmem:[%s3058 + $0x68] sm:$0xff]
      %v3073 = vld [vmem:[%s3058 + $0x70] sm:$0xff]
      %v3074 = vld [vmem:[%s3058 + $0x78] sm:$0xff]
      %v3075 = vld [vmem:[%s3058 + $0x80] sm:$0xff]
      %v3076 = vld [vmem:[%s3058 + $0x88] sm:$0xff]
      %v3077 = vld [vmem:[%s3058 + $0x90] sm:$0xff]
      %v3078 = vld [vmem:[%s3058 + $0x98] sm:$0xff]
      %v3079 = vld [vmem:[%s3058 + $0xa0] sm:$0xff]
      %v3080 = vld [vmem:[%s3058 + $0xa8] sm:$0xff]
      %v3081 = vld [vmem:[%s3058 + $0xb0] sm:$0xff]
      %v3082 = vld [vmem:[%s3058 + $0xb8] sm:$0xff]
      %v3083 = vld [vmem:[%s3058 + $0xc0] sm:$0xff]
      %v3084 = vld [vmem:[%s3058 + $0xc8] sm:$0xff]
      %v3085 = vld [vmem:[%s3058 + $0xd0] sm:$0xff]
      %v3086 = vld [vmem:[%s3058 + $0xd8] sm:$0xff]
      %v3087 = vld [vmem:[%s3058 + $0xe0] sm:$0xff]
      %v3088 = vld [vmem:[%s3058 + $0xe8] sm:$0xff]
      %v3089 = vld [vmem:[%s3058 + $0xf0] sm:$0xff]
      %v3090 = vld [vmem:[%s3058 + $0xf8] sm:$0xff]
      %v3091 = vld [vmem:[%s3058 + $0x100] sm:$0xff]
      %v3092 = vld [vmem:[%s3058 + $0x108] sm:$0xff]
      %v3093 = vld [vmem:[%s3058 + $0x110] sm:$0xff]
      %v3094 = vld [vmem:[%s3058 + $0x118] sm:$0xff]
      %v3095 = vld [vmem:[%s3058 + $0x120] sm:$0xff]
      %v3096 = vld [vmem:[%s3058 + $0x128] sm:$0xff]
      %v3097 = vld [vmem:[%s3058 + $0x130] sm:$0xff]
      %v3098 = vld [vmem:[%s3058 + $0x138] sm:$0xff]
      %v3099 = vld [vmem:[%s3058 + $0x140] sm:$0xff]
      %v3100 = vld [vmem:[%s3058 + $0x148] sm:$0xff]
      %v3101 = vld [vmem:[%s3058 + $0x150] sm:$0xff]
      %v3102 = vld [vmem:[%s3058 + $0x158] sm:$0xff]
      %v3103 = vld [vmem:[%s3058 + $0x160] sm:$0xff]
      %v3104 = vld [vmem:[%s3058 + $0x168] sm:$0xff]
      %v3105 = vld [vmem:[%s3058 + $0x170] sm:$0xff]
      %v3106 = vld [vmem:[%s3058 + $0x178] sm:$0xff]
      %v3107 = vld [vmem:[%s3058 + $0x180] sm:$0xff]
      %v3108 = vld [vmem:[%s3058 + $0x188] sm:$0xff]
      %v3109 = vld [vmem:[%s3058 + $0x190] sm:$0xff]
      %v3110 = vld [vmem:[%s3058 + $0x198] sm:$0xff]
      %v3111 = vld [vmem:[%s3058 + $0x1a0] sm:$0xff]
      %v3112 = vld [vmem:[%s3058 + $0x1a8] sm:$0xff]
      %v3113 = vld [vmem:[%s3058 + $0x1b0] sm:$0xff]
      %v3114 = vld [vmem:[%s3058 + $0x1b8] sm:$0xff]
      %v3115 = vld [vmem:[%s3058 + $0x1c0] sm:$0xff]
      %v3116 = vld [vmem:[%s3058 + $0x1c8] sm:$0xff]
      %v3117 = vld [vmem:[%s3058 + $0x1d0] sm:$0xff]
      %v3118 = vld [vmem:[%s3058 + $0x1d8] sm:$0xff]
      %v3119 = vld [vmem:[%s3058 + $0x1e0] sm:$0xff]
      %v3120 = vld [vmem:[%s3058 + $0x1e8] sm:$0xff]
      %v3121 = vld [vmem:[%s3058 + $0x1f0] sm:$0xff]
      %v3122 = vld [vmem:[%s3058 + $0x1f8] sm:$0xff]
      %v3123 = vld [vmem:[%s3058 + $0x200] sm:$0xff]
      %v3124 = vld [vmem:[%s3058 + $0x208] sm:$0xff]
      %v3125 = vld [vmem:[%s3058 + $0x210] sm:$0xff]
      %v3126 = vld [vmem:[%s3058 + $0x218] sm:$0xff]
      %v3127 = vld [vmem:[%s3058 + $0x220] sm:$0xff]
      %v3128 = vld [vmem:[%s3058 + $0x228] sm:$0xff]
      %v3129 = vld [vmem:[%s3058 + $0x230] sm:$0xff]
      %v3130 = vld [vmem:[%s3058 + $0x238] sm:$0xff]
      %v3131 = vld [vmem:[%s3058 + $0x240] sm:$0xff]
      %v3132 = vld [vmem:[%s3058 + $0x248] sm:$0xff]
      %v3133 = vld [vmem:[%s3058 + $0x250] sm:$0xff]
      %v3134 = vld [vmem:[%s3058 + $0x258] sm:$0xff]
      %v3135 = vld [vmem:[%s3058 + $0x260] sm:$0xff]
      %v3136 = vld [vmem:[%s3058 + $0x268] sm:$0xff]
      %v3137 = vld [vmem:[%s3058 + $0x270] sm:$0xff]
      %v3138 = vld [vmem:[%s3058 + $0x278] sm:$0xff]
      %v3139 = vld [vmem:[%s3058 + $0x280] sm:$0xff]
      %v3140 = vld [vmem:[%s3058 + $0x288] sm:$0xff]
      %v3141 = vld [vmem:[%s3058 + $0x290] sm:$0xff]
      %v3142 = vld [vmem:[%s3058 + $0x298] sm:$0xff]
      %v3143 = vld [vmem:[%s3058 + $0x2a0] sm:$0xff]
      %v3144 = vld [vmem:[%s3058 + $0x2a8] sm:$0xff]
      %v3145 = vld [vmem:[%s3058 + $0x2b0] sm:$0xff]
      %v3146 = vld [vmem:[%s3058 + $0x2b8] sm:$0xff]
      %v3147 = vld [vmem:[%s3058 + $0x2c0] sm:$0xff]
      %v3148 = vld [vmem:[%s3058 + $0x2c8] sm:$0xff]
      %v3149 = vld [vmem:[%s3058 + $0x2d0] sm:$0xff]
      %v3150 = vld [vmem:[%s3058 + $0x2d8] sm:$0xff]
      %v3151 = vld [vmem:[%s3058 + $0x2e0] sm:$0xff]
      %v3152 = vld [vmem:[%s3058 + $0x2e8] sm:$0xff]
      %v3153 = vld [vmem:[%s3058 + $0x2f0] sm:$0xff]
      %v3154 = vld [vmem:[%s3058 + $0x2f8] sm:$0xff]
      %v3155 = vld [vmem:[%s3058 + $0x300] sm:$0xff]
      %v3156 = vld [vmem:[%s3058 + $0x308] sm:$0xff]
      %v3157 = vld [vmem:[%s3058 + $0x310] sm:$0xff]
      %v3158 = vld [vmem:[%s3058 + $0x318] sm:$0xff]
      %v3159 = vld [vmem:[%s3058 + $0x320] sm:$0xff]
      %v3160 = vld [vmem:[%s3058 + $0x328] sm:$0xff]
      %v3161 = vld [vmem:[%s3058 + $0x330] sm:$0xff]
      %v3162 = vld [vmem:[%s3058 + $0x338] sm:$0xff]
      %v3163 = vld [vmem:[%s3058 + $0x340] sm:$0xff]
      %v3164 = vld [vmem:[%s3058 + $0x348] sm:$0xff]
      %v3165 = vld [vmem:[%s3058 + $0x350] sm:$0xff]
      %v3166 = vld [vmem:[%s3058 + $0x358] sm:$0xff]
      %v3167 = vld [vmem:[%s3058 + $0x360] sm:$0xff]
      %v3168 = vld [vmem:[%s3058 + $0x368] sm:$0xff]
      %v3169 = vld [vmem:[%s3058 + $0x370] sm:$0xff]
      %v3170 = vld [vmem:[%s3058 + $0x378] sm:$0xff]
      %v3171 = vld [vmem:[%s3058 + $0x380] sm:$0xff]
      %v3172 = vld [vmem:[%s3058 + $0x388] sm:$0xff]
      %v3173 = vld [vmem:[%s3058 + $0x390] sm:$0xff]
      %v3174 = vld [vmem:[%s3058 + $0x398] sm:$0xff]
      %v3175 = vld [vmem:[%s3058 + $0x3a0] sm:$0xff]
      %v3176 = vld [vmem:[%s3058 + $0x3a8] sm:$0xff]
      %v3177 = vld [vmem:[%s3058 + $0x3b0] sm:$0xff]
      %v3178 = vld [vmem:[%s3058 + $0x3b8] sm:$0xff]
      %v3179 = vld [vmem:[%s3058 + $0x3c0] sm:$0xff]
      %v3180 = vld [vmem:[%s3058 + $0x3c8] sm:$0xff]
      %v3181 = vld [vmem:[%s3058 + $0x3d0] sm:$0xff]
      %v3182 = vld [vmem:[%s3058 + $0x3d8] sm:$0xff]
      %v3183 = vld [vmem:[%s3058 + $0x3e0] sm:$0xff]
      %v3184 = vld [vmem:[%s3058 + $0x3e8] sm:$0xff]
      %v3185 = vld [vmem:[%s3058 + $0x3f0] sm:$0xff]
      %v3186 = vld [vmem:[%s3058 + $0x3f8] sm:$0xff]
      %v3191 = vrot.slane %v1091, 1
      %v3192 = vrot.slane %v1093, 1
      %v3193 = vsel %vm573, %v3191, %v3192
      %v3194 = vrot.slane %v1092, 1
      %v3195 = vrot.slane %v1094, 1
      %v3196 = vsel %vm573, %v3194, %v3195
      %v3329 = vunpack.c.l.b16 %v3059
      %v3330 = vunpack.c.h.b16 %v3059
      %v3331 = vunpack.c.l.b16 %v3060
      %v3332 = vunpack.c.h.b16 %v3060
      %v3333 = vunpack.c.l.b16 %v3061
      %v3334 = vunpack.c.h.b16 %v3061
      %v3335 = vunpack.c.l.b16 %v3062
      %v3336 = vunpack.c.h.b16 %v3062
      %v3337 = vunpack.c.l.b16 %v3063
      %v3338 = vunpack.c.h.b16 %v3063
      %v3339 = vunpack.c.l.b16 %v3064
      %v3340 = vunpack.c.h.b16 %v3064
      %v3341 = vunpack.c.l.b16 %v3065
      %v3342 = vunpack.c.h.b16 %v3065
      %v3343 = vunpack.c.l.b16 %v3066
      %v3344 = vunpack.c.h.b16 %v3066
      %v3345 = vunpack.c.l.b16 %v3067
      %v3346 = vunpack.c.h.b16 %v3067
      %v3347 = vunpack.c.l.b16 %v3068
      %v3348 = vunpack.c.h.b16 %v3068
      %v3349 = vunpack.c.l.b16 %v3069
      %v3350 = vunpack.c.h.b16 %v3069
      %v3351 = vunpack.c.l.b16 %v3070
      %v3352 = vunpack.c.h.b16 %v3070
      %v3353 = vunpack.c.l.b16 %v3071
      %v3354 = vunpack.c.h.b16 %v3071
      %v3355 = vunpack.c.l.b16 %v3072
      %v3356 = vunpack.c.h.b16 %v3072
      %v3357 = vunpack.c.l.b16 %v3073
      %v3358 = vunpack.c.h.b16 %v3073
      %v3359 = vunpack.c.l.b16 %v3074
      %v3360 = vunpack.c.h.b16 %v3074
      %v3361 = vunpack.c.l.b16 %v3075
      %v3362 = vunpack.c.h.b16 %v3075
      %v3363 = vunpack.c.l.b16 %v3076
      %v3364 = vunpack.c.h.b16 %v3076
      %v3365 = vunpack.c.l.b16 %v3077
      %v3366 = vunpack.c.h.b16 %v3077
      %v3367 = vunpack.c.l.b16 %v3078
      %v3368 = vunpack.c.h.b16 %v3078
      %v3369 = vunpack.c.l.b16 %v3079
      %v3370 = vunpack.c.h.b16 %v3079
      %v3371 = vunpack.c.l.b16 %v3080
      %v3372 = vunpack.c.h.b16 %v3080
      %v3373 = vunpack.c.l.b16 %v3081
      %v3374 = vunpack.c.h.b16 %v3081
      %v3375 = vunpack.c.l.b16 %v3082
      %v3376 = vunpack.c.h.b16 %v3082
      %v3377 = vunpack.c.l.b16 %v3083
      %v3378 = vunpack.c.h.b16 %v3083
      %v3379 = vunpack.c.l.b16 %v3084
      %v3380 = vunpack.c.h.b16 %v3084
      %v3381 = vunpack.c.l.b16 %v3085
      %v3382 = vunpack.c.h.b16 %v3085
      %v3383 = vunpack.c.l.b16 %v3086
      %v3384 = vunpack.c.h.b16 %v3086
      %v3385 = vunpack.c.l.b16 %v3087
      %v3386 = vunpack.c.h.b16 %v3087
      %v3387 = vunpack.c.l.b16 %v3088
      %v3388 = vunpack.c.h.b16 %v3088
      %v3389 = vunpack.c.l.b16 %v3089
      %v3390 = vunpack.c.h.b16 %v3089
      %v3391 = vunpack.c.l.b16 %v3090
      %v3392 = vunpack.c.h.b16 %v3090
      %v3393 = vunpack.c.l.b16 %v3091
      %v3394 = vunpack.c.h.b16 %v3091
      %v3395 = vunpack.c.l.b16 %v3092
      %v3396 = vunpack.c.h.b16 %v3092
      %v3397 = vunpack.c.l.b16 %v3093
      %v3398 = vunpack.c.h.b16 %v3093
      %v3399 = vunpack.c.l.b16 %v3094
      %v3400 = vunpack.c.h.b16 %v3094
      %v3401 = vunpack.c.l.b16 %v3095
      %v3402 = vunpack.c.h.b16 %v3095
      %v3403 = vunpack.c.l.b16 %v3096
      %v3404 = vunpack.c.h.b16 %v3096
      %v3405 = vunpack.c.l.b16 %v3097
      %v3406 = vunpack.c.h.b16 %v3097
      %v3407 = vunpack.c.l.b16 %v3098
      %v3408 = vunpack.c.h.b16 %v3098
      %v3409 = vunpack.c.l.b16 %v3099
      %v3410 = vunpack.c.h.b16 %v3099
      %v3411 = vunpack.c.l.b16 %v3100
      %v3412 = vunpack.c.h.b16 %v3100
      %v3413 = vunpack.c.l.b16 %v3101
      %v3414 = vunpack.c.h.b16 %v3101
      %v3415 = vunpack.c.l.b16 %v3102
      %v3416 = vunpack.c.h.b16 %v3102
      %v3417 = vunpack.c.l.b16 %v3103
      %v3418 = vunpack.c.h.b16 %v3103
      %v3419 = vunpack.c.l.b16 %v3104
      %v3420 = vunpack.c.h.b16 %v3104
      %v3421 = vunpack.c.l.b16 %v3105
      %v3422 = vunpack.c.h.b16 %v3105
      %v3423 = vunpack.c.l.b16 %v3106
      %v3424 = vunpack.c.h.b16 %v3106
      %v3425 = vunpack.c.l.b16 %v3107
      %v3426 = vunpack.c.h.b16 %v3107
      %v3427 = vunpack.c.l.b16 %v3108
      %v3428 = vunpack.c.h.b16 %v3108
      %v3429 = vunpack.c.l.b16 %v3109
      %v3430 = vunpack.c.h.b16 %v3109
      %v3431 = vunpack.c.l.b16 %v3110
      %v3432 = vunpack.c.h.b16 %v3110
      %v3433 = vunpack.c.l.b16 %v3111
      %v3434 = vunpack.c.h.b16 %v3111
      %v3435 = vunpack.c.l.b16 %v3112
      %v3436 = vunpack.c.h.b16 %v3112
      %v3437 = vunpack.c.l.b16 %v3113
      %v3438 = vunpack.c.h.b16 %v3113
      %v3439 = vunpack.c.l.b16 %v3114
      %v3440 = vunpack.c.h.b16 %v3114
      %v3441 = vunpack.c.l.b16 %v3115
      %v3442 = vunpack.c.h.b16 %v3115
      %v3443 = vunpack.c.l.b16 %v3116
      %v3444 = vunpack.c.h.b16 %v3116
      %v3445 = vunpack.c.l.b16 %v3117
      %v3446 = vunpack.c.h.b16 %v3117
      %v3447 = vunpack.c.l.b16 %v3118
      %v3448 = vunpack.c.h.b16 %v3118
      %v3449 = vunpack.c.l.b16 %v3119
      %v3450 = vunpack.c.h.b16 %v3119
      %v3451 = vunpack.c.l.b16 %v3120
      %v3452 = vunpack.c.h.b16 %v3120
      %v3453 = vunpack.c.l.b16 %v3121
      %v3454 = vunpack.c.h.b16 %v3121
      %v3455 = vunpack.c.l.b16 %v3122
      %v3456 = vunpack.c.h.b16 %v3122
      %v3457 = vunpack.c.l.b16 %v3123
      %v3458 = vunpack.c.h.b16 %v3123
      %v3459 = vunpack.c.l.b16 %v3124
      %v3460 = vunpack.c.h.b16 %v3124
      %v3461 = vunpack.c.l.b16 %v3125
      %v3462 = vunpack.c.h.b16 %v3125
      %v3463 = vunpack.c.l.b16 %v3126
      %v3464 = vunpack.c.h.b16 %v3126
      %v3465 = vunpack.c.l.b16 %v3127
      %v3466 = vunpack.c.h.b16 %v3127
      %v3467 = vunpack.c.l.b16 %v3128
      %v3468 = vunpack.c.h.b16 %v3128
      %v3469 = vunpack.c.l.b16 %v3129
      %v3470 = vunpack.c.h.b16 %v3129
      %v3471 = vunpack.c.l.b16 %v3130
      %v3472 = vunpack.c.h.b16 %v3130
      %v3473 = vunpack.c.l.b16 %v3131
      %v3474 = vunpack.c.h.b16 %v3131
      %v3475 = vunpack.c.l.b16 %v3132
      %v3476 = vunpack.c.h.b16 %v3132
      %v3477 = vunpack.c.l.b16 %v3133
      %v3478 = vunpack.c.h.b16 %v3133
      %v3479 = vunpack.c.l.b16 %v3134
      %v3480 = vunpack.c.h.b16 %v3134
      %v3481 = vunpack.c.l.b16 %v3135
      %v3482 = vunpack.c.h.b16 %v3135
      %v3483 = vunpack.c.l.b16 %v3136
      %v3484 = vunpack.c.h.b16 %v3136
      %v3485 = vunpack.c.l.b16 %v3137
      %v3486 = vunpack.c.h.b16 %v3137
      %v3487 = vunpack.c.l.b16 %v3138
      %v3488 = vunpack.c.h.b16 %v3138
      %v3489 = vunpack.c.l.b16 %v3139
      %v3490 = vunpack.c.h.b16 %v3139
      %v3491 = vunpack.c.l.b16 %v3140
      %v3492 = vunpack.c.h.b16 %v3140
      %v3493 = vunpack.c.l.b16 %v3141
      %v3494 = vunpack.c.h.b16 %v3141
      %v3495 = vunpack.c.l.b16 %v3142
      %v3496 = vunpack.c.h.b16 %v3142
      %v3497 = vunpack.c.l.b16 %v3143
      %v3498 = vunpack.c.h.b16 %v3143
      %v3499 = vunpack.c.l.b16 %v3144
      %v3500 = vunpack.c.h.b16 %v3144
      %v3501 = vunpack.c.l.b16 %v3145
      %v3502 = vunpack.c.h.b16 %v3145
      %v3503 = vunpack.c.l.b16 %v3146
      %v3504 = vunpack.c.h.b16 %v3146
      %v3505 = vunpack.c.l.b16 %v3147
      %v3506 = vunpack.c.h.b16 %v3147
      %v3507 = vunpack.c.l.b16 %v3148
      %v3508 = vunpack.c.h.b16 %v3148
      %v3509 = vunpack.c.l.b16 %v3149
      %v3510 = vunpack.c.h.b16 %v3149
      %v3511 = vunpack.c.l.b16 %v3150
      %v3512 = vunpack.c.h.b16 %v3150
      %v3513 = vunpack.c.l.b16 %v3151
      %v3514 = vunpack.c.h.b16 %v3151
      %v3515 = vunpack.c.l.b16 %v3152
      %v3516 = vunpack.c.h.b16 %v3152
      %v3517 = vunpack.c.l.b16 %v3153
      %v3518 = vunpack.c.h.b16 %v3153
      %v3519 = vunpack.c.l.b16 %v3154
      %v3520 = vunpack.c.h.b16 %v3154
      %v3521 = vunpack.c.l.b16 %v3155
      %v3522 = vunpack.c.h.b16 %v3155
      %v3523 = vunpack.c.l.b16 %v3156
      %v3524 = vunpack.c.h.b16 %v3156
      %v3525 = vunpack.c.l.b16 %v3157
      %v3526 = vunpack.c.h.b16 %v3157
      %v3527 = vunpack.c.l.b16 %v3158
      %v3528 = vunpack.c.h.b16 %v3158
      %v3529 = vunpack.c.l.b16 %v3159
      %v3530 = vunpack.c.h.b16 %v3159
      %v3531 = vunpack.c.l.b16 %v3160
      %v3532 = vunpack.c.h.b16 %v3160
      %v3533 = vunpack.c.l.b16 %v3161
      %v3534 = vunpack.c.h.b16 %v3161
      %v3535 = vunpack.c.l.b16 %v3162
      %v3536 = vunpack.c.h.b16 %v3162
      %v3537 = vunpack.c.l.b16 %v3163
      %v3538 = vunpack.c.h.b16 %v3163
      %v3539 = vunpack.c.l.b16 %v3164
      %v3540 = vunpack.c.h.b16 %v3164
      %v3541 = vunpack.c.l.b16 %v3165
      %v3542 = vunpack.c.h.b16 %v3165
      %v3543 = vunpack.c.l.b16 %v3166
      %v3544 = vunpack.c.h.b16 %v3166
      %v3545 = vunpack.c.l.b16 %v3167
      %v3546 = vunpack.c.h.b16 %v3167
      %v3547 = vunpack.c.l.b16 %v3168
      %v3548 = vunpack.c.h.b16 %v3168
      %v3549 = vunpack.c.l.b16 %v3169
      %v3550 = vunpack.c.h.b16 %v3169
      %v3551 = vunpack.c.l.b16 %v3170
      %v3552 = vunpack.c.h.b16 %v3170
      %v3553 = vunpack.c.l.b16 %v3171
      %v3554 = vunpack.c.h.b16 %v3171
      %v3555 = vunpack.c.l.b16 %v3172
      %v3556 = vunpack.c.h.b16 %v3172
      %v3557 = vunpack.c.l.b16 %v3173
      %v3558 = vunpack.c.h.b16 %v3173
      %v3559 = vunpack.c.l.b16 %v3174
      %v3560 = vunpack.c.h.b16 %v3174
      %v3561 = vunpack.c.l.b16 %v3175
      %v3562 = vunpack.c.h.b16 %v3175
      %v3563 = vunpack.c.l.b16 %v3176
      %v3564 = vunpack.c.h.b16 %v3176
      %v3565 = vunpack.c.l.b16 %v3177
      %v3566 = vunpack.c.h.b16 %v3177
      %v3567 = vunpack.c.l.b16 %v3178
      %v3568 = vunpack.c.h.b16 %v3178
      %v3569 = vunpack.c.l.b16 %v3179
      %v3570 = vunpack.c.h.b16 %v3179
      %v3571 = vunpack.c.l.b16 %v3180
      %v3572 = vunpack.c.h.b16 %v3180
      %v3573 = vunpack.c.l.b16 %v3181
      %v3574 = vunpack.c.h.b16 %v3181
      %v3575 = vunpack.c.l.b16 %v3182
      %v3576 = vunpack.c.h.b16 %v3182
      %v3577 = vunpack.c.l.b16 %v3183
      %v3578 = vunpack.c.h.b16 %v3183
      %v3579 = vunpack.c.l.b16 %v3184
      %v3580 = vunpack.c.h.b16 %v3184
      %v3581 = vunpack.c.l.b16 %v3185
      %v3582 = vunpack.c.h.b16 %v3185
      %v3583 = vunpack.c.l.b16 %v3186
      %v3584 = vunpack.c.h.b16 %v3186
      %v3585 = vpack.c.b16 %v3337, %v3329
      %v3586 = vpack.c.b16 %v3338, %v3330
      %v3587 = vpack.c.b16 %v3339, %v3331
      %v3588 = vpack.c.b16 %v3340, %v3332
      %v3589 = vpack.c.b16 %v3341, %v3333
      %v3590 = vpack.c.b16 %v3342, %v3334
      %v3591 = vpack.c.b16 %v3343, %v3335
      %v3592 = vpack.c.b16 %v3344, %v3336
      %v3593 = vpack.c.b16 %v3353, %v3345
      %v3594 = vpack.c.b16 %v3354, %v3346
      %v3595 = vpack.c.b16 %v3355, %v3347
      %v3596 = vpack.c.b16 %v3356, %v3348
      %v3597 = vpack.c.b16 %v3357, %v3349
      %v3598 = vpack.c.b16 %v3358, %v3350
      %v3599 = vpack.c.b16 %v3359, %v3351
      %v3600 = vpack.c.b16 %v3360, %v3352
      %v3601 = vpack.c.b16 %v3369, %v3361
      %v3602 = vpack.c.b16 %v3370, %v3362
      %v3603 = vpack.c.b16 %v3371, %v3363
      %v3604 = vpack.c.b16 %v3372, %v3364
      %v3605 = vpack.c.b16 %v3373, %v3365
      %v3606 = vpack.c.b16 %v3374, %v3366
      %v3607 = vpack.c.b16 %v3375, %v3367
      %v3608 = vpack.c.b16 %v3376, %v3368
      %v3609 = vpack.c.b16 %v3385, %v3377
      %v3610 = vpack.c.b16 %v3386, %v3378
      %v3611 = vpack.c.b16 %v3387, %v3379
      %v3612 = vpack.c.b16 %v3388, %v3380
      %v3613 = vpack.c.b16 %v3389, %v3381
      %v3614 = vpack.c.b16 %v3390, %v3382
      %v3615 = vpack.c.b16 %v3391, %v3383
      %v3616 = vpack.c.b16 %v3392, %v3384
      %v3617 = vpack.c.b16 %v3401, %v3393
      %v3618 = vpack.c.b16 %v3402, %v3394
      %v3619 = vpack.c.b16 %v3403, %v3395
      %v3620 = vpack.c.b16 %v3404, %v3396
      %v3621 = vpack.c.b16 %v3405, %v3397
      %v3622 = vpack.c.b16 %v3406, %v3398
      %v3623 = vpack.c.b16 %v3407, %v3399
      %v3624 = vpack.c.b16 %v3408, %v3400
      %v3625 = vpack.c.b16 %v3417, %v3409
      %v3626 = vpack.c.b16 %v3418, %v3410
      %v3627 = vpack.c.b16 %v3419, %v3411
      %v3628 = vpack.c.b16 %v3420, %v3412
      %v3629 = vpack.c.b16 %v3421, %v3413
      %v3630 = vpack.c.b16 %v3422, %v3414
      %v3631 = vpack.c.b16 %v3423, %v3415
      %v3632 = vpack.c.b16 %v3424, %v3416
      %v3633 = vpack.c.b16 %v3433, %v3425
      %v3634 = vpack.c.b16 %v3434, %v3426
      %v3635 = vpack.c.b16 %v3435, %v3427
      %v3636 = vpack.c.b16 %v3436, %v3428
      %v3637 = vpack.c.b16 %v3437, %v3429
      %v3638 = vpack.c.b16 %v3438, %v3430
      %v3639 = vpack.c.b16 %v3439, %v3431
      %v3640 = vpack.c.b16 %v3440, %v3432
      %v3641 = vpack.c.b16 %v3449, %v3441
      %v3642 = vpack.c.b16 %v3450, %v3442
      %v3643 = vpack.c.b16 %v3451, %v3443
      %v3644 = vpack.c.b16 %v3452, %v3444
      %v3645 = vpack.c.b16 %v3453, %v3445
      %v3646 = vpack.c.b16 %v3454, %v3446
      %v3647 = vpack.c.b16 %v3455, %v3447
      %v3648 = vpack.c.b16 %v3456, %v3448
      %v3649 = vpack.c.b16 %v3465, %v3457
      %v3650 = vpack.c.b16 %v3466, %v3458
      %v3651 = vpack.c.b16 %v3467, %v3459
      %v3652 = vpack.c.b16 %v3468, %v3460
      %v3653 = vpack.c.b16 %v3469, %v3461
      %v3654 = vpack.c.b16 %v3470, %v3462
      %v3655 = vpack.c.b16 %v3471, %v3463
      %v3656 = vpack.c.b16 %v3472, %v3464
      %v3657 = vpack.c.b16 %v3481, %v3473
      %v3658 = vpack.c.b16 %v3482, %v3474
      %v3659 = vpack.c.b16 %v3483, %v3475
      %v3660 = vpack.c.b16 %v3484, %v3476
      %v3661 = vpack.c.b16 %v3485, %v3477
      %v3662 = vpack.c.b16 %v3486, %v3478
      %v3663 = vpack.c.b16 %v3487, %v3479
      %v3664 = vpack.c.b16 %v3488, %v3480
      %v3665 = vpack.c.b16 %v3497, %v3489
      %v3666 = vpack.c.b16 %v3498, %v3490
      %v3667 = vpack.c.b16 %v3499, %v3491
      %v3668 = vpack.c.b16 %v3500, %v3492
      %v3669 = vpack.c.b16 %v3501, %v3493
      %v3670 = vpack.c.b16 %v3502, %v3494
      %v3671 = vpack.c.b16 %v3503, %v3495
      %v3672 = vpack.c.b16 %v3504, %v3496
      %v3673 = vpack.c.b16 %v3513, %v3505
      %v3674 = vpack.c.b16 %v3514, %v3506
      %v3675 = vpack.c.b16 %v3515, %v3507
      %v3676 = vpack.c.b16 %v3516, %v3508
      %v3677 = vpack.c.b16 %v3517, %v3509
      %v3678 = vpack.c.b16 %v3518, %v3510
      %v3679 = vpack.c.b16 %v3519, %v3511
      %v3680 = vpack.c.b16 %v3520, %v3512
      %v3681 = vpack.c.b16 %v3529, %v3521
      %v3682 = vpack.c.b16 %v3530, %v3522
      %v3683 = vpack.c.b16 %v3531, %v3523
      %v3684 = vpack.c.b16 %v3532, %v3524
      %v3685 = vpack.c.b16 %v3533, %v3525
      %v3686 = vpack.c.b16 %v3534, %v3526
      %v3687 = vpack.c.b16 %v3535, %v3527
      %v3688 = vpack.c.b16 %v3536, %v3528
      %v3689 = vpack.c.b16 %v3545, %v3537
      %v3690 = vpack.c.b16 %v3546, %v3538
      %v3691 = vpack.c.b16 %v3547, %v3539
      %v3692 = vpack.c.b16 %v3548, %v3540
      %v3693 = vpack.c.b16 %v3549, %v3541
      %v3694 = vpack.c.b16 %v3550, %v3542
      %v3695 = vpack.c.b16 %v3551, %v3543
      %v3696 = vpack.c.b16 %v3552, %v3544
      %v3697 = vpack.c.b16 %v3561, %v3553
      %v3698 = vpack.c.b16 %v3562, %v3554
      %v3699 = vpack.c.b16 %v3563, %v3555
      %v3700 = vpack.c.b16 %v3564, %v3556
      %v3701 = vpack.c.b16 %v3565, %v3557
      %v3702 = vpack.c.b16 %v3566, %v3558
      %v3703 = vpack.c.b16 %v3567, %v3559
      %v3704 = vpack.c.b16 %v3568, %v3560
      %v3705 = vpack.c.b16 %v3577, %v3569
      %v3706 = vpack.c.b16 %v3578, %v3570
      %v3707 = vpack.c.b16 %v3579, %v3571
      %v3708 = vpack.c.b16 %v3580, %v3572
      %v3709 = vpack.c.b16 %v3581, %v3573
      %v3710 = vpack.c.b16 %v3582, %v3574
      %v3711 = vpack.c.b16 %v3583, %v3575
      %v3712 = vpack.c.b16 %v3584, %v3576
      %3841 = vmatprep.subr.bf16.mxu0 %v3586
      %3842 = vmatpush1.bf16.msra.mxu0 %v3585
      %3843 = vmatprep.subr.bf16.mxu0 %v3594
      %3844 = vmatpush1.bf16.msra.mxu0 %v3593
      %3845 = vmatprep.subr.bf16.mxu0 %v3602
      %3846 = vmatpush1.bf16.msra.mxu0 %v3601
      %3847 = vmatprep.subr.bf16.mxu0 %v3610
      %3848 = vmatpush1.bf16.msra.mxu0 %v3609
      %3849 = vmatprep.subr.bf16.mxu0 %v3618
      %3850 = vmatpush1.bf16.msra.mxu0 %v3617
      %3851 = vmatprep.subr.bf16.mxu0 %v3626
      %3852 = vmatpush1.bf16.msra.mxu0 %v3625
      %3853 = vmatprep.subr.bf16.mxu0 %v3634
      %3854 = vmatpush1.bf16.msra.mxu0 %v3633
      %3855 = vmatprep.subr.bf16.mxu0 %v3642
      %3856 = vmatpush1.bf16.msra.mxu0 %v3641
      %3857 = vmatprep.subr.bf16.mxu0 %v3650
      %3858 = vmatpush1.bf16.msra.mxu0 %v3649
      %3859 = vmatprep.subr.bf16.mxu0 %v3658
      %3860 = vmatpush1.bf16.msra.mxu0 %v3657
      %3861 = vmatprep.subr.bf16.mxu0 %v3666
      %3862 = vmatpush1.bf16.msra.mxu0 %v3665
      %3863 = vmatprep.subr.bf16.mxu0 %v3674
      %3864 = vmatpush1.bf16.msra.mxu0 %v3673
      %3865 = vmatprep.subr.bf16.mxu0 %v3682
      %3866 = vmatpush1.bf16.msra.mxu0 %v3681
      %3867 = vmatprep.subr.bf16.mxu0 %v3690
      %3868 = vmatpush1.bf16.msra.mxu0 %v3689
      %3869 = vmatprep.subr.bf16.mxu0 %v3698
      %3870 = vmatpush1.bf16.msra.mxu0 %v3697
      %3871 = vmatprep.subr.bf16.mxu0 %v3706
      %3872 = vmatpush1.bf16.msra.mxu0 %v3705
      %3873 = vmatprep.mubr.bf16.mxu0 %v3196
      %3874 = vmatmul.mubr.bf16.gmra.mrb[0].mxu0 %v3193
      %v3875 = vpop.f32.mrb[0].mxu0
      %v3876 = vadd.f32 0.0, %v3875
      %v3877 = vpop.f32.mrb[0].mxu0
      %v3878 = vadd.f32 0.0, %v3877
      %v3879 = vpop.f32.mrb[0].mxu0
      %v3880 = vadd.f32 0.0, %v3879
      %v3881 = vpop.f32.mrb[0].mxu0
      %v3882 = vadd.f32 0.0, %v3881
      %3883 = vmatprep.mubr.bf16.mxu0 %v3195
      %3884 = vmatmul.mubr.bf16.gmra.mrb[0].mxu0 %v3192
      %v3885 = vpop.f32.mrb[0].mxu0
      %v3886 = vpop.f32.mrb[0].mxu0
      %v3887 = vpop.f32.mrb[0].mxu0
      %v3888 = vpop.f32.mrb[0].mxu0
      %3889 = vdwg.mxu0
      %3890 = vmatprep.subr.bf16.mxu0 %v3588
      %3891 = vmatpush1.bf16.msra.mxu0 %v3587
      %3892 = vmatprep.subr.bf16.mxu0 %v3596
      %3893 = vmatpush1.bf16.msra.mxu0 %v3595
      %3894 = vmatprep.subr.bf16.mxu0 %v3604
      %3895 = vmatpush1.bf16.msra.mxu0 %v3603
      %3896 = vmatprep.subr.bf16.mxu0 %v3612
      %3897 = vmatpush1.bf16.msra.mxu0 %v3611
      %3898 = vmatprep.subr.bf16.mxu0 %v3620
      %3899 = vmatpush1.bf16.msra.mxu0 %v3619
      %3900 = vmatprep.subr.bf16.mxu0 %v3628
      %3901 = vmatpush1.bf16.msra.mxu0 %v3627
      %3902 = vmatprep.subr.bf16.mxu0 %v3636
      %3903 = vmatpush1.bf16.msra.mxu0 %v3635
      %3904 = vmatprep.subr.bf16.mxu0 %v3644
      %3905 = vmatpush1.bf16.msra.mxu0 %v3643
      %3906 = vmatprep.subr.bf16.mxu0 %v3652
      %3907 = vmatpush1.bf16.msra.mxu0 %v3651
      %3908 = vmatprep.subr.bf16.mxu0 %v3660
      %3909 = vmatpush1.bf16.msra.mxu0 %v3659
      %3910 = vmatprep.subr.bf16.mxu0 %v3668
      %3911 = vmatpush1.bf16.msra.mxu0 %v3667
      %3912 = vmatprep.subr.bf16.mxu0 %v3676
      %3913 = vmatpush1.bf16.msra.mxu0 %v3675
      %3914 = vmatprep.subr.bf16.mxu0 %v3684
      %3915 = vmatpush1.bf16.msra.mxu0 %v3683
      %3916 = vmatprep.subr.bf16.mxu0 %v3692
      %3917 = vmatpush1.bf16.msra.mxu0 %v3691
      %3918 = vmatprep.subr.bf16.mxu0 %v3700
      %3919 = vmatpush1.bf16.msra.mxu0 %v3699
      %3920 = vmatprep.subr.bf16.mxu0 %v3708
      %3921 = vmatpush1.bf16.msra.mxu0 %v3707
      %3922 = vmatprep.mubr.bf16.mxu0 %v3196
      %3923 = vmatmul.mubr.bf16.gmra.mrb[0].mxu0 %v3193
      %v3924 = vpop.f32.mrb[0].mxu0
      %v3925 = vadd.f32 0.0, %v3924
      %v3926 = vpop.f32.mrb[0].mxu0
      %v3927 = vadd.f32 0.0, %v3926
      %v3928 = vpop.f32.mrb[0].mxu0
      %v3929 = vadd.f32 0.0, %v3928
      %v3930 = vpop.f32.mrb[0].mxu0
      %v3931 = vadd.f32 0.0, %v3930
      %3932 = vmatprep.mubr.bf16.mxu0 %v3195
      %3933 = vmatmul.mubr.bf16.gmra.mrb[0].mxu0 %v3192
      %v3934 = vpop.f32.mrb[0].mxu0
      %v3935 = vpop.f32.mrb[0].mxu0
      %v3936 = vpop.f32.mrb[0].mxu0
      %v3937 = vpop.f32.mrb[0].mxu0
      %3938 = vdwg.mxu0
      %3939 = vmatprep.subr.bf16.mxu0 %v3590
      %3940 = vmatpush1.bf16.msra.mxu0 %v3589
      %3941 = vmatprep.subr.bf16.mxu0 %v3598
      %3942 = vmatpush1.bf16.msra.mxu0 %v3597
      %3943 = vmatprep.subr.bf16.mxu0 %v3606
      %3944 = vmatpush1.bf16.msra.mxu0 %v3605
      %3945 = vmatprep.subr.bf16.mxu0 %v3614
      %3946 = vmatpush1.bf16.msra.mxu0 %v3613
      %3947 = vmatprep.subr.bf16.mxu0 %v3622
      %3948 = vmatpush1.bf16.msra.mxu0 %v3621
      %3949 = vmatprep.subr.bf16.mxu0 %v3630
      %3950 = vmatpush1.bf16.msra.mxu0 %v3629
      %3951 = vmatprep.subr.bf16.mxu0 %v3638
      %3952 = vmatpush1.bf16.msra.mxu0 %v3637
      %3953 = vmatprep.subr.bf16.mxu0 %v3646
      %3954 = vmatpush1.bf16.msra.mxu0 %v3645
      %3955 = vmatprep.subr.bf16.mxu0 %v3654
      %3956 = vmatpush1.bf16.msra.mxu0 %v3653
      %3957 = vmatprep.subr.bf16.mxu0 %v3662
      %3958 = vmatpush1.bf16.msra.mxu0 %v3661
      %3959 = vmatprep.subr.bf16.mxu0 %v3670
      %3960 = vmatpush1.bf16.msra.mxu0 %v3669
      %3961 = vmatprep.subr.bf16.mxu0 %v3678
      %3962 = vmatpush1.bf16.msra.mxu0 %v3677
      %3963 = vmatprep.subr.bf16.mxu0 %v3686
      %3964 = vmatpush1.bf16.msra.mxu0 %v3685
      %3965 = vmatprep.subr.bf16.mxu0 %v3694
      %3966 = vmatpush1.bf16.msra.mxu0 %v3693
      %3967 = vmatprep.subr.bf16.mxu0 %v3702
      %3968 = vmatpush1.bf16.msra.mxu0 %v3701
      %3969 = vmatprep.subr.bf16.mxu0 %v3710
      %3970 = vmatpush1.bf16.msra.mxu0 %v3709
      %3971 = vmatprep.mubr.bf16.mxu0 %v3196
      %3972 = vmatmul.mubr.bf16.gmra.mrb[0].mxu0 %v3193
      %v3973 = vpop.f32.mrb[0].mxu0
      %v3974 = vadd.f32 0.0, %v3973
      %v3975 = vpop.f32.mrb[0].mxu0
      %v3976 = vadd.f32 0.0, %v3975
      %v3977 = vpop.f32.mrb[0].mxu0
      %v3978 = vadd.f32 0.0, %v3977
      %v3979 = vpop.f32.mrb[0].mxu0
      %v3980 = vadd.f32 0.0, %v3979
      %3981 = vmatprep.mubr.bf16.mxu0 %v3195
      %3982 = vmatmul.mubr.bf16.gmra.mrb[0].mxu0 %v3192
      %v3983 = vpop.f32.mrb[0].mxu0
      %v3984 = vpop.f32.mrb[0].mxu0
      %v3985 = vpop.f32.mrb[0].mxu0
      %v3986 = vpop.f32.mrb[0].mxu0
      %3987 = vdwg.mxu0
      %3988 = vmatprep.subr.bf16.mxu0 %v3592
      %3989 = vmatpush1.bf16.msra.mxu0 %v3591
      %3990 = vmatprep.subr.bf16.mxu0 %v3600
      %3991 = vmatpush1.bf16.msra.mxu0 %v3599
      %3992 = vmatprep.subr.bf16.mxu0 %v3608
      %3993 = vmatpush1.bf16.msra.mxu0 %v3607
      %3994 = vmatprep.subr.bf16.mxu0 %v3616
      %3995 = vmatpush1.bf16.msra.mxu0 %v3615
      %3996 = vmatprep.subr.bf16.mxu0 %v3624
      %3997 = vmatpush1.bf16.msra.mxu0 %v3623
      %3998 = vmatprep.subr.bf16.mxu0 %v3632
      %3999 = vmatpush1.bf16.msra.mxu0 %v3631
      %4000 = vmatprep.subr.bf16.mxu0 %v3640
      %4001 = vmatpush1.bf16.msra.mxu0 %v3639
      %4002 = vmatprep.subr.bf16.mxu0 %v3648
      %4003 = vmatpush1.bf16.msra.mxu0 %v3647
      %4004 = vmatprep.subr.bf16.mxu0 %v3656
      %4005 = vmatpush1.bf16.msra.mxu0 %v3655
      %4006 = vmatprep.subr.bf16.mxu0 %v3664
      %4007 = vmatpush1.bf16.msra.mxu0 %v3663
      %4008 = vmatprep.subr.bf16.mxu0 %v3672
      %4009 = vmatpush1.bf16.msra.mxu0 %v3671
      %4010 = vmatprep.subr.bf16.mxu0 %v3680
      %4011 = vmatpush1.bf16.msra.mxu0 %v3679
      %4012 = vmatprep.subr.bf16.mxu0 %v3688
      %4013 = vmatpush1.bf16.msra.mxu0 %v3687
      %4014 = vmatprep.subr.bf16.mxu0 %v3696
      %4015 = vmatpush1.bf16.msra.mxu0 %v3695
      %4016 = vmatprep.subr.bf16.mxu0 %v3704
      %4017 = vmatpush1.bf16.msra.mxu0 %v3703
      %4018 = vmatprep.subr.bf16.mxu0 %v3712
      %4019 = vmatpush1.bf16.msra.mxu0 %v3711
      %4020 = vmatprep.mubr.bf16.mxu0 %v3196
      %4021 = vmatmul.mubr.bf16.gmra.mrb[0].mxu0 %v3193
      %v4022 = vpop.f32.mrb[0].mxu0
      %v4023 = vadd.f32 0.0, %v4022
      %v4024 = vpop.f32.mrb[0].mxu0
      %v4025 = vadd.f32 0.0, %v4024
      %v4026 = vpop.f32.mrb[0].mxu0
      %v4027 = vadd.f32 0.0, %v4026
      %v4028 = vpop.f32.mrb[0].mxu0
      %v4029 = vadd.f32 0.0, %v4028
      %4030 = vmatprep.mubr.bf16.mxu0 %v3195
      %4031 = vmatmul.mubr.bf16.gmra.mrb[0].mxu0 %v3192
      %v4032 = vpop.f32.mrb[0].mxu0
      %v4033 = vpop.f32.mrb[0].mxu0
      %v4034 = vpop.f32.mrb[0].mxu0
      %v4035 = vpop.f32.mrb[0].mxu0
      %4036 = vdwg.mxu0
      %v4037 = vadd.f32 %v2897, %v3876
      %v4038 = vadd.f32 %v2899, %v3878
      %v4039 = vadd.f32 %v2946, %v3925
      %v4040 = vadd.f32 %v2948, %v3927
      %v4041 = vadd.f32 %v2995, %v3974
      %v4042 = vadd.f32 %v2997, %v3976
      %v4043 = vadd.f32 %v3044, %v4023
      %v4044 = vadd.f32 %v3046, %v4025
      %v4045 = vadd.f32 %v2901, %v3880
      %v4046 = vadd.f32 %v2903, %v3882
      %v4047 = vadd.f32 %v2950, %v3929
      %v4048 = vadd.f32 %v2952, %v3931
      %v4049 = vadd.f32 %v2999, %v3978
      %v4050 = vadd.f32 %v3001, %v3980
      %v4051 = vadd.f32 %v3048, %v4027
      %v4052 = vadd.f32 %v3050, %v4029
      %v4053 = vld [vmem:[%s10] sm:$0xff]
      %v4055 = vlaneseq
      %v4056 = vshrl.u32 %v4055, 7
      %v4057 = vsub.s32 0, %v4056
      %v4058 = vrot.slane %v4053, %v4057
      %v4059 = vlaneseq
      %v4060 = vshrl.u32 %v4059, 7
      %v4061 = vsub.s32 1, %v4060
      %v4062 = vrot.slane %v4053, %v4061
      %v4063 = vlaneseq
      %v4064 = vshrl.u32 %v4063, 7
      %v4065 = vsub.s32 2, %v4064
      %v4066 = vrot.slane %v4053, %v4065
      %v4067 = vlaneseq
      %v4068 = vshrl.u32 %v4067, 7
      %v4069 = vsub.s32 3, %v4068
      %v4070 = vrot.slane %v4053, %v4069
      %v4071 = vlaneseq
      %v4072 = vshrl.u32 %v4071, 7
      %v4073 = vsub.s32 4, %v4072
      %v4074 = vrot.slane %v4053, %v4073
      %v4075 = vlaneseq
      %v4076 = vshrl.u32 %v4075, 7
      %v4077 = vsub.s32 5, %v4076
      %v4078 = vrot.slane %v4053, %v4077
      %v4079 = vlaneseq
      %v4080 = vshrl.u32 %v4079, 7
      %v4081 = vsub.s32 6, %v4080
      %v4082 = vrot.slane %v4053, %v4081
      %v4083 = vlaneseq
      %v4084 = vshrl.u32 %v4083, 7
      %v4085 = vsub.s32 7, %v4084
      %v4086 = vrot.slane %v4053, %v4085
      %v4095 = vmul.f32 %v4037, %v4058
      %v4096 = vmul.f32 %v4038, %v4062
      %v4097 = vmul.f32 %v4039, %v4066
      %v4098 = vmul.f32 %v4040, %v4070
      %v4099 = vmul.f32 %v4041, %v4074
      %v4100 = vmul.f32 %v4042, %v4078
      %v4101 = vmul.f32 %v4043, %v4082
      %v4102 = vmul.f32 %v4044, %v4086
      %v4103 = vmul.f32 %v4045, %v4058
      %v4104 = vmul.f32 %v4046, %v4062
      %v4105 = vmul.f32 %v4047, %v4066
      %v4106 = vmul.f32 %v4048, %v4070
      %v4107 = vmul.f32 %v4049, %v4074
      %v4108 = vmul.f32 %v4050, %v4078
      %v4109 = vmul.f32 %v4051, %v4082
      %v4110 = vmul.f32 %v4052, %v4086
      %v4111 = vld [vmem:[%s11] sm:$0xff]
      %v4113 = vlaneseq
      %v4114 = vshrl.u32 %v4113, 7
      %v4115 = vsub.s32 0, %v4114
      %v4116 = vrot.slane %v4111, %v4115
      %v4117 = vlaneseq
      %v4118 = vshrl.u32 %v4117, 7
      %v4119 = vsub.s32 1, %v4118
      %v4120 = vrot.slane %v4111, %v4119
      %v4121 = vlaneseq
      %v4122 = vshrl.u32 %v4121, 7
      %v4123 = vsub.s32 2, %v4122
      %v4124 = vrot.slane %v4111, %v4123
      %v4125 = vlaneseq
      %v4126 = vshrl.u32 %v4125, 7
      %v4127 = vsub.s32 3, %v4126
      %v4128 = vrot.slane %v4111, %v4127
      %v4129 = vlaneseq
      %v4130 = vshrl.u32 %v4129, 7
      %v4131 = vsub.s32 4, %v4130
      %v4132 = vrot.slane %v4111, %v4131
      %v4133 = vlaneseq
      %v4134 = vshrl.u32 %v4133, 7
      %v4135 = vsub.s32 5, %v4134
      %v4136 = vrot.slane %v4111, %v4135
      %v4137 = vlaneseq
      %v4138 = vshrl.u32 %v4137, 7
      %v4139 = vsub.s32 6, %v4138
      %v4140 = vrot.slane %v4111, %v4139
      %v4141 = vlaneseq
      %v4142 = vshrl.u32 %v4141, 7
      %v4143 = vsub.s32 7, %v4142
      %v4144 = vrot.slane %v4111, %v4143
      %v4153 = vadd.f32 %v4095, %v4116
      %v4154 = vadd.f32 %v4096, %v4120
      %v4155 = vadd.f32 %v4097, %v4124
      %v4156 = vadd.f32 %v4098, %v4128
      %v4157 = vadd.f32 %v4099, %v4132
      %v4158 = vadd.f32 %v4100, %v4136
      %v4159 = vadd.f32 %v4101, %v4140
      %v4160 = vadd.f32 %v4102, %v4144
      %v4161 = vadd.f32 %v4103, %v4116
      %v4162 = vadd.f32 %v4104, %v4120
      %v4163 = vadd.f32 %v4105, %v4124
      %v4164 = vadd.f32 %v4106, %v4128
      %v4165 = vadd.f32 %v4107, %v4132
      %v4166 = vadd.f32 %v4108, %v4136
      %v4167 = vadd.f32 %v4109, %v4140
      %v4168 = vadd.f32 %v4110, %v4144
      %vm4169 = vcmp.gt.f32.partialorder %v4153, 0.0
      %vm4170 = vcmp.gt.f32.partialorder %v4154, 0.0
      %vm4171 = vcmp.gt.f32.partialorder %v4155, 0.0
      %vm4172 = vcmp.gt.f32.partialorder %v4156, 0.0
      %vm4173 = vcmp.gt.f32.partialorder %v4157, 0.0
      %vm4174 = vcmp.gt.f32.partialorder %v4158, 0.0
      %vm4175 = vcmp.gt.f32.partialorder %v4159, 0.0
      %vm4176 = vcmp.gt.f32.partialorder %v4160, 0.0
      %vm4177 = vcmp.gt.f32.partialorder %v4161, 0.0
      %vm4178 = vcmp.gt.f32.partialorder %v4162, 0.0
      %vm4179 = vcmp.gt.f32.partialorder %v4163, 0.0
      %vm4180 = vcmp.gt.f32.partialorder %v4164, 0.0
      %vm4181 = vcmp.gt.f32.partialorder %v4165, 0.0
      %vm4182 = vcmp.gt.f32.partialorder %v4166, 0.0
      %vm4183 = vcmp.gt.f32.partialorder %v4167, 0.0
      %vm4184 = vcmp.gt.f32.partialorder %v4168, 0.0
      %v4185 = vmul.f32 %v4153, 0.2
      %v4186 = vmul.f32 %v4154, 0.2
      %v4187 = vmul.f32 %v4155, 0.2
      %v4188 = vmul.f32 %v4156, 0.2
      %v4189 = vmul.f32 %v4157, 0.2
      %v4190 = vmul.f32 %v4158, 0.2
      %v4191 = vmul.f32 %v4159, 0.2
      %v4192 = vmul.f32 %v4160, 0.2
      %v4193 = vmul.f32 %v4161, 0.2
      %v4194 = vmul.f32 %v4162, 0.2
      %v4195 = vmul.f32 %v4163, 0.2
      %v4196 = vmul.f32 %v4164, 0.2
      %v4197 = vmul.f32 %v4165, 0.2
      %v4198 = vmul.f32 %v4166, 0.2
      %v4199 = vmul.f32 %v4167, 0.2
      %v4200 = vmul.f32 %v4168, 0.2
      %v4201 = vsel %vm4169, %v4153, %v4185
      %v4202 = vsel %vm4170, %v4154, %v4186
      %v4203 = vsel %vm4171, %v4155, %v4187
      %v4204 = vsel %vm4172, %v4156, %v4188
      %v4205 = vsel %vm4173, %v4157, %v4189
      %v4206 = vsel %vm4174, %v4158, %v4190
      %v4207 = vsel %vm4175, %v4159, %v4191
      %v4208 = vsel %vm4176, %v4160, %v4192
      %v4209 = vsel %vm4177, %v4161, %v4193
      %v4210 = vsel %vm4178, %v4162, %v4194
      %v4211 = vsel %vm4179, %v4163, %v4195
      %v4212 = vsel %vm4180, %v4164, %v4196
      %v4213 = vsel %vm4181, %v4165, %v4197
      %v4214 = vsel %vm4182, %v4166, %v4198
      %v4215 = vsel %vm4183, %v4167, %v4199
      %v4216 = vsel %vm4184, %v4168, %v4200
      %4217 = vst [vmem:[%s417] sm:$0xff] %v4201
      %4218 = vst [vmem:[%s417 + $0x8] sm:$0xff] %v4202
      %4219 = vst [vmem:[%s417 + $0x10] sm:$0xff] %v4203
      %4220 = vst [vmem:[%s417 + $0x18] sm:$0xff] %v4204
      %4221 = vst [vmem:[%s417 + $0x20] sm:$0xff] %v4205
      %4222 = vst [vmem:[%s417 + $0x28] sm:$0xff] %v4206
      %4223 = vst [vmem:[%s417 + $0x30] sm:$0xff] %v4207
      %4224 = vst [vmem:[%s417 + $0x38] sm:$0xff] %v4208
      %4225 = vst [vmem:[%s417 + $0x40] sm:$0xff] %v4209
      %4226 = vst [vmem:[%s417 + $0x48] sm:$0xff] %v4210
      %4227 = vst [vmem:[%s417 + $0x50] sm:$0xff] %v4211
      %4228 = vst [vmem:[%s417 + $0x58] sm:$0xff] %v4212
      %4229 = vst [vmem:[%s417 + $0x60] sm:$0xff] %v4213
      %4230 = vst [vmem:[%s417 + $0x68] sm:$0xff] %v4214
      %4231 = vst [vmem:[%s417 + $0x70] sm:$0xff] %v4215
      %4232 = vst [vmem:[%s417 + $0x78] sm:$0xff] %v4216
      %s4233 = smul.u32 2, %s23
      %p4234 = scmp.lt.s32.totalorder %s4233, 3
      %s4235 = scalar_select %p4234, %s4233, 3
      %s4236 = smul.addr %s4235, 8
      %s4237 = smul.addr %s4236, 8
      %s4238 = scalar_lea.vmem %s12, %s4237
      // Predicated region
      $region69: #{specadapter_forward.1} parent=67 // pred_check
        %p4239 = pneg %p298
      $region70: #{specadapter_forward.1} parent=67 // pred_check_branch
        %4241 = sbr.rel (%p4239) target = $region72
      $region71: #{specadapter_forward.1} parent=67 // pred_region
        %s4242 = smul.u32 2, %s23
      $region72: #{specadapter_forward.1} parent=67 // pred_fallthru
        _
    $region68: #{specadapter_forward.1} parent=5 // pred_fallthru
      _
    %p4243 = scmp.le.s32.totalorder 2, %s18
    // Predicated region
    $region73: #{specadapter_forward.1} parent=5 // pred_check
      %p4244 = pneg %p4243
    $region74: #{specadapter_forward.1} parent=5 // pred_check_branch
      %4246 = sbr.rel (%p4244) target = $region76
    $region75: #{specadapter_forward.1} parent=5 // pred_region
      %s4247 = ssub.s32 %s18, 2
      // Predicated region
      $region77: #{specadapter_forward.1} parent=75 // pred_check
        %p4248 = pneg %p304
      $region78: #{specadapter_forward.1} parent=75 // pred_check_branch
        %4250 = sbr.rel (%p4248) target = $region80
      $region79: #{specadapter_forward.1} parent=75 // pred_region
        %s4251 = smul.u32 2, %s24
        %p4252 = scmp.lt.s32.totalorder %s4251, 3
        %s4253 = scalar_select %p4252, %s4251, 3
        %s4254 = smul.addr %s4253, 8
        %s4255 = smul.addr %s4254, 8
        %s4256 = scalar_lea.vmem %s12, %s4255
      $region80: #{specadapter_forward.1} parent=75 // pred_fallthru
        _
    $region76: #{specadapter_forward.1} parent=5 // pred_fallthru
      _
  $region6: #{specadapter_forward.1} parent=0 // loop_footer
    %s22 = sadd.s32 1, %s18
  $region7: #{specadapter_forward.1} parent=0 // loop_footer_branch
    %17 = sbr.rel target = $region3
  $region8: #{specadapter_forward.1} parent=0 // loop_exit
    _

</llo_original>
